<compile_context>
chip_gen: v7x
topology: tpu7x:2x2x1
jax: 0.10.0
libtpu: 0.0.40
codegen_flags: <defaults>
</compile_context>

<pallas_src>
import jax
import jax.numpy as jnp
from jax import lax
from jax.experimental import pallas as pl
from jax.experimental.pallas import tpu as pltpu


TB = 128          # batch tile: batch sits in the 128-wide lane dimension
NEG_BIG = -1e30   # load-bearing fc3 pad bias: exp(-1e30 - m) == 0 in log_softmax


# ---------------------------------------------------------------------------
# In-kernel helpers
# ---------------------------------------------------------------------------

def _pool2x2(a):
    """2x2 / stride-2 max pool (floor) over the two leading dims of (H, W, B)."""
    ph, pw = a.shape[0] // 2, a.shape[1] // 2
    a = a[: 2 * ph, : 2 * pw, :]
    a = a.reshape(ph, 2, 2 * pw, a.shape[-1])
    a = jnp.maximum(a[:, 0], a[:, 1])
    a = a.reshape(ph, pw, 2, a.shape[-1])
    return jnp.maximum(a[:, :, 0], a[:, :, 1])


def _lenet_kernel(x_ref, w1_ref, b1_ref, w2_ref, b2_ref,
                  fc1w_ref, fc1b_ref, fc2w_ref, fc2b_ref, fc3w_ref, fc3b_ref,
                  out_ref, p1_scr, p2_scr):
    f32 = jnp.float32
    tb = x_ref.shape[-1]

    # ---- conv1: 1 -> 6, 3x3 VALID, +ReLU, then 2x2 maxpool -------------------
    xv = x_ref[...]                                          # (28, 28, tb)
    taps1 = [xv[dh:dh + 26, dw:dw + 26, :]                   # 9 shifted slices
             for dh in range(3) for dw in range(3)]

    @pl.loop(0, 6)
    def _c1(co):
        # value accumulation (no scratch RMW): 9 scalar-weight MACs per channel
        s = taps1[0] * w1_ref[co]
        for t in range(1, 9):
            s = s + taps1[t] * w1_ref[t * 6 + co]
        a = jnp.maximum(s + b1_ref[co], 0.0)                 # (26, 26, tb)
        p1_scr[co] = _pool2x2(a)                             # (13, 13, tb)

    # ---- conv2: 6 -> 16, 3x3 VALID, +ReLU, then 2x2 maxpool ------------------
    p1c = [p1_scr[ci] for ci in range(6)]                    # per-channel maps
    taps2 = []                                               # index k = t*6 + ci
    for t in range(9):
        dh, dw = t // 3, t % 3
        for ci in range(6):
            taps2.append(p1c[ci][dh:dh + 11, dw:dw + 11, :])  # (11, 11, tb)

    @pl.loop(0, 16)
    def _c2(co):
        s = taps2[0] * w2_ref[co]
        for k in range(1, 54):
            s = s + taps2[k] * w2_ref[k * 16 + co]
        a = jnp.maximum(s + b2_ref[co], 0.0)                 # (11, 11, tb)
        p = _pool2x2(a).reshape(25, tb)                      # row = h*5 + w
        # pad each channel to a 32-row (8-aligned) slot so the later flatten to
        # (512, tb) is a relayout-free view; pad rows are zero (fc1 pad cols=0).
        p2_scr[co] = jnp.concatenate([p, jnp.zeros((7, tb), f32)], axis=0)

    # ---- fc stack on the MXU, batch in lanes ----------------------------------
    feats = p2_scr[...].reshape(16 * 32, tb)                 # (512, tb), pure view
    h1 = jnp.maximum(
        jnp.dot(fc1w_ref[...], feats, preferred_element_type=f32) + fc1b_ref[...],
        0.0)                                                 # (128, tb)
    h2 = jnp.maximum(
        jnp.dot(fc2w_ref[...], h1, preferred_element_type=f32) + fc2b_ref[...],
        0.0)                                                 # (128, tb)
    z = jnp.dot(fc3w_ref[...], h2, preferred_element_type=f32) + fc3b_ref[...]

    # log_softmax over the class (sublane) axis.  Rows 10..127 have zero weights
    # and a -1e30 bias, so exp() underflows to exactly 0 and they do not perturb
    # the normalizer.  (Load-bearing -- do not change the padding to 0.)
    m = jnp.max(z, axis=0, keepdims=True)
    e = jnp.exp(z - m)
    lse = jnp.log(jnp.sum(e, axis=0, keepdims=True))
    out_ref[...] = (z - m - lse).astype(out_ref.dtype)       # (128, tb)


# ---------------------------------------------------------------------------
# Host-side wrappers
# ---------------------------------------------------------------------------

def _smem_spec():
    return pl.BlockSpec(memory_space=pltpu.MemorySpace.SMEM)


@jax.jit
def convolutional_network_forward(x_nchw, kp):
    """log_softmax(LeNet(x)).  x_nchw: (B, 1, 28, 28) f32 -> (B, 10) f32."""
    B = x_nchw.shape[0]
    assert x_nchw.shape[1:] == (1, 28, 28), "ConvolutionalNetwork expects 1x28x28"
    n_tiles = -(-B // TB)
    b_pad = n_tiles * TB

    x = x_nchw.astype(jnp.float32)[:, 0]                     # (B, 28, 28)
    if b_pad != B:
        x = jnp.pad(x, ((0, b_pad - B), (0, 0), (0, 0)))
    # Tile-major, batch-in-lanes layout -> one contiguous ~400 KB DMA per step.
    x = x.reshape(n_tiles, TB, 28, 28).transpose(0, 2, 3, 1)  # (n_tiles,28,28,TB)

    weights = (kp["w1"], kp["b1"], kp["w2"], kp["b2"],
               kp["fc1w"], kp["fc1b"], kp["fc2w"], kp["fc2b"],
               kp["fc3w"], kp["fc3b"])

    in_specs = [pl.BlockSpec((None, 28, 28, TB), lambda i: (i, 0, 0, 0))]
    in_specs += [_smem_spec()] * 4                           # conv w/b as scalars
    in_specs += [
        pl.BlockSpec((128, 512), lambda i: (0, 0)),          # fc1wT
        pl.BlockSpec((128, 1), lambda i: (0, 0)),            # fc1b column
        pl.BlockSpec((128, 128), lambda i: (0, 0)),          # fc2wT
        pl.BlockSpec((128, 1), lambda i: (0, 0)),            # fc2b column
        pl.BlockSpec((128, 128), lambda i: (0, 0)),          # fc3wT
        pl.BlockSpec((128, 1), lambda i: (0, 0)),            # fc3b column (-1e30 pad)
    ]
    out_specs = pl.BlockSpec((None, 128, TB), lambda i: (i, 0, 0))

    flops = 2 * b_pad * (26 * 26 * 9 * 6 + 11 * 11 * 9 * 6 * 16
                         + 512 * 128 + 128 * 128 + 128 * 128)
    bytes_accessed = int(4 * (x.size + sum(int(w.size) for w in weights)
                              + b_pad * 128))
    cost = pl.CostEstimate(flops=flops, transcendentals=129 * b_pad,
                           bytes_accessed=bytes_accessed)

    # NOTE: the batch-tile axis is "parallel"; with B >= 2*TB (grid >= 2 steps)
    # both v7x TensorCores are used.  For tiny demo batches one tile suffices.
    out = pl.pallas_call(
        _lenet_kernel,
        out_shape=jax.ShapeDtypeStruct((n_tiles, 128, TB), jnp.float32),
        grid=(n_tiles,),
        in_specs=in_specs,
        out_specs=out_specs,
        scratch_shapes=[
            pltpu.VMEM((6, 13, 13, TB), jnp.float32),        # pooled conv1 maps
            pltpu.VMEM((16, 32, TB), jnp.float32),           # pooled conv2 maps
        ],
        compiler_params=pltpu.CompilerParams(
            dimension_semantics=("parallel",),
            vmem_limit_bytes=40 * 1024 * 1024),
        cost_estimate=cost,
    )(x, *weights)

    # (n_tiles, 128, TB) -> (b_pad, 128) -> (B, 10)
    return out.transpose(0, 2, 1).reshape(b_pad, 128)[:B, :10]


def prepare_params(params):
    """One-time re-layout of PyTorch-convention params into kernel layouts:
    flat scalar conv weights (SMEM), 32-row-aligned / 128-padded FC matrices."""
    f32 = jnp.float32
    # conv1 (6,1,3,3) -> flat [t*6 + co],  t = kh*3 + kw
    w1 = params["conv1_w"].astype(f32).reshape(6, 9).T.reshape(-1)            # (54,)
    b1 = params["conv1_b"].astype(f32)                                        # (6,)
    # conv2 (16,6,3,3) -> (kh,kw,ci,co) -> flat [(t*6+ci)*16 + co]
    w2 = jnp.transpose(params["conv2_w"].astype(f32), (2, 3, 1, 0)).reshape(-1)  # (864,)
    b2 = params["conv2_b"].astype(f32)                                        # (16,)
    # fc1 (400,120): torch feature f = c*25 + (h*5+w) -> kernel row c*32 + (h*5+w)
    w = params["fc1_w"].astype(f32).reshape(16, 25, 120)
    w = jnp.pad(w, ((0, 0), (0, 7), (0, 0))).reshape(512, 120)
    fc1w = jnp.zeros((128, 512), f32).at[:120, :].set(w.T)
    fc1b = jnp.zeros((128, 1), f32).at[:120, 0].set(params["fc1_b"].astype(f32))
    # fc2 (120,84)
    fc2w = jnp.zeros((128, 128), f32).at[:84, :120].set(params["fc2_w"].astype(f32).T)
    fc2b = jnp.zeros((128, 1), f32).at[:84, 0].set(params["fc2_b"].astype(f32))
    # fc3 (84,10): padded rows get zero weights and a -1e30 bias (load-bearing)
    fc3w = jnp.zeros((128, 128), f32).at[:10, :84].set(params["fc3_w"].astype(f32).T)
    fc3b = jnp.full((128, 1), NEG_BIG, f32).at[:10, 0].set(params["fc3_b"].astype(f32))
    return dict(w1=w1, b1=b1, w2=w2, b2=b2,
                fc1w=fc1w, fc1b=fc1b, fc2w=fc2w, fc2b=fc2b, fc3w=fc3w, fc3b=fc3b)


def init_params(key):
    ks = jax.random.split(key, 10)
    f = lambda k, shape, scale: scale * jax.random.normal(k, shape, jnp.float32)
    return {
        "conv1_w": f(ks[0], (6, 1, 3, 3), 0.3),     # torch (Cout, Cin, KH, KW)
        "conv1_b": f(ks[1], (6,), 0.1),
        "conv2_w": f(ks[2], (16, 6, 3, 3), 0.1),
        "conv2_b": f(ks[3], (16,), 0.1),
        "fc1_w":   f(ks[4], (400, 120), 0.05),      # stored (in, out); y = x @ W + b
        "fc1_b":   f(ks[5], (120,), 0.05),
        "fc2_w":   f(ks[6], (120, 84), 0.05),
        "fc2_b":   f(ks[7], (84,), 0.05),
        "fc3_w":   f(ks[8], (84, 10), 0.05),
        "fc3_b":   f(ks[9], (10,), 0.05),
    }


def _reference_forward(x_nchw, params):
    """Pure-JAX (XLA) reference with PyTorch semantics, for validation."""
    hp = lax.Precision.HIGHEST
    x = lax.conv_general_dilated(x_nchw, params["conv1_w"], (1, 1), "VALID",
                                 dimension_numbers=("NCHW", "OIHW", "NCHW"),
                                 precision=hp)
    x = jax.nn.relu(x + params["conv1_b"][None, :, None, None])
    x = lax.reduce_window(x, -jnp.inf, lax.max, (1, 1, 2, 2), (1, 1, 2, 2), "VALID")
    x = lax.conv_general_dilated(x, params["conv2_w"], (1, 1), "VALID",
                                 dimension_numbers=("NCHW", "OIHW", "NCHW"),
                                 precision=hp)
    x = jax.nn.relu(x + params["conv2_b"][None, :, None, None])
    x = lax.reduce_window(x, -jnp.inf, lax.max, (1, 1, 2, 2), (1, 1, 2, 2), "VALID")
    x = x.reshape(x.shape[0], -1)                               # NCHW flatten == view(-1, 400)
    x = jax.nn.relu(jnp.dot(x, params["fc1_w"], precision=hp) + params["fc1_b"])
    x = jax.nn.relu(jnp.dot(x, params["fc2_w"], precision=hp) + params["fc2_b"])
    x = jnp.dot(x, params["fc3_w"], precision=hp) + params["fc3_b"]
    return jax.nn.log_softmax(x, axis=-1)


if __name__ == "__main__":
    key = jax.random.PRNGKey(0)
    k_x, k_p = jax.random.split(key)
    # MNIST-shaped input (fc1 = 400 forces 1x28x28), small batch.
    x = jax.random.normal(k_x, (2, 1, 28, 28), jnp.float32)
    params = init_params(k_p)
    kparams = prepare_params(params)          # one-time layout prep, outside the hot path

    out = convolutional_network_forward(x, kparams)
    out = jax.block_until_ready(out)

    assert out.shape == (2, 10) and out.dtype == jnp.float32
    # log_softmax rows must (exp-)sum to ~1
    row_sums = jnp.exp(out).sum(axis=1)
    assert bool(jnp.all(jnp.abs(row_sums - 1.0) < 1e-4))

    # cross-check against a pure-JAX reference of the PyTorch forward
    ref = _reference_forward(x, params)
    assert bool(jnp.max(jnp.abs(out - ref)) < 1e-2), "mismatch vs pure-JAX reference"

    print("KERNEL_OK")
</pallas_src>

<mosaic_0001>
module attributes {stable_mosaic.version = 11 : i64} {
  func.func @_lenet_kernel(%arg0: i32, %arg1: memref<1x28x28x128xf32, #tpu.memory_space<vmem>>, %arg2: memref<54xf32, #tpu.memory_space<smem>>, %arg3: memref<6xf32, #tpu.memory_space<smem>>, %arg4: memref<864xf32, #tpu.memory_space<smem>>, %arg5: memref<16xf32, #tpu.memory_space<smem>>, %arg6: memref<128x512xf32, #tpu.memory_space<vmem>>, %arg7: memref<128x1xf32, #tpu.memory_space<vmem>>, %arg8: memref<128x128xf32, #tpu.memory_space<vmem>>, %arg9: memref<128x1xf32, #tpu.memory_space<vmem>>, %arg10: memref<128x128xf32, #tpu.memory_space<vmem>>, %arg11: memref<128x1xf32, #tpu.memory_space<vmem>>, %arg12: memref<1x128x128xf32, #tpu.memory_space<vmem>>, %arg13: memref<6x13x13x128xf32, #tpu.memory_space<vmem>>, %arg14: memref<16x32x128xf32, #tpu.memory_space<vmem>>) attributes {dimension_semantics = [#tpu.dimension_semantics<parallel>], iteration_bounds = array<i64: 1>, scalar_prefetch = 0 : i64, scratch_operands = 2 : i64, tpu.core_type = #tpu.core_type<tc>, window_params = [{transform_indices = @transform_0, window_bounds = array<i64: 1, 28, 28, 128>}, {transform_indices = @transform_1, window_bounds = array<i64: 54>}, {transform_indices = @transform_2, window_bounds = array<i64: 6>}, {transform_indices = @transform_3, window_bounds = array<i64: 864>}, {transform_indices = @transform_4, window_bounds = array<i64: 16>}, {pipeline_mode = #tpu.pipeline_mode<synchronous>, transform_indices = @transform_5, window_bounds = array<i64: 128, 512>}, {pipeline_mode = #tpu.pipeline_mode<synchronous>, transform_indices = @transform_6, window_bounds = array<i64: 128, 1>}, {pipeline_mode = #tpu.pipeline_mode<synchronous>, transform_indices = @transform_7, window_bounds = array<i64: 128, 128>}, {pipeline_mode = #tpu.pipeline_mode<synchronous>, transform_indices = @transform_8, window_bounds = array<i64: 128, 1>}, {pipeline_mode = #tpu.pipeline_mode<synchronous>, transform_indices = @transform_9, window_bounds = array<i64: 128, 128>}, {pipeline_mode = #tpu.pipeline_mode<synchronous>, transform_indices = @transform_10, window_bounds = array<i64: 128, 1>}, {transform_indices = @transform_11, window_bounds = array<i64: 1, 128, 128>}]} {
    %c0 = arith.constant 0 : index
    %c0_0 = arith.constant 0 : index
    %c0_1 = arith.constant 0 : index
    %c0_2 = arith.constant 0 : index
    %0 = vector.load %arg1[%c0, %c0_0, %c0_1, %c0_2] : memref<1x28x28x128xf32, #tpu.memory_space<vmem>>, vector<1x28x28x128xf32>
    %1 = vector.shape_cast %0 : vector<1x28x28x128xf32> to vector<28x28x128xf32>
    %2 = vector.extract_strided_slice %1 {offsets = [0, 0, 0], sizes = [26, 26, 128], strides = [1, 1, 1]} : vector<28x28x128xf32> to vector<26x26x128xf32>
    %3 = vector.extract_strided_slice %1 {offsets = [0, 1, 0], sizes = [26, 26, 128], strides = [1, 1, 1]} : vector<28x28x128xf32> to vector<26x26x128xf32>
    %4 = vector.extract_strided_slice %1 {offsets = [0, 2, 0], sizes = [26, 26, 128], strides = [1, 1, 1]} : vector<28x28x128xf32> to vector<26x26x128xf32>
    %5 = vector.extract_strided_slice %1 {offsets = [1, 0, 0], sizes = [26, 26, 128], strides = [1, 1, 1]} : vector<28x28x128xf32> to vector<26x26x128xf32>
    %6 = vector.extract_strided_slice %1 {offsets = [1, 1, 0], sizes = [26, 26, 128], strides = [1, 1, 1]} : vector<28x28x128xf32> to vector<26x26x128xf32>
    %7 = vector.extract_strided_slice %1 {offsets = [1, 2, 0], sizes = [26, 26, 128], strides = [1, 1, 1]} : vector<28x28x128xf32> to vector<26x26x128xf32>
    %8 = vector.extract_strided_slice %1 {offsets = [2, 0, 0], sizes = [26, 26, 128], strides = [1, 1, 1]} : vector<28x28x128xf32> to vector<26x26x128xf32>
    %9 = vector.extract_strided_slice %1 {offsets = [2, 1, 0], sizes = [26, 26, 128], strides = [1, 1, 1]} : vector<28x28x128xf32> to vector<26x26x128xf32>
    %10 = vector.extract_strided_slice %1 {offsets = [2, 2, 0], sizes = [26, 26, 128], strides = [1, 1, 1]} : vector<28x28x128xf32> to vector<26x26x128xf32>
    %c0_i32 = arith.constant 0 : i32
    %c6_i32 = arith.constant 6 : i32
    %11 = arith.addi %c0_i32, %c6_i32 : i32
    %c1_i32 = arith.constant 1 : i32
    scf.for %arg15 = %c0_i32 to %11 step %c1_i32  : i32 {
      %c1_i32_50 = arith.constant 1 : i32
      %115 = arith.muli %arg15, %c1_i32_50 : i32
      %c0_i32_51 = arith.constant 0 : i32
      %116 = arith.addi %c0_i32_51, %115 : i32
      %117 = arith.index_cast %116 : i32 to index
      %118 = memref.load %arg2[%117] : memref<54xf32, #tpu.memory_space<smem>>
      %119 = vector.broadcast %118 : f32 to vector<26x26x128xf32>
      %120 = arith.mulf %2, %119 : vector<26x26x128xf32>
      %c6_i32_52 = arith.constant 6 : i32
      %121 = arith.addi %c6_i32_52, %116 : i32
      %122 = arith.index_cast %121 : i32 to index
      %123 = memref.load %arg2[%122] : memref<54xf32, #tpu.memory_space<smem>>
      %124 = vector.broadcast %123 : f32 to vector<26x26x128xf32>
      %125 = arith.mulf %3, %124 : vector<26x26x128xf32>
      %126 = arith.addf %120, %125 : vector<26x26x128xf32>
      %c12_i32 = arith.constant 12 : i32
      %127 = arith.addi %c12_i32, %116 : i32
      %128 = arith.index_cast %127 : i32 to index
      %129 = memref.load %arg2[%128] : memref<54xf32, #tpu.memory_space<smem>>
      %130 = vector.broadcast %129 : f32 to vector<26x26x128xf32>
      %131 = arith.mulf %4, %130 : vector<26x26x128xf32>
      %132 = arith.addf %126, %131 : vector<26x26x128xf32>
      %c18_i32 = arith.constant 18 : i32
      %133 = arith.addi %c18_i32, %116 : i32
      %134 = arith.index_cast %133 : i32 to index
      %135 = memref.load %arg2[%134] : memref<54xf32, #tpu.memory_space<smem>>
      %136 = vector.broadcast %135 : f32 to vector<26x26x128xf32>
      %137 = arith.mulf %5, %136 : vector<26x26x128xf32>
      %138 = arith.addf %132, %137 : vector<26x26x128xf32>
      %c24_i32 = arith.constant 24 : i32
      %139 = arith.addi %c24_i32, %116 : i32
      %140 = arith.index_cast %139 : i32 to index
      %141 = memref.load %arg2[%140] : memref<54xf32, #tpu.memory_space<smem>>
      %142 = vector.broadcast %141 : f32 to vector<26x26x128xf32>
      %143 = arith.mulf %6, %142 : vector<26x26x128xf32>
      %144 = arith.addf %138, %143 : vector<26x26x128xf32>
      %c30_i32 = arith.constant 30 : i32
      %145 = arith.addi %c30_i32, %116 : i32
      %146 = arith.index_cast %145 : i32 to index
      %147 = memref.load %arg2[%146] : memref<54xf32, #tpu.memory_space<smem>>
      %148 = vector.broadcast %147 : f32 to vector<26x26x128xf32>
      %149 = arith.mulf %7, %148 : vector<26x26x128xf32>
      %150 = arith.addf %144, %149 : vector<26x26x128xf32>
      %c36_i32 = arith.constant 36 : i32
      %151 = arith.addi %c36_i32, %116 : i32
      %152 = arith.index_cast %151 : i32 to index
      %153 = memref.load %arg2[%152] : memref<54xf32, #tpu.memory_space<smem>>
      %154 = vector.broadcast %153 : f32 to vector<26x26x128xf32>
      %155 = arith.mulf %8, %154 : vector<26x26x128xf32>
      %156 = arith.addf %150, %155 : vector<26x26x128xf32>
      %c42_i32 = arith.constant 42 : i32
      %157 = arith.addi %c42_i32, %116 : i32
      %158 = arith.index_cast %157 : i32 to index
      %159 = memref.load %arg2[%158] : memref<54xf32, #tpu.memory_space<smem>>
      %160 = vector.broadcast %159 : f32 to vector<26x26x128xf32>
      %161 = arith.mulf %9, %160 : vector<26x26x128xf32>
      %162 = arith.addf %156, %161 : vector<26x26x128xf32>
      %c48_i32 = arith.constant 48 : i32
      %163 = arith.addi %c48_i32, %116 : i32
      %164 = arith.index_cast %163 : i32 to index
      %165 = memref.load %arg2[%164] : memref<54xf32, #tpu.memory_space<smem>>
      %166 = vector.broadcast %165 : f32 to vector<26x26x128xf32>
      %167 = arith.mulf %10, %166 : vector<26x26x128xf32>
      %168 = arith.addf %162, %167 : vector<26x26x128xf32>
      %169 = arith.index_cast %116 : i32 to index
      %170 = memref.load %arg3[%169] : memref<6xf32, #tpu.memory_space<smem>>
      %171 = vector.broadcast %170 : f32 to vector<26x26x128xf32>
      %172 = arith.addf %168, %171 : vector<26x26x128xf32>
      %cst_53 = arith.constant 0.000000e+00 : f32
      %173 = vector.broadcast %cst_53 : f32 to vector<26x26x128xf32>
      %174 = arith.maximumf %172, %173 : vector<26x26x128xf32>
      %175 = vector.shape_cast %174 : vector<26x26x128xf32> to vector<13x2x26x128xf32>
      %176 = vector.extract_strided_slice %175 {offsets = [0, 0, 0, 0], sizes = [13, 1, 26, 128], strides = [1, 1, 1, 1]} : vector<13x2x26x128xf32> to vector<13x1x26x128xf32>
      %177 = vector.shape_cast %176 : vector<13x1x26x128xf32> to vector<13x26x128xf32>
      %178 = vector.extract_strided_slice %175 {offsets = [0, 1, 0, 0], sizes = [13, 1, 26, 128], strides = [1, 1, 1, 1]} : vector<13x2x26x128xf32> to vector<13x1x26x128xf32>
      %179 = vector.shape_cast %178 : vector<13x1x26x128xf32> to vector<13x26x128xf32>
      %180 = arith.maximumf %177, %179 : vector<13x26x128xf32>
      %181 = vector.shape_cast %180 : vector<13x26x128xf32> to vector<13x13x2x128xf32>
      %182 = vector.extract_strided_slice %181 {offsets = [0, 0, 0, 0], sizes = [13, 13, 1, 128], strides = [1, 1, 1, 1]} : vector<13x13x2x128xf32> to vector<13x13x1x128xf32>
      %183 = vector.shape_cast %182 : vector<13x13x1x128xf32> to vector<13x13x128xf32>
      %184 = vector.extract_strided_slice %181 {offsets = [0, 0, 1, 0], sizes = [13, 13, 1, 128], strides = [1, 1, 1, 1]} : vector<13x13x2x128xf32> to vector<13x13x1x128xf32>
      %185 = vector.shape_cast %184 : vector<13x13x1x128xf32> to vector<13x13x128xf32>
      %186 = arith.maximumf %183, %185 : vector<13x13x128xf32>
      %187 = arith.index_cast %116 : i32 to index
      %c0_54 = arith.constant 0 : index
      %c0_55 = arith.constant 0 : index
      %c0_56 = arith.constant 0 : index
      %188 = vector.load %arg13[%187, %c0_54, %c0_55, %c0_56] : memref<6x13x13x128xf32, #tpu.memory_space<vmem>>, vector<1x13x13x128xf32>
      %189 = vector.shape_cast %188 : vector<1x13x13x128xf32> to vector<13x13x128xf32>
      %190 = vector.shape_cast %186 : vector<13x13x128xf32> to vector<1x13x13x128xf32>
      tpu.vector_store %arg13[%187, %c0_54, %c0_55, %c0_56], %190 {strides = array<i32>} : memref<6x13x13x128xf32, #tpu.memory_space<vmem>>, vector<1x13x13x128xf32>,
    }
    %c6_i32_3 = arith.constant 6 : i32
    %c0_4 = arith.constant 0 : index
    %c0_5 = arith.constant 0 : index
    %c0_6 = arith.constant 0 : index
    %c0_7 = arith.constant 0 : index
    %12 = vector.load %arg13[%c0_4, %c0_5, %c0_6, %c0_7] : memref<6x13x13x128xf32, #tpu.memory_space<vmem>>, vector<1x13x13x128xf32>
    %13 = vector.shape_cast %12 : vector<1x13x13x128xf32> to vector<13x13x128xf32>
    %c1 = arith.constant 1 : index
    %c0_8 = arith.constant 0 : index
    %c0_9 = arith.constant 0 : index
    %c0_10 = arith.constant 0 : index
    %14 = vector.load %arg13[%c1, %c0_8, %c0_9, %c0_10] : memref<6x13x13x128xf32, #tpu.memory_space<vmem>>, vector<1x13x13x128xf32>
    %15 = vector.shape_cast %14 : vector<1x13x13x128xf32> to vector<13x13x128xf32>
    %c2 = arith.constant 2 : index
    %c0_11 = arith.constant 0 : index
    %c0_12 = arith.constant 0 : index
    %c0_13 = arith.constant 0 : index
    %16 = vector.load %arg13[%c2, %c0_11, %c0_12, %c0_13] : memref<6x13x13x128xf32, #tpu.memory_space<vmem>>, vector<1x13x13x128xf32>
    %17 = vector.shape_cast %16 : vector<1x13x13x128xf32> to vector<13x13x128xf32>
    %c3 = arith.constant 3 : index
    %c0_14 = arith.constant 0 : index
    %c0_15 = arith.constant 0 : index
    %c0_16 = arith.constant 0 : index
    %18 = vector.load %arg13[%c3, %c0_14, %c0_15, %c0_16] : memref<6x13x13x128xf32, #tpu.memory_space<vmem>>, vector<1x13x13x128xf32>
    %19 = vector.shape_cast %18 : vector<1x13x13x128xf32> to vector<13x13x128xf32>
    %c4 = arith.constant 4 : index
    %c0_17 = arith.constant 0 : index
    %c0_18 = arith.constant 0 : index
    %c0_19 = arith.constant 0 : index
    %20 = vector.load %arg13[%c4, %c0_17, %c0_18, %c0_19] : memref<6x13x13x128xf32, #tpu.memory_space<vmem>>, vector<1x13x13x128xf32>
    %21 = vector.shape_cast %20 : vector<1x13x13x128xf32> to vector<13x13x128xf32>
    %c5 = arith.constant 5 : index
    %c0_20 = arith.constant 0 : index
    %c0_21 = arith.constant 0 : index
    %c0_22 = arith.constant 0 : index
    %22 = vector.load %arg13[%c5, %c0_20, %c0_21, %c0_22] : memref<6x13x13x128xf32, #tpu.memory_space<vmem>>, vector<1x13x13x128xf32>
    %23 = vector.shape_cast %22 : vector<1x13x13x128xf32> to vector<13x13x128xf32>
    %24 = vector.extract_strided_slice %13 {offsets = [0, 0, 0], sizes = [11, 11, 128], strides = [1, 1, 1]} : vector<13x13x128xf32> to vector<11x11x128xf32>
    %25 = vector.extract_strided_slice %15 {offsets = [0, 0, 0], sizes = [11, 11, 128], strides = [1, 1, 1]} : vector<13x13x128xf32> to vector<11x11x128xf32>
    %26 = vector.extract_strided_slice %17 {offsets = [0, 0, 0], sizes = [11, 11, 128], strides = [1, 1, 1]} : vector<13x13x128xf32> to vector<11x11x128xf32>
    %27 = vector.extract_strided_slice %19 {offsets = [0, 0, 0], sizes = [11, 11, 128], strides = [1, 1, 1]} : vector<13x13x128xf32> to vector<11x11x128xf32>
    %28 = vector.extract_strided_slice %21 {offsets = [0, 0, 0], sizes = [11, 11, 128], strides = [1, 1, 1]} : vector<13x13x128xf32> to vector<11x11x128xf32>
    %29 = vector.extract_strided_slice %23 {offsets = [0, 0, 0], sizes = [11, 11, 128], strides = [1, 1, 1]} : vector<13x13x128xf32> to vector<11x11x128xf32>
    %30 = vector.extract_strided_slice %13 {offsets = [0, 1, 0], sizes = [11, 11, 128], strides = [1, 1, 1]} : vector<13x13x128xf32> to vector<11x11x128xf32>
    %31 = vector.extract_strided_slice %15 {offsets = [0, 1, 0], sizes = [11, 11, 128], strides = [1, 1, 1]} : vector<13x13x128xf32> to vector<11x11x128xf32>
    %32 = vector.extract_strided_slice %17 {offsets = [0, 1, 0], sizes = [11, 11, 128], strides = [1, 1, 1]} : vector<13x13x128xf32> to vector<11x11x128xf32>
    %33 = vector.extract_strided_slice %19 {offsets = [0, 1, 0], sizes = [11, 11, 128], strides = [1, 1, 1]} : vector<13x13x128xf32> to vector<11x11x128xf32>
    %34 = vector.extract_strided_slice %21 {offsets = [0, 1, 0], sizes = [11, 11, 128], strides = [1, 1, 1]} : vector<13x13x128xf32> to vector<11x11x128xf32>
    %35 = vector.extract_strided_slice %23 {offsets = [0, 1, 0], sizes = [11, 11, 128], strides = [1, 1, 1]} : vector<13x13x128xf32> to vector<11x11x128xf32>
    %36 = vector.extract_strided_slice %13 {offsets = [0, 2, 0], sizes = [11, 11, 128], strides = [1, 1, 1]} : vector<13x13x128xf32> to vector<11x11x128xf32>
    %37 = vector.extract_strided_slice %15 {offsets = [0, 2, 0], sizes = [11, 11, 128], strides = [1, 1, 1]} : vector<13x13x128xf32> to vector<11x11x128xf32>
    %38 = vector.extract_strided_slice %17 {offsets = [0, 2, 0], sizes = [11, 11, 128], strides = [1, 1, 1]} : vector<13x13x128xf32> to vector<11x11x128xf32>
    %39 = vector.extract_strided_slice %19 {offsets = [0, 2, 0], sizes = [11, 11, 128], strides = [1, 1, 1]} : vector<13x13x128xf32> to vector<11x11x128xf32>
    %40 = vector.extract_strided_slice %21 {offsets = [0, 2, 0], sizes = [11, 11, 128], strides = [1, 1, 1]} : vector<13x13x128xf32> to vector<11x11x128xf32>
    %41 = vector.extract_strided_slice %23 {offsets = [0, 2, 0], sizes = [11, 11, 128], strides = [1, 1, 1]} : vector<13x13x128xf32> to vector<11x11x128xf32>
    %42 = vector.extract_strided_slice %13 {offsets = [1, 0, 0], sizes = [11, 11, 128], strides = [1, 1, 1]} : vector<13x13x128xf32> to vector<11x11x128xf32>
    %43 = vector.extract_strided_slice %15 {offsets = [1, 0, 0], sizes = [11, 11, 128], strides = [1, 1, 1]} : vector<13x13x128xf32> to vector<11x11x128xf32>
    %44 = vector.extract_strided_slice %17 {offsets = [1, 0, 0], sizes = [11, 11, 128], strides = [1, 1, 1]} : vector<13x13x128xf32> to vector<11x11x128xf32>
    %45 = vector.extract_strided_slice %19 {offsets = [1, 0, 0], sizes = [11, 11, 128], strides = [1, 1, 1]} : vector<13x13x128xf32> to vector<11x11x128xf32>
    %46 = vector.extract_strided_slice %21 {offsets = [1, 0, 0], sizes = [11, 11, 128], strides = [1, 1, 1]} : vector<13x13x128xf32> to vector<11x11x128xf32>
    %47 = vector.extract_strided_slice %23 {offsets = [1, 0, 0], sizes = [11, 11, 128], strides = [1, 1, 1]} : vector<13x13x128xf32> to vector<11x11x128xf32>
    %48 = vector.extract_strided_slice %13 {offsets = [1, 1, 0], sizes = [11, 11, 128], strides = [1, 1, 1]} : vector<13x13x128xf32> to vector<11x11x128xf32>
    %49 = vector.extract_strided_slice %15 {offsets = [1, 1, 0], sizes = [11, 11, 128], strides = [1, 1, 1]} : vector<13x13x128xf32> to vector<11x11x128xf32>
    %50 = vector.extract_strided_slice %17 {offsets = [1, 1, 0], sizes = [11, 11, 128], strides = [1, 1, 1]} : vector<13x13x128xf32> to vector<11x11x128xf32>
    %51 = vector.extract_strided_slice %19 {offsets = [1, 1, 0], sizes = [11, 11, 128], strides = [1, 1, 1]} : vector<13x13x128xf32> to vector<11x11x128xf32>
    %52 = vector.extract_strided_slice %21 {offsets = [1, 1, 0], sizes = [11, 11, 128], strides = [1, 1, 1]} : vector<13x13x128xf32> to vector<11x11x128xf32>
    %53 = vector.extract_strided_slice %23 {offsets = [1, 1, 0], sizes = [11, 11, 128], strides = [1, 1, 1]} : vector<13x13x128xf32> to vector<11x11x128xf32>
    %54 = vector.extract_strided_slice %13 {offsets = [1, 2, 0], sizes = [11, 11, 128], strides = [1, 1, 1]} : vector<13x13x128xf32> to vector<11x11x128xf32>
    %55 = vector.extract_strided_slice %15 {offsets = [1, 2, 0], sizes = [11, 11, 128], strides = [1, 1, 1]} : vector<13x13x128xf32> to vector<11x11x128xf32>
    %56 = vector.extract_strided_slice %17 {offsets = [1, 2, 0], sizes = [11, 11, 128], strides = [1, 1, 1]} : vector<13x13x128xf32> to vector<11x11x128xf32>
    %57 = vector.extract_strided_slice %19 {offsets = [1, 2, 0], sizes = [11, 11, 128], strides = [1, 1, 1]} : vector<13x13x128xf32> to vector<11x11x128xf32>
    %58 = vector.extract_strided_slice %21 {offsets = [1, 2, 0], sizes = [11, 11, 128], strides = [1, 1, 1]} : vector<13x13x128xf32> to vector<11x11x128xf32>
    %59 = vector.extract_strided_slice %23 {offsets = [1, 2, 0], sizes = [11, 11, 128], strides = [1, 1, 1]} : vector<13x13x128xf32> to vector<11x11x128xf32>
    %60 = vector.extract_strided_slice %13 {offsets = [2, 0, 0], sizes = [11, 11, 128], strides = [1, 1, 1]} : vector<13x13x128xf32> to vector<11x11x128xf32>
    %61 = vector.extract_strided_slice %15 {offsets = [2, 0, 0], sizes = [11, 11, 128], strides = [1, 1, 1]} : vector<13x13x128xf32> to vector<11x11x128xf32>
    %62 = vector.extract_strided_slice %17 {offsets = [2, 0, 0], sizes = [11, 11, 128], strides = [1, 1, 1]} : vector<13x13x128xf32> to vector<11x11x128xf32>
    %63 = vector.extract_strided_slice %19 {offsets = [2, 0, 0], sizes = [11, 11, 128], strides = [1, 1, 1]} : vector<13x13x128xf32> to vector<11x11x128xf32>
    %64 = vector.extract_strided_slice %21 {offsets = [2, 0, 0], sizes = [11, 11, 128], strides = [1, 1, 1]} : vector<13x13x128xf32> to vector<11x11x128xf32>
    %65 = vector.extract_strided_slice %23 {offsets = [2, 0, 0], sizes = [11, 11, 128], strides = [1, 1, 1]} : vector<13x13x128xf32> to vector<11x11x128xf32>
    %66 = vector.extract_strided_slice %13 {offsets = [2, 1, 0], sizes = [11, 11, 128], strides = [1, 1, 1]} : vector<13x13x128xf32> to vector<11x11x128xf32>
    %67 = vector.extract_strided_slice %15 {offsets = [2, 1, 0], sizes = [11, 11, 128], strides = [1, 1, 1]} : vector<13x13x128xf32> to vector<11x11x128xf32>
    %68 = vector.extract_strided_slice %17 {offsets = [2, 1, 0], sizes = [11, 11, 128], strides = [1, 1, 1]} : vector<13x13x128xf32> to vector<11x11x128xf32>
    %69 = vector.extract_strided_slice %19 {offsets = [2, 1, 0], sizes = [11, 11, 128], strides = [1, 1, 1]} : vector<13x13x128xf32> to vector<11x11x128xf32>
    %70 = vector.extract_strided_slice %21 {offsets = [2, 1, 0], sizes = [11, 11, 128], strides = [1, 1, 1]} : vector<13x13x128xf32> to vector<11x11x128xf32>
    %71 = vector.extract_strided_slice %23 {offsets = [2, 1, 0], sizes = [11, 11, 128], strides = [1, 1, 1]} : vector<13x13x128xf32> to vector<11x11x128xf32>
    %72 = vector.extract_strided_slice %13 {offsets = [2, 2, 0], sizes = [11, 11, 128], strides = [1, 1, 1]} : vector<13x13x128xf32> to vector<11x11x128xf32>
    %73 = vector.extract_strided_slice %15 {offsets = [2, 2, 0], sizes = [11, 11, 128], strides = [1, 1, 1]} : vector<13x13x128xf32> to vector<11x11x128xf32>
    %74 = vector.extract_strided_slice %17 {offsets = [2, 2, 0], sizes = [11, 11, 128], strides = [1, 1, 1]} : vector<13x13x128xf32> to vector<11x11x128xf32>
    %75 = vector.extract_strided_slice %19 {offsets = [2, 2, 0], sizes = [11, 11, 128], strides = [1, 1, 1]} : vector<13x13x128xf32> to vector<11x11x128xf32>
    %76 = vector.extract_strided_slice %21 {offsets = [2, 2, 0], sizes = [11, 11, 128], strides = [1, 1, 1]} : vector<13x13x128xf32> to vector<11x11x128xf32>
    %77 = vector.extract_strided_slice %23 {offsets = [2, 2, 0], sizes = [11, 11, 128], strides = [1, 1, 1]} : vector<13x13x128xf32> to vector<11x11x128xf32>
    %c0_i32_23 = arith.constant 0 : i32
    %c16_i32 = arith.constant 16 : i32
    %78 = arith.addi %c0_i32_23, %c16_i32 : i32
    %c1_i32_24 = arith.constant 1 : i32
    scf.for %arg15 = %c0_i32_23 to %78 step %c1_i32_24  : i32 {
      %c1_i32_50 = arith.constant 1 : i32
      %115 = arith.muli %arg15, %c1_i32_50 : i32
      %c0_i32_51 = arith.constant 0 : i32
      %116 = arith.addi %c0_i32_51, %115 : i32
      %117 = arith.index_cast %116 : i32 to index
      %118 = memref.load %arg4[%117] : memref<864xf32, #tpu.memory_space<smem>>
      %119 = vector.broadcast %118 : f32 to vector<11x11x128xf32>
      %120 = arith.mulf %24, %119 : vector<11x11x128xf32>
      %c16_i32_52 = arith.constant 16 : i32
      %121 = arith.addi %c16_i32_52, %116 : i32
      %122 = arith.index_cast %121 : i32 to index
      %123 = memref.load %arg4[%122] : memref<864xf32, #tpu.memory_space<smem>>
      %124 = vector.broadcast %123 : f32 to vector<11x11x128xf32>
      %125 = arith.mulf %25, %124 : vector<11x11x128xf32>
      %126 = arith.addf %120, %125 : vector<11x11x128xf32>
      %c32_i32 = arith.constant 32 : i32
      %127 = arith.addi %c32_i32, %116 : i32
      %128 = arith.index_cast %127 : i32 to index
      %129 = memref.load %arg4[%128] : memref<864xf32, #tpu.memory_space<smem>>
      %130 = vector.broadcast %129 : f32 to vector<11x11x128xf32>
      %131 = arith.mulf %26, %130 : vector<11x11x128xf32>
      %132 = arith.addf %126, %131 : vector<11x11x128xf32>
      %c48_i32 = arith.constant 48 : i32
      %133 = arith.addi %c48_i32, %116 : i32
      %134 = arith.index_cast %133 : i32 to index
      %135 = memref.load %arg4[%134] : memref<864xf32, #tpu.memory_space<smem>>
      %136 = vector.broadcast %135 : f32 to vector<11x11x128xf32>
      %137 = arith.mulf %27, %136 : vector<11x11x128xf32>
      %138 = arith.addf %132, %137 : vector<11x11x128xf32>
      %c64_i32 = arith.constant 64 : i32
      %139 = arith.addi %c64_i32, %116 : i32
      %140 = arith.index_cast %139 : i32 to index
      %141 = memref.load %arg4[%140] : memref<864xf32, #tpu.memory_space<smem>>
      %142 = vector.broadcast %141 : f32 to vector<11x11x128xf32>
      %143 = arith.mulf %28, %142 : vector<11x11x128xf32>
      %144 = arith.addf %138, %143 : vector<11x11x128xf32>
      %c80_i32 = arith.constant 80 : i32
      %145 = arith.addi %c80_i32, %116 : i32
      %146 = arith.index_cast %145 : i32 to index
      %147 = memref.load %arg4[%146] : memref<864xf32, #tpu.memory_space<smem>>
      %148 = vector.broadcast %147 : f32 to vector<11x11x128xf32>
      %149 = arith.mulf %29, %148 : vector<11x11x128xf32>
      %150 = arith.addf %144, %149 : vector<11x11x128xf32>
      %c96_i32 = arith.constant 96 : i32
      %151 = arith.addi %c96_i32, %116 : i32
      %152 = arith.index_cast %151 : i32 to index
      %153 = memref.load %arg4[%152] : memref<864xf32, #tpu.memory_space<smem>>
      %154 = vector.broadcast %153 : f32 to vector<11x11x128xf32>
      %155 = arith.mulf %30, %154 : vector<11x11x128xf32>
      %156 = arith.addf %150, %155 : vector<11x11x128xf32>
      %c112_i32 = arith.constant 112 : i32
      %157 = arith.addi %c112_i32, %116 : i32
      %158 = arith.index_cast %157 : i32 to index
      %159 = memref.load %arg4[%158] : memref<864xf32, #tpu.memory_space<smem>>
      %160 = vector.broadcast %159 : f32 to vector<11x11x128xf32>
      %161 = arith.mulf %31, %160 : vector<11x11x128xf32>
      %162 = arith.addf %156, %161 : vector<11x11x128xf32>
      %c128_i32 = arith.constant 128 : i32
      %163 = arith.addi %c128_i32, %116 : i32
      %164 = arith.index_cast %163 : i32 to index
      %165 = memref.load %arg4[%164] : memref<864xf32, #tpu.memory_space<smem>>
      %166 = vector.broadcast %165 : f32 to vector<11x11x128xf32>
      %167 = arith.mulf %32, %166 : vector<11x11x128xf32>
      %168 = arith.addf %162, %167 : vector<11x11x128xf32>
      %c144_i32 = arith.constant 144 : i32
      %169 = arith.addi %c144_i32, %116 : i32
      %170 = arith.index_cast %169 : i32 to index
      %171 = memref.load %arg4[%170] : memref<864xf32, #tpu.memory_space<smem>>
      %172 = vector.broadcast %171 : f32 to vector<11x11x128xf32>
      %173 = arith.mulf %33, %172 : vector<11x11x128xf32>
      %174 = arith.addf %168, %173 : vector<11x11x128xf32>
      %c160_i32 = arith.constant 160 : i32
      %175 = arith.addi %c160_i32, %116 : i32
      %176 = arith.index_cast %175 : i32 to index
      %177 = memref.load %arg4[%176] : memref<864xf32, #tpu.memory_space<smem>>
      %178 = vector.broadcast %177 : f32 to vector<11x11x128xf32>
      %179 = arith.mulf %34, %178 : vector<11x11x128xf32>
      %180 = arith.addf %174, %179 : vector<11x11x128xf32>
      %c176_i32 = arith.constant 176 : i32
      %181 = arith.addi %c176_i32, %116 : i32
      %182 = arith.index_cast %181 : i32 to index
      %183 = memref.load %arg4[%182] : memref<864xf32, #tpu.memory_space<smem>>
      %184 = vector.broadcast %183 : f32 to vector<11x11x128xf32>
      %185 = arith.mulf %35, %184 : vector<11x11x128xf32>
      %186 = arith.addf %180, %185 : vector<11x11x128xf32>
      %c192_i32 = arith.constant 192 : i32
      %187 = arith.addi %c192_i32, %116 : i32
      %188 = arith.index_cast %187 : i32 to index
      %189 = memref.load %arg4[%188] : memref<864xf32, #tpu.memory_space<smem>>
      %190 = vector.broadcast %189 : f32 to vector<11x11x128xf32>
      %191 = arith.mulf %36, %190 : vector<11x11x128xf32>
      %192 = arith.addf %186, %191 : vector<11x11x128xf32>
      %c208_i32 = arith.constant 208 : i32
      %193 = arith.addi %c208_i32, %116 : i32
      %194 = arith.index_cast %193 : i32 to index
      %195 = memref.load %arg4[%194] : memref<864xf32, #tpu.memory_space<smem>>
      %196 = vector.broadcast %195 : f32 to vector<11x11x128xf32>
      %197 = arith.mulf %37, %196 : vector<11x11x128xf32>
      %198 = arith.addf %192, %197 : vector<11x11x128xf32>
      %c224_i32 = arith.constant 224 : i32
      %199 = arith.addi %c224_i32, %116 : i32
      %200 = arith.index_cast %199 : i32 to index
      %201 = memref.load %arg4[%200] : memref<864xf32, #tpu.memory_space<smem>>
      %202 = vector.broadcast %201 : f32 to vector<11x11x128xf32>
      %203 = arith.mulf %38, %202 : vector<11x11x128xf32>
      %204 = arith.addf %198, %203 : vector<11x11x128xf32>
      %c240_i32 = arith.constant 240 : i32
      %205 = arith.addi %c240_i32, %116 : i32
      %206 = arith.index_cast %205 : i32 to index
      %207 = memref.load %arg4[%206] : memref<864xf32, #tpu.memory_space<smem>>
      %208 = vector.broadcast %207 : f32 to vector<11x11x128xf32>
      %209 = arith.mulf %39, %208 : vector<11x11x128xf32>
      %210 = arith.addf %204, %209 : vector<11x11x128xf32>
      %c256_i32 = arith.constant 256 : i32
      %211 = arith.addi %c256_i32, %116 : i32
      %212 = arith.index_cast %211 : i32 to index
      %213 = memref.load %arg4[%212] : memref<864xf32, #tpu.memory_space<smem>>
      %214 = vector.broadcast %213 : f32 to vector<11x11x128xf32>
      %215 = arith.mulf %40, %214 : vector<11x11x128xf32>
      %216 = arith.addf %210, %215 : vector<11x11x128xf32>
      %c272_i32 = arith.constant 272 : i32
      %217 = arith.addi %c272_i32, %116 : i32
      %218 = arith.index_cast %217 : i32 to index
      %219 = memref.load %arg4[%218] : memref<864xf32, #tpu.memory_space<smem>>
      %220 = vector.broadcast %219 : f32 to vector<11x11x128xf32>
      %221 = arith.mulf %41, %220 : vector<11x11x128xf32>
      %222 = arith.addf %216, %221 : vector<11x11x128xf32>
      %c288_i32 = arith.constant 288 : i32
      %223 = arith.addi %c288_i32, %116 : i32
      %224 = arith.index_cast %223 : i32 to index
      %225 = memref.load %arg4[%224] : memref<864xf32, #tpu.memory_space<smem>>
      %226 = vector.broadcast %225 : f32 to vector<11x11x128xf32>
      %227 = arith.mulf %42, %226 : vector<11x11x128xf32>
      %228 = arith.addf %222, %227 : vector<11x11x128xf32>
      %c304_i32 = arith.constant 304 : i32
      %229 = arith.addi %c304_i32, %116 : i32
      %230 = arith.index_cast %229 : i32 to index
      %231 = memref.load %arg4[%230] : memref<864xf32, #tpu.memory_space<smem>>
      %232 = vector.broadcast %231 : f32 to vector<11x11x128xf32>
      %233 = arith.mulf %43, %232 : vector<11x11x128xf32>
      %234 = arith.addf %228, %233 : vector<11x11x128xf32>
      %c320_i32 = arith.constant 320 : i32
      %235 = arith.addi %c320_i32, %116 : i32
      %236 = arith.index_cast %235 : i32 to index
      %237 = memref.load %arg4[%236] : memref<864xf32, #tpu.memory_space<smem>>
      %238 = vector.broadcast %237 : f32 to vector<11x11x128xf32>
      %239 = arith.mulf %44, %238 : vector<11x11x128xf32>
      %240 = arith.addf %234, %239 : vector<11x11x128xf32>
      %c336_i32 = arith.constant 336 : i32
      %241 = arith.addi %c336_i32, %116 : i32
      %242 = arith.index_cast %241 : i32 to index
      %243 = memref.load %arg4[%242] : memref<864xf32, #tpu.memory_space<smem>>
      %244 = vector.broadcast %243 : f32 to vector<11x11x128xf32>
      %245 = arith.mulf %45, %244 : vector<11x11x128xf32>
      %246 = arith.addf %240, %245 : vector<11x11x128xf32>
      %c352_i32 = arith.constant 352 : i32
      %247 = arith.addi %c352_i32, %116 : i32
      %248 = arith.index_cast %247 : i32 to index
      %249 = memref.load %arg4[%248] : memref<864xf32, #tpu.memory_space<smem>>
      %250 = vector.broadcast %249 : f32 to vector<11x11x128xf32>
      %251 = arith.mulf %46, %250 : vector<11x11x128xf32>
      %252 = arith.addf %246, %251 : vector<11x11x128xf32>
      %c368_i32 = arith.constant 368 : i32
      %253 = arith.addi %c368_i32, %116 : i32
      %254 = arith.index_cast %253 : i32 to index
      %255 = memref.load %arg4[%254] : memref<864xf32, #tpu.memory_space<smem>>
      %256 = vector.broadcast %255 : f32 to vector<11x11x128xf32>
      %257 = arith.mulf %47, %256 : vector<11x11x128xf32>
      %258 = arith.addf %252, %257 : vector<11x11x128xf32>
      %c384_i32 = arith.constant 384 : i32
      %259 = arith.addi %c384_i32, %116 : i32
      %260 = arith.index_cast %259 : i32 to index
      %261 = memref.load %arg4[%260] : memref<864xf32, #tpu.memory_space<smem>>
      %262 = vector.broadcast %261 : f32 to vector<11x11x128xf32>
      %263 = arith.mulf %48, %262 : vector<11x11x128xf32>
      %264 = arith.addf %258, %263 : vector<11x11x128xf32>
      %c400_i32 = arith.constant 400 : i32
      %265 = arith.addi %c400_i32, %116 : i32
      %266 = arith.index_cast %265 : i32 to index
      %267 = memref.load %arg4[%266] : memref<864xf32, #tpu.memory_space<smem>>
      %268 = vector.broadcast %267 : f32 to vector<11x11x128xf32>
      %269 = arith.mulf %49, %268 : vector<11x11x128xf32>
      %270 = arith.addf %264, %269 : vector<11x11x128xf32>
      %c416_i32 = arith.constant 416 : i32
      %271 = arith.addi %c416_i32, %116 : i32
      %272 = arith.index_cast %271 : i32 to index
      %273 = memref.load %arg4[%272] : memref<864xf32, #tpu.memory_space<smem>>
      %274 = vector.broadcast %273 : f32 to vector<11x11x128xf32>
      %275 = arith.mulf %50, %274 : vector<11x11x128xf32>
      %276 = arith.addf %270, %275 : vector<11x11x128xf32>
      %c432_i32 = arith.constant 432 : i32
      %277 = arith.addi %c432_i32, %116 : i32
      %278 = arith.index_cast %277 : i32 to index
      %279 = memref.load %arg4[%278] : memref<864xf32, #tpu.memory_space<smem>>
      %280 = vector.broadcast %279 : f32 to vector<11x11x128xf32>
      %281 = arith.mulf %51, %280 : vector<11x11x128xf32>
      %282 = arith.addf %276, %281 : vector<11x11x128xf32>
      %c448_i32 = arith.constant 448 : i32
      %283 = arith.addi %c448_i32, %116 : i32
      %284 = arith.index_cast %283 : i32 to index
      %285 = memref.load %arg4[%284] : memref<864xf32, #tpu.memory_space<smem>>
      %286 = vector.broadcast %285 : f32 to vector<11x11x128xf32>
      %287 = arith.mulf %52, %286 : vector<11x11x128xf32>
      %288 = arith.addf %282, %287 : vector<11x11x128xf32>
      %c464_i32 = arith.constant 464 : i32
      %289 = arith.addi %c464_i32, %116 : i32
      %290 = arith.index_cast %289 : i32 to index
      %291 = memref.load %arg4[%290] : memref<864xf32, #tpu.memory_space<smem>>
      %292 = vector.broadcast %291 : f32 to vector<11x11x128xf32>
      %293 = arith.mulf %53, %292 : vector<11x11x128xf32>
      %294 = arith.addf %288, %293 : vector<11x11x128xf32>
      %c480_i32 = arith.constant 480 : i32
      %295 = arith.addi %c480_i32, %116 : i32
      %296 = arith.index_cast %295 : i32 to index
      %297 = memref.load %arg4[%296] : memref<864xf32, #tpu.memory_space<smem>>
      %298 = vector.broadcast %297 : f32 to vector<11x11x128xf32>
      %299 = arith.mulf %54, %298 : vector<11x11x128xf32>
      %300 = arith.addf %294, %299 : vector<11x11x128xf32>
      %c496_i32 = arith.constant 496 : i32
      %301 = arith.addi %c496_i32, %116 : i32
      %302 = arith.index_cast %301 : i32 to index
      %303 = memref.load %arg4[%302] : memref<864xf32, #tpu.memory_space<smem>>
      %304 = vector.broadcast %303 : f32 to vector<11x11x128xf32>
      %305 = arith.mulf %55, %304 : vector<11x11x128xf32>
      %306 = arith.addf %300, %305 : vector<11x11x128xf32>
      %c512_i32 = arith.constant 512 : i32
      %307 = arith.addi %c512_i32, %116 : i32
      %308 = arith.index_cast %307 : i32 to index
      %309 = memref.load %arg4[%308] : memref<864xf32, #tpu.memory_space<smem>>
      %310 = vector.broadcast %309 : f32 to vector<11x11x128xf32>
      %311 = arith.mulf %56, %310 : vector<11x11x128xf32>
      %312 = arith.addf %306, %311 : vector<11x11x128xf32>
      %c528_i32 = arith.constant 528 : i32
      %313 = arith.addi %c528_i32, %116 : i32
      %314 = arith.index_cast %313 : i32 to index
      %315 = memref.load %arg4[%314] : memref<864xf32, #tpu.memory_space<smem>>
      %316 = vector.broadcast %315 : f32 to vector<11x11x128xf32>
      %317 = arith.mulf %57, %316 : vector<11x11x128xf32>
      %318 = arith.addf %312, %317 : vector<11x11x128xf32>
      %c544_i32 = arith.constant 544 : i32
      %319 = arith.addi %c544_i32, %116 : i32
      %320 = arith.index_cast %319 : i32 to index
      %321 = memref.load %arg4[%320] : memref<864xf32, #tpu.memory_space<smem>>
      %322 = vector.broadcast %321 : f32 to vector<11x11x128xf32>
      %323 = arith.mulf %58, %322 : vector<11x11x128xf32>
      %324 = arith.addf %318, %323 : vector<11x11x128xf32>
      %c560_i32 = arith.constant 560 : i32
      %325 = arith.addi %c560_i32, %116 : i32
      %326 = arith.index_cast %325 : i32 to index
      %327 = memref.load %arg4[%326] : memref<864xf32, #tpu.memory_space<smem>>
      %328 = vector.broadcast %327 : f32 to vector<11x11x128xf32>
      %329 = arith.mulf %59, %328 : vector<11x11x128xf32>
      %330 = arith.addf %324, %329 : vector<11x11x128xf32>
      %c576_i32 = arith.constant 576 : i32
      %331 = arith.addi %c576_i32, %116 : i32
      %332 = arith.index_cast %331 : i32 to index
      %333 = memref.load %arg4[%332] : memref<864xf32, #tpu.memory_space<smem>>
      %334 = vector.broadcast %333 : f32 to vector<11x11x128xf32>
      %335 = arith.mulf %60, %334 : vector<11x11x128xf32>
      %336 = arith.addf %330, %335 : vector<11x11x128xf32>
      %c592_i32 = arith.constant 592 : i32
      %337 = arith.addi %c592_i32, %116 : i32
      %338 = arith.index_cast %337 : i32 to index
      %339 = memref.load %arg4[%338] : memref<864xf32, #tpu.memory_space<smem>>
      %340 = vector.broadcast %339 : f32 to vector<11x11x128xf32>
      %341 = arith.mulf %61, %340 : vector<11x11x128xf32>
      %342 = arith.addf %336, %341 : vector<11x11x128xf32>
      %c608_i32 = arith.constant 608 : i32
      %343 = arith.addi %c608_i32, %116 : i32
      %344 = arith.index_cast %343 : i32 to index
      %345 = memref.load %arg4[%344] : memref<864xf32, #tpu.memory_space<smem>>
      %346 = vector.broadcast %345 : f32 to vector<11x11x128xf32>
      %347 = arith.mulf %62, %346 : vector<11x11x128xf32>
      %348 = arith.addf %342, %347 : vector<11x11x128xf32>
      %c624_i32 = arith.constant 624 : i32
      %349 = arith.addi %c624_i32, %116 : i32
      %350 = arith.index_cast %349 : i32 to index
      %351 = memref.load %arg4[%350] : memref<864xf32, #tpu.memory_space<smem>>
      %352 = vector.broadcast %351 : f32 to vector<11x11x128xf32>
      %353 = arith.mulf %63, %352 : vector<11x11x128xf32>
      %354 = arith.addf %348, %353 : vector<11x11x128xf32>
      %c640_i32 = arith.constant 640 : i32
      %355 = arith.addi %c640_i32, %116 : i32
      %356 = arith.index_cast %355 : i32 to index
      %357 = memref.load %arg4[%356] : memref<864xf32, #tpu.memory_space<smem>>
      %358 = vector.broadcast %357 : f32 to vector<11x11x128xf32>
      %359 = arith.mulf %64, %358 : vector<11x11x128xf32>
      %360 = arith.addf %354, %359 : vector<11x11x128xf32>
      %c656_i32 = arith.constant 656 : i32
      %361 = arith.addi %c656_i32, %116 : i32
      %362 = arith.index_cast %361 : i32 to index
      %363 = memref.load %arg4[%362] : memref<864xf32, #tpu.memory_space<smem>>
      %364 = vector.broadcast %363 : f32 to vector<11x11x128xf32>
      %365 = arith.mulf %65, %364 : vector<11x11x128xf32>
      %366 = arith.addf %360, %365 : vector<11x11x128xf32>
      %c672_i32 = arith.constant 672 : i32
      %367 = arith.addi %c672_i32, %116 : i32
      %368 = arith.index_cast %367 : i32 to index
      %369 = memref.load %arg4[%368] : memref<864xf32, #tpu.memory_space<smem>>
      %370 = vector.broadcast %369 : f32 to vector<11x11x128xf32>
      %371 = arith.mulf %66, %370 : vector<11x11x128xf32>
      %372 = arith.addf %366, %371 : vector<11x11x128xf32>
      %c688_i32 = arith.constant 688 : i32
      %373 = arith.addi %c688_i32, %116 : i32
      %374 = arith.index_cast %373 : i32 to index
      %375 = memref.load %arg4[%374] : memref<864xf32, #tpu.memory_space<smem>>
      %376 = vector.broadcast %375 : f32 to vector<11x11x128xf32>
      %377 = arith.mulf %67, %376 : vector<11x11x128xf32>
      %378 = arith.addf %372, %377 : vector<11x11x128xf32>
      %c704_i32 = arith.constant 704 : i32
      %379 = arith.addi %c704_i32, %116 : i32
      %380 = arith.index_cast %379 : i32 to index
      %381 = memref.load %arg4[%380] : memref<864xf32, #tpu.memory_space<smem>>
      %382 = vector.broadcast %381 : f32 to vector<11x11x128xf32>
      %383 = arith.mulf %68, %382 : vector<11x11x128xf32>
      %384 = arith.addf %378, %383 : vector<11x11x128xf32>
      %c720_i32 = arith.constant 720 : i32
      %385 = arith.addi %c720_i32, %116 : i32
      %386 = arith.index_cast %385 : i32 to index
      %387 = memref.load %arg4[%386] : memref<864xf32, #tpu.memory_space<smem>>
      %388 = vector.broadcast %387 : f32 to vector<11x11x128xf32>
      %389 = arith.mulf %69, %388 : vector<11x11x128xf32>
      %390 = arith.addf %384, %389 : vector<11x11x128xf32>
      %c736_i32 = arith.constant 736 : i32
      %391 = arith.addi %c736_i32, %116 : i32
      %392 = arith.index_cast %391 : i32 to index
      %393 = memref.load %arg4[%392] : memref<864xf32, #tpu.memory_space<smem>>
      %394 = vector.broadcast %393 : f32 to vector<11x11x128xf32>
      %395 = arith.mulf %70, %394 : vector<11x11x128xf32>
      %396 = arith.addf %390, %395 : vector<11x11x128xf32>
      %c752_i32 = arith.constant 752 : i32
      %397 = arith.addi %c752_i32, %116 : i32
      %398 = arith.index_cast %397 : i32 to index
      %399 = memref.load %arg4[%398] : memref<864xf32, #tpu.memory_space<smem>>
      %400 = vector.broadcast %399 : f32 to vector<11x11x128xf32>
      %401 = arith.mulf %71, %400 : vector<11x11x128xf32>
      %402 = arith.addf %396, %401 : vector<11x11x128xf32>
      %c768_i32 = arith.constant 768 : i32
      %403 = arith.addi %c768_i32, %116 : i32
      %404 = arith.index_cast %403 : i32 to index
      %405 = memref.load %arg4[%404] : memref<864xf32, #tpu.memory_space<smem>>
      %406 = vector.broadcast %405 : f32 to vector<11x11x128xf32>
      %407 = arith.mulf %72, %406 : vector<11x11x128xf32>
      %408 = arith.addf %402, %407 : vector<11x11x128xf32>
      %c784_i32 = arith.constant 784 : i32
      %409 = arith.addi %c784_i32, %116 : i32
      %410 = arith.index_cast %409 : i32 to index
      %411 = memref.load %arg4[%410] : memref<864xf32, #tpu.memory_space<smem>>
      %412 = vector.broadcast %411 : f32 to vector<11x11x128xf32>
      %413 = arith.mulf %73, %412 : vector<11x11x128xf32>
      %414 = arith.addf %408, %413 : vector<11x11x128xf32>
      %c800_i32 = arith.constant 800 : i32
      %415 = arith.addi %c800_i32, %116 : i32
      %416 = arith.index_cast %415 : i32 to index
      %417 = memref.load %arg4[%416] : memref<864xf32, #tpu.memory_space<smem>>
      %418 = vector.broadcast %417 : f32 to vector<11x11x128xf32>
      %419 = arith.mulf %74, %418 : vector<11x11x128xf32>
      %420 = arith.addf %414, %419 : vector<11x11x128xf32>
      %c816_i32 = arith.constant 816 : i32
      %421 = arith.addi %c816_i32, %116 : i32
      %422 = arith.index_cast %421 : i32 to index
      %423 = memref.load %arg4[%422] : memref<864xf32, #tpu.memory_space<smem>>
      %424 = vector.broadcast %423 : f32 to vector<11x11x128xf32>
      %425 = arith.mulf %75, %424 : vector<11x11x128xf32>
      %426 = arith.addf %420, %425 : vector<11x11x128xf32>
      %c832_i32 = arith.constant 832 : i32
      %427 = arith.addi %c832_i32, %116 : i32
      %428 = arith.index_cast %427 : i32 to index
      %429 = memref.load %arg4[%428] : memref<864xf32, #tpu.memory_space<smem>>
      %430 = vector.broadcast %429 : f32 to vector<11x11x128xf32>
      %431 = arith.mulf %76, %430 : vector<11x11x128xf32>
      %432 = arith.addf %426, %431 : vector<11x11x128xf32>
      %c848_i32 = arith.constant 848 : i32
      %433 = arith.addi %c848_i32, %116 : i32
      %434 = arith.index_cast %433 : i32 to index
      %435 = memref.load %arg4[%434] : memref<864xf32, #tpu.memory_space<smem>>
      %436 = vector.broadcast %435 : f32 to vector<11x11x128xf32>
      %437 = arith.mulf %77, %436 : vector<11x11x128xf32>
      %438 = arith.addf %432, %437 : vector<11x11x128xf32>
      %439 = arith.index_cast %116 : i32 to index
      %440 = memref.load %arg5[%439] : memref<16xf32, #tpu.memory_space<smem>>
      %441 = vector.broadcast %440 : f32 to vector<11x11x128xf32>
      %442 = arith.addf %438, %441 : vector<11x11x128xf32>
      %cst_53 = arith.constant 0.000000e+00 : f32
      %443 = vector.broadcast %cst_53 : f32 to vector<11x11x128xf32>
      %444 = arith.maximumf %442, %443 : vector<11x11x128xf32>
      %445 = vector.extract_strided_slice %444 {offsets = [0, 0, 0], sizes = [10, 10, 128], strides = [1, 1, 1]} : vector<11x11x128xf32> to vector<10x10x128xf32>
      %446 = vector.shape_cast %445 : vector<10x10x128xf32> to vector<5x2x10x128xf32>
      %447 = vector.extract_strided_slice %446 {offsets = [0, 0, 0, 0], sizes = [5, 1, 10, 128], strides = [1, 1, 1, 1]} : vector<5x2x10x128xf32> to vector<5x1x10x128xf32>
      %448 = vector.shape_cast %447 : vector<5x1x10x128xf32> to vector<5x10x128xf32>
      %449 = vector.extract_strided_slice %446 {offsets = [0, 1, 0, 0], sizes = [5, 1, 10, 128], strides = [1, 1, 1, 1]} : vector<5x2x10x128xf32> to vector<5x1x10x128xf32>
      %450 = vector.shape_cast %449 : vector<5x1x10x128xf32> to vector<5x10x128xf32>
      %451 = arith.maximumf %448, %450 : vector<5x10x128xf32>
      %452 = vector.shape_cast %451 : vector<5x10x128xf32> to vector<5x5x2x128xf32>
      %453 = vector.extract_strided_slice %452 {offsets = [0, 0, 0, 0], sizes = [5, 5, 1, 128], strides = [1, 1, 1, 1]} : vector<5x5x2x128xf32> to vector<5x5x1x128xf32>
      %454 = vector.shape_cast %453 : vector<5x5x1x128xf32> to vector<5x5x128xf32>
      %455 = vector.extract_strided_slice %452 {offsets = [0, 0, 1, 0], sizes = [5, 5, 1, 128], strides = [1, 1, 1, 1]} : vector<5x5x2x128xf32> to vector<5x5x1x128xf32>
      %456 = vector.shape_cast %455 : vector<5x5x1x128xf32> to vector<5x5x128xf32>
      %457 = arith.maximumf %454, %456 : vector<5x5x128xf32>
      %458 = vector.shape_cast %457 : vector<5x5x128xf32> to vector<25x128xf32>
      %cst_54 = arith.constant 0.000000e+00 : f32
      %459 = vector.broadcast %cst_54 : f32 to vector<7x128xf32>
      %460 = tpu.concatenate %458, %459 in 0 : vector<25x128xf32>, vector<7x128xf32> -> vector<32x128xf32>
      %461 = arith.index_cast %116 : i32 to index
      %c0_55 = arith.constant 0 : index
      %c0_56 = arith.constant 0 : index
      %462 = vector.load %arg14[%461, %c0_55, %c0_56] : memref<16x32x128xf32, #tpu.memory_space<vmem>>, vector<1x32x128xf32>
      %463 = vector.shape_cast %462 : vector<1x32x128xf32> to vector<32x128xf32>
      %464 = vector.shape_cast %460 : vector<32x128xf32> to vector<1x32x128xf32>
      tpu.vector_store %arg14[%461, %c0_55, %c0_56], %464 {strides = array<i32>} : memref<16x32x128xf32, #tpu.memory_space<vmem>>, vector<1x32x128xf32>,
    }
    %c16_i32_25 = arith.constant 16 : i32
    %c0_26 = arith.constant 0 : index
    %c0_27 = arith.constant 0 : index
    %c0_28 = arith.constant 0 : index
    %79 = vector.load %arg14[%c0_26, %c0_27, %c0_28] : memref<16x32x128xf32, #tpu.memory_space<vmem>>, vector<16x32x128xf32>
    %80 = vector.shape_cast %79 : vector<16x32x128xf32> to vector<512x128xf32>
    %c0_29 = arith.constant 0 : index
    %c0_30 = arith.constant 0 : index
    %81 = vector.load %arg6[%c0_29, %c0_30] : memref<128x512xf32, #tpu.memory_space<vmem>>, vector<128x512xf32>
    %cst = arith.constant dense<0.000000e+00> : vector<128x128xf32>
    %82 = tpu.matmul %81, %80, %cst {dimension_numbers = #tpu.dot_dimension_numbers<[1], [0], [0], [1], [0, 0, 1, 1], [], []>} : vector<128x512xf32>, vector<512x128xf32>, vector<128x128xf32> -> vector<128x128xf32>
    %c0_31 = arith.constant 0 : index
    %c0_32 = arith.constant 0 : index
    %83 = vector.load %arg7[%c0_31, %c0_32] : memref<128x1xf32, #tpu.memory_space<vmem>>, vector<128x1xf32>
    %84 = vector.broadcast %83 : vector<128x1xf32> to vector<128x128xf32>
    %85 = arith.addf %82, %84 : vector<128x128xf32>
    %cst_33 = arith.constant 0.000000e+00 : f32
    %86 = vector.broadcast %cst_33 : f32 to vector<128x128xf32>
    %87 = arith.maximumf %85, %86 : vector<128x128xf32>
    %c0_34 = arith.constant 0 : index
    %c0_35 = arith.constant 0 : index
    %88 = vector.load %arg8[%c0_34, %c0_35] : memref<128x128xf32, #tpu.memory_space<vmem>>, vector<128x128xf32>
    %cst_36 = arith.constant dense<0.000000e+00> : vector<128x128xf32>
    %89 = tpu.matmul %88, %87, %cst_36 {dimension_numbers = #tpu.dot_dimension_numbers<[1], [0], [0], [1], [0, 0, 1, 1], [], []>} : vector<128x128xf32>, vector<128x128xf32>, vector<128x128xf32> -> vector<128x128xf32>
    %c0_37 = arith.constant 0 : index
    %c0_38 = arith.constant 0 : index
    %90 = vector.load %arg9[%c0_37, %c0_38] : memref<128x1xf32, #tpu.memory_space<vmem>>, vector<128x1xf32>
    %91 = vector.broadcast %90 : vector<128x1xf32> to vector<128x128xf32>
    %92 = arith.addf %89, %91 : vector<128x128xf32>
    %cst_39 = arith.constant 0.000000e+00 : f32
    %93 = vector.broadcast %cst_39 : f32 to vector<128x128xf32>
    %94 = arith.maximumf %92, %93 : vector<128x128xf32>
    %c0_40 = arith.constant 0 : index
    %c0_41 = arith.constant 0 : index
    %95 = vector.load %arg10[%c0_40, %c0_41] : memref<128x128xf32, #tpu.memory_space<vmem>>, vector<128x128xf32>
    %cst_42 = arith.constant dense<0.000000e+00> : vector<128x128xf32>
    %96 = tpu.matmul %95, %94, %cst_42 {dimension_numbers = #tpu.dot_dimension_numbers<[1], [0], [0], [1], [0, 0, 1, 1], [], []>} : vector<128x128xf32>, vector<128x128xf32>, vector<128x128xf32> -> vector<128x128xf32>
    %c0_43 = arith.constant 0 : index
    %c0_44 = arith.constant 0 : index
    %97 = vector.load %arg11[%c0_43, %c0_44] : memref<128x1xf32, #tpu.memory_space<vmem>>, vector<128x1xf32>
    %98 = vector.broadcast %97 : vector<128x1xf32> to vector<128x128xf32>
    %99 = arith.addf %96, %98 : vector<128x128xf32>
    %cst_45 = arith.constant dense<0xFF800000> : vector<128xf32>
    %100 = vector.multi_reduction <maximumf>, %99, %cst_45 [0] : vector<128x128xf32> to vector<128xf32>
    %101 = vector.shape_cast %100 : vector<128xf32> to vector<1x128xf32>
    %102 = vector.broadcast %101 : vector<1x128xf32> to vector<128x128xf32>
    %103 = arith.subf %99, %102 : vector<128x128xf32>
    %104 = math.exp %103 : vector<128x128xf32>
    %cst_46 = arith.constant dense<0.000000e+00> : vector<128xf32>
    %105 = vector.multi_reduction <add>, %104, %cst_46 [0] : vector<128x128xf32> to vector<128xf32>
    %106 = vector.shape_cast %105 : vector<128xf32> to vector<1x128xf32>
    %107 = math.log %106 : vector<1x128xf32>
    %108 = vector.broadcast %101 : vector<1x128xf32> to vector<128x128xf32>
    %109 = arith.subf %99, %108 : vector<128x128xf32>
    %110 = vector.broadcast %107 : vector<1x128xf32> to vector<128x128xf32>
    %111 = arith.subf %109, %110 : vector<128x128xf32>
    %c0_47 = arith.constant 0 : index
    %c0_48 = arith.constant 0 : index
    %c0_49 = arith.constant 0 : index
    %112 = vector.load %arg12[%c0_47, %c0_48, %c0_49] : memref<1x128x128xf32, #tpu.memory_space<vmem>>, vector<1x128x128xf32>
    %113 = vector.shape_cast %112 : vector<1x128x128xf32> to vector<128x128xf32>
    %114 = vector.shape_cast %111 : vector<128x128xf32> to vector<1x128x128xf32>
    tpu.vector_store %arg12[%c0_47, %c0_48, %c0_49], %114 {strides = array<i32>} : memref<1x128x128xf32, #tpu.memory_space<vmem>>, vector<1x128x128xf32>,
    return
  }
  func.func @transform_0(%arg0: i32) -> (i32, i32, i32, i32) {
    %c0_i32 = arith.constant 0 : i32
    %c0_i32_0 = arith.constant 0 : i32
    %c0_i32_1 = arith.constant 0 : i32
    %c0_i32_2 = arith.constant 0 : i32
    return %arg0, %c0_i32, %c0_i32_0, %c0_i32_1 : i32, i32, i32, i32
  }
  func.func @transform_1(%arg0: i32) -> i32 {
    %c0_i32 = arith.constant 0 : i32
    %c0_i32_0 = arith.constant 0 : i32
    return %c0_i32 : i32
  }
  func.func @transform_2(%arg0: i32) -> i32 {
    %c0_i32 = arith.constant 0 : i32
    %c0_i32_0 = arith.constant 0 : i32
    return %c0_i32 : i32
  }
  func.func @transform_3(%arg0: i32) -> i32 {
    %c0_i32 = arith.constant 0 : i32
    %c0_i32_0 = arith.constant 0 : i32
    return %c0_i32 : i32
  }
  func.func @transform_4(%arg0: i32) -> i32 {
    %c0_i32 = arith.constant 0 : i32
    %c0_i32_0 = arith.constant 0 : i32
    return %c0_i32 : i32
  }
  func.func @transform_5(%arg0: i32) -> (i32, i32) {
    %c0_i32 = arith.constant 0 : i32
    %c0_i32_0 = arith.constant 0 : i32
    %c0_i32_1 = arith.constant 0 : i32
    return %c0_i32, %c0_i32_0 : i32, i32
  }
  func.func @transform_6(%arg0: i32) -> (i32, i32) {
    %c0_i32 = arith.constant 0 : i32
    %c0_i32_0 = arith.constant 0 : i32
    %c0_i32_1 = arith.constant 0 : i32
    return %c0_i32, %c0_i32_0 : i32, i32
  }
  func.func @transform_7(%arg0: i32) -> (i32, i32) {
    %c0_i32 = arith.constant 0 : i32
    %c0_i32_0 = arith.constant 0 : i32
    %c0_i32_1 = arith.constant 0 : i32
    return %c0_i32, %c0_i32_0 : i32, i32
  }
  func.func @transform_8(%arg0: i32) -> (i32, i32) {
    %c0_i32 = arith.constant 0 : i32
    %c0_i32_0 = arith.constant 0 : i32
    %c0_i32_1 = arith.constant 0 : i32
    return %c0_i32, %c0_i32_0 : i32, i32
  }
  func.func @transform_9(%arg0: i32) -> (i32, i32) {
    %c0_i32 = arith.constant 0 : i32
    %c0_i32_0 = arith.constant 0 : i32
    %c0_i32_1 = arith.constant 0 : i32
    return %c0_i32, %c0_i32_0 : i32, i32
  }
  func.func @transform_10(%arg0: i32) -> (i32, i32) {
    %c0_i32 = arith.constant 0 : i32
    %c0_i32_0 = arith.constant 0 : i32
    %c0_i32_1 = arith.constant 0 : i32
    return %c0_i32, %c0_i32_0 : i32, i32
  }
  func.func @transform_11(%arg0: i32) -> (i32, i32, i32) {
    %c0_i32 = arith.constant 0 : i32
    %c0_i32_0 = arith.constant 0 : i32
    %c0_i32_1 = arith.constant 0 : i32
    return %arg0, %c0_i32, %c0_i32_0 : i32, i32, i32
  }
}

</mosaic_0001>

<llo_original>
// kernel: convolutional_network_forward.1
$region0: #{convolutional_network_forward.1}
  #allocation0 [shape = 'u32[]', space=smem, size = 0x4, offset = 0x4, fixed_abs, tag = 'smem constant byte address 0x4 - core index']
  #allocation1 [shape = 'u32[144,128]{1,0:T(1,128)}', space=vmem, size = 0x12000, scoped, tag = 'internal scratch']
  #allocation2 [shape = 'f32[6,13,13,128]{3,2,1,0:T(8,128)}', space=vmem, size = 0x9c000, scoped, tag = 'scratch operand']
  #allocation3 [shape = 'f32[16,32,128]{2,1,0:T(8,128)}', space=vmem, size = 0x40000, scoped, tag = 'scratch operand']
  %s0 = inlined_call_operand.vmem [shape: f32[1,28,28,128], index: 0, kind: input, shape index: {}]
  %s1 = inlined_call_operand.vmem [shape: f32[54], index: 1, kind: input, shape index: {}]
  %s2 = inlined_call_operand.vmem [shape: f32[6], index: 2, kind: input, shape index: {}]
  %s3 = inlined_call_operand.vmem [shape: f32[864], index: 3, kind: input, shape index: {}]
  %s4 = inlined_call_operand.vmem [shape: f32[16], index: 4, kind: input, shape index: {}]
  %s5 = inlined_call_operand.vmem [shape: f32[128,512], index: 5, kind: input, shape index: {}]
  %s6 = inlined_call_operand.vmem [shape: f32[128,1], index: 6, kind: input, shape index: {}]
  %s7 = inlined_call_operand.vmem [shape: f32[128,128], index: 7, kind: input, shape index: {}]
  %s8 = inlined_call_operand.vmem [shape: f32[128,1], index: 8, kind: input, shape index: {}]
  %s9 = inlined_call_operand.vmem [shape: f32[128,128], index: 9, kind: input, shape index: {}]
  %s10 = inlined_call_operand.vmem [shape: f32[128,1], index: 10, kind: input, shape index: {}]
  %s11 = inlined_call_operand.vmem [shape: f32[1,128,128], index: 11, kind: output, shape index: {}]
  %s12 = sld [smem:[#allocation0]]
  $region84: #{convolutional_network_forward.1} parent=0
    _
  %s14 = ssub.s32 1, %s12
  %s15 = scalar_select 0, %s14, %s12
  $region1: #{convolutional_network_forward.1} parent=0
    #allocation4 [shape = 'u8[512]{0}', space=smem, size = 0x200, scoped, tag = 'input window, operand 1, single buffered']
    #allocation5 [shape = 's32[1]{0}', space=sflag, size = 0x4, scoped, tag = 'scoped memory for convolutional_network_forward.1']
    #allocation6 [shape = 'u8[512]{0}', space=smem, size = 0x200, scoped, tag = 'input window, operand 2, single buffered']
    #allocation7 [shape = 's32[1]{0}', space=sflag, size = 0x4, scoped, tag = 'scoped memory for convolutional_network_forward.1']
    #allocation8 [shape = 'u8[3584]{0}', space=smem, size = 0xe00, scoped, tag = 'input window, operand 3, single buffered']
    #allocation9 [shape = 'u8[512]{0}', space=smem, size = 0x200, scoped, tag = 'input window, operand 4, single buffered']
    #allocation10 [shape = 's32[1]{0}', space=sflag, size = 0x4, scoped, tag = 'scoped memory for convolutional_network_forward.1']
    %16 = vsyncpa [#allocation5], 0
    %17 = vsyncpa [#allocation7], 0
    %18 = vsyncpa [#allocation10], 0
    // Predicated region
    $region2: #{convolutional_network_forward.1} parent=1 // pred_check
      _
    $region3: #{convolutional_network_forward.1} parent=1 // pred_check_branch
      %20 = sbr.rel (0) target = $region5
    $region4: #{convolutional_network_forward.1} parent=1 // pred_region
      _
    $region5: #{convolutional_network_forward.1} parent=1 // pred_fallthru
      _
    // Predicated region
    $region6: #{convolutional_network_forward.1} parent=1 // pred_check
      _
    $region7: #{convolutional_network_forward.1} parent=1 // pred_check_branch
      %22 = sbr.rel (0) target = $region9
    $region8: #{convolutional_network_forward.1} parent=1 // pred_region
      %s24 = ssub.s32 16, 16
      %25 = vsyncadd [#allocation5], %s24
      %s27 = sshll.u32 %s1, 4
      %s28 = int_to_ptr.vmem [resolvable:$true] %s27
      %30 = dma.vmem_to_smem %s28, 16, [#allocation4], [#allocation5]
    $region9: #{convolutional_network_forward.1} parent=1 // pred_fallthru
      _
    // Predicated region
    $region10: #{convolutional_network_forward.1} parent=1 // pred_check
      _
    $region11: #{convolutional_network_forward.1} parent=1 // pred_check_branch
      %32 = sbr.rel (0) target = $region13
    $region12: #{convolutional_network_forward.1} parent=1 // pred_region
      %s34 = ssub.s32 16, 16
      %35 = vsyncadd [#allocation7], %s34
      %s37 = sshll.u32 %s2, 4
      %s38 = int_to_ptr.vmem [resolvable:$true] %s37
      %40 = dma.vmem_to_smem %s38, 16, [#allocation6], [#allocation7]
    $region13: #{convolutional_network_forward.1} parent=1 // pred_fallthru
      _
    // Predicated region
    $region14: #{convolutional_network_forward.1} parent=1 // pred_check
      _
    $region15: #{convolutional_network_forward.1} parent=1 // pred_check_branch
      %42 = sbr.rel (0) target = $region17
    $region16: #{convolutional_network_forward.1} parent=1 // pred_region
      %s44 = ssub.s32 112, 112
      %45 = vsyncadd [#allocation7], %s44
      %s47 = sshll.u32 %s3, 4
      %s48 = int_to_ptr.vmem [resolvable:$true] %s47
      %50 = dma.vmem_to_smem %s48, 112, [#allocation8], [#allocation7]
    $region17: #{convolutional_network_forward.1} parent=1 // pred_fallthru
      _
    // Predicated region
    $region18: #{convolutional_network_forward.1} parent=1 // pred_check
      _
    $region19: #{convolutional_network_forward.1} parent=1 // pred_check_branch
      %52 = sbr.rel (0) target = $region21
    $region20: #{convolutional_network_forward.1} parent=1 // pred_region
      %s54 = ssub.s32 16, 16
      %55 = vsyncadd [#allocation10], %s54
      %s57 = sshll.u32 %s4, 4
      %s58 = int_to_ptr.vmem [resolvable:$true] %s57
      %60 = dma.vmem_to_smem %s58, 16, [#allocation9], [#allocation10]
    $region21: #{convolutional_network_forward.1} parent=1 // pred_fallthru
      _
    // Predicated region
    $region22: #{convolutional_network_forward.1} parent=1 // pred_check
      _
    $region23: #{convolutional_network_forward.1} parent=1 // pred_check_branch
      %62 = sbr.rel (0) target = $region25
    $region24: #{convolutional_network_forward.1} parent=1 // pred_region
      _
    $region25: #{convolutional_network_forward.1} parent=1 // pred_fallthru
      _
    // Predicated region
    $region26: #{convolutional_network_forward.1} parent=1 // pred_check
      _
    $region27: #{convolutional_network_forward.1} parent=1 // pred_check_branch
      %64 = sbr.rel (0) target = $region29
    $region28: #{convolutional_network_forward.1} parent=1 // pred_region
      _
    $region29: #{convolutional_network_forward.1} parent=1 // pred_fallthru
      _
    // Predicated region
    $region30: #{convolutional_network_forward.1} parent=1 // pred_check
      _
    $region31: #{convolutional_network_forward.1} parent=1 // pred_check_branch
      %66 = sbr.rel (0) target = $region33
    $region32: #{convolutional_network_forward.1} parent=1 // pred_region
      _
    $region33: #{convolutional_network_forward.1} parent=1 // pred_fallthru
      _
    // Predicated region
    $region34: #{convolutional_network_forward.1} parent=1 // pred_check
      _
    $region35: #{convolutional_network_forward.1} parent=1 // pred_check_branch
      %68 = sbr.rel (0) target = $region37
    $region36: #{convolutional_network_forward.1} parent=1 // pred_region
      _
    $region37: #{convolutional_network_forward.1} parent=1 // pred_fallthru
      _
    // Predicated region
    $region38: #{convolutional_network_forward.1} parent=1 // pred_check
      _
    $region39: #{convolutional_network_forward.1} parent=1 // pred_check_branch
      %70 = sbr.rel (0) target = $region41
    $region40: #{convolutional_network_forward.1} parent=1 // pred_region
      _
    $region41: #{convolutional_network_forward.1} parent=1 // pred_fallthru
      _
    // Predicated region
    $region42: #{convolutional_network_forward.1} parent=1 // pred_check
      _
    $region43: #{convolutional_network_forward.1} parent=1 // pred_check_branch
      %72 = sbr.rel (0) target = $region45
    $region44: #{convolutional_network_forward.1} parent=1 // pred_region
      _
    $region45: #{convolutional_network_forward.1} parent=1 // pred_fallthru
      _
    // Predicated region
    $region46: #{convolutional_network_forward.1} parent=1 // pred_check
      _
    $region47: #{convolutional_network_forward.1} parent=1 // pred_check_branch
      %74 = sbr.rel (0) target = $region49
    $region48: #{convolutional_network_forward.1} parent=1 // pred_region
      %75 = dma.done [#allocation5], 16
    $region49: #{convolutional_network_forward.1} parent=1 // pred_fallthru
      _
    // Predicated region
    $region50: #{convolutional_network_forward.1} parent=1 // pred_check
      _
    $region51: #{convolutional_network_forward.1} parent=1 // pred_check_branch
      %77 = sbr.rel (0) target = $region53
    $region52: #{convolutional_network_forward.1} parent=1 // pred_region
      %78 = dma.done [#allocation7], 16
    $region53: #{convolutional_network_forward.1} parent=1 // pred_fallthru
      _
    // Predicated region
    $region54: #{convolutional_network_forward.1} parent=1 // pred_check
      _
    $region55: #{convolutional_network_forward.1} parent=1 // pred_check_branch
      %80 = sbr.rel (0) target = $region57
    $region56: #{convolutional_network_forward.1} parent=1 // pred_region
      %81 = dma.done [#allocation7], 112
    $region57: #{convolutional_network_forward.1} parent=1 // pred_fallthru
      _
    // Predicated region
    $region58: #{convolutional_network_forward.1} parent=1 // pred_check
      _
    $region59: #{convolutional_network_forward.1} parent=1 // pred_check_branch
      %83 = sbr.rel (0) target = $region61
    $region60: #{convolutional_network_forward.1} parent=1 // pred_region
      %84 = dma.done [#allocation10], 16
    $region61: #{convolutional_network_forward.1} parent=1 // pred_fallthru
      _
    %85 = sfence
    %v86 = vld [vmem:[%s0] sm:$0xff]
    %v87 = vld [vmem:[%s0 + $0x8] sm:$0xff]
    %v88 = vld [vmem:[%s0 + $0x10] sm:$0xff]
    %v89 = vld [vmem:[%s0 + $0x18] sm:$0xf]
    %v90 = vld [vmem:[%s0 + $0x20] sm:$0xff]
    %v91 = vld [vmem:[%s0 + $0x28] sm:$0xff]
    %v92 = vld [vmem:[%s0 + $0x30] sm:$0xff]
    %v93 = vld [vmem:[%s0 + $0x38] sm:$0xf]
    %v94 = vld [vmem:[%s0 + $0x40] sm:$0xff]
    %v95 = vld [vmem:[%s0 + $0x48] sm:$0xff]
    %v96 = vld [vmem:[%s0 + $0x50] sm:$0xff]
    %v97 = vld [vmem:[%s0 + $0x58] sm:$0xf]
    %v98 = vld [vmem:[%s0 + $0x60] sm:$0xff]
    %v99 = vld [vmem:[%s0 + $0x68] sm:$0xff]
    %v100 = vld [vmem:[%s0 + $0x70] sm:$0xff]
    %v101 = vld [vmem:[%s0 + $0x78] sm:$0xf]
    %v102 = vld [vmem:[%s0 + $0x80] sm:$0xff]
    %v103 = vld [vmem:[%s0 + $0x88] sm:$0xff]
    %v104 = vld [vmem:[%s0 + $0x90] sm:$0xff]
    %v105 = vld [vmem:[%s0 + $0x98] sm:$0xf]
    %v106 = vld [vmem:[%s0 + $0xa0] sm:$0xff]
    %v107 = vld [vmem:[%s0 + $0xa8] sm:$0xff]
    %v108 = vld [vmem:[%s0 + $0xb0] sm:$0xff]
    %v109 = vld [vmem:[%s0 + $0xb8] sm:$0xf]
    %v110 = vld [vmem:[%s0 + $0xc0] sm:$0xff]
    %v111 = vld [vmem:[%s0 + $0xc8] sm:$0xff]
    %v112 = vld [vmem:[%s0 + $0xd0] sm:$0xff]
    %v113 = vld [vmem:[%s0 + $0xd8] sm:$0xf]
    %v114 = vld [vmem:[%s0 + $0xe0] sm:$0xff]
    %v115 = vld [vmem:[%s0 + $0xe8] sm:$0xff]
    %v116 = vld [vmem:[%s0 + $0xf0] sm:$0xff]
    %v117 = vld [vmem:[%s0 + $0xf8] sm:$0xf]
    %v118 = vld [vmem:[%s0 + $0x100] sm:$0xff]
    %v119 = vld [vmem:[%s0 + $0x108] sm:$0xff]
    %v120 = vld [vmem:[%s0 + $0x110] sm:$0xff]
    %v121 = vld [vmem:[%s0 + $0x118] sm:$0xf]
    %v122 = vld [vmem:[%s0 + $0x120] sm:$0xff]
    %v123 = vld [vmem:[%s0 + $0x128] sm:$0xff]
    %v124 = vld [vmem:[%s0 + $0x130] sm:$0xff]
    %v125 = vld [vmem:[%s0 + $0x138] sm:$0xf]
    %v126 = vld [vmem:[%s0 + $0x140] sm:$0xff]
    %v127 = vld [vmem:[%s0 + $0x148] sm:$0xff]
    %v128 = vld [vmem:[%s0 + $0x150] sm:$0xff]
    %v129 = vld [vmem:[%s0 + $0x158] sm:$0xf]
    %v130 = vld [vmem:[%s0 + $0x160] sm:$0xff]
    %v131 = vld [vmem:[%s0 + $0x168] sm:$0xff]
    %v132 = vld [vmem:[%s0 + $0x170] sm:$0xff]
    %v133 = vld [vmem:[%s0 + $0x178] sm:$0xf]
    %v134 = vld [vmem:[%s0 + $0x180] sm:$0xff]
    %v135 = vld [vmem:[%s0 + $0x188] sm:$0xff]
    %v136 = vld [vmem:[%s0 + $0x190] sm:$0xff]
    %v137 = vld [vmem:[%s0 + $0x198] sm:$0xf]
    %v138 = vld [vmem:[%s0 + $0x1a0] sm:$0xff]
    %v139 = vld [vmem:[%s0 + $0x1a8] sm:$0xff]
    %v140 = vld [vmem:[%s0 + $0x1b0] sm:$0xff]
    %v141 = vld [vmem:[%s0 + $0x1b8] sm:$0xf]
    %v142 = vld [vmem:[%s0 + $0x1c0] sm:$0xff]
    %v143 = vld [vmem:[%s0 + $0x1c8] sm:$0xff]
    %v144 = vld [vmem:[%s0 + $0x1d0] sm:$0xff]
    %v145 = vld [vmem:[%s0 + $0x1d8] sm:$0xf]
    %v146 = vld [vmem:[%s0 + $0x1e0] sm:$0xff]
    %v147 = vld [vmem:[%s0 + $0x1e8] sm:$0xff]
    %v148 = vld [vmem:[%s0 + $0x1f0] sm:$0xff]
    %v149 = vld [vmem:[%s0 + $0x1f8] sm:$0xf]
    %v150 = vld [vmem:[%s0 + $0x200] sm:$0xff]
    %v151 = vld [vmem:[%s0 + $0x208] sm:$0xff]
    %v152 = vld [vmem:[%s0 + $0x210] sm:$0xff]
    %v153 = vld [vmem:[%s0 + $0x218] sm:$0xf]
    %v154 = vld [vmem:[%s0 + $0x220] sm:$0xff]
    %v155 = vld [vmem:[%s0 + $0x228] sm:$0xff]
    %v156 = vld [vmem:[%s0 + $0x230] sm:$0xff]
    %v157 = vld [vmem:[%s0 + $0x238] sm:$0xf]
    %v158 = vld [vmem:[%s0 + $0x240] sm:$0xff]
    %v159 = vld [vmem:[%s0 + $0x248] sm:$0xff]
    %v160 = vld [vmem:[%s0 + $0x250] sm:$0xff]
    %v161 = vld [vmem:[%s0 + $0x258] sm:$0xf]
    %v162 = vld [vmem:[%s0 + $0x260] sm:$0xff]
    %v163 = vld [vmem:[%s0 + $0x268] sm:$0xff]
    %v164 = vld [vmem:[%s0 + $0x270] sm:$0xff]
    %v165 = vld [vmem:[%s0 + $0x278] sm:$0xf]
    %v166 = vld [vmem:[%s0 + $0x280] sm:$0xff]
    %v167 = vld [vmem:[%s0 + $0x288] sm:$0xff]
    %v168 = vld [vmem:[%s0 + $0x290] sm:$0xff]
    %v169 = vld [vmem:[%s0 + $0x298] sm:$0xf]
    %v170 = vld [vmem:[%s0 + $0x2a0] sm:$0xff]
    %v171 = vld [vmem:[%s0 + $0x2a8] sm:$0xff]
    %v172 = vld [vmem:[%s0 + $0x2b0] sm:$0xff]
    %v173 = vld [vmem:[%s0 + $0x2b8] sm:$0xf]
    %v174 = vld [vmem:[%s0 + $0x2c0] sm:$0xff]
    %v175 = vld [vmem:[%s0 + $0x2c8] sm:$0xff]
    %v176 = vld [vmem:[%s0 + $0x2d0] sm:$0xff]
    %v177 = vld [vmem:[%s0 + $0x2d8] sm:$0xf]
    %v178 = vld [vmem:[%s0 + $0x2e0] sm:$0xff]
    %v179 = vld [vmem:[%s0 + $0x2e8] sm:$0xff]
    %v180 = vld [vmem:[%s0 + $0x2f0] sm:$0xff]
    %v181 = vld [vmem:[%s0 + $0x2f8] sm:$0xf]
    %v182 = vld [vmem:[%s0 + $0x300] sm:$0xff]
    %v183 = vld [vmem:[%s0 + $0x308] sm:$0xff]
    %v184 = vld [vmem:[%s0 + $0x310] sm:$0xff]
    %v185 = vld [vmem:[%s0 + $0x318] sm:$0xf]
    %v186 = vld [vmem:[%s0 + $0x320] sm:$0xff]
    %v187 = vld [vmem:[%s0 + $0x328] sm:$0xff]
    %v188 = vld [vmem:[%s0 + $0x330] sm:$0xff]
    %v189 = vld [vmem:[%s0 + $0x338] sm:$0xf]
    %v190 = vld [vmem:[%s0 + $0x340] sm:$0xff]
    %v191 = vld [vmem:[%s0 + $0x348] sm:$0xff]
    %v192 = vld [vmem:[%s0 + $0x350] sm:$0xff]
    %v193 = vld [vmem:[%s0 + $0x358] sm:$0xf]
    %v194 = vld [vmem:[%s0 + $0x360] sm:$0xff]
    %v195 = vld [vmem:[%s0 + $0x368] sm:$0xff]
    %v196 = vld [vmem:[%s0 + $0x370] sm:$0xff]
    %v197 = vld [vmem:[%s0 + $0x378] sm:$0xf]
    loop: start=0, step=1, limit=6
    $region62: #{convolutional_network_forward.1} parent=1 // loop_pre_header
      _
    $region63: #{convolutional_network_forward.1} parent=1 // loop_header
      %s199 = sphi 0, %s203
      %p200 = scmp.ge.s32.totalorder %s199, 6
    $region64: #{convolutional_network_forward.1} parent=1 // loop_header_branch
      %202 = sbr.rel (%p200) target = $region68
    $region65: #{convolutional_network_forward.1} parent=1 // loop_body
      %s204 = sld [smem:[#allocation4 + %s199]]
      %v205 = vstv %s204
      %v206 = vmul.f32 %v86, %v205
      %v207 = vmul.f32 %v87, %v205
      %v208 = vmul.f32 %v88, %v205
      %v209 = vmul.f32 %v89, %v205
      %v210 = vmul.f32 %v90, %v205
      %v211 = vmul.f32 %v91, %v205
      %v212 = vmul.f32 %v92, %v205
      %v213 = vmul.f32 %v93, %v205
      %v214 = vmul.f32 %v94, %v205
      %v215 = vmul.f32 %v95, %v205
      %v216 = vmul.f32 %v96, %v205
      %v217 = vmul.f32 %v97, %v205
      %v218 = vmul.f32 %v98, %v205
      %v219 = vmul.f32 %v99, %v205
      %v220 = vmul.f32 %v100, %v205
      %v221 = vmul.f32 %v101, %v205
      %v222 = vmul.f32 %v102, %v205
      %v223 = vmul.f32 %v103, %v205
      %v224 = vmul.f32 %v104, %v205
      %v225 = vmul.f32 %v105, %v205
      %v226 = vmul.f32 %v106, %v205
      %v227 = vmul.f32 %v107, %v205
      %v228 = vmul.f32 %v108, %v205
      %v229 = vmul.f32 %v109, %v205
      %v230 = vmul.f32 %v110, %v205
      %v231 = vmul.f32 %v111, %v205
      %v232 = vmul.f32 %v112, %v205
      %v233 = vmul.f32 %v113, %v205
      %v234 = vmul.f32 %v114, %v205
      %v235 = vmul.f32 %v115, %v205
      %v236 = vmul.f32 %v116, %v205
      %v237 = vmul.f32 %v117, %v205
      %v238 = vmul.f32 %v118, %v205
      %v239 = vmul.f32 %v119, %v205
      %v240 = vmul.f32 %v120, %v205
      %v241 = vmul.f32 %v121, %v205
      %v242 = vmul.f32 %v122, %v205
      %v243 = vmul.f32 %v123, %v205
      %v244 = vmul.f32 %v124, %v205
      %v245 = vmul.f32 %v125, %v205
      %v246 = vmul.f32 %v126, %v205
      %v247 = vmul.f32 %v127, %v205
      %v248 = vmul.f32 %v128, %v205
      %v249 = vmul.f32 %v129, %v205
      %v250 = vmul.f32 %v130, %v205
      %v251 = vmul.f32 %v131, %v205
      %v252 = vmul.f32 %v132, %v205
      %v253 = vmul.f32 %v133, %v205
      %v254 = vmul.f32 %v134, %v205
      %v255 = vmul.f32 %v135, %v205
      %v256 = vmul.f32 %v136, %v205
      %v257 = vmul.f32 %v137, %v205
      %v258 = vmul.f32 %v138, %v205
      %v259 = vmul.f32 %v139, %v205
      %v260 = vmul.f32 %v140, %v205
      %v261 = vmul.f32 %v141, %v205
      %v262 = vmul.f32 %v142, %v205
      %v263 = vmul.f32 %v143, %v205
      %v264 = vmul.f32 %v144, %v205
      %v265 = vmul.f32 %v145, %v205
      %v266 = vmul.f32 %v146, %v205
      %v267 = vmul.f32 %v147, %v205
      %v268 = vmul.f32 %v148, %v205
      %v269 = vmul.f32 %v149, %v205
      %v270 = vmul.f32 %v150, %v205
      %v271 = vmul.f32 %v151, %v205
      %v272 = vmul.f32 %v152, %v205
      %v273 = vmul.f32 %v153, %v205
      %v274 = vmul.f32 %v154, %v205
      %v275 = vmul.f32 %v155, %v205
      %v276 = vmul.f32 %v156, %v205
      %v277 = vmul.f32 %v157, %v205
      %v278 = vmul.f32 %v158, %v205
      %v279 = vmul.f32 %v159, %v205
      %v280 = vmul.f32 %v160, %v205
      %v281 = vmul.f32 %v161, %v205
      %v282 = vmul.f32 %v162, %v205
      %v283 = vmul.f32 %v163, %v205
      %v284 = vmul.f32 %v164, %v205
      %v285 = vmul.f32 %v165, %v205
      %v286 = vmul.f32 %v166, %v205
      %v287 = vmul.f32 %v167, %v205
      %v288 = vmul.f32 %v168, %v205
      %v289 = vmul.f32 %v169, %v205
      %v290 = vmul.f32 %v170, %v205
      %v291 = vmul.f32 %v171, %v205
      %v292 = vmul.f32 %v172, %v205
      %v293 = vmul.f32 %v173, %v205
      %v294 = vmul.f32 %v174, %v205
      %v295 = vmul.f32 %v175, %v205
      %v296 = vmul.f32 %v176, %v205
      %v297 = vmul.f32 %v177, %v205
      %v298 = vmul.f32 %v178, %v205
      %v299 = vmul.f32 %v179, %v205
      %v300 = vmul.f32 %v180, %v205
      %v301 = vmul.f32 %v181, %v205
      %v302 = vmul.f32 %v182, %v205
      %v303 = vmul.f32 %v183, %v205
      %v304 = vmul.f32 %v184, %v205
      %v305 = vmul.f32 %v185, %v205
      %v306 = vmul.f32 %v186, %v205
      %v307 = vmul.f32 %v187, %v205
      %v308 = vmul.f32 %v188, %v205
      %v309 = vmul.f32 %v189, %v205
      %s310 = sadd.s32 %s199, 6
      %s311 = sld [smem:[#allocation4 + %s310]]
      %v312 = vstv %s311
      %v313 = vmul.f32 %v86, %v312
      %v314 = vmul.f32 %v87, %v312
      %v315 = vmul.f32 %v88, %v312
      %v316 = vmul.f32 %v89, %v312
      %v317 = vmul.f32 %v90, %v312
      %v318 = vmul.f32 %v91, %v312
      %v319 = vmul.f32 %v92, %v312
      %v320 = vmul.f32 %v93, %v312
      %v321 = vmul.f32 %v94, %v312
      %v322 = vmul.f32 %v95, %v312
      %v323 = vmul.f32 %v96, %v312
      %v324 = vmul.f32 %v97, %v312
      %v325 = vmul.f32 %v98, %v312
      %v326 = vmul.f32 %v99, %v312
      %v327 = vmul.f32 %v100, %v312
      %v328 = vmul.f32 %v101, %v312
      %v329 = vmul.f32 %v102, %v312
      %v330 = vmul.f32 %v103, %v312
      %v331 = vmul.f32 %v104, %v312
      %v332 = vmul.f32 %v105, %v312
      %v333 = vmul.f32 %v106, %v312
      %v334 = vmul.f32 %v107, %v312
      %v335 = vmul.f32 %v108, %v312
      %v336 = vmul.f32 %v109, %v312
      %v337 = vmul.f32 %v110, %v312
      %v338 = vmul.f32 %v111, %v312
      %v339 = vmul.f32 %v112, %v312
      %v340 = vmul.f32 %v113, %v312
      %v341 = vmul.f32 %v114, %v312
      %v342 = vmul.f32 %v115, %v312
      %v343 = vmul.f32 %v116, %v312
      %v344 = vmul.f32 %v117, %v312
      %v345 = vmul.f32 %v118, %v312
      %v346 = vmul.f32 %v119, %v312
      %v347 = vmul.f32 %v120, %v312
      %v348 = vmul.f32 %v121, %v312
      %v349 = vmul.f32 %v122, %v312
      %v350 = vmul.f32 %v123, %v312
      %v351 = vmul.f32 %v124, %v312
      %v352 = vmul.f32 %v125, %v312
      %v353 = vmul.f32 %v126, %v312
      %v354 = vmul.f32 %v127, %v312
      %v355 = vmul.f32 %v128, %v312
      %v356 = vmul.f32 %v129, %v312
      %v357 = vmul.f32 %v130, %v312
      %v358 = vmul.f32 %v131, %v312
      %v359 = vmul.f32 %v132, %v312
      %v360 = vmul.f32 %v133, %v312
      %v361 = vmul.f32 %v134, %v312
      %v362 = vmul.f32 %v135, %v312
      %v363 = vmul.f32 %v136, %v312
      %v364 = vmul.f32 %v137, %v312
      %v365 = vmul.f32 %v138, %v312
      %v366 = vmul.f32 %v139, %v312
      %v367 = vmul.f32 %v140, %v312
      %v368 = vmul.f32 %v141, %v312
      %v369 = vmul.f32 %v142, %v312
      %v370 = vmul.f32 %v143, %v312
      %v371 = vmul.f32 %v144, %v312
      %v372 = vmul.f32 %v145, %v312
      %v373 = vmul.f32 %v146, %v312
      %v374 = vmul.f32 %v147, %v312
      %v375 = vmul.f32 %v148, %v312
      %v376 = vmul.f32 %v149, %v312
      %v377 = vmul.f32 %v150, %v312
      %v378 = vmul.f32 %v151, %v312
      %v379 = vmul.f32 %v152, %v312
      %v380 = vmul.f32 %v153, %v312
      %v381 = vmul.f32 %v154, %v312
      %v382 = vmul.f32 %v155, %v312
      %v383 = vmul.f32 %v156, %v312
      %v384 = vmul.f32 %v157, %v312
      %v385 = vmul.f32 %v158, %v312
      %v386 = vmul.f32 %v159, %v312
      %v387 = vmul.f32 %v160, %v312
      %v388 = vmul.f32 %v161, %v312
      %v389 = vmul.f32 %v162, %v312
      %v390 = vmul.f32 %v163, %v312
      %v391 = vmul.f32 %v164, %v312
      %v392 = vmul.f32 %v165, %v312
      %v393 = vmul.f32 %v166, %v312
      %v394 = vmul.f32 %v167, %v312
      %v395 = vmul.f32 %v168, %v312
      %v396 = vmul.f32 %v169, %v312
      %v397 = vmul.f32 %v170, %v312
      %v398 = vmul.f32 %v171, %v312
      %v399 = vmul.f32 %v172, %v312
      %v400 = vmul.f32 %v173, %v312
      %v401 = vmul.f32 %v174, %v312
      %v402 = vmul.f32 %v175, %v312
      %v403 = vmul.f32 %v176, %v312
      %v404 = vmul.f32 %v177, %v312
      %v405 = vmul.f32 %v178, %v312
      %v406 = vmul.f32 %v179, %v312
      %v407 = vmul.f32 %v180, %v312
      %v408 = vmul.f32 %v181, %v312
      %v409 = vmul.f32 %v182, %v312
      %v410 = vmul.f32 %v183, %v312
      %v411 = vmul.f32 %v184, %v312
      %v412 = vmul.f32 %v185, %v312
      %v413 = vmul.f32 %v186, %v312
      %v414 = vmul.f32 %v187, %v312
      %v415 = vmul.f32 %v188, %v312
      %v416 = vmul.f32 %v189, %v312
      %vm521 = vcmask 1046528
      %v522 = vrot.slane %v313, 1
      %v523 = vrot.slane %v314, 1
      %v524 = vsel %vm521, %v522, %v523
      %v525 = vrot.slane %v315, 1
      %v526 = vsel %vm521, %v523, %v525
      %v527 = vrot.slane %v316, 1
      %v528 = vsel %vm521, %v525, %v527
      %v529 = vrot.slane %v317, 1
      %v530 = vrot.slane %v318, 1
      %v531 = vsel %vm521, %v529, %v530
      %v532 = vrot.slane %v319, 1
      %v533 = vsel %vm521, %v530, %v532
      %v534 = vrot.slane %v320, 1
      %v535 = vsel %vm521, %v532, %v534
      %v536 = vrot.slane %v321, 1
      %v537 = vrot.slane %v322, 1
      %v538 = vsel %vm521, %v536, %v537
      %v539 = vrot.slane %v323, 1
      %v540 = vsel %vm521, %v537, %v539
      %v541 = vrot.slane %v324, 1
      %v542 = vsel %vm521, %v539, %v541
      %v543 = vrot.slane %v325, 1
      %v544 = vrot.slane %v326, 1
      %v545 = vsel %vm521, %v543, %v544
      %v546 = vrot.slane %v327, 1
      %v547 = vsel %vm521, %v544, %v546
      %v548 = vrot.slane %v328, 1
      %v549 = vsel %vm521, %v546, %v548
      %v550 = vrot.slane %v329, 1
      %v551 = vrot.slane %v330, 1
      %v552 = vsel %vm521, %v550, %v551
      %v553 = vrot.slane %v331, 1
      %v554 = vsel %vm521, %v551, %v553
      %v555 = vrot.slane %v332, 1
      %v556 = vsel %vm521, %v553, %v555
      %v557 = vrot.slane %v333, 1
      %v558 = vrot.slane %v334, 1
      %v559 = vsel %vm521, %v557, %v558
      %v560 = vrot.slane %v335, 1
      %v561 = vsel %vm521, %v558, %v560
      %v562 = vrot.slane %v336, 1
      %v563 = vsel %vm521, %v560, %v562
      %v564 = vrot.slane %v337, 1
      %v565 = vrot.slane %v338, 1
      %v566 = vsel %vm521, %v564, %v565
      %v567 = vrot.slane %v339, 1
      %v568 = vsel %vm521, %v565, %v567
      %v569 = vrot.slane %v340, 1
      %v570 = vsel %vm521, %v567, %v569
      %v571 = vrot.slane %v341, 1
      %v572 = vrot.slane %v342, 1
      %v573 = vsel %vm521, %v571, %v572
      %v574 = vrot.slane %v343, 1
      %v575 = vsel %vm521, %v572, %v574
      %v576 = vrot.slane %v344, 1
      %v577 = vsel %vm521, %v574, %v576
      %v578 = vrot.slane %v345, 1
      %v579 = vrot.slane %v346, 1
      %v580 = vsel %vm521, %v578, %v579
      %v581 = vrot.slane %v347, 1
      %v582 = vsel %vm521, %v579, %v581
      %v583 = vrot.slane %v348, 1
      %v584 = vsel %vm521, %v581, %v583
      %v585 = vrot.slane %v349, 1
      %v586 = vrot.slane %v350, 1
      %v587 = vsel %vm521, %v585, %v586
      %v588 = vrot.slane %v351, 1
      %v589 = vsel %vm521, %v586, %v588
      %v590 = vrot.slane %v352, 1
      %v591 = vsel %vm521, %v588, %v590
      %v592 = vrot.slane %v353, 1
      %v593 = vrot.slane %v354, 1
      %v594 = vsel %vm521, %v592, %v593
      %v595 = vrot.slane %v355, 1
      %v596 = vsel %vm521, %v593, %v595
      %v597 = vrot.slane %v356, 1
      %v598 = vsel %vm521, %v595, %v597
      %v599 = vrot.slane %v357, 1
      %v600 = vrot.slane %v358, 1
      %v601 = vsel %vm521, %v599, %v600
      %v602 = vrot.slane %v359, 1
      %v603 = vsel %vm521, %v600, %v602
      %v604 = vrot.slane %v360, 1
      %v605 = vsel %vm521, %v602, %v604
      %v606 = vrot.slane %v361, 1
      %v607 = vrot.slane %v362, 1
      %v608 = vsel %vm521, %v606, %v607
      %v609 = vrot.slane %v363, 1
      %v610 = vsel %vm521, %v607, %v609
      %v611 = vrot.slane %v364, 1
      %v612 = vsel %vm521, %v609, %v611
      %v613 = vrot.slane %v365, 1
      %v614 = vrot.slane %v366, 1
      %v615 = vsel %vm521, %v613, %v614
      %v616 = vrot.slane %v367, 1
      %v617 = vsel %vm521, %v614, %v616
      %v618 = vrot.slane %v368, 1
      %v619 = vsel %vm521, %v616, %v618
      %v620 = vrot.slane %v369, 1
      %v621 = vrot.slane %v370, 1
      %v622 = vsel %vm521, %v620, %v621
      %v623 = vrot.slane %v371, 1
      %v624 = vsel %vm521, %v621, %v623
      %v625 = vrot.slane %v372, 1
      %v626 = vsel %vm521, %v623, %v625
      %v627 = vrot.slane %v373, 1
      %v628 = vrot.slane %v374, 1
      %v629 = vsel %vm521, %v627, %v628
      %v630 = vrot.slane %v375, 1
      %v631 = vsel %vm521, %v628, %v630
      %v632 = vrot.slane %v376, 1
      %v633 = vsel %vm521, %v630, %v632
      %v634 = vrot.slane %v377, 1
      %v635 = vrot.slane %v378, 1
      %v636 = vsel %vm521, %v634, %v635
      %v637 = vrot.slane %v379, 1
      %v638 = vsel %vm521, %v635, %v637
      %v639 = vrot.slane %v380, 1
      %v640 = vsel %vm521, %v637, %v639
      %v641 = vrot.slane %v381, 1
      %v642 = vrot.slane %v382, 1
      %v643 = vsel %vm521, %v641, %v642
      %v644 = vrot.slane %v383, 1
      %v645 = vsel %vm521, %v642, %v644
      %v646 = vrot.slane %v384, 1
      %v647 = vsel %vm521, %v644, %v646
      %v648 = vrot.slane %v385, 1
      %v649 = vrot.slane %v386, 1
      %v650 = vsel %vm521, %v648, %v649
      %v651 = vrot.slane %v387, 1
      %v652 = vsel %vm521, %v649, %v651
      %v653 = vrot.slane %v388, 1
      %v654 = vsel %vm521, %v651, %v653
      %v655 = vrot.slane %v389, 1
      %v656 = vrot.slane %v390, 1
      %v657 = vsel %vm521, %v655, %v656
      %v658 = vrot.slane %v391, 1
      %v659 = vsel %vm521, %v656, %v658
      %v660 = vrot.slane %v392, 1
      %v661 = vsel %vm521, %v658, %v660
      %v662 = vrot.slane %v393, 1
      %v663 = vrot.slane %v394, 1
      %v664 = vsel %vm521, %v662, %v663
      %v665 = vrot.slane %v395, 1
      %v666 = vsel %vm521, %v663, %v665
      %v667 = vrot.slane %v396, 1
      %v668 = vsel %vm521, %v665, %v667
      %v669 = vrot.slane %v397, 1
      %v670 = vrot.slane %v398, 1
      %v671 = vsel %vm521, %v669, %v670
      %v672 = vrot.slane %v399, 1
      %v673 = vsel %vm521, %v670, %v672
      %v674 = vrot.slane %v400, 1
      %v675 = vsel %vm521, %v672, %v674
      %v676 = vrot.slane %v401, 1
      %v677 = vrot.slane %v402, 1
      %v678 = vsel %vm521, %v676, %v677
      %v679 = vrot.slane %v403, 1
      %v680 = vsel %vm521, %v677, %v679
      %v681 = vrot.slane %v404, 1
      %v682 = vsel %vm521, %v679, %v681
      %v683 = vrot.slane %v405, 1
      %v684 = vrot.slane %v406, 1
      %v685 = vsel %vm521, %v683, %v684
      %v686 = vrot.slane %v407, 1
      %v687 = vsel %vm521, %v684, %v686
      %v688 = vrot.slane %v408, 1
      %v689 = vsel %vm521, %v686, %v688
      %v690 = vrot.slane %v409, 1
      %v691 = vrot.slane %v410, 1
      %v692 = vsel %vm521, %v690, %v691
      %v693 = vrot.slane %v411, 1
      %v694 = vsel %vm521, %v691, %v693
      %v695 = vrot.slane %v412, 1
      %v696 = vsel %vm521, %v693, %v695
      %v697 = vrot.slane %v413, 1
      %v698 = vrot.slane %v414, 1
      %v699 = vsel %vm521, %v697, %v698
      %v700 = vrot.slane %v415, 1
      %v701 = vsel %vm521, %v698, %v700
      %v702 = vrot.slane %v416, 1
      %v703 = vsel %vm521, %v700, %v702
      %v808 = vadd.f32 %v206, %v524
      %v809 = vadd.f32 %v207, %v526
      %v810 = vadd.f32 %v208, %v528
      %v811 = vadd.f32 %v209, %v527
      %v812 = vadd.f32 %v210, %v531
      %v813 = vadd.f32 %v211, %v533
      %v814 = vadd.f32 %v212, %v535
      %v815 = vadd.f32 %v213, %v534
      %v816 = vadd.f32 %v214, %v538
      %v817 = vadd.f32 %v215, %v540
      %v818 = vadd.f32 %v216, %v542
      %v819 = vadd.f32 %v217, %v541
      %v820 = vadd.f32 %v218, %v545
      %v821 = vadd.f32 %v219, %v547
      %v822 = vadd.f32 %v220, %v549
      %v823 = vadd.f32 %v221, %v548
      %v824 = vadd.f32 %v222, %v552
      %v825 = vadd.f32 %v223, %v554
      %v826 = vadd.f32 %v224, %v556
      %v827 = vadd.f32 %v225, %v555
      %v828 = vadd.f32 %v226, %v559
      %v829 = vadd.f32 %v227, %v561
      %v830 = vadd.f32 %v228, %v563
      %v831 = vadd.f32 %v229, %v562
      %v832 = vadd.f32 %v230, %v566
      %v833 = vadd.f32 %v231, %v568
      %v834 = vadd.f32 %v232, %v570
      %v835 = vadd.f32 %v233, %v569
      %v836 = vadd.f32 %v234, %v573
      %v837 = vadd.f32 %v235, %v575
      %v838 = vadd.f32 %v236, %v577
      %v839 = vadd.f32 %v237, %v576
      %v840 = vadd.f32 %v238, %v580
      %v841 = vadd.f32 %v239, %v582
      %v842 = vadd.f32 %v240, %v584
      %v843 = vadd.f32 %v241, %v583
      %v844 = vadd.f32 %v242, %v587
      %v845 = vadd.f32 %v243, %v589
      %v846 = vadd.f32 %v244, %v591
      %v847 = vadd.f32 %v245, %v590
      %v848 = vadd.f32 %v246, %v594
      %v849 = vadd.f32 %v247, %v596
      %v850 = vadd.f32 %v248, %v598
      %v851 = vadd.f32 %v249, %v597
      %v852 = vadd.f32 %v250, %v601
      %v853 = vadd.f32 %v251, %v603
      %v854 = vadd.f32 %v252, %v605
      %v855 = vadd.f32 %v253, %v604
      %v856 = vadd.f32 %v254, %v608
      %v857 = vadd.f32 %v255, %v610
      %v858 = vadd.f32 %v256, %v612
      %v859 = vadd.f32 %v257, %v611
      %v860 = vadd.f32 %v258, %v615
      %v861 = vadd.f32 %v259, %v617
      %v862 = vadd.f32 %v260, %v619
      %v863 = vadd.f32 %v261, %v618
      %v864 = vadd.f32 %v262, %v622
      %v865 = vadd.f32 %v263, %v624
      %v866 = vadd.f32 %v264, %v626
      %v867 = vadd.f32 %v265, %v625
      %v868 = vadd.f32 %v266, %v629
      %v869 = vadd.f32 %v267, %v631
      %v870 = vadd.f32 %v268, %v633
      %v871 = vadd.f32 %v269, %v632
      %v872 = vadd.f32 %v270, %v636
      %v873 = vadd.f32 %v271, %v638
      %v874 = vadd.f32 %v272, %v640
      %v875 = vadd.f32 %v273, %v639
      %v876 = vadd.f32 %v274, %v643
      %v877 = vadd.f32 %v275, %v645
      %v878 = vadd.f32 %v276, %v647
      %v879 = vadd.f32 %v277, %v646
      %v880 = vadd.f32 %v278, %v650
      %v881 = vadd.f32 %v279, %v652
      %v882 = vadd.f32 %v280, %v654
      %v883 = vadd.f32 %v281, %v653
      %v884 = vadd.f32 %v282, %v657
      %v885 = vadd.f32 %v283, %v659
      %v886 = vadd.f32 %v284, %v661
      %v887 = vadd.f32 %v285, %v660
      %v888 = vadd.f32 %v286, %v664
      %v889 = vadd.f32 %v287, %v666
      %v890 = vadd.f32 %v288, %v668
      %v891 = vadd.f32 %v289, %v667
      %v892 = vadd.f32 %v290, %v671
      %v893 = vadd.f32 %v291, %v673
      %v894 = vadd.f32 %v292, %v675
      %v895 = vadd.f32 %v293, %v674
      %v896 = vadd.f32 %v294, %v678
      %v897 = vadd.f32 %v295, %v680
      %v898 = vadd.f32 %v296, %v682
      %v899 = vadd.f32 %v297, %v681
      %v900 = vadd.f32 %v298, %v685
      %v901 = vadd.f32 %v299, %v687
      %v902 = vadd.f32 %v300, %v689
      %v903 = vadd.f32 %v301, %v688
      %v904 = vadd.f32 %v302, %v692
      %v905 = vadd.f32 %v303, %v694
      %v906 = vadd.f32 %v304, %v696
      %v907 = vadd.f32 %v305, %v695
      %v908 = vadd.f32 %v306, %v699
      %v909 = vadd.f32 %v307, %v701
      %v910 = vadd.f32 %v308, %v703
      %v911 = vadd.f32 %v309, %v702
      %s912 = sadd.s32 %s199, 12
      %s913 = sld [smem:[#allocation4 + %s912]]
      %v914 = vstv %s913
      %v915 = vmul.f32 %v86, %v914
      %v916 = vmul.f32 %v87, %v914
      %v917 = vmul.f32 %v88, %v914
      %v918 = vmul.f32 %v89, %v914
      %v919 = vmul.f32 %v90, %v914
      %v920 = vmul.f32 %v91, %v914
      %v921 = vmul.f32 %v92, %v914
      %v922 = vmul.f32 %v93, %v914
      %v923 = vmul.f32 %v94, %v914
      %v924 = vmul.f32 %v95, %v914
      %v925 = vmul.f32 %v96, %v914
      %v926 = vmul.f32 %v97, %v914
      %v927 = vmul.f32 %v98, %v914
      %v928 = vmul.f32 %v99, %v914
      %v929 = vmul.f32 %v100, %v914
      %v930 = vmul.f32 %v101, %v914
      %v931 = vmul.f32 %v102, %v914
      %v932 = vmul.f32 %v103, %v914
      %v933 = vmul.f32 %v104, %v914
      %v934 = vmul.f32 %v105, %v914
      %v935 = vmul.f32 %v106, %v914
      %v936 = vmul.f32 %v107, %v914
      %v937 = vmul.f32 %v108, %v914
      %v938 = vmul.f32 %v109, %v914
      %v939 = vmul.f32 %v110, %v914
      %v940 = vmul.f32 %v111, %v914
      %v941 = vmul.f32 %v112, %v914
      %v942 = vmul.f32 %v113, %v914
      %v943 = vmul.f32 %v114, %v914
      %v944 = vmul.f32 %v115, %v914
      %v945 = vmul.f32 %v116, %v914
      %v946 = vmul.f32 %v117, %v914
      %v947 = vmul.f32 %v118, %v914
      %v948 = vmul.f32 %v119, %v914
      %v949 = vmul.f32 %v120, %v914
      %v950 = vmul.f32 %v121, %v914
      %v951 = vmul.f32 %v122, %v914
      %v952 = vmul.f32 %v123, %v914
      %v953 = vmul.f32 %v124, %v914
      %v954 = vmul.f32 %v125, %v914
      %v955 = vmul.f32 %v126, %v914
      %v956 = vmul.f32 %v127, %v914
      %v957 = vmul.f32 %v128, %v914
      %v958 = vmul.f32 %v129, %v914
      %v959 = vmul.f32 %v130, %v914
      %v960 = vmul.f32 %v131, %v914
      %v961 = vmul.f32 %v132, %v914
      %v962 = vmul.f32 %v133, %v914
      %v963 = vmul.f32 %v134, %v914
      %v964 = vmul.f32 %v135, %v914
      %v965 = vmul.f32 %v136, %v914
      %v966 = vmul.f32 %v137, %v914
      %v967 = vmul.f32 %v138, %v914
      %v968 = vmul.f32 %v139, %v914
      %v969 = vmul.f32 %v140, %v914
      %v970 = vmul.f32 %v141, %v914
      %v971 = vmul.f32 %v142, %v914
      %v972 = vmul.f32 %v143, %v914
      %v973 = vmul.f32 %v144, %v914
      %v974 = vmul.f32 %v145, %v914
      %v975 = vmul.f32 %v146, %v914
      %v976 = vmul.f32 %v147, %v914
      %v977 = vmul.f32 %v148, %v914
      %v978 = vmul.f32 %v149, %v914
      %v979 = vmul.f32 %v150, %v914
      %v980 = vmul.f32 %v151, %v914
      %v981 = vmul.f32 %v152, %v914
      %v982 = vmul.f32 %v153, %v914
      %v983 = vmul.f32 %v154, %v914
      %v984 = vmul.f32 %v155, %v914
      %v985 = vmul.f32 %v156, %v914
      %v986 = vmul.f32 %v157, %v914
      %v987 = vmul.f32 %v158, %v914
      %v988 = vmul.f32 %v159, %v914
      %v989 = vmul.f32 %v160, %v914
      %v990 = vmul.f32 %v161, %v914
      %v991 = vmul.f32 %v162, %v914
      %v992 = vmul.f32 %v163, %v914
      %v993 = vmul.f32 %v164, %v914
      %v994 = vmul.f32 %v165, %v914
      %v995 = vmul.f32 %v166, %v914
      %v996 = vmul.f32 %v167, %v914
      %v997 = vmul.f32 %v168, %v914
      %v998 = vmul.f32 %v169, %v914
      %v999 = vmul.f32 %v170, %v914
      %v1000 = vmul.f32 %v171, %v914
      %v1001 = vmul.f32 %v172, %v914
      %v1002 = vmul.f32 %v173, %v914
      %v1003 = vmul.f32 %v174, %v914
      %v1004 = vmul.f32 %v175, %v914
      %v1005 = vmul.f32 %v176, %v914
      %v1006 = vmul.f32 %v177, %v914
      %v1007 = vmul.f32 %v178, %v914
      %v1008 = vmul.f32 %v179, %v914
      %v1009 = vmul.f32 %v180, %v914
      %v1010 = vmul.f32 %v181, %v914
      %v1011 = vmul.f32 %v182, %v914
      %v1012 = vmul.f32 %v183, %v914
      %v1013 = vmul.f32 %v184, %v914
      %v1014 = vmul.f32 %v185, %v914
      %v1015 = vmul.f32 %v186, %v914
      %v1016 = vmul.f32 %v187, %v914
      %v1017 = vmul.f32 %v188, %v914
      %v1018 = vmul.f32 %v189, %v914
      %vm1123 = vcmask 1045504
      %v1124 = vrot.slane %v915, 2
      %v1125 = vrot.slane %v916, 2
      %v1126 = vsel %vm1123, %v1124, %v1125
      %v1127 = vrot.slane %v917, 2
      %v1128 = vsel %vm1123, %v1125, %v1127
      %v1129 = vrot.slane %v918, 2
      %v1130 = vsel %vm1123, %v1127, %v1129
      %v1131 = vrot.slane %v919, 2
      %v1132 = vrot.slane %v920, 2
      %v1133 = vsel %vm1123, %v1131, %v1132
      %v1134 = vrot.slane %v921, 2
      %v1135 = vsel %vm1123, %v1132, %v1134
      %v1136 = vrot.slane %v922, 2
      %v1137 = vsel %vm1123, %v1134, %v1136
      %v1138 = vrot.slane %v923, 2
      %v1139 = vrot.slane %v924, 2
      %v1140 = vsel %vm1123, %v1138, %v1139
      %v1141 = vrot.slane %v925, 2
      %v1142 = vsel %vm1123, %v1139, %v1141
      %v1143 = vrot.slane %v926, 2
      %v1144 = vsel %vm1123, %v1141, %v1143
      %v1145 = vrot.slane %v927, 2
      %v1146 = vrot.slane %v928, 2
      %v1147 = vsel %vm1123, %v1145, %v1146
      %v1148 = vrot.slane %v929, 2
      %v1149 = vsel %vm1123, %v1146, %v1148
      %v1150 = vrot.slane %v930, 2
      %v1151 = vsel %vm1123, %v1148, %v1150
      %v1152 = vrot.slane %v931, 2
      %v1153 = vrot.slane %v932, 2
      %v1154 = vsel %vm1123, %v1152, %v1153
      %v1155 = vrot.slane %v933, 2
      %v1156 = vsel %vm1123, %v1153, %v1155
      %v1157 = vrot.slane %v934, 2
      %v1158 = vsel %vm1123, %v1155, %v1157
      %v1159 = vrot.slane %v935, 2
      %v1160 = vrot.slane %v936, 2
      %v1161 = vsel %vm1123, %v1159, %v1160
      %v1162 = vrot.slane %v937, 2
      %v1163 = vsel %vm1123, %v1160, %v1162
      %v1164 = vrot.slane %v938, 2
      %v1165 = vsel %vm1123, %v1162, %v1164
      %v1166 = vrot.slane %v939, 2
      %v1167 = vrot.slane %v940, 2
      %v1168 = vsel %vm1123, %v1166, %v1167
      %v1169 = vrot.slane %v941, 2
      %v1170 = vsel %vm1123, %v1167, %v1169
      %v1171 = vrot.slane %v942, 2
      %v1172 = vsel %vm1123, %v1169, %v1171
      %v1173 = vrot.slane %v943, 2
      %v1174 = vrot.slane %v944, 2
      %v1175 = vsel %vm1123, %v1173, %v1174
      %v1176 = vrot.slane %v945, 2
      %v1177 = vsel %vm1123, %v1174, %v1176
      %v1178 = vrot.slane %v946, 2
      %v1179 = vsel %vm1123, %v1176, %v1178
      %v1180 = vrot.slane %v947, 2
      %v1181 = vrot.slane %v948, 2
      %v1182 = vsel %vm1123, %v1180, %v1181
      %v1183 = vrot.slane %v949, 2
      %v1184 = vsel %vm1123, %v1181, %v1183
      %v1185 = vrot.slane %v950, 2
      %v1186 = vsel %vm1123, %v1183, %v1185
      %v1187 = vrot.slane %v951, 2
      %v1188 = vrot.slane %v952, 2
      %v1189 = vsel %vm1123, %v1187, %v1188
      %v1190 = vrot.slane %v953, 2
      %v1191 = vsel %vm1123, %v1188, %v1190
      %v1192 = vrot.slane %v954, 2
      %v1193 = vsel %vm1123, %v1190, %v1192
      %v1194 = vrot.slane %v955, 2
      %v1195 = vrot.slane %v956, 2
      %v1196 = vsel %vm1123, %v1194, %v1195
      %v1197 = vrot.slane %v957, 2
      %v1198 = vsel %vm1123, %v1195, %v1197
      %v1199 = vrot.slane %v958, 2
      %v1200 = vsel %vm1123, %v1197, %v1199
      %v1201 = vrot.slane %v959, 2
      %v1202 = vrot.slane %v960, 2
      %v1203 = vsel %vm1123, %v1201, %v1202
      %v1204 = vrot.slane %v961, 2
      %v1205 = vsel %vm1123, %v1202, %v1204
      %v1206 = vrot.slane %v962, 2
      %v1207 = vsel %vm1123, %v1204, %v1206
      %v1208 = vrot.slane %v963, 2
      %v1209 = vrot.slane %v964, 2
      %v1210 = vsel %vm1123, %v1208, %v1209
      %v1211 = vrot.slane %v965, 2
      %v1212 = vsel %vm1123, %v1209, %v1211
      %v1213 = vrot.slane %v966, 2
      %v1214 = vsel %vm1123, %v1211, %v1213
      %v1215 = vrot.slane %v967, 2
      %v1216 = vrot.slane %v968, 2
      %v1217 = vsel %vm1123, %v1215, %v1216
      %v1218 = vrot.slane %v969, 2
      %v1219 = vsel %vm1123, %v1216, %v1218
      %v1220 = vrot.slane %v970, 2
      %v1221 = vsel %vm1123, %v1218, %v1220
      %v1222 = vrot.slane %v971, 2
      %v1223 = vrot.slane %v972, 2
      %v1224 = vsel %vm1123, %v1222, %v1223
      %v1225 = vrot.slane %v973, 2
      %v1226 = vsel %vm1123, %v1223, %v1225
      %v1227 = vrot.slane %v974, 2
      %v1228 = vsel %vm1123, %v1225, %v1227
      %v1229 = vrot.slane %v975, 2
      %v1230 = vrot.slane %v976, 2
      %v1231 = vsel %vm1123, %v1229, %v1230
      %v1232 = vrot.slane %v977, 2
      %v1233 = vsel %vm1123, %v1230, %v1232
      %v1234 = vrot.slane %v978, 2
      %v1235 = vsel %vm1123, %v1232, %v1234
      %v1236 = vrot.slane %v979, 2
      %v1237 = vrot.slane %v980, 2
      %v1238 = vsel %vm1123, %v1236, %v1237
      %v1239 = vrot.slane %v981, 2
      %v1240 = vsel %vm1123, %v1237, %v1239
      %v1241 = vrot.slane %v982, 2
      %v1242 = vsel %vm1123, %v1239, %v1241
      %v1243 = vrot.slane %v983, 2
      %v1244 = vrot.slane %v984, 2
      %v1245 = vsel %vm1123, %v1243, %v1244
      %v1246 = vrot.slane %v985, 2
      %v1247 = vsel %vm1123, %v1244, %v1246
      %v1248 = vrot.slane %v986, 2
      %v1249 = vsel %vm1123, %v1246, %v1248
      %v1250 = vrot.slane %v987, 2
      %v1251 = vrot.slane %v988, 2
      %v1252 = vsel %vm1123, %v1250, %v1251
      %v1253 = vrot.slane %v989, 2
      %v1254 = vsel %vm1123, %v1251, %v1253
      %v1255 = vrot.slane %v990, 2
      %v1256 = vsel %vm1123, %v1253, %v1255
      %v1257 = vrot.slane %v991, 2
      %v1258 = vrot.slane %v992, 2
      %v1259 = vsel %vm1123, %v1257, %v1258
      %v1260 = vrot.slane %v993, 2
      %v1261 = vsel %vm1123, %v1258, %v1260
      %v1262 = vrot.slane %v994, 2
      %v1263 = vsel %vm1123, %v1260, %v1262
      %v1264 = vrot.slane %v995, 2
      %v1265 = vrot.slane %v996, 2
      %v1266 = vsel %vm1123, %v1264, %v1265
      %v1267 = vrot.slane %v997, 2
      %v1268 = vsel %vm1123, %v1265, %v1267
      %v1269 = vrot.slane %v998, 2
      %v1270 = vsel %vm1123, %v1267, %v1269
      %v1271 = vrot.slane %v999, 2
      %v1272 = vrot.slane %v1000, 2
      %v1273 = vsel %vm1123, %v1271, %v1272
      %v1274 = vrot.slane %v1001, 2
      %v1275 = vsel %vm1123, %v1272, %v1274
      %v1276 = vrot.slane %v1002, 2
      %v1277 = vsel %vm1123, %v1274, %v1276
      %v1278 = vrot.slane %v1003, 2
      %v1279 = vrot.slane %v1004, 2
      %v1280 = vsel %vm1123, %v1278, %v1279
      %v1281 = vrot.slane %v1005, 2
      %v1282 = vsel %vm1123, %v1279, %v1281
      %v1283 = vrot.slane %v1006, 2
      %v1284 = vsel %vm1123, %v1281, %v1283
      %v1285 = vrot.slane %v1007, 2
      %v1286 = vrot.slane %v1008, 2
      %v1287 = vsel %vm1123, %v1285, %v1286
      %v1288 = vrot.slane %v1009, 2
      %v1289 = vsel %vm1123, %v1286, %v1288
      %v1290 = vrot.slane %v1010, 2
      %v1291 = vsel %vm1123, %v1288, %v1290
      %v1292 = vrot.slane %v1011, 2
      %v1293 = vrot.slane %v1012, 2
      %v1294 = vsel %vm1123, %v1292, %v1293
      %v1295 = vrot.slane %v1013, 2
      %v1296 = vsel %vm1123, %v1293, %v1295
      %v1297 = vrot.slane %v1014, 2
      %v1298 = vsel %vm1123, %v1295, %v1297
      %v1299 = vrot.slane %v1015, 2
      %v1300 = vrot.slane %v1016, 2
      %v1301 = vsel %vm1123, %v1299, %v1300
      %v1302 = vrot.slane %v1017, 2
      %v1303 = vsel %vm1123, %v1300, %v1302
      %v1304 = vrot.slane %v1018, 2
      %v1305 = vsel %vm1123, %v1302, %v1304
      %v1410 = vadd.f32 %v808, %v1126
      %v1411 = vadd.f32 %v809, %v1128
      %v1412 = vadd.f32 %v810, %v1130
      %v1413 = vadd.f32 %v811, %v1129
      %v1414 = vadd.f32 %v812, %v1133
      %v1415 = vadd.f32 %v813, %v1135
      %v1416 = vadd.f32 %v814, %v1137
      %v1417 = vadd.f32 %v815, %v1136
      %v1418 = vadd.f32 %v816, %v1140
      %v1419 = vadd.f32 %v817, %v1142
      %v1420 = vadd.f32 %v818, %v1144
      %v1421 = vadd.f32 %v819, %v1143
      %v1422 = vadd.f32 %v820, %v1147
      %v1423 = vadd.f32 %v821, %v1149
      %v1424 = vadd.f32 %v822, %v1151
      %v1425 = vadd.f32 %v823, %v1150
      %v1426 = vadd.f32 %v824, %v1154
      %v1427 = vadd.f32 %v825, %v1156
      %v1428 = vadd.f32 %v826, %v1158
      %v1429 = vadd.f32 %v827, %v1157
      %v1430 = vadd.f32 %v828, %v1161
      %v1431 = vadd.f32 %v829, %v1163
      %v1432 = vadd.f32 %v830, %v1165
      %v1433 = vadd.f32 %v831, %v1164
      %v1434 = vadd.f32 %v832, %v1168
      %v1435 = vadd.f32 %v833, %v1170
      %v1436 = vadd.f32 %v834, %v1172
      %v1437 = vadd.f32 %v835, %v1171
      %v1438 = vadd.f32 %v836, %v1175
      %v1439 = vadd.f32 %v837, %v1177
      %v1440 = vadd.f32 %v838, %v1179
      %v1441 = vadd.f32 %v839, %v1178
      %v1442 = vadd.f32 %v840, %v1182
      %v1443 = vadd.f32 %v841, %v1184
      %v1444 = vadd.f32 %v842, %v1186
      %v1445 = vadd.f32 %v843, %v1185
      %v1446 = vadd.f32 %v844, %v1189
      %v1447 = vadd.f32 %v845, %v1191
      %v1448 = vadd.f32 %v846, %v1193
      %v1449 = vadd.f32 %v847, %v1192
      %v1450 = vadd.f32 %v848, %v1196
      %v1451 = vadd.f32 %v849, %v1198
      %v1452 = vadd.f32 %v850, %v1200
      %v1453 = vadd.f32 %v851, %v1199
      %v1454 = vadd.f32 %v852, %v1203
      %v1455 = vadd.f32 %v853, %v1205
      %v1456 = vadd.f32 %v854, %v1207
      %v1457 = vadd.f32 %v855, %v1206
      %v1458 = vadd.f32 %v856, %v1210
      %v1459 = vadd.f32 %v857, %v1212
      %v1460 = vadd.f32 %v858, %v1214
      %v1461 = vadd.f32 %v859, %v1213
      %v1462 = vadd.f32 %v860, %v1217
      %v1463 = vadd.f32 %v861, %v1219
      %v1464 = vadd.f32 %v862, %v1221
      %v1465 = vadd.f32 %v863, %v1220
      %v1466 = vadd.f32 %v864, %v1224
      %v1467 = vadd.f32 %v865, %v1226
      %v1468 = vadd.f32 %v866, %v1228
      %v1469 = vadd.f32 %v867, %v1227
      %v1470 = vadd.f32 %v868, %v1231
      %v1471 = vadd.f32 %v869, %v1233
      %v1472 = vadd.f32 %v870, %v1235
      %v1473 = vadd.f32 %v871, %v1234
      %v1474 = vadd.f32 %v872, %v1238
      %v1475 = vadd.f32 %v873, %v1240
      %v1476 = vadd.f32 %v874, %v1242
      %v1477 = vadd.f32 %v875, %v1241
      %v1478 = vadd.f32 %v876, %v1245
      %v1479 = vadd.f32 %v877, %v1247
      %v1480 = vadd.f32 %v878, %v1249
      %v1481 = vadd.f32 %v879, %v1248
      %v1482 = vadd.f32 %v880, %v1252
      %v1483 = vadd.f32 %v881, %v1254
      %v1484 = vadd.f32 %v882, %v1256
      %v1485 = vadd.f32 %v883, %v1255
      %v1486 = vadd.f32 %v884, %v1259
      %v1487 = vadd.f32 %v885, %v1261
      %v1488 = vadd.f32 %v886, %v1263
      %v1489 = vadd.f32 %v887, %v1262
      %v1490 = vadd.f32 %v888, %v1266
      %v1491 = vadd.f32 %v889, %v1268
      %v1492 = vadd.f32 %v890, %v1270
      %v1493 = vadd.f32 %v891, %v1269
      %v1494 = vadd.f32 %v892, %v1273
      %v1495 = vadd.f32 %v893, %v1275
      %v1496 = vadd.f32 %v894, %v1277
      %v1497 = vadd.f32 %v895, %v1276
      %v1498 = vadd.f32 %v896, %v1280
      %v1499 = vadd.f32 %v897, %v1282
      %v1500 = vadd.f32 %v898, %v1284
      %v1501 = vadd.f32 %v899, %v1283
      %v1502 = vadd.f32 %v900, %v1287
      %v1503 = vadd.f32 %v901, %v1289
      %v1504 = vadd.f32 %v902, %v1291
      %v1505 = vadd.f32 %v903, %v1290
      %v1506 = vadd.f32 %v904, %v1294
      %v1507 = vadd.f32 %v905, %v1296
      %v1508 = vadd.f32 %v906, %v1298
      %v1509 = vadd.f32 %v907, %v1297
      %v1510 = vadd.f32 %v908, %v1301
      %v1511 = vadd.f32 %v909, %v1303
      %v1512 = vadd.f32 %v910, %v1305
      %v1513 = vadd.f32 %v911, %v1304
      %s1514 = sadd.s32 %s199, 18
      %s1515 = sld [smem:[#allocation4 + %s1514]]
      %v1516 = vstv %s1515
      %v1517 = vmul.f32 %v90, %v1516
      %v1518 = vmul.f32 %v91, %v1516
      %v1519 = vmul.f32 %v92, %v1516
      %v1520 = vmul.f32 %v93, %v1516
      %v1521 = vmul.f32 %v94, %v1516
      %v1522 = vmul.f32 %v95, %v1516
      %v1523 = vmul.f32 %v96, %v1516
      %v1524 = vmul.f32 %v97, %v1516
      %v1525 = vmul.f32 %v98, %v1516
      %v1526 = vmul.f32 %v99, %v1516
      %v1527 = vmul.f32 %v100, %v1516
      %v1528 = vmul.f32 %v101, %v1516
      %v1529 = vmul.f32 %v102, %v1516
      %v1530 = vmul.f32 %v103, %v1516
      %v1531 = vmul.f32 %v104, %v1516
      %v1532 = vmul.f32 %v105, %v1516
      %v1533 = vmul.f32 %v106, %v1516
      %v1534 = vmul.f32 %v107, %v1516
      %v1535 = vmul.f32 %v108, %v1516
      %v1536 = vmul.f32 %v109, %v1516
      %v1537 = vmul.f32 %v110, %v1516
      %v1538 = vmul.f32 %v111, %v1516
      %v1539 = vmul.f32 %v112, %v1516
      %v1540 = vmul.f32 %v113, %v1516
      %v1541 = vmul.f32 %v114, %v1516
      %v1542 = vmul.f32 %v115, %v1516
      %v1543 = vmul.f32 %v116, %v1516
      %v1544 = vmul.f32 %v117, %v1516
      %v1545 = vmul.f32 %v118, %v1516
      %v1546 = vmul.f32 %v119, %v1516
      %v1547 = vmul.f32 %v120, %v1516
      %v1548 = vmul.f32 %v121, %v1516
      %v1549 = vmul.f32 %v122, %v1516
      %v1550 = vmul.f32 %v123, %v1516
      %v1551 = vmul.f32 %v124, %v1516
      %v1552 = vmul.f32 %v125, %v1516
      %v1553 = vmul.f32 %v126, %v1516
      %v1554 = vmul.f32 %v127, %v1516
      %v1555 = vmul.f32 %v128, %v1516
      %v1556 = vmul.f32 %v129, %v1516
      %v1557 = vmul.f32 %v130, %v1516
      %v1558 = vmul.f32 %v131, %v1516
      %v1559 = vmul.f32 %v132, %v1516
      %v1560 = vmul.f32 %v133, %v1516
      %v1561 = vmul.f32 %v134, %v1516
      %v1562 = vmul.f32 %v135, %v1516
      %v1563 = vmul.f32 %v136, %v1516
      %v1564 = vmul.f32 %v137, %v1516
      %v1565 = vmul.f32 %v138, %v1516
      %v1566 = vmul.f32 %v139, %v1516
      %v1567 = vmul.f32 %v140, %v1516
      %v1568 = vmul.f32 %v141, %v1516
      %v1569 = vmul.f32 %v142, %v1516
      %v1570 = vmul.f32 %v143, %v1516
      %v1571 = vmul.f32 %v144, %v1516
      %v1572 = vmul.f32 %v145, %v1516
      %v1573 = vmul.f32 %v146, %v1516
      %v1574 = vmul.f32 %v147, %v1516
      %v1575 = vmul.f32 %v148, %v1516
      %v1576 = vmul.f32 %v149, %v1516
      %v1577 = vmul.f32 %v150, %v1516
      %v1578 = vmul.f32 %v151, %v1516
      %v1579 = vmul.f32 %v152, %v1516
      %v1580 = vmul.f32 %v153, %v1516
      %v1581 = vmul.f32 %v154, %v1516
      %v1582 = vmul.f32 %v155, %v1516
      %v1583 = vmul.f32 %v156, %v1516
      %v1584 = vmul.f32 %v157, %v1516
      %v1585 = vmul.f32 %v158, %v1516
      %v1586 = vmul.f32 %v159, %v1516
      %v1587 = vmul.f32 %v160, %v1516
      %v1588 = vmul.f32 %v161, %v1516
      %v1589 = vmul.f32 %v162, %v1516
      %v1590 = vmul.f32 %v163, %v1516
      %v1591 = vmul.f32 %v164, %v1516
      %v1592 = vmul.f32 %v165, %v1516
      %v1593 = vmul.f32 %v166, %v1516
      %v1594 = vmul.f32 %v167, %v1516
      %v1595 = vmul.f32 %v168, %v1516
      %v1596 = vmul.f32 %v169, %v1516
      %v1597 = vmul.f32 %v170, %v1516
      %v1598 = vmul.f32 %v171, %v1516
      %v1599 = vmul.f32 %v172, %v1516
      %v1600 = vmul.f32 %v173, %v1516
      %v1601 = vmul.f32 %v174, %v1516
      %v1602 = vmul.f32 %v175, %v1516
      %v1603 = vmul.f32 %v176, %v1516
      %v1604 = vmul.f32 %v177, %v1516
      %v1605 = vmul.f32 %v178, %v1516
      %v1606 = vmul.f32 %v179, %v1516
      %v1607 = vmul.f32 %v180, %v1516
      %v1608 = vmul.f32 %v181, %v1516
      %v1609 = vmul.f32 %v182, %v1516
      %v1610 = vmul.f32 %v183, %v1516
      %v1611 = vmul.f32 %v184, %v1516
      %v1612 = vmul.f32 %v185, %v1516
      %v1613 = vmul.f32 %v186, %v1516
      %v1614 = vmul.f32 %v187, %v1516
      %v1615 = vmul.f32 %v188, %v1516
      %v1616 = vmul.f32 %v189, %v1516
      %v1617 = vmul.f32 %v190, %v1516
      %v1618 = vmul.f32 %v191, %v1516
      %v1619 = vmul.f32 %v192, %v1516
      %v1620 = vmul.f32 %v193, %v1516
      %v1621 = vadd.f32 %v1410, %v1517
      %v1622 = vadd.f32 %v1411, %v1518
      %v1623 = vadd.f32 %v1412, %v1519
      %v1624 = vadd.f32 %v1413, %v1520
      %v1625 = vadd.f32 %v1414, %v1521
      %v1626 = vadd.f32 %v1415, %v1522
      %v1627 = vadd.f32 %v1416, %v1523
      %v1628 = vadd.f32 %v1417, %v1524
      %v1629 = vadd.f32 %v1418, %v1525
      %v1630 = vadd.f32 %v1419, %v1526
      %v1631 = vadd.f32 %v1420, %v1527
      %v1632 = vadd.f32 %v1421, %v1528
      %v1633 = vadd.f32 %v1422, %v1529
      %v1634 = vadd.f32 %v1423, %v1530
      %v1635 = vadd.f32 %v1424, %v1531
      %v1636 = vadd.f32 %v1425, %v1532
      %v1637 = vadd.f32 %v1426, %v1533
      %v1638 = vadd.f32 %v1427, %v1534
      %v1639 = vadd.f32 %v1428, %v1535
      %v1640 = vadd.f32 %v1429, %v1536
      %v1641 = vadd.f32 %v1430, %v1537
      %v1642 = vadd.f32 %v1431, %v1538
      %v1643 = vadd.f32 %v1432, %v1539
      %v1644 = vadd.f32 %v1433, %v1540
      %v1645 = vadd.f32 %v1434, %v1541
      %v1646 = vadd.f32 %v1435, %v1542
      %v1647 = vadd.f32 %v1436, %v1543
      %v1648 = vadd.f32 %v1437, %v1544
      %v1649 = vadd.f32 %v1438, %v1545
      %v1650 = vadd.f32 %v1439, %v1546
      %v1651 = vadd.f32 %v1440, %v1547
      %v1652 = vadd.f32 %v1441, %v1548
      %v1653 = vadd.f32 %v1442, %v1549
      %v1654 = vadd.f32 %v1443, %v1550
      %v1655 = vadd.f32 %v1444, %v1551
      %v1656 = vadd.f32 %v1445, %v1552
      %v1657 = vadd.f32 %v1446, %v1553
      %v1658 = vadd.f32 %v1447, %v1554
      %v1659 = vadd.f32 %v1448, %v1555
      %v1660 = vadd.f32 %v1449, %v1556
      %v1661 = vadd.f32 %v1450, %v1557
      %v1662 = vadd.f32 %v1451, %v1558
      %v1663 = vadd.f32 %v1452, %v1559
      %v1664 = vadd.f32 %v1453, %v1560
      %v1665 = vadd.f32 %v1454, %v1561
      %v1666 = vadd.f32 %v1455, %v1562
      %v1667 = vadd.f32 %v1456, %v1563
      %v1668 = vadd.f32 %v1457, %v1564
      %v1669 = vadd.f32 %v1458, %v1565
      %v1670 = vadd.f32 %v1459, %v1566
      %v1671 = vadd.f32 %v1460, %v1567
      %v1672 = vadd.f32 %v1461, %v1568
      %v1673 = vadd.f32 %v1462, %v1569
      %v1674 = vadd.f32 %v1463, %v1570
      %v1675 = vadd.f32 %v1464, %v1571
      %v1676 = vadd.f32 %v1465, %v1572
      %v1677 = vadd.f32 %v1466, %v1573
      %v1678 = vadd.f32 %v1467, %v1574
      %v1679 = vadd.f32 %v1468, %v1575
      %v1680 = vadd.f32 %v1469, %v1576
      %v1681 = vadd.f32 %v1470, %v1577
      %v1682 = vadd.f32 %v1471, %v1578
      %v1683 = vadd.f32 %v1472, %v1579
      %v1684 = vadd.f32 %v1473, %v1580
      %v1685 = vadd.f32 %v1474, %v1581
      %v1686 = vadd.f32 %v1475, %v1582
      %v1687 = vadd.f32 %v1476, %v1583
      %v1688 = vadd.f32 %v1477, %v1584
      %v1689 = vadd.f32 %v1478, %v1585
      %v1690 = vadd.f32 %v1479, %v1586
      %v1691 = vadd.f32 %v1480, %v1587
      %v1692 = vadd.f32 %v1481, %v1588
      %v1693 = vadd.f32 %v1482, %v1589
      %v1694 = vadd.f32 %v1483, %v1590
      %v1695 = vadd.f32 %v1484, %v1591
      %v1696 = vadd.f32 %v1485, %v1592
      %v1697 = vadd.f32 %v1486, %v1593
      %v1698 = vadd.f32 %v1487, %v1594
      %v1699 = vadd.f32 %v1488, %v1595
      %v1700 = vadd.f32 %v1489, %v1596
      %v1701 = vadd.f32 %v1490, %v1597
      %v1702 = vadd.f32 %v1491, %v1598
      %v1703 = vadd.f32 %v1492, %v1599
      %v1704 = vadd.f32 %v1493, %v1600
      %v1705 = vadd.f32 %v1494, %v1601
      %v1706 = vadd.f32 %v1495, %v1602
      %v1707 = vadd.f32 %v1496, %v1603
      %v1708 = vadd.f32 %v1497, %v1604
      %v1709 = vadd.f32 %v1498, %v1605
      %v1710 = vadd.f32 %v1499, %v1606
      %v1711 = vadd.f32 %v1500, %v1607
      %v1712 = vadd.f32 %v1501, %v1608
      %v1713 = vadd.f32 %v1502, %v1609
      %v1714 = vadd.f32 %v1503, %v1610
      %v1715 = vadd.f32 %v1504, %v1611
      %v1716 = vadd.f32 %v1505, %v1612
      %v1717 = vadd.f32 %v1506, %v1613
      %v1718 = vadd.f32 %v1507, %v1614
      %v1719 = vadd.f32 %v1508, %v1615
      %v1720 = vadd.f32 %v1509, %v1616
      %v1721 = vadd.f32 %v1510, %v1617
      %v1722 = vadd.f32 %v1511, %v1618
      %v1723 = vadd.f32 %v1512, %v1619
      %v1724 = vadd.f32 %v1513, %v1620
      %s1725 = sadd.s32 %s199, 24
      %s1726 = sld [smem:[#allocation4 + %s1725]]
      %v1727 = vstv %s1726
      %v1728 = vmul.f32 %v90, %v1727
      %v1729 = vmul.f32 %v91, %v1727
      %v1730 = vmul.f32 %v92, %v1727
      %v1731 = vmul.f32 %v93, %v1727
      %v1732 = vmul.f32 %v94, %v1727
      %v1733 = vmul.f32 %v95, %v1727
      %v1734 = vmul.f32 %v96, %v1727
      %v1735 = vmul.f32 %v97, %v1727
      %v1736 = vmul.f32 %v98, %v1727
      %v1737 = vmul.f32 %v99, %v1727
      %v1738 = vmul.f32 %v100, %v1727
      %v1739 = vmul.f32 %v101, %v1727
      %v1740 = vmul.f32 %v102, %v1727
      %v1741 = vmul.f32 %v103, %v1727
      %v1742 = vmul.f32 %v104, %v1727
      %v1743 = vmul.f32 %v105, %v1727
      %v1744 = vmul.f32 %v106, %v1727
      %v1745 = vmul.f32 %v107, %v1727
      %v1746 = vmul.f32 %v108, %v1727
      %v1747 = vmul.f32 %v109, %v1727
      %v1748 = vmul.f32 %v110, %v1727
      %v1749 = vmul.f32 %v111, %v1727
      %v1750 = vmul.f32 %v112, %v1727
      %v1751 = vmul.f32 %v113, %v1727
      %v1752 = vmul.f32 %v114, %v1727
      %v1753 = vmul.f32 %v115, %v1727
      %v1754 = vmul.f32 %v116, %v1727
      %v1755 = vmul.f32 %v117, %v1727
      %v1756 = vmul.f32 %v118, %v1727
      %v1757 = vmul.f32 %v119, %v1727
      %v1758 = vmul.f32 %v120, %v1727
      %v1759 = vmul.f32 %v121, %v1727
      %v1760 = vmul.f32 %v122, %v1727
      %v1761 = vmul.f32 %v123, %v1727
      %v1762 = vmul.f32 %v124, %v1727
      %v1763 = vmul.f32 %v125, %v1727
      %v1764 = vmul.f32 %v126, %v1727
      %v1765 = vmul.f32 %v127, %v1727
      %v1766 = vmul.f32 %v128, %v1727
      %v1767 = vmul.f32 %v129, %v1727
      %v1768 = vmul.f32 %v130, %v1727
      %v1769 = vmul.f32 %v131, %v1727
      %v1770 = vmul.f32 %v132, %v1727
      %v1771 = vmul.f32 %v133, %v1727
      %v1772 = vmul.f32 %v134, %v1727
      %v1773 = vmul.f32 %v135, %v1727
      %v1774 = vmul.f32 %v136, %v1727
      %v1775 = vmul.f32 %v137, %v1727
      %v1776 = vmul.f32 %v138, %v1727
      %v1777 = vmul.f32 %v139, %v1727
      %v1778 = vmul.f32 %v140, %v1727
      %v1779 = vmul.f32 %v141, %v1727
      %v1780 = vmul.f32 %v142, %v1727
      %v1781 = vmul.f32 %v143, %v1727
      %v1782 = vmul.f32 %v144, %v1727
      %v1783 = vmul.f32 %v145, %v1727
      %v1784 = vmul.f32 %v146, %v1727
      %v1785 = vmul.f32 %v147, %v1727
      %v1786 = vmul.f32 %v148, %v1727
      %v1787 = vmul.f32 %v149, %v1727
      %v1788 = vmul.f32 %v150, %v1727
      %v1789 = vmul.f32 %v151, %v1727
      %v1790 = vmul.f32 %v152, %v1727
      %v1791 = vmul.f32 %v153, %v1727
      %v1792 = vmul.f32 %v154, %v1727
      %v1793 = vmul.f32 %v155, %v1727
      %v1794 = vmul.f32 %v156, %v1727
      %v1795 = vmul.f32 %v157, %v1727
      %v1796 = vmul.f32 %v158, %v1727
      %v1797 = vmul.f32 %v159, %v1727
      %v1798 = vmul.f32 %v160, %v1727
      %v1799 = vmul.f32 %v161, %v1727
      %v1800 = vmul.f32 %v162, %v1727
      %v1801 = vmul.f32 %v163, %v1727
      %v1802 = vmul.f32 %v164, %v1727
      %v1803 = vmul.f32 %v165, %v1727
      %v1804 = vmul.f32 %v166, %v1727
      %v1805 = vmul.f32 %v167, %v1727
      %v1806 = vmul.f32 %v168, %v1727
      %v1807 = vmul.f32 %v169, %v1727
      %v1808 = vmul.f32 %v170, %v1727
      %v1809 = vmul.f32 %v171, %v1727
      %v1810 = vmul.f32 %v172, %v1727
      %v1811 = vmul.f32 %v173, %v1727
      %v1812 = vmul.f32 %v174, %v1727
      %v1813 = vmul.f32 %v175, %v1727
      %v1814 = vmul.f32 %v176, %v1727
      %v1815 = vmul.f32 %v177, %v1727
      %v1816 = vmul.f32 %v178, %v1727
      %v1817 = vmul.f32 %v179, %v1727
      %v1818 = vmul.f32 %v180, %v1727
      %v1819 = vmul.f32 %v181, %v1727
      %v1820 = vmul.f32 %v182, %v1727
      %v1821 = vmul.f32 %v183, %v1727
      %v1822 = vmul.f32 %v184, %v1727
      %v1823 = vmul.f32 %v185, %v1727
      %v1824 = vmul.f32 %v186, %v1727
      %v1825 = vmul.f32 %v187, %v1727
      %v1826 = vmul.f32 %v188, %v1727
      %v1827 = vmul.f32 %v189, %v1727
      %v1828 = vmul.f32 %v190, %v1727
      %v1829 = vmul.f32 %v191, %v1727
      %v1830 = vmul.f32 %v192, %v1727
      %v1831 = vmul.f32 %v193, %v1727
      %v1936 = vrot.slane %v1728, 1
      %v1937 = vrot.slane %v1729, 1
      %v1938 = vsel %vm521, %v1936, %v1937
      %v1939 = vrot.slane %v1730, 1
      %v1940 = vsel %vm521, %v1937, %v1939
      %v1941 = vrot.slane %v1731, 1
      %v1942 = vsel %vm521, %v1939, %v1941
      %v1943 = vrot.slane %v1732, 1
      %v1944 = vrot.slane %v1733, 1
      %v1945 = vsel %vm521, %v1943, %v1944
      %v1946 = vrot.slane %v1734, 1
      %v1947 = vsel %vm521, %v1944, %v1946
      %v1948 = vrot.slane %v1735, 1
      %v1949 = vsel %vm521, %v1946, %v1948
      %v1950 = vrot.slane %v1736, 1
      %v1951 = vrot.slane %v1737, 1
      %v1952 = vsel %vm521, %v1950, %v1951
      %v1953 = vrot.slane %v1738, 1
      %v1954 = vsel %vm521, %v1951, %v1953
      %v1955 = vrot.slane %v1739, 1
      %v1956 = vsel %vm521, %v1953, %v1955
      %v1957 = vrot.slane %v1740, 1
      %v1958 = vrot.slane %v1741, 1
      %v1959 = vsel %vm521, %v1957, %v1958
      %v1960 = vrot.slane %v1742, 1
      %v1961 = vsel %vm521, %v1958, %v1960
      %v1962 = vrot.slane %v1743, 1
      %v1963 = vsel %vm521, %v1960, %v1962
      %v1964 = vrot.slane %v1744, 1
      %v1965 = vrot.slane %v1745, 1
      %v1966 = vsel %vm521, %v1964, %v1965
      %v1967 = vrot.slane %v1746, 1
      %v1968 = vsel %vm521, %v1965, %v1967
      %v1969 = vrot.slane %v1747, 1
      %v1970 = vsel %vm521, %v1967, %v1969
      %v1971 = vrot.slane %v1748, 1
      %v1972 = vrot.slane %v1749, 1
      %v1973 = vsel %vm521, %v1971, %v1972
      %v1974 = vrot.slane %v1750, 1
      %v1975 = vsel %vm521, %v1972, %v1974
      %v1976 = vrot.slane %v1751, 1
      %v1977 = vsel %vm521, %v1974, %v1976
      %v1978 = vrot.slane %v1752, 1
      %v1979 = vrot.slane %v1753, 1
      %v1980 = vsel %vm521, %v1978, %v1979
      %v1981 = vrot.slane %v1754, 1
      %v1982 = vsel %vm521, %v1979, %v1981
      %v1983 = vrot.slane %v1755, 1
      %v1984 = vsel %vm521, %v1981, %v1983
      %v1985 = vrot.slane %v1756, 1
      %v1986 = vrot.slane %v1757, 1
      %v1987 = vsel %vm521, %v1985, %v1986
      %v1988 = vrot.slane %v1758, 1
      %v1989 = vsel %vm521, %v1986, %v1988
      %v1990 = vrot.slane %v1759, 1
      %v1991 = vsel %vm521, %v1988, %v1990
      %v1992 = vrot.slane %v1760, 1
      %v1993 = vrot.slane %v1761, 1
      %v1994 = vsel %vm521, %v1992, %v1993
      %v1995 = vrot.slane %v1762, 1
      %v1996 = vsel %vm521, %v1993, %v1995
      %v1997 = vrot.slane %v1763, 1
      %v1998 = vsel %vm521, %v1995, %v1997
      %v1999 = vrot.slane %v1764, 1
      %v2000 = vrot.slane %v1765, 1
      %v2001 = vsel %vm521, %v1999, %v2000
      %v2002 = vrot.slane %v1766, 1
      %v2003 = vsel %vm521, %v2000, %v2002
      %v2004 = vrot.slane %v1767, 1
      %v2005 = vsel %vm521, %v2002, %v2004
      %v2006 = vrot.slane %v1768, 1
      %v2007 = vrot.slane %v1769, 1
      %v2008 = vsel %vm521, %v2006, %v2007
      %v2009 = vrot.slane %v1770, 1
      %v2010 = vsel %vm521, %v2007, %v2009
      %v2011 = vrot.slane %v1771, 1
      %v2012 = vsel %vm521, %v2009, %v2011
      %v2013 = vrot.slane %v1772, 1
      %v2014 = vrot.slane %v1773, 1
      %v2015 = vsel %vm521, %v2013, %v2014
      %v2016 = vrot.slane %v1774, 1
      %v2017 = vsel %vm521, %v2014, %v2016
      %v2018 = vrot.slane %v1775, 1
      %v2019 = vsel %vm521, %v2016, %v2018
      %v2020 = vrot.slane %v1776, 1
      %v2021 = vrot.slane %v1777, 1
      %v2022 = vsel %vm521, %v2020, %v2021
      %v2023 = vrot.slane %v1778, 1
      %v2024 = vsel %vm521, %v2021, %v2023
      %v2025 = vrot.slane %v1779, 1
      %v2026 = vsel %vm521, %v2023, %v2025
      %v2027 = vrot.slane %v1780, 1
      %v2028 = vrot.slane %v1781, 1
      %v2029 = vsel %vm521, %v2027, %v2028
      %v2030 = vrot.slane %v1782, 1
      %v2031 = vsel %vm521, %v2028, %v2030
      %v2032 = vrot.slane %v1783, 1
      %v2033 = vsel %vm521, %v2030, %v2032
      %v2034 = vrot.slane %v1784, 1
      %v2035 = vrot.slane %v1785, 1
      %v2036 = vsel %vm521, %v2034, %v2035
      %v2037 = vrot.slane %v1786, 1
      %v2038 = vsel %vm521, %v2035, %v2037
      %v2039 = vrot.slane %v1787, 1
      %v2040 = vsel %vm521, %v2037, %v2039
      %v2041 = vrot.slane %v1788, 1
      %v2042 = vrot.slane %v1789, 1
      %v2043 = vsel %vm521, %v2041, %v2042
      %v2044 = vrot.slane %v1790, 1
      %v2045 = vsel %vm521, %v2042, %v2044
      %v2046 = vrot.slane %v1791, 1
      %v2047 = vsel %vm521, %v2044, %v2046
      %v2048 = vrot.slane %v1792, 1
      %v2049 = vrot.slane %v1793, 1
      %v2050 = vsel %vm521, %v2048, %v2049
      %v2051 = vrot.slane %v1794, 1
      %v2052 = vsel %vm521, %v2049, %v2051
      %v2053 = vrot.slane %v1795, 1
      %v2054 = vsel %vm521, %v2051, %v2053
      %v2055 = vrot.slane %v1796, 1
      %v2056 = vrot.slane %v1797, 1
      %v2057 = vsel %vm521, %v2055, %v2056
      %v2058 = vrot.slane %v1798, 1
      %v2059 = vsel %vm521, %v2056, %v2058
      %v2060 = vrot.slane %v1799, 1
      %v2061 = vsel %vm521, %v2058, %v2060
      %v2062 = vrot.slane %v1800, 1
      %v2063 = vrot.slane %v1801, 1
      %v2064 = vsel %vm521, %v2062, %v2063
      %v2065 = vrot.slane %v1802, 1
      %v2066 = vsel %vm521, %v2063, %v2065
      %v2067 = vrot.slane %v1803, 1
      %v2068 = vsel %vm521, %v2065, %v2067
      %v2069 = vrot.slane %v1804, 1
      %v2070 = vrot.slane %v1805, 1
      %v2071 = vsel %vm521, %v2069, %v2070
      %v2072 = vrot.slane %v1806, 1
      %v2073 = vsel %vm521, %v2070, %v2072
      %v2074 = vrot.slane %v1807, 1
      %v2075 = vsel %vm521, %v2072, %v2074
      %v2076 = vrot.slane %v1808, 1
      %v2077 = vrot.slane %v1809, 1
      %v2078 = vsel %vm521, %v2076, %v2077
      %v2079 = vrot.slane %v1810, 1
      %v2080 = vsel %vm521, %v2077, %v2079
      %v2081 = vrot.slane %v1811, 1
      %v2082 = vsel %vm521, %v2079, %v2081
      %v2083 = vrot.slane %v1812, 1
      %v2084 = vrot.slane %v1813, 1
      %v2085 = vsel %vm521, %v2083, %v2084
      %v2086 = vrot.slane %v1814, 1
      %v2087 = vsel %vm521, %v2084, %v2086
      %v2088 = vrot.slane %v1815, 1
      %v2089 = vsel %vm521, %v2086, %v2088
      %v2090 = vrot.slane %v1816, 1
      %v2091 = vrot.slane %v1817, 1
      %v2092 = vsel %vm521, %v2090, %v2091
      %v2093 = vrot.slane %v1818, 1
      %v2094 = vsel %vm521, %v2091, %v2093
      %v2095 = vrot.slane %v1819, 1
      %v2096 = vsel %vm521, %v2093, %v2095
      %v2097 = vrot.slane %v1820, 1
      %v2098 = vrot.slane %v1821, 1
      %v2099 = vsel %vm521, %v2097, %v2098
      %v2100 = vrot.slane %v1822, 1
      %v2101 = vsel %vm521, %v2098, %v2100
      %v2102 = vrot.slane %v1823, 1
      %v2103 = vsel %vm521, %v2100, %v2102
      %v2104 = vrot.slane %v1824, 1
      %v2105 = vrot.slane %v1825, 1
      %v2106 = vsel %vm521, %v2104, %v2105
      %v2107 = vrot.slane %v1826, 1
      %v2108 = vsel %vm521, %v2105, %v2107
      %v2109 = vrot.slane %v1827, 1
      %v2110 = vsel %vm521, %v2107, %v2109
      %v2111 = vrot.slane %v1828, 1
      %v2112 = vrot.slane %v1829, 1
      %v2113 = vsel %vm521, %v2111, %v2112
      %v2114 = vrot.slane %v1830, 1
      %v2115 = vsel %vm521, %v2112, %v2114
      %v2116 = vrot.slane %v1831, 1
      %v2117 = vsel %vm521, %v2114, %v2116
      %v2222 = vadd.f32 %v1621, %v1938
      %v2223 = vadd.f32 %v1622, %v1940
      %v2224 = vadd.f32 %v1623, %v1942
      %v2225 = vadd.f32 %v1624, %v1941
      %v2226 = vadd.f32 %v1625, %v1945
      %v2227 = vadd.f32 %v1626, %v1947
      %v2228 = vadd.f32 %v1627, %v1949
      %v2229 = vadd.f32 %v1628, %v1948
      %v2230 = vadd.f32 %v1629, %v1952
      %v2231 = vadd.f32 %v1630, %v1954
      %v2232 = vadd.f32 %v1631, %v1956
      %v2233 = vadd.f32 %v1632, %v1955
      %v2234 = vadd.f32 %v1633, %v1959
      %v2235 = vadd.f32 %v1634, %v1961
      %v2236 = vadd.f32 %v1635, %v1963
      %v2237 = vadd.f32 %v1636, %v1962
      %v2238 = vadd.f32 %v1637, %v1966
      %v2239 = vadd.f32 %v1638, %v1968
      %v2240 = vadd.f32 %v1639, %v1970
      %v2241 = vadd.f32 %v1640, %v1969
      %v2242 = vadd.f32 %v1641, %v1973
      %v2243 = vadd.f32 %v1642, %v1975
      %v2244 = vadd.f32 %v1643, %v1977
      %v2245 = vadd.f32 %v1644, %v1976
      %v2246 = vadd.f32 %v1645, %v1980
      %v2247 = vadd.f32 %v1646, %v1982
      %v2248 = vadd.f32 %v1647, %v1984
      %v2249 = vadd.f32 %v1648, %v1983
      %v2250 = vadd.f32 %v1649, %v1987
      %v2251 = vadd.f32 %v1650, %v1989
      %v2252 = vadd.f32 %v1651, %v1991
      %v2253 = vadd.f32 %v1652, %v1990
      %v2254 = vadd.f32 %v1653, %v1994
      %v2255 = vadd.f32 %v1654, %v1996
      %v2256 = vadd.f32 %v1655, %v1998
      %v2257 = vadd.f32 %v1656, %v1997
      %v2258 = vadd.f32 %v1657, %v2001
      %v2259 = vadd.f32 %v1658, %v2003
      %v2260 = vadd.f32 %v1659, %v2005
      %v2261 = vadd.f32 %v1660, %v2004
      %v2262 = vadd.f32 %v1661, %v2008
      %v2263 = vadd.f32 %v1662, %v2010
      %v2264 = vadd.f32 %v1663, %v2012
      %v2265 = vadd.f32 %v1664, %v2011
      %v2266 = vadd.f32 %v1665, %v2015
      %v2267 = vadd.f32 %v1666, %v2017
      %v2268 = vadd.f32 %v1667, %v2019
      %v2269 = vadd.f32 %v1668, %v2018
      %v2270 = vadd.f32 %v1669, %v2022
      %v2271 = vadd.f32 %v1670, %v2024
      %v2272 = vadd.f32 %v1671, %v2026
      %v2273 = vadd.f32 %v1672, %v2025
      %v2274 = vadd.f32 %v1673, %v2029
      %v2275 = vadd.f32 %v1674, %v2031
      %v2276 = vadd.f32 %v1675, %v2033
      %v2277 = vadd.f32 %v1676, %v2032
      %v2278 = vadd.f32 %v1677, %v2036
      %v2279 = vadd.f32 %v1678, %v2038
      %v2280 = vadd.f32 %v1679, %v2040
      %v2281 = vadd.f32 %v1680, %v2039
      %v2282 = vadd.f32 %v1681, %v2043
      %v2283 = vadd.f32 %v1682, %v2045
      %v2284 = vadd.f32 %v1683, %v2047
      %v2285 = vadd.f32 %v1684, %v2046
      %v2286 = vadd.f32 %v1685, %v2050
      %v2287 = vadd.f32 %v1686, %v2052
      %v2288 = vadd.f32 %v1687, %v2054
      %v2289 = vadd.f32 %v1688, %v2053
      %v2290 = vadd.f32 %v1689, %v2057
      %v2291 = vadd.f32 %v1690, %v2059
      %v2292 = vadd.f32 %v1691, %v2061
      %v2293 = vadd.f32 %v1692, %v2060
      %v2294 = vadd.f32 %v1693, %v2064
      %v2295 = vadd.f32 %v1694, %v2066
      %v2296 = vadd.f32 %v1695, %v2068
      %v2297 = vadd.f32 %v1696, %v2067
      %v2298 = vadd.f32 %v1697, %v2071
      %v2299 = vadd.f32 %v1698, %v2073
      %v2300 = vadd.f32 %v1699, %v2075
      %v2301 = vadd.f32 %v1700, %v2074
      %v2302 = vadd.f32 %v1701, %v2078
      %v2303 = vadd.f32 %v1702, %v2080
      %v2304 = vadd.f32 %v1703, %v2082
      %v2305 = vadd.f32 %v1704, %v2081
      %v2306 = vadd.f32 %v1705, %v2085
      %v2307 = vadd.f32 %v1706, %v2087
      %v2308 = vadd.f32 %v1707, %v2089
      %v2309 = vadd.f32 %v1708, %v2088
      %v2310 = vadd.f32 %v1709, %v2092
      %v2311 = vadd.f32 %v1710, %v2094
      %v2312 = vadd.f32 %v1711, %v2096
      %v2313 = vadd.f32 %v1712, %v2095
      %v2314 = vadd.f32 %v1713, %v2099
      %v2315 = vadd.f32 %v1714, %v2101
      %v2316 = vadd.f32 %v1715, %v2103
      %v2317 = vadd.f32 %v1716, %v2102
      %v2318 = vadd.f32 %v1717, %v2106
      %v2319 = vadd.f32 %v1718, %v2108
      %v2320 = vadd.f32 %v1719, %v2110
      %v2321 = vadd.f32 %v1720, %v2109
      %v2322 = vadd.f32 %v1721, %v2113
      %v2323 = vadd.f32 %v1722, %v2115
      %v2324 = vadd.f32 %v1723, %v2117
      %v2325 = vadd.f32 %v1724, %v2116
      %s2326 = sadd.s32 %s199, 30
      %s2327 = sld [smem:[#allocation4 + %s2326]]
      %v2328 = vstv %s2327
      %v2329 = vmul.f32 %v90, %v2328
      %v2330 = vmul.f32 %v91, %v2328
      %v2331 = vmul.f32 %v92, %v2328
      %v2332 = vmul.f32 %v93, %v2328
      %v2333 = vmul.f32 %v94, %v2328
      %v2334 = vmul.f32 %v95, %v2328
      %v2335 = vmul.f32 %v96, %v2328
      %v2336 = vmul.f32 %v97, %v2328
      %v2337 = vmul.f32 %v98, %v2328
      %v2338 = vmul.f32 %v99, %v2328
      %v2339 = vmul.f32 %v100, %v2328
      %v2340 = vmul.f32 %v101, %v2328
      %v2341 = vmul.f32 %v102, %v2328
      %v2342 = vmul.f32 %v103, %v2328
      %v2343 = vmul.f32 %v104, %v2328
      %v2344 = vmul.f32 %v105, %v2328
      %v2345 = vmul.f32 %v106, %v2328
      %v2346 = vmul.f32 %v107, %v2328
      %v2347 = vmul.f32 %v108, %v2328
      %v2348 = vmul.f32 %v109, %v2328
      %v2349 = vmul.f32 %v110, %v2328
      %v2350 = vmul.f32 %v111, %v2328
      %v2351 = vmul.f32 %v112, %v2328
      %v2352 = vmul.f32 %v113, %v2328
      %v2353 = vmul.f32 %v114, %v2328
      %v2354 = vmul.f32 %v115, %v2328
      %v2355 = vmul.f32 %v116, %v2328
      %v2356 = vmul.f32 %v117, %v2328
      %v2357 = vmul.f32 %v118, %v2328
      %v2358 = vmul.f32 %v119, %v2328
      %v2359 = vmul.f32 %v120, %v2328
      %v2360 = vmul.f32 %v121, %v2328
      %v2361 = vmul.f32 %v122, %v2328
      %v2362 = vmul.f32 %v123, %v2328
      %v2363 = vmul.f32 %v124, %v2328
      %v2364 = vmul.f32 %v125, %v2328
      %v2365 = vmul.f32 %v126, %v2328
      %v2366 = vmul.f32 %v127, %v2328
      %v2367 = vmul.f32 %v128, %v2328
      %v2368 = vmul.f32 %v129, %v2328
      %v2369 = vmul.f32 %v130, %v2328
      %v2370 = vmul.f32 %v131, %v2328
      %v2371 = vmul.f32 %v132, %v2328
      %v2372 = vmul.f32 %v133, %v2328
      %v2373 = vmul.f32 %v134, %v2328
      %v2374 = vmul.f32 %v135, %v2328
      %v2375 = vmul.f32 %v136, %v2328
      %v2376 = vmul.f32 %v137, %v2328
      %v2377 = vmul.f32 %v138, %v2328
      %v2378 = vmul.f32 %v139, %v2328
      %v2379 = vmul.f32 %v140, %v2328
      %v2380 = vmul.f32 %v141, %v2328
      %v2381 = vmul.f32 %v142, %v2328
      %v2382 = vmul.f32 %v143, %v2328
      %v2383 = vmul.f32 %v144, %v2328
      %v2384 = vmul.f32 %v145, %v2328
      %v2385 = vmul.f32 %v146, %v2328
      %v2386 = vmul.f32 %v147, %v2328
      %v2387 = vmul.f32 %v148, %v2328
      %v2388 = vmul.f32 %v149, %v2328
      %v2389 = vmul.f32 %v150, %v2328
      %v2390 = vmul.f32 %v151, %v2328
      %v2391 = vmul.f32 %v152, %v2328
      %v2392 = vmul.f32 %v153, %v2328
      %v2393 = vmul.f32 %v154, %v2328
      %v2394 = vmul.f32 %v155, %v2328
      %v2395 = vmul.f32 %v156, %v2328
      %v2396 = vmul.f32 %v157, %v2328
      %v2397 = vmul.f32 %v158, %v2328
      %v2398 = vmul.f32 %v159, %v2328
      %v2399 = vmul.f32 %v160, %v2328
      %v2400 = vmul.f32 %v161, %v2328
      %v2401 = vmul.f32 %v162, %v2328
      %v2402 = vmul.f32 %v163, %v2328
      %v2403 = vmul.f32 %v164, %v2328
      %v2404 = vmul.f32 %v165, %v2328
      %v2405 = vmul.f32 %v166, %v2328
      %v2406 = vmul.f32 %v167, %v2328
      %v2407 = vmul.f32 %v168, %v2328
      %v2408 = vmul.f32 %v169, %v2328
      %v2409 = vmul.f32 %v170, %v2328
      %v2410 = vmul.f32 %v171, %v2328
      %v2411 = vmul.f32 %v172, %v2328
      %v2412 = vmul.f32 %v173, %v2328
      %v2413 = vmul.f32 %v174, %v2328
      %v2414 = vmul.f32 %v175, %v2328
      %v2415 = vmul.f32 %v176, %v2328
      %v2416 = vmul.f32 %v177, %v2328
      %v2417 = vmul.f32 %v178, %v2328
      %v2418 = vmul.f32 %v179, %v2328
      %v2419 = vmul.f32 %v180, %v2328
      %v2420 = vmul.f32 %v181, %v2328
      %v2421 = vmul.f32 %v182, %v2328
      %v2422 = vmul.f32 %v183, %v2328
      %v2423 = vmul.f32 %v184, %v2328
      %v2424 = vmul.f32 %v185, %v2328
      %v2425 = vmul.f32 %v186, %v2328
      %v2426 = vmul.f32 %v187, %v2328
      %v2427 = vmul.f32 %v188, %v2328
      %v2428 = vmul.f32 %v189, %v2328
      %v2429 = vmul.f32 %v190, %v2328
      %v2430 = vmul.f32 %v191, %v2328
      %v2431 = vmul.f32 %v192, %v2328
      %v2432 = vmul.f32 %v193, %v2328
      %v2537 = vrot.slane %v2329, 2
      %v2538 = vrot.slane %v2330, 2
      %v2539 = vsel %vm1123, %v2537, %v2538
      %v2540 = vrot.slane %v2331, 2
      %v2541 = vsel %vm1123, %v2538, %v2540
      %v2542 = vrot.slane %v2332, 2
      %v2543 = vsel %vm1123, %v2540, %v2542
      %v2544 = vrot.slane %v2333, 2
      %v2545 = vrot.slane %v2334, 2
      %v2546 = vsel %vm1123, %v2544, %v2545
      %v2547 = vrot.slane %v2335, 2
      %v2548 = vsel %vm1123, %v2545, %v2547
      %v2549 = vrot.slane %v2336, 2
      %v2550 = vsel %vm1123, %v2547, %v2549
      %v2551 = vrot.slane %v2337, 2
      %v2552 = vrot.slane %v2338, 2
      %v2553 = vsel %vm1123, %v2551, %v2552
      %v2554 = vrot.slane %v2339, 2
      %v2555 = vsel %vm1123, %v2552, %v2554
      %v2556 = vrot.slane %v2340, 2
      %v2557 = vsel %vm1123, %v2554, %v2556
      %v2558 = vrot.slane %v2341, 2
      %v2559 = vrot.slane %v2342, 2
      %v2560 = vsel %vm1123, %v2558, %v2559
      %v2561 = vrot.slane %v2343, 2
      %v2562 = vsel %vm1123, %v2559, %v2561
      %v2563 = vrot.slane %v2344, 2
      %v2564 = vsel %vm1123, %v2561, %v2563
      %v2565 = vrot.slane %v2345, 2
      %v2566 = vrot.slane %v2346, 2
      %v2567 = vsel %vm1123, %v2565, %v2566
      %v2568 = vrot.slane %v2347, 2
      %v2569 = vsel %vm1123, %v2566, %v2568
      %v2570 = vrot.slane %v2348, 2
      %v2571 = vsel %vm1123, %v2568, %v2570
      %v2572 = vrot.slane %v2349, 2
      %v2573 = vrot.slane %v2350, 2
      %v2574 = vsel %vm1123, %v2572, %v2573
      %v2575 = vrot.slane %v2351, 2
      %v2576 = vsel %vm1123, %v2573, %v2575
      %v2577 = vrot.slane %v2352, 2
      %v2578 = vsel %vm1123, %v2575, %v2577
      %v2579 = vrot.slane %v2353, 2
      %v2580 = vrot.slane %v2354, 2
      %v2581 = vsel %vm1123, %v2579, %v2580
      %v2582 = vrot.slane %v2355, 2
      %v2583 = vsel %vm1123, %v2580, %v2582
      %v2584 = vrot.slane %v2356, 2
      %v2585 = vsel %vm1123, %v2582, %v2584
      %v2586 = vrot.slane %v2357, 2
      %v2587 = vrot.slane %v2358, 2
      %v2588 = vsel %vm1123, %v2586, %v2587
      %v2589 = vrot.slane %v2359, 2
      %v2590 = vsel %vm1123, %v2587, %v2589
      %v2591 = vrot.slane %v2360, 2
      %v2592 = vsel %vm1123, %v2589, %v2591
      %v2593 = vrot.slane %v2361, 2
      %v2594 = vrot.slane %v2362, 2
      %v2595 = vsel %vm1123, %v2593, %v2594
      %v2596 = vrot.slane %v2363, 2
      %v2597 = vsel %vm1123, %v2594, %v2596
      %v2598 = vrot.slane %v2364, 2
      %v2599 = vsel %vm1123, %v2596, %v2598
      %v2600 = vrot.slane %v2365, 2
      %v2601 = vrot.slane %v2366, 2
      %v2602 = vsel %vm1123, %v2600, %v2601
      %v2603 = vrot.slane %v2367, 2
      %v2604 = vsel %vm1123, %v2601, %v2603
      %v2605 = vrot.slane %v2368, 2
      %v2606 = vsel %vm1123, %v2603, %v2605
      %v2607 = vrot.slane %v2369, 2
      %v2608 = vrot.slane %v2370, 2
      %v2609 = vsel %vm1123, %v2607, %v2608
      %v2610 = vrot.slane %v2371, 2
      %v2611 = vsel %vm1123, %v2608, %v2610
      %v2612 = vrot.slane %v2372, 2
      %v2613 = vsel %vm1123, %v2610, %v2612
      %v2614 = vrot.slane %v2373, 2
      %v2615 = vrot.slane %v2374, 2
      %v2616 = vsel %vm1123, %v2614, %v2615
      %v2617 = vrot.slane %v2375, 2
      %v2618 = vsel %vm1123, %v2615, %v2617
      %v2619 = vrot.slane %v2376, 2
      %v2620 = vsel %vm1123, %v2617, %v2619
      %v2621 = vrot.slane %v2377, 2
      %v2622 = vrot.slane %v2378, 2
      %v2623 = vsel %vm1123, %v2621, %v2622
      %v2624 = vrot.slane %v2379, 2
      %v2625 = vsel %vm1123, %v2622, %v2624
      %v2626 = vrot.slane %v2380, 2
      %v2627 = vsel %vm1123, %v2624, %v2626
      %v2628 = vrot.slane %v2381, 2
      %v2629 = vrot.slane %v2382, 2
      %v2630 = vsel %vm1123, %v2628, %v2629
      %v2631 = vrot.slane %v2383, 2
      %v2632 = vsel %vm1123, %v2629, %v2631
      %v2633 = vrot.slane %v2384, 2
      %v2634 = vsel %vm1123, %v2631, %v2633
      %v2635 = vrot.slane %v2385, 2
      %v2636 = vrot.slane %v2386, 2
      %v2637 = vsel %vm1123, %v2635, %v2636
      %v2638 = vrot.slane %v2387, 2
      %v2639 = vsel %vm1123, %v2636, %v2638
      %v2640 = vrot.slane %v2388, 2
      %v2641 = vsel %vm1123, %v2638, %v2640
      %v2642 = vrot.slane %v2389, 2
      %v2643 = vrot.slane %v2390, 2
      %v2644 = vsel %vm1123, %v2642, %v2643
      %v2645 = vrot.slane %v2391, 2
      %v2646 = vsel %vm1123, %v2643, %v2645
      %v2647 = vrot.slane %v2392, 2
      %v2648 = vsel %vm1123, %v2645, %v2647
      %v2649 = vrot.slane %v2393, 2
      %v2650 = vrot.slane %v2394, 2
      %v2651 = vsel %vm1123, %v2649, %v2650
      %v2652 = vrot.slane %v2395, 2
      %v2653 = vsel %vm1123, %v2650, %v2652
      %v2654 = vrot.slane %v2396, 2
      %v2655 = vsel %vm1123, %v2652, %v2654
      %v2656 = vrot.slane %v2397, 2
      %v2657 = vrot.slane %v2398, 2
      %v2658 = vsel %vm1123, %v2656, %v2657
      %v2659 = vrot.slane %v2399, 2
      %v2660 = vsel %vm1123, %v2657, %v2659
      %v2661 = vrot.slane %v2400, 2
      %v2662 = vsel %vm1123, %v2659, %v2661
      %v2663 = vrot.slane %v2401, 2
      %v2664 = vrot.slane %v2402, 2
      %v2665 = vsel %vm1123, %v2663, %v2664
      %v2666 = vrot.slane %v2403, 2
      %v2667 = vsel %vm1123, %v2664, %v2666
      %v2668 = vrot.slane %v2404, 2
      %v2669 = vsel %vm1123, %v2666, %v2668
      %v2670 = vrot.slane %v2405, 2
      %v2671 = vrot.slane %v2406, 2
      %v2672 = vsel %vm1123, %v2670, %v2671
      %v2673 = vrot.slane %v2407, 2
      %v2674 = vsel %vm1123, %v2671, %v2673
      %v2675 = vrot.slane %v2408, 2
      %v2676 = vsel %vm1123, %v2673, %v2675
      %v2677 = vrot.slane %v2409, 2
      %v2678 = vrot.slane %v2410, 2
      %v2679 = vsel %vm1123, %v2677, %v2678
      %v2680 = vrot.slane %v2411, 2
      %v2681 = vsel %vm1123, %v2678, %v2680
      %v2682 = vrot.slane %v2412, 2
      %v2683 = vsel %vm1123, %v2680, %v2682
      %v2684 = vrot.slane %v2413, 2
      %v2685 = vrot.slane %v2414, 2
      %v2686 = vsel %vm1123, %v2684, %v2685
      %v2687 = vrot.slane %v2415, 2
      %v2688 = vsel %vm1123, %v2685, %v2687
      %v2689 = vrot.slane %v2416, 2
      %v2690 = vsel %vm1123, %v2687, %v2689
      %v2691 = vrot.slane %v2417, 2
      %v2692 = vrot.slane %v2418, 2
      %v2693 = vsel %vm1123, %v2691, %v2692
      %v2694 = vrot.slane %v2419, 2
      %v2695 = vsel %vm1123, %v2692, %v2694
      %v2696 = vrot.slane %v2420, 2
      %v2697 = vsel %vm1123, %v2694, %v2696
      %v2698 = vrot.slane %v2421, 2
      %v2699 = vrot.slane %v2422, 2
      %v2700 = vsel %vm1123, %v2698, %v2699
      %v2701 = vrot.slane %v2423, 2
      %v2702 = vsel %vm1123, %v2699, %v2701
      %v2703 = vrot.slane %v2424, 2
      %v2704 = vsel %vm1123, %v2701, %v2703
      %v2705 = vrot.slane %v2425, 2
      %v2706 = vrot.slane %v2426, 2
      %v2707 = vsel %vm1123, %v2705, %v2706
      %v2708 = vrot.slane %v2427, 2
      %v2709 = vsel %vm1123, %v2706, %v2708
      %v2710 = vrot.slane %v2428, 2
      %v2711 = vsel %vm1123, %v2708, %v2710
      %v2712 = vrot.slane %v2429, 2
      %v2713 = vrot.slane %v2430, 2
      %v2714 = vsel %vm1123, %v2712, %v2713
      %v2715 = vrot.slane %v2431, 2
      %v2716 = vsel %vm1123, %v2713, %v2715
      %v2717 = vrot.slane %v2432, 2
      %v2718 = vsel %vm1123, %v2715, %v2717
      %v2823 = vadd.f32 %v2222, %v2539
      %v2824 = vadd.f32 %v2223, %v2541
      %v2825 = vadd.f32 %v2224, %v2543
      %v2826 = vadd.f32 %v2225, %v2542
      %v2827 = vadd.f32 %v2226, %v2546
      %v2828 = vadd.f32 %v2227, %v2548
      %v2829 = vadd.f32 %v2228, %v2550
      %v2830 = vadd.f32 %v2229, %v2549
      %v2831 = vadd.f32 %v2230, %v2553
      %v2832 = vadd.f32 %v2231, %v2555
      %v2833 = vadd.f32 %v2232, %v2557
      %v2834 = vadd.f32 %v2233, %v2556
      %v2835 = vadd.f32 %v2234, %v2560
      %v2836 = vadd.f32 %v2235, %v2562
      %v2837 = vadd.f32 %v2236, %v2564
      %v2838 = vadd.f32 %v2237, %v2563
      %v2839 = vadd.f32 %v2238, %v2567
      %v2840 = vadd.f32 %v2239, %v2569
      %v2841 = vadd.f32 %v2240, %v2571
      %v2842 = vadd.f32 %v2241, %v2570
      %v2843 = vadd.f32 %v2242, %v2574
      %v2844 = vadd.f32 %v2243, %v2576
      %v2845 = vadd.f32 %v2244, %v2578
      %v2846 = vadd.f32 %v2245, %v2577
      %v2847 = vadd.f32 %v2246, %v2581
      %v2848 = vadd.f32 %v2247, %v2583
      %v2849 = vadd.f32 %v2248, %v2585
      %v2850 = vadd.f32 %v2249, %v2584
      %v2851 = vadd.f32 %v2250, %v2588
      %v2852 = vadd.f32 %v2251, %v2590
      %v2853 = vadd.f32 %v2252, %v2592
      %v2854 = vadd.f32 %v2253, %v2591
      %v2855 = vadd.f32 %v2254, %v2595
      %v2856 = vadd.f32 %v2255, %v2597
      %v2857 = vadd.f32 %v2256, %v2599
      %v2858 = vadd.f32 %v2257, %v2598
      %v2859 = vadd.f32 %v2258, %v2602
      %v2860 = vadd.f32 %v2259, %v2604
      %v2861 = vadd.f32 %v2260, %v2606
      %v2862 = vadd.f32 %v2261, %v2605
      %v2863 = vadd.f32 %v2262, %v2609
      %v2864 = vadd.f32 %v2263, %v2611
      %v2865 = vadd.f32 %v2264, %v2613
      %v2866 = vadd.f32 %v2265, %v2612
      %v2867 = vadd.f32 %v2266, %v2616
      %v2868 = vadd.f32 %v2267, %v2618
      %v2869 = vadd.f32 %v2268, %v2620
      %v2870 = vadd.f32 %v2269, %v2619
      %v2871 = vadd.f32 %v2270, %v2623
      %v2872 = vadd.f32 %v2271, %v2625
      %v2873 = vadd.f32 %v2272, %v2627
      %v2874 = vadd.f32 %v2273, %v2626
      %v2875 = vadd.f32 %v2274, %v2630
      %v2876 = vadd.f32 %v2275, %v2632
      %v2877 = vadd.f32 %v2276, %v2634
      %v2878 = vadd.f32 %v2277, %v2633
      %v2879 = vadd.f32 %v2278, %v2637
      %v2880 = vadd.f32 %v2279, %v2639
      %v2881 = vadd.f32 %v2280, %v2641
      %v2882 = vadd.f32 %v2281, %v2640
      %v2883 = vadd.f32 %v2282, %v2644
      %v2884 = vadd.f32 %v2283, %v2646
      %v2885 = vadd.f32 %v2284, %v2648
      %v2886 = vadd.f32 %v2285, %v2647
      %v2887 = vadd.f32 %v2286, %v2651
      %v2888 = vadd.f32 %v2287, %v2653
      %v2889 = vadd.f32 %v2288, %v2655
      %v2890 = vadd.f32 %v2289, %v2654
      %v2891 = vadd.f32 %v2290, %v2658
      %v2892 = vadd.f32 %v2291, %v2660
      %v2893 = vadd.f32 %v2292, %v2662
      %v2894 = vadd.f32 %v2293, %v2661
      %v2895 = vadd.f32 %v2294, %v2665
      %v2896 = vadd.f32 %v2295, %v2667
      %v2897 = vadd.f32 %v2296, %v2669
      %v2898 = vadd.f32 %v2297, %v2668
      %v2899 = vadd.f32 %v2298, %v2672
      %v2900 = vadd.f32 %v2299, %v2674
      %v2901 = vadd.f32 %v2300, %v2676
      %v2902 = vadd.f32 %v2301, %v2675
      %v2903 = vadd.f32 %v2302, %v2679
      %v2904 = vadd.f32 %v2303, %v2681
      %v2905 = vadd.f32 %v2304, %v2683
      %v2906 = vadd.f32 %v2305, %v2682
      %v2907 = vadd.f32 %v2306, %v2686
      %v2908 = vadd.f32 %v2307, %v2688
      %v2909 = vadd.f32 %v2308, %v2690
      %v2910 = vadd.f32 %v2309, %v2689
      %v2911 = vadd.f32 %v2310, %v2693
      %v2912 = vadd.f32 %v2311, %v2695
      %v2913 = vadd.f32 %v2312, %v2697
      %v2914 = vadd.f32 %v2313, %v2696
      %v2915 = vadd.f32 %v2314, %v2700
      %v2916 = vadd.f32 %v2315, %v2702
      %v2917 = vadd.f32 %v2316, %v2704
      %v2918 = vadd.f32 %v2317, %v2703
      %v2919 = vadd.f32 %v2318, %v2707
      %v2920 = vadd.f32 %v2319, %v2709
      %v2921 = vadd.f32 %v2320, %v2711
      %v2922 = vadd.f32 %v2321, %v2710
      %v2923 = vadd.f32 %v2322, %v2714
      %v2924 = vadd.f32 %v2323, %v2716
      %v2925 = vadd.f32 %v2324, %v2718
      %v2926 = vadd.f32 %v2325, %v2717
      %s2927 = sadd.s32 %s199, 36
      %s2928 = sld [smem:[#allocation4 + %s2927]]
      %v2929 = vstv %s2928
      %v2930 = vmul.f32 %v94, %v2929
      %v2931 = vmul.f32 %v95, %v2929
      %v2932 = vmul.f32 %v96, %v2929
      %v2933 = vmul.f32 %v97, %v2929
      %v2934 = vmul.f32 %v98, %v2929
      %v2935 = vmul.f32 %v99, %v2929
      %v2936 = vmul.f32 %v100, %v2929
      %v2937 = vmul.f32 %v101, %v2929
      %v2938 = vmul.f32 %v102, %v2929
      %v2939 = vmul.f32 %v103, %v2929
      %v2940 = vmul.f32 %v104, %v2929
      %v2941 = vmul.f32 %v105, %v2929
      %v2942 = vmul.f32 %v106, %v2929
      %v2943 = vmul.f32 %v107, %v2929
      %v2944 = vmul.f32 %v108, %v2929
      %v2945 = vmul.f32 %v109, %v2929
      %v2946 = vmul.f32 %v110, %v2929
      %v2947 = vmul.f32 %v111, %v2929
      %v2948 = vmul.f32 %v112, %v2929
      %v2949 = vmul.f32 %v113, %v2929
      %v2950 = vmul.f32 %v114, %v2929
      %v2951 = vmul.f32 %v115, %v2929
      %v2952 = vmul.f32 %v116, %v2929
      %v2953 = vmul.f32 %v117, %v2929
      %v2954 = vmul.f32 %v118, %v2929
      %v2955 = vmul.f32 %v119, %v2929
      %v2956 = vmul.f32 %v120, %v2929
      %v2957 = vmul.f32 %v121, %v2929
      %v2958 = vmul.f32 %v122, %v2929
      %v2959 = vmul.f32 %v123, %v2929
      %v2960 = vmul.f32 %v124, %v2929
      %v2961 = vmul.f32 %v125, %v2929
      %v2962 = vmul.f32 %v126, %v2929
      %v2963 = vmul.f32 %v127, %v2929
      %v2964 = vmul.f32 %v128, %v2929
      %v2965 = vmul.f32 %v129, %v2929
      %v2966 = vmul.f32 %v130, %v2929
      %v2967 = vmul.f32 %v131, %v2929
      %v2968 = vmul.f32 %v132, %v2929
      %v2969 = vmul.f32 %v133, %v2929
      %v2970 = vmul.f32 %v134, %v2929
      %v2971 = vmul.f32 %v135, %v2929
      %v2972 = vmul.f32 %v136, %v2929
      %v2973 = vmul.f32 %v137, %v2929
      %v2974 = vmul.f32 %v138, %v2929
      %v2975 = vmul.f32 %v139, %v2929
      %v2976 = vmul.f32 %v140, %v2929
      %v2977 = vmul.f32 %v141, %v2929
      %v2978 = vmul.f32 %v142, %v2929
      %v2979 = vmul.f32 %v143, %v2929
      %v2980 = vmul.f32 %v144, %v2929
      %v2981 = vmul.f32 %v145, %v2929
      %v2982 = vmul.f32 %v146, %v2929
      %v2983 = vmul.f32 %v147, %v2929
      %v2984 = vmul.f32 %v148, %v2929
      %v2985 = vmul.f32 %v149, %v2929
      %v2986 = vmul.f32 %v150, %v2929
      %v2987 = vmul.f32 %v151, %v2929
      %v2988 = vmul.f32 %v152, %v2929
      %v2989 = vmul.f32 %v153, %v2929
      %v2990 = vmul.f32 %v154, %v2929
      %v2991 = vmul.f32 %v155, %v2929
      %v2992 = vmul.f32 %v156, %v2929
      %v2993 = vmul.f32 %v157, %v2929
      %v2994 = vmul.f32 %v158, %v2929
      %v2995 = vmul.f32 %v159, %v2929
      %v2996 = vmul.f32 %v160, %v2929
      %v2997 = vmul.f32 %v161, %v2929
      %v2998 = vmul.f32 %v162, %v2929
      %v2999 = vmul.f32 %v163, %v2929
      %v3000 = vmul.f32 %v164, %v2929
      %v3001 = vmul.f32 %v165, %v2929
      %v3002 = vmul.f32 %v166, %v2929
      %v3003 = vmul.f32 %v167, %v2929
      %v3004 = vmul.f32 %v168, %v2929
      %v3005 = vmul.f32 %v169, %v2929
      %v3006 = vmul.f32 %v170, %v2929
      %v3007 = vmul.f32 %v171, %v2929
      %v3008 = vmul.f32 %v172, %v2929
      %v3009 = vmul.f32 %v173, %v2929
      %v3010 = vmul.f32 %v174, %v2929
      %v3011 = vmul.f32 %v175, %v2929
      %v3012 = vmul.f32 %v176, %v2929
      %v3013 = vmul.f32 %v177, %v2929
      %v3014 = vmul.f32 %v178, %v2929
      %v3015 = vmul.f32 %v179, %v2929
      %v3016 = vmul.f32 %v180, %v2929
      %v3017 = vmul.f32 %v181, %v2929
      %v3018 = vmul.f32 %v182, %v2929
      %v3019 = vmul.f32 %v183, %v2929
      %v3020 = vmul.f32 %v184, %v2929
      %v3021 = vmul.f32 %v185, %v2929
      %v3022 = vmul.f32 %v186, %v2929
      %v3023 = vmul.f32 %v187, %v2929
      %v3024 = vmul.f32 %v188, %v2929
      %v3025 = vmul.f32 %v189, %v2929
      %v3026 = vmul.f32 %v190, %v2929
      %v3027 = vmul.f32 %v191, %v2929
      %v3028 = vmul.f32 %v192, %v2929
      %v3029 = vmul.f32 %v193, %v2929
      %v3030 = vmul.f32 %v194, %v2929
      %v3031 = vmul.f32 %v195, %v2929
      %v3032 = vmul.f32 %v196, %v2929
      %v3033 = vmul.f32 %v197, %v2929
      %v3034 = vadd.f32 %v2823, %v2930
      %v3035 = vadd.f32 %v2824, %v2931
      %v3036 = vadd.f32 %v2825, %v2932
      %v3037 = vadd.f32 %v2826, %v2933
      %v3038 = vadd.f32 %v2827, %v2934
      %v3039 = vadd.f32 %v2828, %v2935
      %v3040 = vadd.f32 %v2829, %v2936
      %v3041 = vadd.f32 %v2830, %v2937
      %v3042 = vadd.f32 %v2831, %v2938
      %v3043 = vadd.f32 %v2832, %v2939
      %v3044 = vadd.f32 %v2833, %v2940
      %v3045 = vadd.f32 %v2834, %v2941
      %v3046 = vadd.f32 %v2835, %v2942
      %v3047 = vadd.f32 %v2836, %v2943
      %v3048 = vadd.f32 %v2837, %v2944
      %v3049 = vadd.f32 %v2838, %v2945
      %v3050 = vadd.f32 %v2839, %v2946
      %v3051 = vadd.f32 %v2840, %v2947
      %v3052 = vadd.f32 %v2841, %v2948
      %v3053 = vadd.f32 %v2842, %v2949
      %v3054 = vadd.f32 %v2843, %v2950
      %v3055 = vadd.f32 %v2844, %v2951
      %v3056 = vadd.f32 %v2845, %v2952
      %v3057 = vadd.f32 %v2846, %v2953
      %v3058 = vadd.f32 %v2847, %v2954
      %v3059 = vadd.f32 %v2848, %v2955
      %v3060 = vadd.f32 %v2849, %v2956
      %v3061 = vadd.f32 %v2850, %v2957
      %v3062 = vadd.f32 %v2851, %v2958
      %v3063 = vadd.f32 %v2852, %v2959
      %v3064 = vadd.f32 %v2853, %v2960
      %v3065 = vadd.f32 %v2854, %v2961
      %v3066 = vadd.f32 %v2855, %v2962
      %v3067 = vadd.f32 %v2856, %v2963
      %v3068 = vadd.f32 %v2857, %v2964
      %v3069 = vadd.f32 %v2858, %v2965
      %v3070 = vadd.f32 %v2859, %v2966
      %v3071 = vadd.f32 %v2860, %v2967
      %v3072 = vadd.f32 %v2861, %v2968
      %v3073 = vadd.f32 %v2862, %v2969
      %v3074 = vadd.f32 %v2863, %v2970
      %v3075 = vadd.f32 %v2864, %v2971
      %v3076 = vadd.f32 %v2865, %v2972
      %v3077 = vadd.f32 %v2866, %v2973
      %v3078 = vadd.f32 %v2867, %v2974
      %v3079 = vadd.f32 %v2868, %v2975
      %v3080 = vadd.f32 %v2869, %v2976
      %v3081 = vadd.f32 %v2870, %v2977
      %v3082 = vadd.f32 %v2871, %v2978
      %v3083 = vadd.f32 %v2872, %v2979
      %v3084 = vadd.f32 %v2873, %v2980
      %v3085 = vadd.f32 %v2874, %v2981
      %v3086 = vadd.f32 %v2875, %v2982
      %v3087 = vadd.f32 %v2876, %v2983
      %v3088 = vadd.f32 %v2877, %v2984
      %v3089 = vadd.f32 %v2878, %v2985
      %v3090 = vadd.f32 %v2879, %v2986
      %v3091 = vadd.f32 %v2880, %v2987
      %v3092 = vadd.f32 %v2881, %v2988
      %v3093 = vadd.f32 %v2882, %v2989
      %v3094 = vadd.f32 %v2883, %v2990
      %v3095 = vadd.f32 %v2884, %v2991
      %v3096 = vadd.f32 %v2885, %v2992
      %v3097 = vadd.f32 %v2886, %v2993
      %v3098 = vadd.f32 %v2887, %v2994
      %v3099 = vadd.f32 %v2888, %v2995
      %v3100 = vadd.f32 %v2889, %v2996
      %v3101 = vadd.f32 %v2890, %v2997
      %v3102 = vadd.f32 %v2891, %v2998
      %v3103 = vadd.f32 %v2892, %v2999
      %v3104 = vadd.f32 %v2893, %v3000
      %v3105 = vadd.f32 %v2894, %v3001
      %v3106 = vadd.f32 %v2895, %v3002
      %v3107 = vadd.f32 %v2896, %v3003
      %v3108 = vadd.f32 %v2897, %v3004
      %v3109 = vadd.f32 %v2898, %v3005
      %v3110 = vadd.f32 %v2899, %v3006
      %v3111 = vadd.f32 %v2900, %v3007
      %v3112 = vadd.f32 %v2901, %v3008
      %v3113 = vadd.f32 %v2902, %v3009
      %v3114 = vadd.f32 %v2903, %v3010
      %v3115 = vadd.f32 %v2904, %v3011
      %v3116 = vadd.f32 %v2905, %v3012
      %v3117 = vadd.f32 %v2906, %v3013
      %v3118 = vadd.f32 %v2907, %v3014
      %v3119 = vadd.f32 %v2908, %v3015
      %v3120 = vadd.f32 %v2909, %v3016
      %v3121 = vadd.f32 %v2910, %v3017
      %v3122 = vadd.f32 %v2911, %v3018
      %v3123 = vadd.f32 %v2912, %v3019
      %v3124 = vadd.f32 %v2913, %v3020
      %v3125 = vadd.f32 %v2914, %v3021
      %v3126 = vadd.f32 %v2915, %v3022
      %v3127 = vadd.f32 %v2916, %v3023
      %v3128 = vadd.f32 %v2917, %v3024
      %v3129 = vadd.f32 %v2918, %v3025
      %v3130 = vadd.f32 %v2919, %v3026
      %v3131 = vadd.f32 %v2920, %v3027
      %v3132 = vadd.f32 %v2921, %v3028
      %v3133 = vadd.f32 %v2922, %v3029
      %v3134 = vadd.f32 %v2923, %v3030
      %v3135 = vadd.f32 %v2924, %v3031
      %v3136 = vadd.f32 %v2925, %v3032
      %v3137 = vadd.f32 %v2926, %v3033
      %s3138 = sadd.s32 %s199, 42
      %s3139 = sld [smem:[#allocation4 + %s3138]]
      %v3140 = vstv %s3139
      %v3141 = vmul.f32 %v94, %v3140
      %v3142 = vmul.f32 %v95, %v3140
      %v3143 = vmul.f32 %v96, %v3140
      %v3144 = vmul.f32 %v97, %v3140
      %v3145 = vmul.f32 %v98, %v3140
      %v3146 = vmul.f32 %v99, %v3140
      %v3147 = vmul.f32 %v100, %v3140
      %v3148 = vmul.f32 %v101, %v3140
      %v3149 = vmul.f32 %v102, %v3140
      %v3150 = vmul.f32 %v103, %v3140
      %v3151 = vmul.f32 %v104, %v3140
      %v3152 = vmul.f32 %v105, %v3140
      %v3153 = vmul.f32 %v106, %v3140
      %v3154 = vmul.f32 %v107, %v3140
      %v3155 = vmul.f32 %v108, %v3140
      %v3156 = vmul.f32 %v109, %v3140
      %v3157 = vmul.f32 %v110, %v3140
      %v3158 = vmul.f32 %v111, %v3140
      %v3159 = vmul.f32 %v112, %v3140
      %v3160 = vmul.f32 %v113, %v3140
      %v3161 = vmul.f32 %v114, %v3140
      %v3162 = vmul.f32 %v115, %v3140
      %v3163 = vmul.f32 %v116, %v3140
      %v3164 = vmul.f32 %v117, %v3140
      %v3165 = vmul.f32 %v118, %v3140
      %v3166 = vmul.f32 %v119, %v3140
      %v3167 = vmul.f32 %v120, %v3140
      %v3168 = vmul.f32 %v121, %v3140
      %v3169 = vmul.f32 %v122, %v3140
      %v3170 = vmul.f32 %v123, %v3140
      %v3171 = vmul.f32 %v124, %v3140
      %v3172 = vmul.f32 %v125, %v3140
      %v3173 = vmul.f32 %v126, %v3140
      %v3174 = vmul.f32 %v127, %v3140
      %v3175 = vmul.f32 %v128, %v3140
      %v3176 = vmul.f32 %v129, %v3140
      %v3177 = vmul.f32 %v130, %v3140
      %v3178 = vmul.f32 %v131, %v3140
      %v3179 = vmul.f32 %v132, %v3140
      %v3180 = vmul.f32 %v133, %v3140
      %v3181 = vmul.f32 %v134, %v3140
      %v3182 = vmul.f32 %v135, %v3140
      %v3183 = vmul.f32 %v136, %v3140
      %v3184 = vmul.f32 %v137, %v3140
      %v3185 = vmul.f32 %v138, %v3140
      %v3186 = vmul.f32 %v139, %v3140
      %v3187 = vmul.f32 %v140, %v3140
      %v3188 = vmul.f32 %v141, %v3140
      %v3189 = vmul.f32 %v142, %v3140
      %v3190 = vmul.f32 %v143, %v3140
      %v3191 = vmul.f32 %v144, %v3140
      %v3192 = vmul.f32 %v145, %v3140
      %v3193 = vmul.f32 %v146, %v3140
      %v3194 = vmul.f32 %v147, %v3140
      %v3195 = vmul.f32 %v148, %v3140
      %v3196 = vmul.f32 %v149, %v3140
      %v3197 = vmul.f32 %v150, %v3140
      %v3198 = vmul.f32 %v151, %v3140
      %v3199 = vmul.f32 %v152, %v3140
      %v3200 = vmul.f32 %v153, %v3140
      %v3201 = vmul.f32 %v154, %v3140
      %v3202 = vmul.f32 %v155, %v3140
      %v3203 = vmul.f32 %v156, %v3140
      %v3204 = vmul.f32 %v157, %v3140
      %v3205 = vmul.f32 %v158, %v3140
      %v3206 = vmul.f32 %v159, %v3140
      %v3207 = vmul.f32 %v160, %v3140
      %v3208 = vmul.f32 %v161, %v3140
      %v3209 = vmul.f32 %v162, %v3140
      %v3210 = vmul.f32 %v163, %v3140
      %v3211 = vmul.f32 %v164, %v3140
      %v3212 = vmul.f32 %v165, %v3140
      %v3213 = vmul.f32 %v166, %v3140
      %v3214 = vmul.f32 %v167, %v3140
      %v3215 = vmul.f32 %v168, %v3140
      %v3216 = vmul.f32 %v169, %v3140
      %v3217 = vmul.f32 %v170, %v3140
      %v3218 = vmul.f32 %v171, %v3140
      %v3219 = vmul.f32 %v172, %v3140
      %v3220 = vmul.f32 %v173, %v3140
      %v3221 = vmul.f32 %v174, %v3140
      %v3222 = vmul.f32 %v175, %v3140
      %v3223 = vmul.f32 %v176, %v3140
      %v3224 = vmul.f32 %v177, %v3140
      %v3225 = vmul.f32 %v178, %v3140
      %v3226 = vmul.f32 %v179, %v3140
      %v3227 = vmul.f32 %v180, %v3140
      %v3228 = vmul.f32 %v181, %v3140
      %v3229 = vmul.f32 %v182, %v3140
      %v3230 = vmul.f32 %v183, %v3140
      %v3231 = vmul.f32 %v184, %v3140
      %v3232 = vmul.f32 %v185, %v3140
      %v3233 = vmul.f32 %v186, %v3140
      %v3234 = vmul.f32 %v187, %v3140
      %v3235 = vmul.f32 %v188, %v3140
      %v3236 = vmul.f32 %v189, %v3140
      %v3237 = vmul.f32 %v190, %v3140
      %v3238 = vmul.f32 %v191, %v3140
      %v3239 = vmul.f32 %v192, %v3140
      %v3240 = vmul.f32 %v193, %v3140
      %v3241 = vmul.f32 %v194, %v3140
      %v3242 = vmul.f32 %v195, %v3140
      %v3243 = vmul.f32 %v196, %v3140
      %v3244 = vmul.f32 %v197, %v3140
      %v3349 = vrot.slane %v3141, 1
      %v3350 = vrot.slane %v3142, 1
      %v3351 = vsel %vm521, %v3349, %v3350
      %v3352 = vrot.slane %v3143, 1
      %v3353 = vsel %vm521, %v3350, %v3352
      %v3354 = vrot.slane %v3144, 1
      %v3355 = vsel %vm521, %v3352, %v3354
      %v3356 = vrot.slane %v3145, 1
      %v3357 = vrot.slane %v3146, 1
      %v3358 = vsel %vm521, %v3356, %v3357
      %v3359 = vrot.slane %v3147, 1
      %v3360 = vsel %vm521, %v3357, %v3359
      %v3361 = vrot.slane %v3148, 1
      %v3362 = vsel %vm521, %v3359, %v3361
      %v3363 = vrot.slane %v3149, 1
      %v3364 = vrot.slane %v3150, 1
      %v3365 = vsel %vm521, %v3363, %v3364
      %v3366 = vrot.slane %v3151, 1
      %v3367 = vsel %vm521, %v3364, %v3366
      %v3368 = vrot.slane %v3152, 1
      %v3369 = vsel %vm521, %v3366, %v3368
      %v3370 = vrot.slane %v3153, 1
      %v3371 = vrot.slane %v3154, 1
      %v3372 = vsel %vm521, %v3370, %v3371
      %v3373 = vrot.slane %v3155, 1
      %v3374 = vsel %vm521, %v3371, %v3373
      %v3375 = vrot.slane %v3156, 1
      %v3376 = vsel %vm521, %v3373, %v3375
      %v3377 = vrot.slane %v3157, 1
      %v3378 = vrot.slane %v3158, 1
      %v3379 = vsel %vm521, %v3377, %v3378
      %v3380 = vrot.slane %v3159, 1
      %v3381 = vsel %vm521, %v3378, %v3380
      %v3382 = vrot.slane %v3160, 1
      %v3383 = vsel %vm521, %v3380, %v3382
      %v3384 = vrot.slane %v3161, 1
      %v3385 = vrot.slane %v3162, 1
      %v3386 = vsel %vm521, %v3384, %v3385
      %v3387 = vrot.slane %v3163, 1
      %v3388 = vsel %vm521, %v3385, %v3387
      %v3389 = vrot.slane %v3164, 1
      %v3390 = vsel %vm521, %v3387, %v3389
      %v3391 = vrot.slane %v3165, 1
      %v3392 = vrot.slane %v3166, 1
      %v3393 = vsel %vm521, %v3391, %v3392
      %v3394 = vrot.slane %v3167, 1
      %v3395 = vsel %vm521, %v3392, %v3394
      %v3396 = vrot.slane %v3168, 1
      %v3397 = vsel %vm521, %v3394, %v3396
      %v3398 = vrot.slane %v3169, 1
      %v3399 = vrot.slane %v3170, 1
      %v3400 = vsel %vm521, %v3398, %v3399
      %v3401 = vrot.slane %v3171, 1
      %v3402 = vsel %vm521, %v3399, %v3401
      %v3403 = vrot.slane %v3172, 1
      %v3404 = vsel %vm521, %v3401, %v3403
      %v3405 = vrot.slane %v3173, 1
      %v3406 = vrot.slane %v3174, 1
      %v3407 = vsel %vm521, %v3405, %v3406
      %v3408 = vrot.slane %v3175, 1
      %v3409 = vsel %vm521, %v3406, %v3408
      %v3410 = vrot.slane %v3176, 1
      %v3411 = vsel %vm521, %v3408, %v3410
      %v3412 = vrot.slane %v3177, 1
      %v3413 = vrot.slane %v3178, 1
      %v3414 = vsel %vm521, %v3412, %v3413
      %v3415 = vrot.slane %v3179, 1
      %v3416 = vsel %vm521, %v3413, %v3415
      %v3417 = vrot.slane %v3180, 1
      %v3418 = vsel %vm521, %v3415, %v3417
      %v3419 = vrot.slane %v3181, 1
      %v3420 = vrot.slane %v3182, 1
      %v3421 = vsel %vm521, %v3419, %v3420
      %v3422 = vrot.slane %v3183, 1
      %v3423 = vsel %vm521, %v3420, %v3422
      %v3424 = vrot.slane %v3184, 1
      %v3425 = vsel %vm521, %v3422, %v3424
      %v3426 = vrot.slane %v3185, 1
      %v3427 = vrot.slane %v3186, 1
      %v3428 = vsel %vm521, %v3426, %v3427
      %v3429 = vrot.slane %v3187, 1
      %v3430 = vsel %vm521, %v3427, %v3429
      %v3431 = vrot.slane %v3188, 1
      %v3432 = vsel %vm521, %v3429, %v3431
      %v3433 = vrot.slane %v3189, 1
      %v3434 = vrot.slane %v3190, 1
      %v3435 = vsel %vm521, %v3433, %v3434
      %v3436 = vrot.slane %v3191, 1
      %v3437 = vsel %vm521, %v3434, %v3436
      %v3438 = vrot.slane %v3192, 1
      %v3439 = vsel %vm521, %v3436, %v3438
      %v3440 = vrot.slane %v3193, 1
      %v3441 = vrot.slane %v3194, 1
      %v3442 = vsel %vm521, %v3440, %v3441
      %v3443 = vrot.slane %v3195, 1
      %v3444 = vsel %vm521, %v3441, %v3443
      %v3445 = vrot.slane %v3196, 1
      %v3446 = vsel %vm521, %v3443, %v3445
      %v3447 = vrot.slane %v3197, 1
      %v3448 = vrot.slane %v3198, 1
      %v3449 = vsel %vm521, %v3447, %v3448
      %v3450 = vrot.slane %v3199, 1
      %v3451 = vsel %vm521, %v3448, %v3450
      %v3452 = vrot.slane %v3200, 1
      %v3453 = vsel %vm521, %v3450, %v3452
      %v3454 = vrot.slane %v3201, 1
      %v3455 = vrot.slane %v3202, 1
      %v3456 = vsel %vm521, %v3454, %v3455
      %v3457 = vrot.slane %v3203, 1
      %v3458 = vsel %vm521, %v3455, %v3457
      %v3459 = vrot.slane %v3204, 1
      %v3460 = vsel %vm521, %v3457, %v3459
      %v3461 = vrot.slane %v3205, 1
      %v3462 = vrot.slane %v3206, 1
      %v3463 = vsel %vm521, %v3461, %v3462
      %v3464 = vrot.slane %v3207, 1
      %v3465 = vsel %vm521, %v3462, %v3464
      %v3466 = vrot.slane %v3208, 1
      %v3467 = vsel %vm521, %v3464, %v3466
      %v3468 = vrot.slane %v3209, 1
      %v3469 = vrot.slane %v3210, 1
      %v3470 = vsel %vm521, %v3468, %v3469
      %v3471 = vrot.slane %v3211, 1
      %v3472 = vsel %vm521, %v3469, %v3471
      %v3473 = vrot.slane %v3212, 1
      %v3474 = vsel %vm521, %v3471, %v3473
      %v3475 = vrot.slane %v3213, 1
      %v3476 = vrot.slane %v3214, 1
      %v3477 = vsel %vm521, %v3475, %v3476
      %v3478 = vrot.slane %v3215, 1
      %v3479 = vsel %vm521, %v3476, %v3478
      %v3480 = vrot.slane %v3216, 1
      %v3481 = vsel %vm521, %v3478, %v3480
      %v3482 = vrot.slane %v3217, 1
      %v3483 = vrot.slane %v3218, 1
      %v3484 = vsel %vm521, %v3482, %v3483
      %v3485 = vrot.slane %v3219, 1
      %v3486 = vsel %vm521, %v3483, %v3485
      %v3487 = vrot.slane %v3220, 1
      %v3488 = vsel %vm521, %v3485, %v3487
      %v3489 = vrot.slane %v3221, 1
      %v3490 = vrot.slane %v3222, 1
      %v3491 = vsel %vm521, %v3489, %v3490
      %v3492 = vrot.slane %v3223, 1
      %v3493 = vsel %vm521, %v3490, %v3492
      %v3494 = vrot.slane %v3224, 1
      %v3495 = vsel %vm521, %v3492, %v3494
      %v3496 = vrot.slane %v3225, 1
      %v3497 = vrot.slane %v3226, 1
      %v3498 = vsel %vm521, %v3496, %v3497
      %v3499 = vrot.slane %v3227, 1
      %v3500 = vsel %vm521, %v3497, %v3499
      %v3501 = vrot.slane %v3228, 1
      %v3502 = vsel %vm521, %v3499, %v3501
      %v3503 = vrot.slane %v3229, 1
      %v3504 = vrot.slane %v3230, 1
      %v3505 = vsel %vm521, %v3503, %v3504
      %v3506 = vrot.slane %v3231, 1
      %v3507 = vsel %vm521, %v3504, %v3506
      %v3508 = vrot.slane %v3232, 1
      %v3509 = vsel %vm521, %v3506, %v3508
      %v3510 = vrot.slane %v3233, 1
      %v3511 = vrot.slane %v3234, 1
      %v3512 = vsel %vm521, %v3510, %v3511
      %v3513 = vrot.slane %v3235, 1
      %v3514 = vsel %vm521, %v3511, %v3513
      %v3515 = vrot.slane %v3236, 1
      %v3516 = vsel %vm521, %v3513, %v3515
      %v3517 = vrot.slane %v3237, 1
      %v3518 = vrot.slane %v3238, 1
      %v3519 = vsel %vm521, %v3517, %v3518
      %v3520 = vrot.slane %v3239, 1
      %v3521 = vsel %vm521, %v3518, %v3520
      %v3522 = vrot.slane %v3240, 1
      %v3523 = vsel %vm521, %v3520, %v3522
      %v3524 = vrot.slane %v3241, 1
      %v3525 = vrot.slane %v3242, 1
      %v3526 = vsel %vm521, %v3524, %v3525
      %v3527 = vrot.slane %v3243, 1
      %v3528 = vsel %vm521, %v3525, %v3527
      %v3529 = vrot.slane %v3244, 1
      %v3530 = vsel %vm521, %v3527, %v3529
      %v3635 = vadd.f32 %v3034, %v3351
      %v3636 = vadd.f32 %v3035, %v3353
      %v3637 = vadd.f32 %v3036, %v3355
      %v3638 = vadd.f32 %v3037, %v3354
      %v3639 = vadd.f32 %v3038, %v3358
      %v3640 = vadd.f32 %v3039, %v3360
      %v3641 = vadd.f32 %v3040, %v3362
      %v3642 = vadd.f32 %v3041, %v3361
      %v3643 = vadd.f32 %v3042, %v3365
      %v3644 = vadd.f32 %v3043, %v3367
      %v3645 = vadd.f32 %v3044, %v3369
      %v3646 = vadd.f32 %v3045, %v3368
      %v3647 = vadd.f32 %v3046, %v3372
      %v3648 = vadd.f32 %v3047, %v3374
      %v3649 = vadd.f32 %v3048, %v3376
      %v3650 = vadd.f32 %v3049, %v3375
      %v3651 = vadd.f32 %v3050, %v3379
      %v3652 = vadd.f32 %v3051, %v3381
      %v3653 = vadd.f32 %v3052, %v3383
      %v3654 = vadd.f32 %v3053, %v3382
      %v3655 = vadd.f32 %v3054, %v3386
      %v3656 = vadd.f32 %v3055, %v3388
      %v3657 = vadd.f32 %v3056, %v3390
      %v3658 = vadd.f32 %v3057, %v3389
      %v3659 = vadd.f32 %v3058, %v3393
      %v3660 = vadd.f32 %v3059, %v3395
      %v3661 = vadd.f32 %v3060, %v3397
      %v3662 = vadd.f32 %v3061, %v3396
      %v3663 = vadd.f32 %v3062, %v3400
      %v3664 = vadd.f32 %v3063, %v3402
      %v3665 = vadd.f32 %v3064, %v3404
      %v3666 = vadd.f32 %v3065, %v3403
      %v3667 = vadd.f32 %v3066, %v3407
      %v3668 = vadd.f32 %v3067, %v3409
      %v3669 = vadd.f32 %v3068, %v3411
      %v3670 = vadd.f32 %v3069, %v3410
      %v3671 = vadd.f32 %v3070, %v3414
      %v3672 = vadd.f32 %v3071, %v3416
      %v3673 = vadd.f32 %v3072, %v3418
      %v3674 = vadd.f32 %v3073, %v3417
      %v3675 = vadd.f32 %v3074, %v3421
      %v3676 = vadd.f32 %v3075, %v3423
      %v3677 = vadd.f32 %v3076, %v3425
      %v3678 = vadd.f32 %v3077, %v3424
      %v3679 = vadd.f32 %v3078, %v3428
      %v3680 = vadd.f32 %v3079, %v3430
      %v3681 = vadd.f32 %v3080, %v3432
      %v3682 = vadd.f32 %v3081, %v3431
      %v3683 = vadd.f32 %v3082, %v3435
      %v3684 = vadd.f32 %v3083, %v3437
      %v3685 = vadd.f32 %v3084, %v3439
      %v3686 = vadd.f32 %v3085, %v3438
      %v3687 = vadd.f32 %v3086, %v3442
      %v3688 = vadd.f32 %v3087, %v3444
      %v3689 = vadd.f32 %v3088, %v3446
      %v3690 = vadd.f32 %v3089, %v3445
      %v3691 = vadd.f32 %v3090, %v3449
      %v3692 = vadd.f32 %v3091, %v3451
      %v3693 = vadd.f32 %v3092, %v3453
      %v3694 = vadd.f32 %v3093, %v3452
      %v3695 = vadd.f32 %v3094, %v3456
      %v3696 = vadd.f32 %v3095, %v3458
      %v3697 = vadd.f32 %v3096, %v3460
      %v3698 = vadd.f32 %v3097, %v3459
      %v3699 = vadd.f32 %v3098, %v3463
      %v3700 = vadd.f32 %v3099, %v3465
      %v3701 = vadd.f32 %v3100, %v3467
      %v3702 = vadd.f32 %v3101, %v3466
      %v3703 = vadd.f32 %v3102, %v3470
      %v3704 = vadd.f32 %v3103, %v3472
      %v3705 = vadd.f32 %v3104, %v3474
      %v3706 = vadd.f32 %v3105, %v3473
      %v3707 = vadd.f32 %v3106, %v3477
      %v3708 = vadd.f32 %v3107, %v3479
      %v3709 = vadd.f32 %v3108, %v3481
      %v3710 = vadd.f32 %v3109, %v3480
      %v3711 = vadd.f32 %v3110, %v3484
      %v3712 = vadd.f32 %v3111, %v3486
      %v3713 = vadd.f32 %v3112, %v3488
      %v3714 = vadd.f32 %v3113, %v3487
      %v3715 = vadd.f32 %v3114, %v3491
      %v3716 = vadd.f32 %v3115, %v3493
      %v3717 = vadd.f32 %v3116, %v3495
      %v3718 = vadd.f32 %v3117, %v3494
      %v3719 = vadd.f32 %v3118, %v3498
      %v3720 = vadd.f32 %v3119, %v3500
      %v3721 = vadd.f32 %v3120, %v3502
      %v3722 = vadd.f32 %v3121, %v3501
      %v3723 = vadd.f32 %v3122, %v3505
      %v3724 = vadd.f32 %v3123, %v3507
      %v3725 = vadd.f32 %v3124, %v3509
      %v3726 = vadd.f32 %v3125, %v3508
      %v3727 = vadd.f32 %v3126, %v3512
      %v3728 = vadd.f32 %v3127, %v3514
      %v3729 = vadd.f32 %v3128, %v3516
      %v3730 = vadd.f32 %v3129, %v3515
      %v3731 = vadd.f32 %v3130, %v3519
      %v3732 = vadd.f32 %v3131, %v3521
      %v3733 = vadd.f32 %v3132, %v3523
      %v3734 = vadd.f32 %v3133, %v3522
      %v3735 = vadd.f32 %v3134, %v3526
      %v3736 = vadd.f32 %v3135, %v3528
      %v3737 = vadd.f32 %v3136, %v3530
      %v3738 = vadd.f32 %v3137, %v3529
      %s3739 = sadd.s32 %s199, 48
      %s3740 = sld [smem:[#allocation4 + %s3739]]
      %v3741 = vstv %s3740
      %v3742 = vmul.f32 %v94, %v3741
      %v3743 = vmul.f32 %v95, %v3741
      %v3744 = vmul.f32 %v96, %v3741
      %v3745 = vmul.f32 %v97, %v3741
      %v3746 = vmul.f32 %v98, %v3741
      %v3747 = vmul.f32 %v99, %v3741
      %v3748 = vmul.f32 %v100, %v3741
      %v3749 = vmul.f32 %v101, %v3741
      %v3750 = vmul.f32 %v102, %v3741
      %v3751 = vmul.f32 %v103, %v3741
      %v3752 = vmul.f32 %v104, %v3741
      %v3753 = vmul.f32 %v105, %v3741
      %v3754 = vmul.f32 %v106, %v3741
      %v3755 = vmul.f32 %v107, %v3741
      %v3756 = vmul.f32 %v108, %v3741
      %v3757 = vmul.f32 %v109, %v3741
      %v3758 = vmul.f32 %v110, %v3741
      %v3759 = vmul.f32 %v111, %v3741
      %v3760 = vmul.f32 %v112, %v3741
      %v3761 = vmul.f32 %v113, %v3741
      %v3762 = vmul.f32 %v114, %v3741
      %v3763 = vmul.f32 %v115, %v3741
      %v3764 = vmul.f32 %v116, %v3741
      %v3765 = vmul.f32 %v117, %v3741
      %v3766 = vmul.f32 %v118, %v3741
      %v3767 = vmul.f32 %v119, %v3741
      %v3768 = vmul.f32 %v120, %v3741
      %v3769 = vmul.f32 %v121, %v3741
      %v3770 = vmul.f32 %v122, %v3741
      %v3771 = vmul.f32 %v123, %v3741
      %v3772 = vmul.f32 %v124, %v3741
      %v3773 = vmul.f32 %v125, %v3741
      %v3774 = vmul.f32 %v126, %v3741
      %v3775 = vmul.f32 %v127, %v3741
      %v3776 = vmul.f32 %v128, %v3741
      %v3777 = vmul.f32 %v129, %v3741
      %v3778 = vmul.f32 %v130, %v3741
      %v3779 = vmul.f32 %v131, %v3741
      %v3780 = vmul.f32 %v132, %v3741
      %v3781 = vmul.f32 %v133, %v3741
      %v3782 = vmul.f32 %v134, %v3741
      %v3783 = vmul.f32 %v135, %v3741
      %v3784 = vmul.f32 %v136, %v3741
      %v3785 = vmul.f32 %v137, %v3741
      %v3786 = vmul.f32 %v138, %v3741
      %v3787 = vmul.f32 %v139, %v3741
      %v3788 = vmul.f32 %v140, %v3741
      %v3789 = vmul.f32 %v141, %v3741
      %v3790 = vmul.f32 %v142, %v3741
      %v3791 = vmul.f32 %v143, %v3741
      %v3792 = vmul.f32 %v144, %v3741
      %v3793 = vmul.f32 %v145, %v3741
      %v3794 = vmul.f32 %v146, %v3741
      %v3795 = vmul.f32 %v147, %v3741
      %v3796 = vmul.f32 %v148, %v3741
      %v3797 = vmul.f32 %v149, %v3741
      %v3798 = vmul.f32 %v150, %v3741
      %v3799 = vmul.f32 %v151, %v3741
      %v3800 = vmul.f32 %v152, %v3741
      %v3801 = vmul.f32 %v153, %v3741
      %v3802 = vmul.f32 %v154, %v3741
      %v3803 = vmul.f32 %v155, %v3741
      %v3804 = vmul.f32 %v156, %v3741
      %v3805 = vmul.f32 %v157, %v3741
      %v3806 = vmul.f32 %v158, %v3741
      %v3807 = vmul.f32 %v159, %v3741
      %v3808 = vmul.f32 %v160, %v3741
      %v3809 = vmul.f32 %v161, %v3741
      %v3810 = vmul.f32 %v162, %v3741
      %v3811 = vmul.f32 %v163, %v3741
      %v3812 = vmul.f32 %v164, %v3741
      %v3813 = vmul.f32 %v165, %v3741
      %v3814 = vmul.f32 %v166, %v3741
      %v3815 = vmul.f32 %v167, %v3741
      %v3816 = vmul.f32 %v168, %v3741
      %v3817 = vmul.f32 %v169, %v3741
      %v3818 = vmul.f32 %v170, %v3741
      %v3819 = vmul.f32 %v171, %v3741
      %v3820 = vmul.f32 %v172, %v3741
      %v3821 = vmul.f32 %v173, %v3741
      %v3822 = vmul.f32 %v174, %v3741
      %v3823 = vmul.f32 %v175, %v3741
      %v3824 = vmul.f32 %v176, %v3741
      %v3825 = vmul.f32 %v177, %v3741
      %v3826 = vmul.f32 %v178, %v3741
      %v3827 = vmul.f32 %v179, %v3741
      %v3828 = vmul.f32 %v180, %v3741
      %v3829 = vmul.f32 %v181, %v3741
      %v3830 = vmul.f32 %v182, %v3741
      %v3831 = vmul.f32 %v183, %v3741
      %v3832 = vmul.f32 %v184, %v3741
      %v3833 = vmul.f32 %v185, %v3741
      %v3834 = vmul.f32 %v186, %v3741
      %v3835 = vmul.f32 %v187, %v3741
      %v3836 = vmul.f32 %v188, %v3741
      %v3837 = vmul.f32 %v189, %v3741
      %v3838 = vmul.f32 %v190, %v3741
      %v3839 = vmul.f32 %v191, %v3741
      %v3840 = vmul.f32 %v192, %v3741
      %v3841 = vmul.f32 %v193, %v3741
      %v3842 = vmul.f32 %v194, %v3741
      %v3843 = vmul.f32 %v195, %v3741
      %v3844 = vmul.f32 %v196, %v3741
      %v3845 = vmul.f32 %v197, %v3741
      %v3950 = vrot.slane %v3742, 2
      %v3951 = vrot.slane %v3743, 2
      %v3952 = vsel %vm1123, %v3950, %v3951
      %v3953 = vrot.slane %v3744, 2
      %v3954 = vsel %vm1123, %v3951, %v3953
      %v3955 = vrot.slane %v3745, 2
      %v3956 = vsel %vm1123, %v3953, %v3955
      %v3957 = vrot.slane %v3746, 2
      %v3958 = vrot.slane %v3747, 2
      %v3959 = vsel %vm1123, %v3957, %v3958
      %v3960 = vrot.slane %v3748, 2
      %v3961 = vsel %vm1123, %v3958, %v3960
      %v3962 = vrot.slane %v3749, 2
      %v3963 = vsel %vm1123, %v3960, %v3962
      %v3964 = vrot.slane %v3750, 2
      %v3965 = vrot.slane %v3751, 2
      %v3966 = vsel %vm1123, %v3964, %v3965
      %v3967 = vrot.slane %v3752, 2
      %v3968 = vsel %vm1123, %v3965, %v3967
      %v3969 = vrot.slane %v3753, 2
      %v3970 = vsel %vm1123, %v3967, %v3969
      %v3971 = vrot.slane %v3754, 2
      %v3972 = vrot.slane %v3755, 2
      %v3973 = vsel %vm1123, %v3971, %v3972
      %v3974 = vrot.slane %v3756, 2
      %v3975 = vsel %vm1123, %v3972, %v3974
      %v3976 = vrot.slane %v3757, 2
      %v3977 = vsel %vm1123, %v3974, %v3976
      %v3978 = vrot.slane %v3758, 2
      %v3979 = vrot.slane %v3759, 2
      %v3980 = vsel %vm1123, %v3978, %v3979
      %v3981 = vrot.slane %v3760, 2
      %v3982 = vsel %vm1123, %v3979, %v3981
      %v3983 = vrot.slane %v3761, 2
      %v3984 = vsel %vm1123, %v3981, %v3983
      %v3985 = vrot.slane %v3762, 2
      %v3986 = vrot.slane %v3763, 2
      %v3987 = vsel %vm1123, %v3985, %v3986
      %v3988 = vrot.slane %v3764, 2
      %v3989 = vsel %vm1123, %v3986, %v3988
      %v3990 = vrot.slane %v3765, 2
      %v3991 = vsel %vm1123, %v3988, %v3990
      %v3992 = vrot.slane %v3766, 2
      %v3993 = vrot.slane %v3767, 2
      %v3994 = vsel %vm1123, %v3992, %v3993
      %v3995 = vrot.slane %v3768, 2
      %v3996 = vsel %vm1123, %v3993, %v3995
      %v3997 = vrot.slane %v3769, 2
      %v3998 = vsel %vm1123, %v3995, %v3997
      %v3999 = vrot.slane %v3770, 2
      %v4000 = vrot.slane %v3771, 2
      %v4001 = vsel %vm1123, %v3999, %v4000
      %v4002 = vrot.slane %v3772, 2
      %v4003 = vsel %vm1123, %v4000, %v4002
      %v4004 = vrot.slane %v3773, 2
      %v4005 = vsel %vm1123, %v4002, %v4004
      %v4006 = vrot.slane %v3774, 2
      %v4007 = vrot.slane %v3775, 2
      %v4008 = vsel %vm1123, %v4006, %v4007
      %v4009 = vrot.slane %v3776, 2
      %v4010 = vsel %vm1123, %v4007, %v4009
      %v4011 = vrot.slane %v3777, 2
      %v4012 = vsel %vm1123, %v4009, %v4011
      %v4013 = vrot.slane %v3778, 2
      %v4014 = vrot.slane %v3779, 2
      %v4015 = vsel %vm1123, %v4013, %v4014
      %v4016 = vrot.slane %v3780, 2
      %v4017 = vsel %vm1123, %v4014, %v4016
      %v4018 = vrot.slane %v3781, 2
      %v4019 = vsel %vm1123, %v4016, %v4018
      %v4020 = vrot.slane %v3782, 2
      %v4021 = vrot.slane %v3783, 2
      %v4022 = vsel %vm1123, %v4020, %v4021
      %v4023 = vrot.slane %v3784, 2
      %v4024 = vsel %vm1123, %v4021, %v4023
      %v4025 = vrot.slane %v3785, 2
      %v4026 = vsel %vm1123, %v4023, %v4025
      %v4027 = vrot.slane %v3786, 2
      %v4028 = vrot.slane %v3787, 2
      %v4029 = vsel %vm1123, %v4027, %v4028
      %v4030 = vrot.slane %v3788, 2
      %v4031 = vsel %vm1123, %v4028, %v4030
      %v4032 = vrot.slane %v3789, 2
      %v4033 = vsel %vm1123, %v4030, %v4032
      %v4034 = vrot.slane %v3790, 2
      %v4035 = vrot.slane %v3791, 2
      %v4036 = vsel %vm1123, %v4034, %v4035
      %v4037 = vrot.slane %v3792, 2
      %v4038 = vsel %vm1123, %v4035, %v4037
      %v4039 = vrot.slane %v3793, 2
      %v4040 = vsel %vm1123, %v4037, %v4039
      %v4041 = vrot.slane %v3794, 2
      %v4042 = vrot.slane %v3795, 2
      %v4043 = vsel %vm1123, %v4041, %v4042
      %v4044 = vrot.slane %v3796, 2
      %v4045 = vsel %vm1123, %v4042, %v4044
      %v4046 = vrot.slane %v3797, 2
      %v4047 = vsel %vm1123, %v4044, %v4046
      %v4048 = vrot.slane %v3798, 2
      %v4049 = vrot.slane %v3799, 2
      %v4050 = vsel %vm1123, %v4048, %v4049
      %v4051 = vrot.slane %v3800, 2
      %v4052 = vsel %vm1123, %v4049, %v4051
      %v4053 = vrot.slane %v3801, 2
      %v4054 = vsel %vm1123, %v4051, %v4053
      %v4055 = vrot.slane %v3802, 2
      %v4056 = vrot.slane %v3803, 2
      %v4057 = vsel %vm1123, %v4055, %v4056
      %v4058 = vrot.slane %v3804, 2
      %v4059 = vsel %vm1123, %v4056, %v4058
      %v4060 = vrot.slane %v3805, 2
      %v4061 = vsel %vm1123, %v4058, %v4060
      %v4062 = vrot.slane %v3806, 2
      %v4063 = vrot.slane %v3807, 2
      %v4064 = vsel %vm1123, %v4062, %v4063
      %v4065 = vrot.slane %v3808, 2
      %v4066 = vsel %vm1123, %v4063, %v4065
      %v4067 = vrot.slane %v3809, 2
      %v4068 = vsel %vm1123, %v4065, %v4067
      %v4069 = vrot.slane %v3810, 2
      %v4070 = vrot.slane %v3811, 2
      %v4071 = vsel %vm1123, %v4069, %v4070
      %v4072 = vrot.slane %v3812, 2
      %v4073 = vsel %vm1123, %v4070, %v4072
      %v4074 = vrot.slane %v3813, 2
      %v4075 = vsel %vm1123, %v4072, %v4074
      %v4076 = vrot.slane %v3814, 2
      %v4077 = vrot.slane %v3815, 2
      %v4078 = vsel %vm1123, %v4076, %v4077
      %v4079 = vrot.slane %v3816, 2
      %v4080 = vsel %vm1123, %v4077, %v4079
      %v4081 = vrot.slane %v3817, 2
      %v4082 = vsel %vm1123, %v4079, %v4081
      %v4083 = vrot.slane %v3818, 2
      %v4084 = vrot.slane %v3819, 2
      %v4085 = vsel %vm1123, %v4083, %v4084
      %v4086 = vrot.slane %v3820, 2
      %v4087 = vsel %vm1123, %v4084, %v4086
      %v4088 = vrot.slane %v3821, 2
      %v4089 = vsel %vm1123, %v4086, %v4088
      %v4090 = vrot.slane %v3822, 2
      %v4091 = vrot.slane %v3823, 2
      %v4092 = vsel %vm1123, %v4090, %v4091
      %v4093 = vrot.slane %v3824, 2
      %v4094 = vsel %vm1123, %v4091, %v4093
      %v4095 = vrot.slane %v3825, 2
      %v4096 = vsel %vm1123, %v4093, %v4095
      %v4097 = vrot.slane %v3826, 2
      %v4098 = vrot.slane %v3827, 2
      %v4099 = vsel %vm1123, %v4097, %v4098
      %v4100 = vrot.slane %v3828, 2
      %v4101 = vsel %vm1123, %v4098, %v4100
      %v4102 = vrot.slane %v3829, 2
      %v4103 = vsel %vm1123, %v4100, %v4102
      %v4104 = vrot.slane %v3830, 2
      %v4105 = vrot.slane %v3831, 2
      %v4106 = vsel %vm1123, %v4104, %v4105
      %v4107 = vrot.slane %v3832, 2
      %v4108 = vsel %vm1123, %v4105, %v4107
      %v4109 = vrot.slane %v3833, 2
      %v4110 = vsel %vm1123, %v4107, %v4109
      %v4111 = vrot.slane %v3834, 2
      %v4112 = vrot.slane %v3835, 2
      %v4113 = vsel %vm1123, %v4111, %v4112
      %v4114 = vrot.slane %v3836, 2
      %v4115 = vsel %vm1123, %v4112, %v4114
      %v4116 = vrot.slane %v3837, 2
      %v4117 = vsel %vm1123, %v4114, %v4116
      %v4118 = vrot.slane %v3838, 2
      %v4119 = vrot.slane %v3839, 2
      %v4120 = vsel %vm1123, %v4118, %v4119
      %v4121 = vrot.slane %v3840, 2
      %v4122 = vsel %vm1123, %v4119, %v4121
      %v4123 = vrot.slane %v3841, 2
      %v4124 = vsel %vm1123, %v4121, %v4123
      %v4125 = vrot.slane %v3842, 2
      %v4126 = vrot.slane %v3843, 2
      %v4127 = vsel %vm1123, %v4125, %v4126
      %v4128 = vrot.slane %v3844, 2
      %v4129 = vsel %vm1123, %v4126, %v4128
      %v4130 = vrot.slane %v3845, 2
      %v4131 = vsel %vm1123, %v4128, %v4130
      %v4236 = vadd.f32 %v3635, %v3952
      %v4237 = vadd.f32 %v3636, %v3954
      %v4238 = vadd.f32 %v3637, %v3956
      %v4239 = vadd.f32 %v3638, %v3955
      %v4240 = vadd.f32 %v3639, %v3959
      %v4241 = vadd.f32 %v3640, %v3961
      %v4242 = vadd.f32 %v3641, %v3963
      %v4243 = vadd.f32 %v3642, %v3962
      %v4244 = vadd.f32 %v3643, %v3966
      %v4245 = vadd.f32 %v3644, %v3968
      %v4246 = vadd.f32 %v3645, %v3970
      %v4247 = vadd.f32 %v3646, %v3969
      %v4248 = vadd.f32 %v3647, %v3973
      %v4249 = vadd.f32 %v3648, %v3975
      %v4250 = vadd.f32 %v3649, %v3977
      %v4251 = vadd.f32 %v3650, %v3976
      %v4252 = vadd.f32 %v3651, %v3980
      %v4253 = vadd.f32 %v3652, %v3982
      %v4254 = vadd.f32 %v3653, %v3984
      %v4255 = vadd.f32 %v3654, %v3983
      %v4256 = vadd.f32 %v3655, %v3987
      %v4257 = vadd.f32 %v3656, %v3989
      %v4258 = vadd.f32 %v3657, %v3991
      %v4259 = vadd.f32 %v3658, %v3990
      %v4260 = vadd.f32 %v3659, %v3994
      %v4261 = vadd.f32 %v3660, %v3996
      %v4262 = vadd.f32 %v3661, %v3998
      %v4263 = vadd.f32 %v3662, %v3997
      %v4264 = vadd.f32 %v3663, %v4001
      %v4265 = vadd.f32 %v3664, %v4003
      %v4266 = vadd.f32 %v3665, %v4005
      %v4267 = vadd.f32 %v3666, %v4004
      %v4268 = vadd.f32 %v3667, %v4008
      %v4269 = vadd.f32 %v3668, %v4010
      %v4270 = vadd.f32 %v3669, %v4012
      %v4271 = vadd.f32 %v3670, %v4011
      %v4272 = vadd.f32 %v3671, %v4015
      %v4273 = vadd.f32 %v3672, %v4017
      %v4274 = vadd.f32 %v3673, %v4019
      %v4275 = vadd.f32 %v3674, %v4018
      %v4276 = vadd.f32 %v3675, %v4022
      %v4277 = vadd.f32 %v3676, %v4024
      %v4278 = vadd.f32 %v3677, %v4026
      %v4279 = vadd.f32 %v3678, %v4025
      %v4280 = vadd.f32 %v3679, %v4029
      %v4281 = vadd.f32 %v3680, %v4031
      %v4282 = vadd.f32 %v3681, %v4033
      %v4283 = vadd.f32 %v3682, %v4032
      %v4284 = vadd.f32 %v3683, %v4036
      %v4285 = vadd.f32 %v3684, %v4038
      %v4286 = vadd.f32 %v3685, %v4040
      %v4287 = vadd.f32 %v3686, %v4039
      %v4288 = vadd.f32 %v3687, %v4043
      %v4289 = vadd.f32 %v3688, %v4045
      %v4290 = vadd.f32 %v3689, %v4047
      %v4291 = vadd.f32 %v3690, %v4046
      %v4292 = vadd.f32 %v3691, %v4050
      %v4293 = vadd.f32 %v3692, %v4052
      %v4294 = vadd.f32 %v3693, %v4054
      %v4295 = vadd.f32 %v3694, %v4053
      %v4296 = vadd.f32 %v3695, %v4057
      %v4297 = vadd.f32 %v3696, %v4059
      %v4298 = vadd.f32 %v3697, %v4061
      %v4299 = vadd.f32 %v3698, %v4060
      %v4300 = vadd.f32 %v3699, %v4064
      %v4301 = vadd.f32 %v3700, %v4066
      %v4302 = vadd.f32 %v3701, %v4068
      %v4303 = vadd.f32 %v3702, %v4067
      %v4304 = vadd.f32 %v3703, %v4071
      %v4305 = vadd.f32 %v3704, %v4073
      %v4306 = vadd.f32 %v3705, %v4075
      %v4307 = vadd.f32 %v3706, %v4074
      %v4308 = vadd.f32 %v3707, %v4078
      %v4309 = vadd.f32 %v3708, %v4080
      %v4310 = vadd.f32 %v3709, %v4082
      %v4311 = vadd.f32 %v3710, %v4081
      %v4312 = vadd.f32 %v3711, %v4085
      %v4313 = vadd.f32 %v3712, %v4087
      %v4314 = vadd.f32 %v3713, %v4089
      %v4315 = vadd.f32 %v3714, %v4088
      %v4316 = vadd.f32 %v3715, %v4092
      %v4317 = vadd.f32 %v3716, %v4094
      %v4318 = vadd.f32 %v3717, %v4096
      %v4319 = vadd.f32 %v3718, %v4095
      %v4320 = vadd.f32 %v3719, %v4099
      %v4321 = vadd.f32 %v3720, %v4101
      %v4322 = vadd.f32 %v3721, %v4103
      %v4323 = vadd.f32 %v3722, %v4102
      %v4324 = vadd.f32 %v3723, %v4106
      %v4325 = vadd.f32 %v3724, %v4108
      %v4326 = vadd.f32 %v3725, %v4110
      %v4327 = vadd.f32 %v3726, %v4109
      %v4328 = vadd.f32 %v3727, %v4113
      %v4329 = vadd.f32 %v3728, %v4115
      %v4330 = vadd.f32 %v3729, %v4117
      %v4331 = vadd.f32 %v3730, %v4116
      %v4332 = vadd.f32 %v3731, %v4120
      %v4333 = vadd.f32 %v3732, %v4122
      %v4334 = vadd.f32 %v3733, %v4124
      %v4335 = vadd.f32 %v3734, %v4123
      %v4336 = vadd.f32 %v3735, %v4127
      %v4337 = vadd.f32 %v3736, %v4129
      %v4338 = vadd.f32 %v3737, %v4131
      %v4339 = vadd.f32 %v3738, %v4130
      %s4340 = sld [smem:[#allocation6 + %s199]]
      %v4341 = vstv %s4340
      %v4342 = vadd.f32 %v4236, %v4341
      %v4343 = vadd.f32 %v4237, %v4341
      %v4344 = vadd.f32 %v4238, %v4341
      %v4345 = vadd.f32 %v4239, %v4341
      %v4346 = vadd.f32 %v4240, %v4341
      %v4347 = vadd.f32 %v4241, %v4341
      %v4348 = vadd.f32 %v4242, %v4341
      %v4349 = vadd.f32 %v4243, %v4341
      %v4350 = vadd.f32 %v4244, %v4341
      %v4351 = vadd.f32 %v4245, %v4341
      %v4352 = vadd.f32 %v4246, %v4341
      %v4353 = vadd.f32 %v4247, %v4341
      %v4354 = vadd.f32 %v4248, %v4341
      %v4355 = vadd.f32 %v4249, %v4341
      %v4356 = vadd.f32 %v4250, %v4341
      %v4357 = vadd.f32 %v4251, %v4341
      %v4358 = vadd.f32 %v4252, %v4341
      %v4359 = vadd.f32 %v4253, %v4341
      %v4360 = vadd.f32 %v4254, %v4341
      %v4361 = vadd.f32 %v4255, %v4341
      %v4362 = vadd.f32 %v4256, %v4341
      %v4363 = vadd.f32 %v4257, %v4341
      %v4364 = vadd.f32 %v4258, %v4341
      %v4365 = vadd.f32 %v4259, %v4341
      %v4366 = vadd.f32 %v4260, %v4341
      %v4367 = vadd.f32 %v4261, %v4341
      %v4368 = vadd.f32 %v4262, %v4341
      %v4369 = vadd.f32 %v4263, %v4341
      %v4370 = vadd.f32 %v4264, %v4341
      %v4371 = vadd.f32 %v4265, %v4341
      %v4372 = vadd.f32 %v4266, %v4341
      %v4373 = vadd.f32 %v4267, %v4341
      %v4374 = vadd.f32 %v4268, %v4341
      %v4375 = vadd.f32 %v4269, %v4341
      %v4376 = vadd.f32 %v4270, %v4341
      %v4377 = vadd.f32 %v4271, %v4341
      %v4378 = vadd.f32 %v4272, %v4341
      %v4379 = vadd.f32 %v4273, %v4341
      %v4380 = vadd.f32 %v4274, %v4341
      %v4381 = vadd.f32 %v4275, %v4341
      %v4382 = vadd.f32 %v4276, %v4341
      %v4383 = vadd.f32 %v4277, %v4341
      %v4384 = vadd.f32 %v4278, %v4341
      %v4385 = vadd.f32 %v4279, %v4341
      %v4386 = vadd.f32 %v4280, %v4341
      %v4387 = vadd.f32 %v4281, %v4341
      %v4388 = vadd.f32 %v4282, %v4341
      %v4389 = vadd.f32 %v4283, %v4341
      %v4390 = vadd.f32 %v4284, %v4341
      %v4391 = vadd.f32 %v4285, %v4341
      %v4392 = vadd.f32 %v4286, %v4341
      %v4393 = vadd.f32 %v4287, %v4341
      %v4394 = vadd.f32 %v4288, %v4341
      %v4395 = vadd.f32 %v4289, %v4341
      %v4396 = vadd.f32 %v4290, %v4341
      %v4397 = vadd.f32 %v4291, %v4341
      %v4398 = vadd.f32 %v4292, %v4341
      %v4399 = vadd.f32 %v4293, %v4341
      %v4400 = vadd.f32 %v4294, %v4341
      %v4401 = vadd.f32 %v4295, %v4341
      %v4402 = vadd.f32 %v4296, %v4341
      %v4403 = vadd.f32 %v4297, %v4341
      %v4404 = vadd.f32 %v4298, %v4341
      %v4405 = vadd.f32 %v4299, %v4341
      %v4406 = vadd.f32 %v4300, %v4341
      %v4407 = vadd.f32 %v4301, %v4341
      %v4408 = vadd.f32 %v4302, %v4341
      %v4409 = vadd.f32 %v4303, %v4341
      %v4410 = vadd.f32 %v4304, %v4341
      %v4411 = vadd.f32 %v4305, %v4341
      %v4412 = vadd.f32 %v4306, %v4341
      %v4413 = vadd.f32 %v4307, %v4341
      %v4414 = vadd.f32 %v4308, %v4341
      %v4415 = vadd.f32 %v4309, %v4341
      %v4416 = vadd.f32 %v4310, %v4341
      %v4417 = vadd.f32 %v4311, %v4341
      %v4418 = vadd.f32 %v4312, %v4341
      %v4419 = vadd.f32 %v4313, %v4341
      %v4420 = vadd.f32 %v4314, %v4341
      %v4421 = vadd.f32 %v4315, %v4341
      %v4422 = vadd.f32 %v4316, %v4341
      %v4423 = vadd.f32 %v4317, %v4341
      %v4424 = vadd.f32 %v4318, %v4341
      %v4425 = vadd.f32 %v4319, %v4341
      %v4426 = vadd.f32 %v4320, %v4341
      %v4427 = vadd.f32 %v4321, %v4341
      %v4428 = vadd.f32 %v4322, %v4341
      %v4429 = vadd.f32 %v4323, %v4341
      %v4430 = vadd.f32 %v4324, %v4341
      %v4431 = vadd.f32 %v4325, %v4341
      %v4432 = vadd.f32 %v4326, %v4341
      %v4433 = vadd.f32 %v4327, %v4341
      %v4434 = vadd.f32 %v4328, %v4341
      %v4435 = vadd.f32 %v4329, %v4341
      %v4436 = vadd.f32 %v4330, %v4341
      %v4437 = vadd.f32 %v4331, %v4341
      %v4438 = vadd.f32 %v4332, %v4341
      %v4439 = vadd.f32 %v4333, %v4341
      %v4440 = vadd.f32 %v4334, %v4341
      %v4441 = vadd.f32 %v4335, %v4341
      %v4442 = vadd.f32 %v4336, %v4341
      %v4443 = vadd.f32 %v4337, %v4341
      %v4444 = vadd.f32 %v4338, %v4341
      %v4445 = vadd.f32 %v4339, %v4341
      %v4446 = vmax.f32 %v4342, 0.0
      %v4447 = vmax.f32 %v4343, 0.0
      %v4448 = vmax.f32 %v4344, 0.0
      %v4449 = vmax.f32 %v4345, 0.0
      %v4450 = vmax.f32 %v4346, 0.0
      %v4451 = vmax.f32 %v4347, 0.0
      %v4452 = vmax.f32 %v4348, 0.0
      %v4453 = vmax.f32 %v4349, 0.0
      %v4454 = vmax.f32 %v4350, 0.0
      %v4455 = vmax.f32 %v4351, 0.0
      %v4456 = vmax.f32 %v4352, 0.0
      %v4457 = vmax.f32 %v4353, 0.0
      %v4458 = vmax.f32 %v4354, 0.0
      %v4459 = vmax.f32 %v4355, 0.0
      %v4460 = vmax.f32 %v4356, 0.0
      %v4461 = vmax.f32 %v4357, 0.0
      %v4462 = vmax.f32 %v4358, 0.0
      %v4463 = vmax.f32 %v4359, 0.0
      %v4464 = vmax.f32 %v4360, 0.0
      %v4465 = vmax.f32 %v4361, 0.0
      %v4466 = vmax.f32 %v4362, 0.0
      %v4467 = vmax.f32 %v4363, 0.0
      %v4468 = vmax.f32 %v4364, 0.0
      %v4469 = vmax.f32 %v4365, 0.0
      %v4470 = vmax.f32 %v4366, 0.0
      %v4471 = vmax.f32 %v4367, 0.0
      %v4472 = vmax.f32 %v4368, 0.0
      %v4473 = vmax.f32 %v4369, 0.0
      %v4474 = vmax.f32 %v4370, 0.0
      %v4475 = vmax.f32 %v4371, 0.0
      %v4476 = vmax.f32 %v4372, 0.0
      %v4477 = vmax.f32 %v4373, 0.0
      %v4478 = vmax.f32 %v4374, 0.0
      %v4479 = vmax.f32 %v4375, 0.0
      %v4480 = vmax.f32 %v4376, 0.0
      %v4481 = vmax.f32 %v4377, 0.0
      %v4482 = vmax.f32 %v4378, 0.0
      %v4483 = vmax.f32 %v4379, 0.0
      %v4484 = vmax.f32 %v4380, 0.0
      %v4485 = vmax.f32 %v4381, 0.0
      %v4486 = vmax.f32 %v4382, 0.0
      %v4487 = vmax.f32 %v4383, 0.0
      %v4488 = vmax.f32 %v4384, 0.0
      %v4489 = vmax.f32 %v4385, 0.0
      %v4490 = vmax.f32 %v4386, 0.0
      %v4491 = vmax.f32 %v4387, 0.0
      %v4492 = vmax.f32 %v4388, 0.0
      %v4493 = vmax.f32 %v4389, 0.0
      %v4494 = vmax.f32 %v4390, 0.0
      %v4495 = vmax.f32 %v4391, 0.0
      %v4496 = vmax.f32 %v4392, 0.0
      %v4497 = vmax.f32 %v4393, 0.0
      %v4498 = vmax.f32 %v4394, 0.0
      %v4499 = vmax.f32 %v4395, 0.0
      %v4500 = vmax.f32 %v4396, 0.0
      %v4501 = vmax.f32 %v4397, 0.0
      %v4502 = vmax.f32 %v4398, 0.0
      %v4503 = vmax.f32 %v4399, 0.0
      %v4504 = vmax.f32 %v4400, 0.0
      %v4505 = vmax.f32 %v4401, 0.0
      %v4506 = vmax.f32 %v4402, 0.0
      %v4507 = vmax.f32 %v4403, 0.0
      %v4508 = vmax.f32 %v4404, 0.0
      %v4509 = vmax.f32 %v4405, 0.0
      %v4510 = vmax.f32 %v4406, 0.0
      %v4511 = vmax.f32 %v4407, 0.0
      %v4512 = vmax.f32 %v4408, 0.0
      %v4513 = vmax.f32 %v4409, 0.0
      %v4514 = vmax.f32 %v4410, 0.0
      %v4515 = vmax.f32 %v4411, 0.0
      %v4516 = vmax.f32 %v4412, 0.0
      %v4517 = vmax.f32 %v4413, 0.0
      %v4518 = vmax.f32 %v4414, 0.0
      %v4519 = vmax.f32 %v4415, 0.0
      %v4520 = vmax.f32 %v4416, 0.0
      %v4521 = vmax.f32 %v4417, 0.0
      %v4522 = vmax.f32 %v4418, 0.0
      %v4523 = vmax.f32 %v4419, 0.0
      %v4524 = vmax.f32 %v4420, 0.0
      %v4525 = vmax.f32 %v4421, 0.0
      %v4526 = vmax.f32 %v4422, 0.0
      %v4527 = vmax.f32 %v4423, 0.0
      %v4528 = vmax.f32 %v4424, 0.0
      %v4529 = vmax.f32 %v4425, 0.0
      %v4530 = vmax.f32 %v4426, 0.0
      %v4531 = vmax.f32 %v4427, 0.0
      %v4532 = vmax.f32 %v4428, 0.0
      %v4533 = vmax.f32 %v4429, 0.0
      %v4534 = vmax.f32 %v4430, 0.0
      %v4535 = vmax.f32 %v4431, 0.0
      %v4536 = vmax.f32 %v4432, 0.0
      %v4537 = vmax.f32 %v4433, 0.0
      %v4538 = vmax.f32 %v4434, 0.0
      %v4539 = vmax.f32 %v4435, 0.0
      %v4540 = vmax.f32 %v4436, 0.0
      %v4541 = vmax.f32 %v4437, 0.0
      %v4542 = vmax.f32 %v4438, 0.0
      %v4543 = vmax.f32 %v4439, 0.0
      %v4544 = vmax.f32 %v4440, 0.0
      %v4545 = vmax.f32 %v4441, 0.0
      %v4546 = vmax.f32 %v4442, 0.0
      %v4547 = vmax.f32 %v4443, 0.0
      %v4548 = vmax.f32 %v4444, 0.0
      %v4549 = vmax.f32 %v4445, 0.0
      %v4550 = vmax.f32 %v4446, %v4450
      %v4551 = vmax.f32 %v4447, %v4451
      %v4552 = vmax.f32 %v4448, %v4452
      %v4553 = vmax.f32 %v4449, %v4453
      %v4554 = vmax.f32 %v4454, %v4458
      %v4555 = vmax.f32 %v4455, %v4459
      %v4556 = vmax.f32 %v4456, %v4460
      %v4557 = vmax.f32 %v4457, %v4461
      %v4558 = vmax.f32 %v4462, %v4466
      %v4559 = vmax.f32 %v4463, %v4467
      %v4560 = vmax.f32 %v4464, %v4468
      %v4561 = vmax.f32 %v4465, %v4469
      %v4562 = vmax.f32 %v4470, %v4474
      %v4563 = vmax.f32 %v4471, %v4475
      %v4564 = vmax.f32 %v4472, %v4476
      %v4565 = vmax.f32 %v4473, %v4477
      %v4566 = vmax.f32 %v4478, %v4482
      %v4567 = vmax.f32 %v4479, %v4483
      %v4568 = vmax.f32 %v4480, %v4484
      %v4569 = vmax.f32 %v4481, %v4485
      %v4570 = vmax.f32 %v4486, %v4490
      %v4571 = vmax.f32 %v4487, %v4491
      %v4572 = vmax.f32 %v4488, %v4492
      %v4573 = vmax.f32 %v4489, %v4493
      %v4574 = vmax.f32 %v4494, %v4498
      %v4575 = vmax.f32 %v4495, %v4499
      %v4576 = vmax.f32 %v4496, %v4500
      %v4577 = vmax.f32 %v4497, %v4501
      %v4578 = vmax.f32 %v4502, %v4506
      %v4579 = vmax.f32 %v4503, %v4507
      %v4580 = vmax.f32 %v4504, %v4508
      %v4581 = vmax.f32 %v4505, %v4509
      %v4582 = vmax.f32 %v4510, %v4514
      %v4583 = vmax.f32 %v4511, %v4515
      %v4584 = vmax.f32 %v4512, %v4516
      %v4585 = vmax.f32 %v4513, %v4517
      %v4586 = vmax.f32 %v4518, %v4522
      %v4587 = vmax.f32 %v4519, %v4523
      %v4588 = vmax.f32 %v4520, %v4524
      %v4589 = vmax.f32 %v4521, %v4525
      %v4590 = vmax.f32 %v4526, %v4530
      %v4591 = vmax.f32 %v4527, %v4531
      %v4592 = vmax.f32 %v4528, %v4532
      %v4593 = vmax.f32 %v4529, %v4533
      %v4594 = vmax.f32 %v4534, %v4538
      %v4595 = vmax.f32 %v4535, %v4539
      %v4596 = vmax.f32 %v4536, %v4540
      %v4597 = vmax.f32 %v4537, %v4541
      %v4598 = vmax.f32 %v4542, %v4546
      %v4599 = vmax.f32 %v4543, %v4547
      %v4600 = vmax.f32 %v4544, %v4548
      %v4601 = vmax.f32 %v4545, %v4549
      %v4654 = vcombine.high %v4550, %v4550
      %v4656 = vunpack.c.l.s4 1983009808
      %v4657 = vunpack.c.0.s8 %v4656
      %v4658 = vlaneseq
      %v4659 = vshrl.u32 %v4658, 7
      %v4660 = vsub.s32 %v4657, %v4659
      %v4661 = vrot.slane %v4550, %v4660
      %v4663 = vunpack.c.l.s4 1983009808
      %v4664 = vunpack.c.0.s8 %v4663
      %v4665 = vlaneseq
      %v4666 = vshrl.u32 %v4665, 7
      %v4667 = vsub.s32 %v4664, %v4666
      %v4668 = vrot.slane %v4654, %v4667
      %v4669 = vcombine.high %v4661, %v4661
      %v4670 = vcombine.high %v4668, %v4668
      %v4671 = vcombine.high %v4551, %v4551
      %v4673 = vunpack.c.l.s4 1983009808
      %v4674 = vunpack.c.0.s8 %v4673
      %v4675 = vlaneseq
      %v4676 = vshrl.u32 %v4675, 7
      %v4677 = vsub.s32 %v4674, %v4676
      %v4678 = vrot.slane %v4551, %v4677
      %v4680 = vunpack.c.l.s4 1983009808
      %v4681 = vunpack.c.0.s8 %v4680
      %v4682 = vlaneseq
      %v4683 = vshrl.u32 %v4682, 7
      %v4684 = vsub.s32 %v4681, %v4683
      %v4685 = vrot.slane %v4671, %v4684
      %v4686 = vcombine.high %v4678, %v4678
      %v4687 = vcombine.high %v4685, %v4685
      %v4688 = vcombine.high %v4552, %v4552
      %v4690 = vunpack.c.l.s4 1983009808
      %v4691 = vunpack.c.0.s8 %v4690
      %v4692 = vlaneseq
      %v4693 = vshrl.u32 %v4692, 7
      %v4694 = vsub.s32 %v4691, %v4693
      %v4695 = vrot.slane %v4552, %v4694
      %v4697 = vunpack.c.l.s4 1983009808
      %v4698 = vunpack.c.0.s8 %v4697
      %v4699 = vlaneseq
      %v4700 = vshrl.u32 %v4699, 7
      %v4701 = vsub.s32 %v4698, %v4700
      %v4702 = vrot.slane %v4688, %v4701
      %v4703 = vcombine.high %v4695, %v4695
      %v4704 = vcombine.high %v4702, %v4702
      %v4706 = vunpack.c.l.s4 1983009808
      %v4707 = vunpack.c.0.s8 %v4706
      %v4708 = vlaneseq
      %v4709 = vshrl.u32 %v4708, 7
      %v4710 = vsub.s32 %v4707, %v4709
      %v4711 = vrot.slane %v4553, %v4710
      %v4712 = vcombine.high %v4554, %v4554
      %v4714 = vunpack.c.l.s4 1983009808
      %v4715 = vunpack.c.0.s8 %v4714
      %v4716 = vlaneseq
      %v4717 = vshrl.u32 %v4716, 7
      %v4718 = vsub.s32 %v4715, %v4717
      %v4719 = vrot.slane %v4554, %v4718
      %v4721 = vunpack.c.l.s4 1983009808
      %v4722 = vunpack.c.0.s8 %v4721
      %v4723 = vlaneseq
      %v4724 = vshrl.u32 %v4723, 7
      %v4725 = vsub.s32 %v4722, %v4724
      %v4726 = vrot.slane %v4712, %v4725
      %v4727 = vcombine.high %v4719, %v4719
      %v4728 = vcombine.high %v4726, %v4726
      %v4729 = vcombine.high %v4555, %v4555
      %v4731 = vunpack.c.l.s4 1983009808
      %v4732 = vunpack.c.0.s8 %v4731
      %v4733 = vlaneseq
      %v4734 = vshrl.u32 %v4733, 7
      %v4735 = vsub.s32 %v4732, %v4734
      %v4736 = vrot.slane %v4555, %v4735
      %v4738 = vunpack.c.l.s4 1983009808
      %v4739 = vunpack.c.0.s8 %v4738
      %v4740 = vlaneseq
      %v4741 = vshrl.u32 %v4740, 7
      %v4742 = vsub.s32 %v4739, %v4741
      %v4743 = vrot.slane %v4729, %v4742
      %v4744 = vcombine.high %v4736, %v4736
      %v4745 = vcombine.high %v4743, %v4743
      %v4746 = vcombine.high %v4556, %v4556
      %v4748 = vunpack.c.l.s4 1983009808
      %v4749 = vunpack.c.0.s8 %v4748
      %v4750 = vlaneseq
      %v4751 = vshrl.u32 %v4750, 7
      %v4752 = vsub.s32 %v4749, %v4751
      %v4753 = vrot.slane %v4556, %v4752
      %v4755 = vunpack.c.l.s4 1983009808
      %v4756 = vunpack.c.0.s8 %v4755
      %v4757 = vlaneseq
      %v4758 = vshrl.u32 %v4757, 7
      %v4759 = vsub.s32 %v4756, %v4758
      %v4760 = vrot.slane %v4746, %v4759
      %v4761 = vcombine.high %v4753, %v4753
      %v4762 = vcombine.high %v4760, %v4760
      %v4764 = vunpack.c.l.s4 1983009808
      %v4765 = vunpack.c.0.s8 %v4764
      %v4766 = vlaneseq
      %v4767 = vshrl.u32 %v4766, 7
      %v4768 = vsub.s32 %v4765, %v4767
      %v4769 = vrot.slane %v4557, %v4768
      %v4770 = vcombine.high %v4558, %v4558
      %v4772 = vunpack.c.l.s4 1983009808
      %v4773 = vunpack.c.0.s8 %v4772
      %v4774 = vlaneseq
      %v4775 = vshrl.u32 %v4774, 7
      %v4776 = vsub.s32 %v4773, %v4775
      %v4777 = vrot.slane %v4558, %v4776
      %v4779 = vunpack.c.l.s4 1983009808
      %v4780 = vunpack.c.0.s8 %v4779
      %v4781 = vlaneseq
      %v4782 = vshrl.u32 %v4781, 7
      %v4783 = vsub.s32 %v4780, %v4782
      %v4784 = vrot.slane %v4770, %v4783
      %v4785 = vcombine.high %v4777, %v4777
      %v4786 = vcombine.high %v4784, %v4784
      %v4787 = vcombine.high %v4559, %v4559
      %v4789 = vunpack.c.l.s4 1983009808
      %v4790 = vunpack.c.0.s8 %v4789
      %v4791 = vlaneseq
      %v4792 = vshrl.u32 %v4791, 7
      %v4793 = vsub.s32 %v4790, %v4792
      %v4794 = vrot.slane %v4559, %v4793
      %v4796 = vunpack.c.l.s4 1983009808
      %v4797 = vunpack.c.0.s8 %v4796
      %v4798 = vlaneseq
      %v4799 = vshrl.u32 %v4798, 7
      %v4800 = vsub.s32 %v4797, %v4799
      %v4801 = vrot.slane %v4787, %v4800
      %v4802 = vcombine.high %v4794, %v4794
      %v4803 = vcombine.high %v4801, %v4801
      %v4804 = vcombine.high %v4560, %v4560
      %v4806 = vunpack.c.l.s4 1983009808
      %v4807 = vunpack.c.0.s8 %v4806
      %v4808 = vlaneseq
      %v4809 = vshrl.u32 %v4808, 7
      %v4810 = vsub.s32 %v4807, %v4809
      %v4811 = vrot.slane %v4560, %v4810
      %v4813 = vunpack.c.l.s4 1983009808
      %v4814 = vunpack.c.0.s8 %v4813
      %v4815 = vlaneseq
      %v4816 = vshrl.u32 %v4815, 7
      %v4817 = vsub.s32 %v4814, %v4816
      %v4818 = vrot.slane %v4804, %v4817
      %v4819 = vcombine.high %v4811, %v4811
      %v4820 = vcombine.high %v4818, %v4818
      %v4822 = vunpack.c.l.s4 1983009808
      %v4823 = vunpack.c.0.s8 %v4822
      %v4824 = vlaneseq
      %v4825 = vshrl.u32 %v4824, 7
      %v4826 = vsub.s32 %v4823, %v4825
      %v4827 = vrot.slane %v4561, %v4826
      %v4828 = vcombine.high %v4562, %v4562
      %v4830 = vunpack.c.l.s4 1983009808
      %v4831 = vunpack.c.0.s8 %v4830
      %v4832 = vlaneseq
      %v4833 = vshrl.u32 %v4832, 7
      %v4834 = vsub.s32 %v4831, %v4833
      %v4835 = vrot.slane %v4562, %v4834
      %v4837 = vunpack.c.l.s4 1983009808
      %v4838 = vunpack.c.0.s8 %v4837
      %v4839 = vlaneseq
      %v4840 = vshrl.u32 %v4839, 7
      %v4841 = vsub.s32 %v4838, %v4840
      %v4842 = vrot.slane %v4828, %v4841
      %v4843 = vcombine.high %v4835, %v4835
      %v4844 = vcombine.high %v4842, %v4842
      %v4845 = vcombine.high %v4563, %v4563
      %v4847 = vunpack.c.l.s4 1983009808
      %v4848 = vunpack.c.0.s8 %v4847
      %v4849 = vlaneseq
      %v4850 = vshrl.u32 %v4849, 7
      %v4851 = vsub.s32 %v4848, %v4850
      %v4852 = vrot.slane %v4563, %v4851
      %v4854 = vunpack.c.l.s4 1983009808
      %v4855 = vunpack.c.0.s8 %v4854
      %v4856 = vlaneseq
      %v4857 = vshrl.u32 %v4856, 7
      %v4858 = vsub.s32 %v4855, %v4857
      %v4859 = vrot.slane %v4845, %v4858
      %v4860 = vcombine.high %v4852, %v4852
      %v4861 = vcombine.high %v4859, %v4859
      %v4862 = vcombine.high %v4564, %v4564
      %v4864 = vunpack.c.l.s4 1983009808
      %v4865 = vunpack.c.0.s8 %v4864
      %v4866 = vlaneseq
      %v4867 = vshrl.u32 %v4866, 7
      %v4868 = vsub.s32 %v4865, %v4867
      %v4869 = vrot.slane %v4564, %v4868
      %v4871 = vunpack.c.l.s4 1983009808
      %v4872 = vunpack.c.0.s8 %v4871
      %v4873 = vlaneseq
      %v4874 = vshrl.u32 %v4873, 7
      %v4875 = vsub.s32 %v4872, %v4874
      %v4876 = vrot.slane %v4862, %v4875
      %v4877 = vcombine.high %v4869, %v4869
      %v4878 = vcombine.high %v4876, %v4876
      %v4880 = vunpack.c.l.s4 1983009808
      %v4881 = vunpack.c.0.s8 %v4880
      %v4882 = vlaneseq
      %v4883 = vshrl.u32 %v4882, 7
      %v4884 = vsub.s32 %v4881, %v4883
      %v4885 = vrot.slane %v4565, %v4884
      %v4886 = vcombine.high %v4566, %v4566
      %v4888 = vunpack.c.l.s4 1983009808
      %v4889 = vunpack.c.0.s8 %v4888
      %v4890 = vlaneseq
      %v4891 = vshrl.u32 %v4890, 7
      %v4892 = vsub.s32 %v4889, %v4891
      %v4893 = vrot.slane %v4566, %v4892
      %v4895 = vunpack.c.l.s4 1983009808
      %v4896 = vunpack.c.0.s8 %v4895
      %v4897 = vlaneseq
      %v4898 = vshrl.u32 %v4897, 7
      %v4899 = vsub.s32 %v4896, %v4898
      %v4900 = vrot.slane %v4886, %v4899
      %v4901 = vcombine.high %v4893, %v4893
      %v4902 = vcombine.high %v4900, %v4900
      %v4903 = vcombine.high %v4567, %v4567
      %v4905 = vunpack.c.l.s4 1983009808
      %v4906 = vunpack.c.0.s8 %v4905
      %v4907 = vlaneseq
      %v4908 = vshrl.u32 %v4907, 7
      %v4909 = vsub.s32 %v4906, %v4908
      %v4910 = vrot.slane %v4567, %v4909
      %v4912 = vunpack.c.l.s4 1983009808
      %v4913 = vunpack.c.0.s8 %v4912
      %v4914 = vlaneseq
      %v4915 = vshrl.u32 %v4914, 7
      %v4916 = vsub.s32 %v4913, %v4915
      %v4917 = vrot.slane %v4903, %v4916
      %v4918 = vcombine.high %v4910, %v4910
      %v4919 = vcombine.high %v4917, %v4917
      %v4920 = vcombine.high %v4568, %v4568
      %v4922 = vunpack.c.l.s4 1983009808
      %v4923 = vunpack.c.0.s8 %v4922
      %v4924 = vlaneseq
      %v4925 = vshrl.u32 %v4924, 7
      %v4926 = vsub.s32 %v4923, %v4925
      %v4927 = vrot.slane %v4568, %v4926
      %v4929 = vunpack.c.l.s4 1983009808
      %v4930 = vunpack.c.0.s8 %v4929
      %v4931 = vlaneseq
      %v4932 = vshrl.u32 %v4931, 7
      %v4933 = vsub.s32 %v4930, %v4932
      %v4934 = vrot.slane %v4920, %v4933
      %v4935 = vcombine.high %v4927, %v4927
      %v4936 = vcombine.high %v4934, %v4934
      %v4938 = vunpack.c.l.s4 1983009808
      %v4939 = vunpack.c.0.s8 %v4938
      %v4940 = vlaneseq
      %v4941 = vshrl.u32 %v4940, 7
      %v4942 = vsub.s32 %v4939, %v4941
      %v4943 = vrot.slane %v4569, %v4942
      %v4944 = vcombine.high %v4570, %v4570
      %v4946 = vunpack.c.l.s4 1983009808
      %v4947 = vunpack.c.0.s8 %v4946
      %v4948 = vlaneseq
      %v4949 = vshrl.u32 %v4948, 7
      %v4950 = vsub.s32 %v4947, %v4949
      %v4951 = vrot.slane %v4570, %v4950
      %v4953 = vunpack.c.l.s4 1983009808
      %v4954 = vunpack.c.0.s8 %v4953
      %v4955 = vlaneseq
      %v4956 = vshrl.u32 %v4955, 7
      %v4957 = vsub.s32 %v4954, %v4956
      %v4958 = vrot.slane %v4944, %v4957
      %v4959 = vcombine.high %v4951, %v4951
      %v4960 = vcombine.high %v4958, %v4958
      %v4961 = vcombine.high %v4571, %v4571
      %v4963 = vunpack.c.l.s4 1983009808
      %v4964 = vunpack.c.0.s8 %v4963
      %v4965 = vlaneseq
      %v4966 = vshrl.u32 %v4965, 7
      %v4967 = vsub.s32 %v4964, %v4966
      %v4968 = vrot.slane %v4571, %v4967
      %v4970 = vunpack.c.l.s4 1983009808
      %v4971 = vunpack.c.0.s8 %v4970
      %v4972 = vlaneseq
      %v4973 = vshrl.u32 %v4972, 7
      %v4974 = vsub.s32 %v4971, %v4973
      %v4975 = vrot.slane %v4961, %v4974
      %v4976 = vcombine.high %v4968, %v4968
      %v4977 = vcombine.high %v4975, %v4975
      %v4978 = vcombine.high %v4572, %v4572
      %v4980 = vunpack.c.l.s4 1983009808
      %v4981 = vunpack.c.0.s8 %v4980
      %v4982 = vlaneseq
      %v4983 = vshrl.u32 %v4982, 7
      %v4984 = vsub.s32 %v4981, %v4983
      %v4985 = vrot.slane %v4572, %v4984
      %v4987 = vunpack.c.l.s4 1983009808
      %v4988 = vunpack.c.0.s8 %v4987
      %v4989 = vlaneseq
      %v4990 = vshrl.u32 %v4989, 7
      %v4991 = vsub.s32 %v4988, %v4990
      %v4992 = vrot.slane %v4978, %v4991
      %v4993 = vcombine.high %v4985, %v4985
      %v4994 = vcombine.high %v4992, %v4992
      %v4996 = vunpack.c.l.s4 1983009808
      %v4997 = vunpack.c.0.s8 %v4996
      %v4998 = vlaneseq
      %v4999 = vshrl.u32 %v4998, 7
      %v5000 = vsub.s32 %v4997, %v4999
      %v5001 = vrot.slane %v4573, %v5000
      %v5002 = vcombine.high %v4574, %v4574
      %v5004 = vunpack.c.l.s4 1983009808
      %v5005 = vunpack.c.0.s8 %v5004
      %v5006 = vlaneseq
      %v5007 = vshrl.u32 %v5006, 7
      %v5008 = vsub.s32 %v5005, %v5007
      %v5009 = vrot.slane %v4574, %v5008
      %v5011 = vunpack.c.l.s4 1983009808
      %v5012 = vunpack.c.0.s8 %v5011
      %v5013 = vlaneseq
      %v5014 = vshrl.u32 %v5013, 7
      %v5015 = vsub.s32 %v5012, %v5014
      %v5016 = vrot.slane %v5002, %v5015
      %v5017 = vcombine.high %v5009, %v5009
      %v5018 = vcombine.high %v5016, %v5016
      %v5019 = vcombine.high %v4575, %v4575
      %v5021 = vunpack.c.l.s4 1983009808
      %v5022 = vunpack.c.0.s8 %v5021
      %v5023 = vlaneseq
      %v5024 = vshrl.u32 %v5023, 7
      %v5025 = vsub.s32 %v5022, %v5024
      %v5026 = vrot.slane %v4575, %v5025
      %v5028 = vunpack.c.l.s4 1983009808
      %v5029 = vunpack.c.0.s8 %v5028
      %v5030 = vlaneseq
      %v5031 = vshrl.u32 %v5030, 7
      %v5032 = vsub.s32 %v5029, %v5031
      %v5033 = vrot.slane %v5019, %v5032
      %v5034 = vcombine.high %v5026, %v5026
      %v5035 = vcombine.high %v5033, %v5033
      %v5036 = vcombine.high %v4576, %v4576
      %v5038 = vunpack.c.l.s4 1983009808
      %v5039 = vunpack.c.0.s8 %v5038
      %v5040 = vlaneseq
      %v5041 = vshrl.u32 %v5040, 7
      %v5042 = vsub.s32 %v5039, %v5041
      %v5043 = vrot.slane %v4576, %v5042
      %v5045 = vunpack.c.l.s4 1983009808
      %v5046 = vunpack.c.0.s8 %v5045
      %v5047 = vlaneseq
      %v5048 = vshrl.u32 %v5047, 7
      %v5049 = vsub.s32 %v5046, %v5048
      %v5050 = vrot.slane %v5036, %v5049
      %v5051 = vcombine.high %v5043, %v5043
      %v5052 = vcombine.high %v5050, %v5050
      %v5054 = vunpack.c.l.s4 1983009808
      %v5055 = vunpack.c.0.s8 %v5054
      %v5056 = vlaneseq
      %v5057 = vshrl.u32 %v5056, 7
      %v5058 = vsub.s32 %v5055, %v5057
      %v5059 = vrot.slane %v4577, %v5058
      %v5060 = vcombine.high %v4578, %v4578
      %v5062 = vunpack.c.l.s4 1983009808
      %v5063 = vunpack.c.0.s8 %v5062
      %v5064 = vlaneseq
      %v5065 = vshrl.u32 %v5064, 7
      %v5066 = vsub.s32 %v5063, %v5065
      %v5067 = vrot.slane %v4578, %v5066
      %v5069 = vunpack.c.l.s4 1983009808
      %v5070 = vunpack.c.0.s8 %v5069
      %v5071 = vlaneseq
      %v5072 = vshrl.u32 %v5071, 7
      %v5073 = vsub.s32 %v5070, %v5072
      %v5074 = vrot.slane %v5060, %v5073
      %v5075 = vcombine.high %v5067, %v5067
      %v5076 = vcombine.high %v5074, %v5074
      %v5077 = vcombine.high %v4579, %v4579
      %v5079 = vunpack.c.l.s4 1983009808
      %v5080 = vunpack.c.0.s8 %v5079
      %v5081 = vlaneseq
      %v5082 = vshrl.u32 %v5081, 7
      %v5083 = vsub.s32 %v5080, %v5082
      %v5084 = vrot.slane %v4579, %v5083
      %v5086 = vunpack.c.l.s4 1983009808
      %v5087 = vunpack.c.0.s8 %v5086
      %v5088 = vlaneseq
      %v5089 = vshrl.u32 %v5088, 7
      %v5090 = vsub.s32 %v5087, %v5089
      %v5091 = vrot.slane %v5077, %v5090
      %v5092 = vcombine.high %v5084, %v5084
      %v5093 = vcombine.high %v5091, %v5091
      %v5094 = vcombine.high %v4580, %v4580
      %v5096 = vunpack.c.l.s4 1983009808
      %v5097 = vunpack.c.0.s8 %v5096
      %v5098 = vlaneseq
      %v5099 = vshrl.u32 %v5098, 7
      %v5100 = vsub.s32 %v5097, %v5099
      %v5101 = vrot.slane %v4580, %v5100
      %v5103 = vunpack.c.l.s4 1983009808
      %v5104 = vunpack.c.0.s8 %v5103
      %v5105 = vlaneseq
      %v5106 = vshrl.u32 %v5105, 7
      %v5107 = vsub.s32 %v5104, %v5106
      %v5108 = vrot.slane %v5094, %v5107
      %v5109 = vcombine.high %v5101, %v5101
      %v5110 = vcombine.high %v5108, %v5108
      %v5112 = vunpack.c.l.s4 1983009808
      %v5113 = vunpack.c.0.s8 %v5112
      %v5114 = vlaneseq
      %v5115 = vshrl.u32 %v5114, 7
      %v5116 = vsub.s32 %v5113, %v5115
      %v5117 = vrot.slane %v4581, %v5116
      %v5118 = vcombine.high %v4582, %v4582
      %v5120 = vunpack.c.l.s4 1983009808
      %v5121 = vunpack.c.0.s8 %v5120
      %v5122 = vlaneseq
      %v5123 = vshrl.u32 %v5122, 7
      %v5124 = vsub.s32 %v5121, %v5123
      %v5125 = vrot.slane %v4582, %v5124
      %v5127 = vunpack.c.l.s4 1983009808
      %v5128 = vunpack.c.0.s8 %v5127
      %v5129 = vlaneseq
      %v5130 = vshrl.u32 %v5129, 7
      %v5131 = vsub.s32 %v5128, %v5130
      %v5132 = vrot.slane %v5118, %v5131
      %v5133 = vcombine.high %v5125, %v5125
      %v5134 = vcombine.high %v5132, %v5132
      %v5135 = vcombine.high %v4583, %v4583
      %v5137 = vunpack.c.l.s4 1983009808
      %v5138 = vunpack.c.0.s8 %v5137
      %v5139 = vlaneseq
      %v5140 = vshrl.u32 %v5139, 7
      %v5141 = vsub.s32 %v5138, %v5140
      %v5142 = vrot.slane %v4583, %v5141
      %v5144 = vunpack.c.l.s4 1983009808
      %v5145 = vunpack.c.0.s8 %v5144
      %v5146 = vlaneseq
      %v5147 = vshrl.u32 %v5146, 7
      %v5148 = vsub.s32 %v5145, %v5147
      %v5149 = vrot.slane %v5135, %v5148
      %v5150 = vcombine.high %v5142, %v5142
      %v5151 = vcombine.high %v5149, %v5149
      %v5152 = vcombine.high %v4584, %v4584
      %v5154 = vunpack.c.l.s4 1983009808
      %v5155 = vunpack.c.0.s8 %v5154
      %v5156 = vlaneseq
      %v5157 = vshrl.u32 %v5156, 7
      %v5158 = vsub.s32 %v5155, %v5157
      %v5159 = vrot.slane %v4584, %v5158
      %v5161 = vunpack.c.l.s4 1983009808
      %v5162 = vunpack.c.0.s8 %v5161
      %v5163 = vlaneseq
      %v5164 = vshrl.u32 %v5163, 7
      %v5165 = vsub.s32 %v5162, %v5164
      %v5166 = vrot.slane %v5152, %v5165
      %v5167 = vcombine.high %v5159, %v5159
      %v5168 = vcombine.high %v5166, %v5166
      %v5170 = vunpack.c.l.s4 1983009808
      %v5171 = vunpack.c.0.s8 %v5170
      %v5172 = vlaneseq
      %v5173 = vshrl.u32 %v5172, 7
      %v5174 = vsub.s32 %v5171, %v5173
      %v5175 = vrot.slane %v4585, %v5174
      %v5176 = vcombine.high %v4586, %v4586
      %v5178 = vunpack.c.l.s4 1983009808
      %v5179 = vunpack.c.0.s8 %v5178
      %v5180 = vlaneseq
      %v5181 = vshrl.u32 %v5180, 7
      %v5182 = vsub.s32 %v5179, %v5181
      %v5183 = vrot.slane %v4586, %v5182
      %v5185 = vunpack.c.l.s4 1983009808
      %v5186 = vunpack.c.0.s8 %v5185
      %v5187 = vlaneseq
      %v5188 = vshrl.u32 %v5187, 7
      %v5189 = vsub.s32 %v5186, %v5188
      %v5190 = vrot.slane %v5176, %v5189
      %v5191 = vcombine.high %v5183, %v5183
      %v5192 = vcombine.high %v5190, %v5190
      %v5193 = vcombine.high %v4587, %v4587
      %v5195 = vunpack.c.l.s4 1983009808
      %v5196 = vunpack.c.0.s8 %v5195
      %v5197 = vlaneseq
      %v5198 = vshrl.u32 %v5197, 7
      %v5199 = vsub.s32 %v5196, %v5198
      %v5200 = vrot.slane %v4587, %v5199
      %v5202 = vunpack.c.l.s4 1983009808
      %v5203 = vunpack.c.0.s8 %v5202
      %v5204 = vlaneseq
      %v5205 = vshrl.u32 %v5204, 7
      %v5206 = vsub.s32 %v5203, %v5205
      %v5207 = vrot.slane %v5193, %v5206
      %v5208 = vcombine.high %v5200, %v5200
      %v5209 = vcombine.high %v5207, %v5207
      %v5210 = vcombine.high %v4588, %v4588
      %v5212 = vunpack.c.l.s4 1983009808
      %v5213 = vunpack.c.0.s8 %v5212
      %v5214 = vlaneseq
      %v5215 = vshrl.u32 %v5214, 7
      %v5216 = vsub.s32 %v5213, %v5215
      %v5217 = vrot.slane %v4588, %v5216
      %v5219 = vunpack.c.l.s4 1983009808
      %v5220 = vunpack.c.0.s8 %v5219
      %v5221 = vlaneseq
      %v5222 = vshrl.u32 %v5221, 7
      %v5223 = vsub.s32 %v5220, %v5222
      %v5224 = vrot.slane %v5210, %v5223
      %v5225 = vcombine.high %v5217, %v5217
      %v5226 = vcombine.high %v5224, %v5224
      %v5228 = vunpack.c.l.s4 1983009808
      %v5229 = vunpack.c.0.s8 %v5228
      %v5230 = vlaneseq
      %v5231 = vshrl.u32 %v5230, 7
      %v5232 = vsub.s32 %v5229, %v5231
      %v5233 = vrot.slane %v4589, %v5232
      %v5234 = vcombine.high %v4590, %v4590
      %v5236 = vunpack.c.l.s4 1983009808
      %v5237 = vunpack.c.0.s8 %v5236
      %v5238 = vlaneseq
      %v5239 = vshrl.u32 %v5238, 7
      %v5240 = vsub.s32 %v5237, %v5239
      %v5241 = vrot.slane %v4590, %v5240
      %v5243 = vunpack.c.l.s4 1983009808
      %v5244 = vunpack.c.0.s8 %v5243
      %v5245 = vlaneseq
      %v5246 = vshrl.u32 %v5245, 7
      %v5247 = vsub.s32 %v5244, %v5246
      %v5248 = vrot.slane %v5234, %v5247
      %v5249 = vcombine.high %v5241, %v5241
      %v5250 = vcombine.high %v5248, %v5248
      %v5251 = vcombine.high %v4591, %v4591
      %v5253 = vunpack.c.l.s4 1983009808
      %v5254 = vunpack.c.0.s8 %v5253
      %v5255 = vlaneseq
      %v5256 = vshrl.u32 %v5255, 7
      %v5257 = vsub.s32 %v5254, %v5256
      %v5258 = vrot.slane %v4591, %v5257
      %v5260 = vunpack.c.l.s4 1983009808
      %v5261 = vunpack.c.0.s8 %v5260
      %v5262 = vlaneseq
      %v5263 = vshrl.u32 %v5262, 7
      %v5264 = vsub.s32 %v5261, %v5263
      %v5265 = vrot.slane %v5251, %v5264
      %v5266 = vcombine.high %v5258, %v5258
      %v5267 = vcombine.high %v5265, %v5265
      %v5268 = vcombine.high %v4592, %v4592
      %v5270 = vunpack.c.l.s4 1983009808
      %v5271 = vunpack.c.0.s8 %v5270
      %v5272 = vlaneseq
      %v5273 = vshrl.u32 %v5272, 7
      %v5274 = vsub.s32 %v5271, %v5273
      %v5275 = vrot.slane %v4592, %v5274
      %v5277 = vunpack.c.l.s4 1983009808
      %v5278 = vunpack.c.0.s8 %v5277
      %v5279 = vlaneseq
      %v5280 = vshrl.u32 %v5279, 7
      %v5281 = vsub.s32 %v5278, %v5280
      %v5282 = vrot.slane %v5268, %v5281
      %v5283 = vcombine.high %v5275, %v5275
      %v5284 = vcombine.high %v5282, %v5282
      %v5286 = vunpack.c.l.s4 1983009808
      %v5287 = vunpack.c.0.s8 %v5286
      %v5288 = vlaneseq
      %v5289 = vshrl.u32 %v5288, 7
      %v5290 = vsub.s32 %v5287, %v5289
      %v5291 = vrot.slane %v4593, %v5290
      %v5292 = vcombine.high %v4594, %v4594
      %v5294 = vunpack.c.l.s4 1983009808
      %v5295 = vunpack.c.0.s8 %v5294
      %v5296 = vlaneseq
      %v5297 = vshrl.u32 %v5296, 7
      %v5298 = vsub.s32 %v5295, %v5297
      %v5299 = vrot.slane %v4594, %v5298
      %v5301 = vunpack.c.l.s4 1983009808
      %v5302 = vunpack.c.0.s8 %v5301
      %v5303 = vlaneseq
      %v5304 = vshrl.u32 %v5303, 7
      %v5305 = vsub.s32 %v5302, %v5304
      %v5306 = vrot.slane %v5292, %v5305
      %v5307 = vcombine.high %v5299, %v5299
      %v5308 = vcombine.high %v5306, %v5306
      %v5309 = vcombine.high %v4595, %v4595
      %v5311 = vunpack.c.l.s4 1983009808
      %v5312 = vunpack.c.0.s8 %v5311
      %v5313 = vlaneseq
      %v5314 = vshrl.u32 %v5313, 7
      %v5315 = vsub.s32 %v5312, %v5314
      %v5316 = vrot.slane %v4595, %v5315
      %v5318 = vunpack.c.l.s4 1983009808
      %v5319 = vunpack.c.0.s8 %v5318
      %v5320 = vlaneseq
      %v5321 = vshrl.u32 %v5320, 7
      %v5322 = vsub.s32 %v5319, %v5321
      %v5323 = vrot.slane %v5309, %v5322
      %v5324 = vcombine.high %v5316, %v5316
      %v5325 = vcombine.high %v5323, %v5323
      %v5326 = vcombine.high %v4596, %v4596
      %v5328 = vunpack.c.l.s4 1983009808
      %v5329 = vunpack.c.0.s8 %v5328
      %v5330 = vlaneseq
      %v5331 = vshrl.u32 %v5330, 7
      %v5332 = vsub.s32 %v5329, %v5331
      %v5333 = vrot.slane %v4596, %v5332
      %v5335 = vunpack.c.l.s4 1983009808
      %v5336 = vunpack.c.0.s8 %v5335
      %v5337 = vlaneseq
      %v5338 = vshrl.u32 %v5337, 7
      %v5339 = vsub.s32 %v5336, %v5338
      %v5340 = vrot.slane %v5326, %v5339
      %v5341 = vcombine.high %v5333, %v5333
      %v5342 = vcombine.high %v5340, %v5340
      %v5344 = vunpack.c.l.s4 1983009808
      %v5345 = vunpack.c.0.s8 %v5344
      %v5346 = vlaneseq
      %v5347 = vshrl.u32 %v5346, 7
      %v5348 = vsub.s32 %v5345, %v5347
      %v5349 = vrot.slane %v4597, %v5348
      %v5350 = vcombine.high %v4598, %v4598
      %v5352 = vunpack.c.l.s4 1983009808
      %v5353 = vunpack.c.0.s8 %v5352
      %v5354 = vlaneseq
      %v5355 = vshrl.u32 %v5354, 7
      %v5356 = vsub.s32 %v5353, %v5355
      %v5357 = vrot.slane %v4598, %v5356
      %v5359 = vunpack.c.l.s4 1983009808
      %v5360 = vunpack.c.0.s8 %v5359
      %v5361 = vlaneseq
      %v5362 = vshrl.u32 %v5361, 7
      %v5363 = vsub.s32 %v5360, %v5362
      %v5364 = vrot.slane %v5350, %v5363
      %v5365 = vcombine.high %v5357, %v5357
      %v5366 = vcombine.high %v5364, %v5364
      %v5367 = vcombine.high %v4599, %v4599
      %v5369 = vunpack.c.l.s4 1983009808
      %v5370 = vunpack.c.0.s8 %v5369
      %v5371 = vlaneseq
      %v5372 = vshrl.u32 %v5371, 7
      %v5373 = vsub.s32 %v5370, %v5372
      %v5374 = vrot.slane %v4599, %v5373
      %v5376 = vunpack.c.l.s4 1983009808
      %v5377 = vunpack.c.0.s8 %v5376
      %v5378 = vlaneseq
      %v5379 = vshrl.u32 %v5378, 7
      %v5380 = vsub.s32 %v5377, %v5379
      %v5381 = vrot.slane %v5367, %v5380
      %v5382 = vcombine.high %v5374, %v5374
      %v5383 = vcombine.high %v5381, %v5381
      %v5384 = vcombine.high %v4600, %v4600
      %v5386 = vunpack.c.l.s4 1983009808
      %v5387 = vunpack.c.0.s8 %v5386
      %v5388 = vlaneseq
      %v5389 = vshrl.u32 %v5388, 7
      %v5390 = vsub.s32 %v5387, %v5389
      %v5391 = vrot.slane %v4600, %v5390
      %v5393 = vunpack.c.l.s4 1983009808
      %v5394 = vunpack.c.0.s8 %v5393
      %v5395 = vlaneseq
      %v5396 = vshrl.u32 %v5395, 7
      %v5397 = vsub.s32 %v5394, %v5396
      %v5398 = vrot.slane %v5384, %v5397
      %v5399 = vcombine.high %v5391, %v5391
      %v5400 = vcombine.high %v5398, %v5398
      %v5402 = vunpack.c.l.s4 1983009808
      %v5403 = vunpack.c.0.s8 %v5402
      %v5404 = vlaneseq
      %v5405 = vshrl.u32 %v5404, 7
      %v5406 = vsub.s32 %v5403, %v5405
      %v5407 = vrot.slane %v4601, %v5406
      %v5577 = vrot.slane %v4661, 7
      %v5578 = vrot.slane %v5577, 2
      %v5579 = vrot.slane %v4669, 7
      %v5580 = vrot.slane %v5579, 2
      %v5581 = vrot.slane %v4668, 7
      %v5582 = vrot.slane %v5581, 2
      %v5583 = vrot.slane %v4670, 7
      %v5584 = vrot.slane %v5583, 2
      %v5585 = vrot.slane %v4678, 7
      %v5586 = vrot.slane %v5585, 2
      %v5587 = vrot.slane %v4686, 7
      %v5588 = vrot.slane %v5587, 2
      %v5589 = vrot.slane %v4685, 7
      %v5590 = vrot.slane %v5589, 2
      %v5591 = vrot.slane %v4687, 7
      %v5592 = vrot.slane %v5591, 2
      %v5593 = vrot.slane %v4695, 7
      %v5594 = vrot.slane %v5593, 2
      %v5595 = vrot.slane %v4703, 7
      %v5596 = vrot.slane %v5595, 2
      %v5597 = vrot.slane %v4702, 7
      %v5598 = vrot.slane %v5597, 2
      %v5599 = vrot.slane %v4704, 7
      %v5600 = vrot.slane %v5599, 2
      %v5601 = vrot.slane %v4711, 7
      %v5602 = vrot.slane %v5601, 2
      %v5603 = vrot.slane %v4719, 7
      %v5604 = vrot.slane %v5603, 2
      %v5605 = vrot.slane %v4727, 7
      %v5606 = vrot.slane %v5605, 2
      %v5607 = vrot.slane %v4726, 7
      %v5608 = vrot.slane %v5607, 2
      %v5609 = vrot.slane %v4728, 7
      %v5610 = vrot.slane %v5609, 2
      %v5611 = vrot.slane %v4736, 7
      %v5612 = vrot.slane %v5611, 2
      %v5613 = vrot.slane %v4744, 7
      %v5614 = vrot.slane %v5613, 2
      %v5615 = vrot.slane %v4743, 7
      %v5616 = vrot.slane %v5615, 2
      %v5617 = vrot.slane %v4745, 7
      %v5618 = vrot.slane %v5617, 2
      %v5619 = vrot.slane %v4753, 7
      %v5620 = vrot.slane %v5619, 2
      %v5621 = vrot.slane %v4761, 7
      %v5622 = vrot.slane %v5621, 2
      %v5623 = vrot.slane %v4760, 7
      %v5624 = vrot.slane %v5623, 2
      %v5625 = vrot.slane %v4762, 7
      %v5626 = vrot.slane %v5625, 2
      %v5627 = vrot.slane %v4769, 7
      %v5628 = vrot.slane %v5627, 2
      %v5629 = vrot.slane %v4777, 7
      %v5630 = vrot.slane %v5629, 2
      %v5631 = vrot.slane %v4785, 7
      %v5632 = vrot.slane %v5631, 2
      %v5633 = vrot.slane %v4784, 7
      %v5634 = vrot.slane %v5633, 2
      %v5635 = vrot.slane %v4786, 7
      %v5636 = vrot.slane %v5635, 2
      %v5637 = vrot.slane %v4794, 7
      %v5638 = vrot.slane %v5637, 2
      %v5639 = vrot.slane %v4802, 7
      %v5640 = vrot.slane %v5639, 2
      %v5641 = vrot.slane %v4801, 7
      %v5642 = vrot.slane %v5641, 2
      %v5643 = vrot.slane %v4803, 7
      %v5644 = vrot.slane %v5643, 2
      %v5645 = vrot.slane %v4811, 7
      %v5646 = vrot.slane %v5645, 2
      %v5647 = vrot.slane %v4819, 7
      %v5648 = vrot.slane %v5647, 2
      %v5649 = vrot.slane %v4818, 7
      %v5650 = vrot.slane %v5649, 2
      %v5651 = vrot.slane %v4820, 7
      %v5652 = vrot.slane %v5651, 2
      %v5653 = vrot.slane %v4827, 7
      %v5654 = vrot.slane %v5653, 2
      %v5655 = vrot.slane %v4835, 7
      %v5656 = vrot.slane %v5655, 2
      %v5657 = vrot.slane %v4843, 7
      %v5658 = vrot.slane %v5657, 2
      %v5659 = vrot.slane %v4842, 7
      %v5660 = vrot.slane %v5659, 2
      %v5661 = vrot.slane %v4844, 7
      %v5662 = vrot.slane %v5661, 2
      %v5663 = vrot.slane %v4852, 7
      %v5664 = vrot.slane %v5663, 2
      %v5665 = vrot.slane %v4860, 7
      %v5666 = vrot.slane %v5665, 2
      %v5667 = vrot.slane %v4859, 7
      %v5668 = vrot.slane %v5667, 2
      %v5669 = vrot.slane %v4861, 7
      %v5670 = vrot.slane %v5669, 2
      %v5671 = vrot.slane %v4869, 7
      %v5672 = vrot.slane %v5671, 2
      %v5673 = vrot.slane %v4877, 7
      %v5674 = vrot.slane %v5673, 2
      %v5675 = vrot.slane %v4876, 7
      %v5676 = vrot.slane %v5675, 2
      %v5677 = vrot.slane %v4878, 7
      %v5678 = vrot.slane %v5677, 2
      %v5679 = vrot.slane %v4885, 7
      %v5680 = vrot.slane %v5679, 2
      %v5681 = vrot.slane %v4893, 7
      %v5682 = vrot.slane %v5681, 2
      %v5683 = vrot.slane %v4901, 7
      %v5684 = vrot.slane %v5683, 2
      %v5685 = vrot.slane %v4900, 7
      %v5686 = vrot.slane %v5685, 2
      %v5687 = vrot.slane %v4902, 7
      %v5688 = vrot.slane %v5687, 2
      %v5689 = vrot.slane %v4910, 7
      %v5690 = vrot.slane %v5689, 2
      %v5691 = vrot.slane %v4918, 7
      %v5692 = vrot.slane %v5691, 2
      %v5693 = vrot.slane %v4917, 7
      %v5694 = vrot.slane %v5693, 2
      %v5695 = vrot.slane %v4919, 7
      %v5696 = vrot.slane %v5695, 2
      %v5697 = vrot.slane %v4927, 7
      %v5698 = vrot.slane %v5697, 2
      %v5699 = vrot.slane %v4935, 7
      %v5700 = vrot.slane %v5699, 2
      %v5701 = vrot.slane %v4934, 7
      %v5702 = vrot.slane %v5701, 2
      %v5703 = vrot.slane %v4936, 7
      %v5704 = vrot.slane %v5703, 2
      %v5705 = vrot.slane %v4943, 7
      %v5706 = vrot.slane %v5705, 2
      %v5707 = vrot.slane %v4951, 7
      %v5708 = vrot.slane %v5707, 2
      %v5709 = vrot.slane %v4959, 7
      %v5710 = vrot.slane %v5709, 2
      %v5711 = vrot.slane %v4958, 7
      %v5712 = vrot.slane %v5711, 2
      %v5713 = vrot.slane %v4960, 7
      %v5714 = vrot.slane %v5713, 2
      %v5715 = vrot.slane %v4968, 7
      %v5716 = vrot.slane %v5715, 2
      %v5717 = vrot.slane %v4976, 7
      %v5718 = vrot.slane %v5717, 2
      %v5719 = vrot.slane %v4975, 7
      %v5720 = vrot.slane %v5719, 2
      %v5721 = vrot.slane %v4977, 7
      %v5722 = vrot.slane %v5721, 2
      %v5723 = vrot.slane %v4985, 7
      %v5724 = vrot.slane %v5723, 2
      %v5725 = vrot.slane %v4993, 7
      %v5726 = vrot.slane %v5725, 2
      %v5727 = vrot.slane %v4992, 7
      %v5728 = vrot.slane %v5727, 2
      %v5729 = vrot.slane %v4994, 7
      %v5730 = vrot.slane %v5729, 2
      %v5731 = vrot.slane %v5001, 7
      %v5732 = vrot.slane %v5731, 2
      %v5733 = vrot.slane %v5009, 7
      %v5734 = vrot.slane %v5733, 2
      %v5735 = vrot.slane %v5017, 7
      %v5736 = vrot.slane %v5735, 2
      %v5737 = vrot.slane %v5016, 7
      %v5738 = vrot.slane %v5737, 2
      %v5739 = vrot.slane %v5018, 7
      %v5740 = vrot.slane %v5739, 2
      %v5741 = vrot.slane %v5026, 7
      %v5742 = vrot.slane %v5741, 2
      %v5743 = vrot.slane %v5034, 7
      %v5744 = vrot.slane %v5743, 2
      %v5745 = vrot.slane %v5033, 7
      %v5746 = vrot.slane %v5745, 2
      %v5747 = vrot.slane %v5035, 7
      %v5748 = vrot.slane %v5747, 2
      %v5749 = vrot.slane %v5043, 7
      %v5750 = vrot.slane %v5749, 2
      %v5751 = vrot.slane %v5051, 7
      %v5752 = vrot.slane %v5751, 2
      %v5753 = vrot.slane %v5050, 7
      %v5754 = vrot.slane %v5753, 2
      %v5755 = vrot.slane %v5052, 7
      %v5756 = vrot.slane %v5755, 2
      %v5757 = vrot.slane %v5059, 7
      %v5758 = vrot.slane %v5757, 2
      %v5759 = vrot.slane %v5067, 7
      %v5760 = vrot.slane %v5759, 2
      %v5761 = vrot.slane %v5075, 7
      %v5762 = vrot.slane %v5761, 2
      %v5763 = vrot.slane %v5074, 7
      %v5764 = vrot.slane %v5763, 2
      %v5765 = vrot.slane %v5076, 7
      %v5766 = vrot.slane %v5765, 2
      %v5767 = vrot.slane %v5084, 7
      %v5768 = vrot.slane %v5767, 2
      %v5769 = vrot.slane %v5092, 7
      %v5770 = vrot.slane %v5769, 2
      %v5771 = vrot.slane %v5091, 7
      %v5772 = vrot.slane %v5771, 2
      %v5773 = vrot.slane %v5093, 7
      %v5774 = vrot.slane %v5773, 2
      %v5775 = vrot.slane %v5101, 7
      %v5776 = vrot.slane %v5775, 2
      %v5777 = vrot.slane %v5109, 7
      %v5778 = vrot.slane %v5777, 2
      %v5779 = vrot.slane %v5108, 7
      %v5780 = vrot.slane %v5779, 2
      %v5781 = vrot.slane %v5110, 7
      %v5782 = vrot.slane %v5781, 2
      %v5783 = vrot.slane %v5117, 7
      %v5784 = vrot.slane %v5783, 2
      %v5785 = vrot.slane %v5125, 7
      %v5786 = vrot.slane %v5785, 2
      %v5787 = vrot.slane %v5133, 7
      %v5788 = vrot.slane %v5787, 2
      %v5789 = vrot.slane %v5132, 7
      %v5790 = vrot.slane %v5789, 2
      %v5791 = vrot.slane %v5134, 7
      %v5792 = vrot.slane %v5791, 2
      %v5793 = vrot.slane %v5142, 7
      %v5794 = vrot.slane %v5793, 2
      %v5795 = vrot.slane %v5150, 7
      %v5796 = vrot.slane %v5795, 2
      %v5797 = vrot.slane %v5149, 7
      %v5798 = vrot.slane %v5797, 2
      %v5799 = vrot.slane %v5151, 7
      %v5800 = vrot.slane %v5799, 2
      %v5801 = vrot.slane %v5159, 7
      %v5802 = vrot.slane %v5801, 2
      %v5803 = vrot.slane %v5167, 7
      %v5804 = vrot.slane %v5803, 2
      %v5805 = vrot.slane %v5166, 7
      %v5806 = vrot.slane %v5805, 2
      %v5807 = vrot.slane %v5168, 7
      %v5808 = vrot.slane %v5807, 2
      %v5809 = vrot.slane %v5175, 7
      %v5810 = vrot.slane %v5809, 2
      %v5811 = vrot.slane %v5183, 7
      %v5812 = vrot.slane %v5811, 2
      %v5813 = vrot.slane %v5191, 7
      %v5814 = vrot.slane %v5813, 2
      %v5815 = vrot.slane %v5190, 7
      %v5816 = vrot.slane %v5815, 2
      %v5817 = vrot.slane %v5192, 7
      %v5818 = vrot.slane %v5817, 2
      %v5819 = vrot.slane %v5200, 7
      %v5820 = vrot.slane %v5819, 2
      %v5821 = vrot.slane %v5208, 7
      %v5822 = vrot.slane %v5821, 2
      %v5823 = vrot.slane %v5207, 7
      %v5824 = vrot.slane %v5823, 2
      %v5825 = vrot.slane %v5209, 7
      %v5826 = vrot.slane %v5825, 2
      %v5827 = vrot.slane %v5217, 7
      %v5828 = vrot.slane %v5827, 2
      %v5829 = vrot.slane %v5225, 7
      %v5830 = vrot.slane %v5829, 2
      %v5831 = vrot.slane %v5224, 7
      %v5832 = vrot.slane %v5831, 2
      %v5833 = vrot.slane %v5226, 7
      %v5834 = vrot.slane %v5833, 2
      %v5835 = vrot.slane %v5233, 7
      %v5836 = vrot.slane %v5835, 2
      %v5837 = vrot.slane %v5241, 7
      %v5838 = vrot.slane %v5837, 2
      %v5839 = vrot.slane %v5249, 7
      %v5840 = vrot.slane %v5839, 2
      %v5841 = vrot.slane %v5248, 7
      %v5842 = vrot.slane %v5841, 2
      %v5843 = vrot.slane %v5250, 7
      %v5844 = vrot.slane %v5843, 2
      %v5845 = vrot.slane %v5258, 7
      %v5846 = vrot.slane %v5845, 2
      %v5847 = vrot.slane %v5266, 7
      %v5848 = vrot.slane %v5847, 2
      %v5849 = vrot.slane %v5265, 7
      %v5850 = vrot.slane %v5849, 2
      %v5851 = vrot.slane %v5267, 7
      %v5852 = vrot.slane %v5851, 2
      %v5853 = vrot.slane %v5275, 7
      %v5854 = vrot.slane %v5853, 2
      %v5855 = vrot.slane %v5283, 7
      %v5856 = vrot.slane %v5855, 2
      %v5857 = vrot.slane %v5282, 7
      %v5858 = vrot.slane %v5857, 2
      %v5859 = vrot.slane %v5284, 7
      %v5860 = vrot.slane %v5859, 2
      %v5861 = vrot.slane %v5291, 7
      %v5862 = vrot.slane %v5861, 2
      %v5863 = vrot.slane %v5299, 7
      %v5864 = vrot.slane %v5863, 2
      %v5865 = vrot.slane %v5307, 7
      %v5866 = vrot.slane %v5865, 2
      %v5867 = vrot.slane %v5306, 7
      %v5868 = vrot.slane %v5867, 2
      %v5869 = vrot.slane %v5308, 7
      %v5870 = vrot.slane %v5869, 2
      %v5871 = vrot.slane %v5316, 7
      %v5872 = vrot.slane %v5871, 2
      %v5873 = vrot.slane %v5324, 7
      %v5874 = vrot.slane %v5873, 2
      %v5875 = vrot.slane %v5323, 7
      %v5876 = vrot.slane %v5875, 2
      %v5877 = vrot.slane %v5325, 7
      %v5878 = vrot.slane %v5877, 2
      %v5879 = vrot.slane %v5333, 7
      %v5880 = vrot.slane %v5879, 2
      %v5881 = vrot.slane %v5341, 7
      %v5882 = vrot.slane %v5881, 2
      %v5883 = vrot.slane %v5340, 7
      %v5884 = vrot.slane %v5883, 2
      %v5885 = vrot.slane %v5342, 7
      %v5886 = vrot.slane %v5885, 2
      %v5887 = vrot.slane %v5349, 7
      %v5888 = vrot.slane %v5887, 2
      %v5889 = vrot.slane %v5357, 7
      %v5890 = vrot.slane %v5889, 2
      %v5891 = vrot.slane %v5365, 7
      %v5892 = vrot.slane %v5891, 2
      %v5893 = vrot.slane %v5364, 7
      %v5894 = vrot.slane %v5893, 2
      %v5895 = vrot.slane %v5366, 7
      %v5896 = vrot.slane %v5895, 2
      %v5897 = vrot.slane %v5374, 7
      %v5898 = vrot.slane %v5897, 2
      %v5899 = vrot.slane %v5382, 7
      %v5900 = vrot.slane %v5899, 2
      %v5901 = vrot.slane %v5381, 7
      %v5902 = vrot.slane %v5901, 2
      %v5903 = vrot.slane %v5383, 7
      %v5904 = vrot.slane %v5903, 2
      %v5905 = vrot.slane %v5391, 7
      %v5906 = vrot.slane %v5905, 2
      %v5907 = vrot.slane %v5399, 7
      %v5908 = vrot.slane %v5907, 2
      %v5909 = vrot.slane %v5398, 7
      %v5910 = vrot.slane %v5909, 2
      %v5911 = vrot.slane %v5400, 7
      %v5912 = vrot.slane %v5911, 2
      %v5913 = vrot.slane %v5407, 7
      %v5914 = vrot.slane %v5913, 2
      %v6084 = vmax.f32 %v4661, %v5578
      %v6085 = vmax.f32 %v4669, %v5580
      %v6086 = vmax.f32 %v4668, %v5582
      %v6087 = vmax.f32 %v4670, %v5584
      %v6088 = vmax.f32 %v4678, %v5586
      %v6089 = vmax.f32 %v4686, %v5588
      %v6090 = vmax.f32 %v4685, %v5590
      %v6091 = vmax.f32 %v4687, %v5592
      %v6092 = vmax.f32 %v4695, %v5594
      %v6093 = vmax.f32 %v4703, %v5596
      %v6094 = vmax.f32 %v4702, %v5598
      %v6095 = vmax.f32 %v4704, %v5600
      %v6096 = vmax.f32 %v4711, %v5602
      %v6097 = vmax.f32 %v4719, %v5604
      %v6098 = vmax.f32 %v4727, %v5606
      %v6099 = vmax.f32 %v4726, %v5608
      %v6100 = vmax.f32 %v4728, %v5610
      %v6101 = vmax.f32 %v4736, %v5612
      %v6102 = vmax.f32 %v4744, %v5614
      %v6103 = vmax.f32 %v4743, %v5616
      %v6104 = vmax.f32 %v4745, %v5618
      %v6105 = vmax.f32 %v4753, %v5620
      %v6106 = vmax.f32 %v4761, %v5622
      %v6107 = vmax.f32 %v4760, %v5624
      %v6108 = vmax.f32 %v4762, %v5626
      %v6109 = vmax.f32 %v4769, %v5628
      %v6110 = vmax.f32 %v4777, %v5630
      %v6111 = vmax.f32 %v4785, %v5632
      %v6112 = vmax.f32 %v4784, %v5634
      %v6113 = vmax.f32 %v4786, %v5636
      %v6114 = vmax.f32 %v4794, %v5638
      %v6115 = vmax.f32 %v4802, %v5640
      %v6116 = vmax.f32 %v4801, %v5642
      %v6117 = vmax.f32 %v4803, %v5644
      %v6118 = vmax.f32 %v4811, %v5646
      %v6119 = vmax.f32 %v4819, %v5648
      %v6120 = vmax.f32 %v4818, %v5650
      %v6121 = vmax.f32 %v4820, %v5652
      %v6122 = vmax.f32 %v4827, %v5654
      %v6123 = vmax.f32 %v4835, %v5656
      %v6124 = vmax.f32 %v4843, %v5658
      %v6125 = vmax.f32 %v4842, %v5660
      %v6126 = vmax.f32 %v4844, %v5662
      %v6127 = vmax.f32 %v4852, %v5664
      %v6128 = vmax.f32 %v4860, %v5666
      %v6129 = vmax.f32 %v4859, %v5668
      %v6130 = vmax.f32 %v4861, %v5670
      %v6131 = vmax.f32 %v4869, %v5672
      %v6132 = vmax.f32 %v4877, %v5674
      %v6133 = vmax.f32 %v4876, %v5676
      %v6134 = vmax.f32 %v4878, %v5678
      %v6135 = vmax.f32 %v4885, %v5680
      %v6136 = vmax.f32 %v4893, %v5682
      %v6137 = vmax.f32 %v4901, %v5684
      %v6138 = vmax.f32 %v4900, %v5686
      %v6139 = vmax.f32 %v4902, %v5688
      %v6140 = vmax.f32 %v4910, %v5690
      %v6141 = vmax.f32 %v4918, %v5692
      %v6142 = vmax.f32 %v4917, %v5694
      %v6143 = vmax.f32 %v4919, %v5696
      %v6144 = vmax.f32 %v4927, %v5698
      %v6145 = vmax.f32 %v4935, %v5700
      %v6146 = vmax.f32 %v4934, %v5702
      %v6147 = vmax.f32 %v4936, %v5704
      %v6148 = vmax.f32 %v4943, %v5706
      %v6149 = vmax.f32 %v4951, %v5708
      %v6150 = vmax.f32 %v4959, %v5710
      %v6151 = vmax.f32 %v4958, %v5712
      %v6152 = vmax.f32 %v4960, %v5714
      %v6153 = vmax.f32 %v4968, %v5716
      %v6154 = vmax.f32 %v4976, %v5718
      %v6155 = vmax.f32 %v4975, %v5720
      %v6156 = vmax.f32 %v4977, %v5722
      %v6157 = vmax.f32 %v4985, %v5724
      %v6158 = vmax.f32 %v4993, %v5726
      %v6159 = vmax.f32 %v4992, %v5728
      %v6160 = vmax.f32 %v4994, %v5730
      %v6161 = vmax.f32 %v5001, %v5732
      %v6162 = vmax.f32 %v5009, %v5734
      %v6163 = vmax.f32 %v5017, %v5736
      %v6164 = vmax.f32 %v5016, %v5738
      %v6165 = vmax.f32 %v5018, %v5740
      %v6166 = vmax.f32 %v5026, %v5742
      %v6167 = vmax.f32 %v5034, %v5744
      %v6168 = vmax.f32 %v5033, %v5746
      %v6169 = vmax.f32 %v5035, %v5748
      %v6170 = vmax.f32 %v5043, %v5750
      %v6171 = vmax.f32 %v5051, %v5752
      %v6172 = vmax.f32 %v5050, %v5754
      %v6173 = vmax.f32 %v5052, %v5756
      %v6174 = vmax.f32 %v5059, %v5758
      %v6175 = vmax.f32 %v5067, %v5760
      %v6176 = vmax.f32 %v5075, %v5762
      %v6177 = vmax.f32 %v5074, %v5764
      %v6178 = vmax.f32 %v5076, %v5766
      %v6179 = vmax.f32 %v5084, %v5768
      %v6180 = vmax.f32 %v5092, %v5770
      %v6181 = vmax.f32 %v5091, %v5772
      %v6182 = vmax.f32 %v5093, %v5774
      %v6183 = vmax.f32 %v5101, %v5776
      %v6184 = vmax.f32 %v5109, %v5778
      %v6185 = vmax.f32 %v5108, %v5780
      %v6186 = vmax.f32 %v5110, %v5782
      %v6187 = vmax.f32 %v5117, %v5784
      %v6188 = vmax.f32 %v5125, %v5786
      %v6189 = vmax.f32 %v5133, %v5788
      %v6190 = vmax.f32 %v5132, %v5790
      %v6191 = vmax.f32 %v5134, %v5792
      %v6192 = vmax.f32 %v5142, %v5794
      %v6193 = vmax.f32 %v5150, %v5796
      %v6194 = vmax.f32 %v5149, %v5798
      %v6195 = vmax.f32 %v5151, %v5800
      %v6196 = vmax.f32 %v5159, %v5802
      %v6197 = vmax.f32 %v5167, %v5804
      %v6198 = vmax.f32 %v5166, %v5806
      %v6199 = vmax.f32 %v5168, %v5808
      %v6200 = vmax.f32 %v5175, %v5810
      %v6201 = vmax.f32 %v5183, %v5812
      %v6202 = vmax.f32 %v5191, %v5814
      %v6203 = vmax.f32 %v5190, %v5816
      %v6204 = vmax.f32 %v5192, %v5818
      %v6205 = vmax.f32 %v5200, %v5820
      %v6206 = vmax.f32 %v5208, %v5822
      %v6207 = vmax.f32 %v5207, %v5824
      %v6208 = vmax.f32 %v5209, %v5826
      %v6209 = vmax.f32 %v5217, %v5828
      %v6210 = vmax.f32 %v5225, %v5830
      %v6211 = vmax.f32 %v5224, %v5832
      %v6212 = vmax.f32 %v5226, %v5834
      %v6213 = vmax.f32 %v5233, %v5836
      %v6214 = vmax.f32 %v5241, %v5838
      %v6215 = vmax.f32 %v5249, %v5840
      %v6216 = vmax.f32 %v5248, %v5842
      %v6217 = vmax.f32 %v5250, %v5844
      %v6218 = vmax.f32 %v5258, %v5846
      %v6219 = vmax.f32 %v5266, %v5848
      %v6220 = vmax.f32 %v5265, %v5850
      %v6221 = vmax.f32 %v5267, %v5852
      %v6222 = vmax.f32 %v5275, %v5854
      %v6223 = vmax.f32 %v5283, %v5856
      %v6224 = vmax.f32 %v5282, %v5858
      %v6225 = vmax.f32 %v5284, %v5860
      %v6226 = vmax.f32 %v5291, %v5862
      %v6227 = vmax.f32 %v5299, %v5864
      %v6228 = vmax.f32 %v5307, %v5866
      %v6229 = vmax.f32 %v5306, %v5868
      %v6230 = vmax.f32 %v5308, %v5870
      %v6231 = vmax.f32 %v5316, %v5872
      %v6232 = vmax.f32 %v5324, %v5874
      %v6233 = vmax.f32 %v5323, %v5876
      %v6234 = vmax.f32 %v5325, %v5878
      %v6235 = vmax.f32 %v5333, %v5880
      %v6236 = vmax.f32 %v5341, %v5882
      %v6237 = vmax.f32 %v5340, %v5884
      %v6238 = vmax.f32 %v5342, %v5886
      %v6239 = vmax.f32 %v5349, %v5888
      %v6240 = vmax.f32 %v5357, %v5890
      %v6241 = vmax.f32 %v5365, %v5892
      %v6242 = vmax.f32 %v5364, %v5894
      %v6243 = vmax.f32 %v5366, %v5896
      %v6244 = vmax.f32 %v5374, %v5898
      %v6245 = vmax.f32 %v5382, %v5900
      %v6246 = vmax.f32 %v5381, %v5902
      %v6247 = vmax.f32 %v5383, %v5904
      %v6248 = vmax.f32 %v5391, %v5906
      %v6249 = vmax.f32 %v5399, %v5908
      %v6250 = vmax.f32 %v5398, %v5910
      %v6251 = vmax.f32 %v5400, %v5912
      %v6252 = vmax.f32 %v5407, %v5914
      %v6422 = vlaneseq
      %v6423 = vshrl.u32 %v6422, 7
      %v6424 = vsub.s32 0, %v6423
      %v6425 = vrot.slane %v6084, %v6424
      %v6426 = vlaneseq
      %v6427 = vshrl.u32 %v6426, 7
      %v6428 = vsub.s32 0, %v6427
      %v6429 = vrot.slane %v6085, %v6428
      %v6430 = vlaneseq
      %v6431 = vshrl.u32 %v6430, 7
      %v6432 = vsub.s32 0, %v6431
      %v6433 = vrot.slane %v6086, %v6432
      %v6434 = vlaneseq
      %v6435 = vshrl.u32 %v6434, 7
      %v6436 = vsub.s32 0, %v6435
      %v6437 = vrot.slane %v6087, %v6436
      %v6438 = vlaneseq
      %v6439 = vshrl.u32 %v6438, 7
      %v6440 = vsub.s32 0, %v6439
      %v6441 = vrot.slane %v6088, %v6440
      %v6442 = vlaneseq
      %v6443 = vshrl.u32 %v6442, 7
      %v6444 = vsub.s32 0, %v6443
      %v6445 = vrot.slane %v6089, %v6444
      %v6446 = vlaneseq
      %v6447 = vshrl.u32 %v6446, 7
      %v6448 = vsub.s32 0, %v6447
      %v6449 = vrot.slane %v6090, %v6448
      %v6450 = vlaneseq
      %v6451 = vshrl.u32 %v6450, 7
      %v6452 = vsub.s32 0, %v6451
      %v6453 = vrot.slane %v6091, %v6452
      %v6454 = vlaneseq
      %v6455 = vshrl.u32 %v6454, 7
      %v6456 = vsub.s32 0, %v6455
      %v6457 = vrot.slane %v6092, %v6456
      %v6458 = vlaneseq
      %v6459 = vshrl.u32 %v6458, 7
      %v6460 = vsub.s32 0, %v6459
      %v6461 = vrot.slane %v6093, %v6460
      %v6462 = vlaneseq
      %v6463 = vshrl.u32 %v6462, 7
      %v6464 = vsub.s32 0, %v6463
      %v6465 = vrot.slane %v6094, %v6464
      %v6466 = vlaneseq
      %v6467 = vshrl.u32 %v6466, 7
      %v6468 = vsub.s32 0, %v6467
      %v6469 = vrot.slane %v6095, %v6468
      %v6470 = vlaneseq
      %v6471 = vshrl.u32 %v6470, 7
      %v6472 = vsub.s32 0, %v6471
      %v6473 = vrot.slane %v6096, %v6472
      %v6474 = vlaneseq
      %v6475 = vshrl.u32 %v6474, 7
      %v6476 = vsub.s32 0, %v6475
      %v6477 = vrot.slane %v6097, %v6476
      %v6478 = vlaneseq
      %v6479 = vshrl.u32 %v6478, 7
      %v6480 = vsub.s32 0, %v6479
      %v6481 = vrot.slane %v6098, %v6480
      %v6482 = vlaneseq
      %v6483 = vshrl.u32 %v6482, 7
      %v6484 = vsub.s32 0, %v6483
      %v6485 = vrot.slane %v6099, %v6484
      %v6486 = vlaneseq
      %v6487 = vshrl.u32 %v6486, 7
      %v6488 = vsub.s32 0, %v6487
      %v6489 = vrot.slane %v6100, %v6488
      %v6490 = vlaneseq
      %v6491 = vshrl.u32 %v6490, 7
      %v6492 = vsub.s32 0, %v6491
      %v6493 = vrot.slane %v6101, %v6492
      %v6494 = vlaneseq
      %v6495 = vshrl.u32 %v6494, 7
      %v6496 = vsub.s32 0, %v6495
      %v6497 = vrot.slane %v6102, %v6496
      %v6498 = vlaneseq
      %v6499 = vshrl.u32 %v6498, 7
      %v6500 = vsub.s32 0, %v6499
      %v6501 = vrot.slane %v6103, %v6500
      %v6502 = vlaneseq
      %v6503 = vshrl.u32 %v6502, 7
      %v6504 = vsub.s32 0, %v6503
      %v6505 = vrot.slane %v6104, %v6504
      %v6506 = vlaneseq
      %v6507 = vshrl.u32 %v6506, 7
      %v6508 = vsub.s32 0, %v6507
      %v6509 = vrot.slane %v6105, %v6508
      %v6510 = vlaneseq
      %v6511 = vshrl.u32 %v6510, 7
      %v6512 = vsub.s32 0, %v6511
      %v6513 = vrot.slane %v6106, %v6512
      %v6514 = vlaneseq
      %v6515 = vshrl.u32 %v6514, 7
      %v6516 = vsub.s32 0, %v6515
      %v6517 = vrot.slane %v6107, %v6516
      %v6518 = vlaneseq
      %v6519 = vshrl.u32 %v6518, 7
      %v6520 = vsub.s32 0, %v6519
      %v6521 = vrot.slane %v6108, %v6520
      %v6522 = vlaneseq
      %v6523 = vshrl.u32 %v6522, 7
      %v6524 = vsub.s32 0, %v6523
      %v6525 = vrot.slane %v6109, %v6524
      %v6526 = vlaneseq
      %v6527 = vshrl.u32 %v6526, 7
      %v6528 = vsub.s32 0, %v6527
      %v6529 = vrot.slane %v6110, %v6528
      %v6530 = vlaneseq
      %v6531 = vshrl.u32 %v6530, 7
      %v6532 = vsub.s32 0, %v6531
      %v6533 = vrot.slane %v6111, %v6532
      %v6534 = vlaneseq
      %v6535 = vshrl.u32 %v6534, 7
      %v6536 = vsub.s32 0, %v6535
      %v6537 = vrot.slane %v6112, %v6536
      %v6538 = vlaneseq
      %v6539 = vshrl.u32 %v6538, 7
      %v6540 = vsub.s32 0, %v6539
      %v6541 = vrot.slane %v6113, %v6540
      %v6542 = vlaneseq
      %v6543 = vshrl.u32 %v6542, 7
      %v6544 = vsub.s32 0, %v6543
      %v6545 = vrot.slane %v6114, %v6544
      %v6546 = vlaneseq
      %v6547 = vshrl.u32 %v6546, 7
      %v6548 = vsub.s32 0, %v6547
      %v6549 = vrot.slane %v6115, %v6548
      %v6550 = vlaneseq
      %v6551 = vshrl.u32 %v6550, 7
      %v6552 = vsub.s32 0, %v6551
      %v6553 = vrot.slane %v6116, %v6552
      %v6554 = vlaneseq
      %v6555 = vshrl.u32 %v6554, 7
      %v6556 = vsub.s32 0, %v6555
      %v6557 = vrot.slane %v6117, %v6556
      %v6558 = vlaneseq
      %v6559 = vshrl.u32 %v6558, 7
      %v6560 = vsub.s32 0, %v6559
      %v6561 = vrot.slane %v6118, %v6560
      %v6562 = vlaneseq
      %v6563 = vshrl.u32 %v6562, 7
      %v6564 = vsub.s32 0, %v6563
      %v6565 = vrot.slane %v6119, %v6564
      %v6566 = vlaneseq
      %v6567 = vshrl.u32 %v6566, 7
      %v6568 = vsub.s32 0, %v6567
      %v6569 = vrot.slane %v6120, %v6568
      %v6570 = vlaneseq
      %v6571 = vshrl.u32 %v6570, 7
      %v6572 = vsub.s32 0, %v6571
      %v6573 = vrot.slane %v6121, %v6572
      %v6574 = vlaneseq
      %v6575 = vshrl.u32 %v6574, 7
      %v6576 = vsub.s32 0, %v6575
      %v6577 = vrot.slane %v6122, %v6576
      %v6578 = vlaneseq
      %v6579 = vshrl.u32 %v6578, 7
      %v6580 = vsub.s32 0, %v6579
      %v6581 = vrot.slane %v6123, %v6580
      %v6582 = vlaneseq
      %v6583 = vshrl.u32 %v6582, 7
      %v6584 = vsub.s32 0, %v6583
      %v6585 = vrot.slane %v6124, %v6584
      %v6586 = vlaneseq
      %v6587 = vshrl.u32 %v6586, 7
      %v6588 = vsub.s32 0, %v6587
      %v6589 = vrot.slane %v6125, %v6588
      %v6590 = vlaneseq
      %v6591 = vshrl.u32 %v6590, 7
      %v6592 = vsub.s32 0, %v6591
      %v6593 = vrot.slane %v6126, %v6592
      %v6594 = vlaneseq
      %v6595 = vshrl.u32 %v6594, 7
      %v6596 = vsub.s32 0, %v6595
      %v6597 = vrot.slane %v6127, %v6596
      %v6598 = vlaneseq
      %v6599 = vshrl.u32 %v6598, 7
      %v6600 = vsub.s32 0, %v6599
      %v6601 = vrot.slane %v6128, %v6600
      %v6602 = vlaneseq
      %v6603 = vshrl.u32 %v6602, 7
      %v6604 = vsub.s32 0, %v6603
      %v6605 = vrot.slane %v6129, %v6604
      %v6606 = vlaneseq
      %v6607 = vshrl.u32 %v6606, 7
      %v6608 = vsub.s32 0, %v6607
      %v6609 = vrot.slane %v6130, %v6608
      %v6610 = vlaneseq
      %v6611 = vshrl.u32 %v6610, 7
      %v6612 = vsub.s32 0, %v6611
      %v6613 = vrot.slane %v6131, %v6612
      %v6614 = vlaneseq
      %v6615 = vshrl.u32 %v6614, 7
      %v6616 = vsub.s32 0, %v6615
      %v6617 = vrot.slane %v6132, %v6616
      %v6618 = vlaneseq
      %v6619 = vshrl.u32 %v6618, 7
      %v6620 = vsub.s32 0, %v6619
      %v6621 = vrot.slane %v6133, %v6620
      %v6622 = vlaneseq
      %v6623 = vshrl.u32 %v6622, 7
      %v6624 = vsub.s32 0, %v6623
      %v6625 = vrot.slane %v6134, %v6624
      %v6626 = vlaneseq
      %v6627 = vshrl.u32 %v6626, 7
      %v6628 = vsub.s32 0, %v6627
      %v6629 = vrot.slane %v6135, %v6628
      %v6630 = vlaneseq
      %v6631 = vshrl.u32 %v6630, 7
      %v6632 = vsub.s32 0, %v6631
      %v6633 = vrot.slane %v6136, %v6632
      %v6634 = vlaneseq
      %v6635 = vshrl.u32 %v6634, 7
      %v6636 = vsub.s32 0, %v6635
      %v6637 = vrot.slane %v6137, %v6636
      %v6638 = vlaneseq
      %v6639 = vshrl.u32 %v6638, 7
      %v6640 = vsub.s32 0, %v6639
      %v6641 = vrot.slane %v6138, %v6640
      %v6642 = vlaneseq
      %v6643 = vshrl.u32 %v6642, 7
      %v6644 = vsub.s32 0, %v6643
      %v6645 = vrot.slane %v6139, %v6644
      %v6646 = vlaneseq
      %v6647 = vshrl.u32 %v6646, 7
      %v6648 = vsub.s32 0, %v6647
      %v6649 = vrot.slane %v6140, %v6648
      %v6650 = vlaneseq
      %v6651 = vshrl.u32 %v6650, 7
      %v6652 = vsub.s32 0, %v6651
      %v6653 = vrot.slane %v6141, %v6652
      %v6654 = vlaneseq
      %v6655 = vshrl.u32 %v6654, 7
      %v6656 = vsub.s32 0, %v6655
      %v6657 = vrot.slane %v6142, %v6656
      %v6658 = vlaneseq
      %v6659 = vshrl.u32 %v6658, 7
      %v6660 = vsub.s32 0, %v6659
      %v6661 = vrot.slane %v6143, %v6660
      %v6662 = vlaneseq
      %v6663 = vshrl.u32 %v6662, 7
      %v6664 = vsub.s32 0, %v6663
      %v6665 = vrot.slane %v6144, %v6664
      %v6666 = vlaneseq
      %v6667 = vshrl.u32 %v6666, 7
      %v6668 = vsub.s32 0, %v6667
      %v6669 = vrot.slane %v6145, %v6668
      %v6670 = vlaneseq
      %v6671 = vshrl.u32 %v6670, 7
      %v6672 = vsub.s32 0, %v6671
      %v6673 = vrot.slane %v6146, %v6672
      %v6674 = vlaneseq
      %v6675 = vshrl.u32 %v6674, 7
      %v6676 = vsub.s32 0, %v6675
      %v6677 = vrot.slane %v6147, %v6676
      %v6678 = vlaneseq
      %v6679 = vshrl.u32 %v6678, 7
      %v6680 = vsub.s32 0, %v6679
      %v6681 = vrot.slane %v6148, %v6680
      %v6682 = vlaneseq
      %v6683 = vshrl.u32 %v6682, 7
      %v6684 = vsub.s32 0, %v6683
      %v6685 = vrot.slane %v6149, %v6684
      %v6686 = vlaneseq
      %v6687 = vshrl.u32 %v6686, 7
      %v6688 = vsub.s32 0, %v6687
      %v6689 = vrot.slane %v6150, %v6688
      %v6690 = vlaneseq
      %v6691 = vshrl.u32 %v6690, 7
      %v6692 = vsub.s32 0, %v6691
      %v6693 = vrot.slane %v6151, %v6692
      %v6694 = vlaneseq
      %v6695 = vshrl.u32 %v6694, 7
      %v6696 = vsub.s32 0, %v6695
      %v6697 = vrot.slane %v6152, %v6696
      %v6698 = vlaneseq
      %v6699 = vshrl.u32 %v6698, 7
      %v6700 = vsub.s32 0, %v6699
      %v6701 = vrot.slane %v6153, %v6700
      %v6702 = vlaneseq
      %v6703 = vshrl.u32 %v6702, 7
      %v6704 = vsub.s32 0, %v6703
      %v6705 = vrot.slane %v6154, %v6704
      %v6706 = vlaneseq
      %v6707 = vshrl.u32 %v6706, 7
      %v6708 = vsub.s32 0, %v6707
      %v6709 = vrot.slane %v6155, %v6708
      %v6710 = vlaneseq
      %v6711 = vshrl.u32 %v6710, 7
      %v6712 = vsub.s32 0, %v6711
      %v6713 = vrot.slane %v6156, %v6712
      %v6714 = vlaneseq
      %v6715 = vshrl.u32 %v6714, 7
      %v6716 = vsub.s32 0, %v6715
      %v6717 = vrot.slane %v6157, %v6716
      %v6718 = vlaneseq
      %v6719 = vshrl.u32 %v6718, 7
      %v6720 = vsub.s32 0, %v6719
      %v6721 = vrot.slane %v6158, %v6720
      %v6722 = vlaneseq
      %v6723 = vshrl.u32 %v6722, 7
      %v6724 = vsub.s32 0, %v6723
      %v6725 = vrot.slane %v6159, %v6724
      %v6726 = vlaneseq
      %v6727 = vshrl.u32 %v6726, 7
      %v6728 = vsub.s32 0, %v6727
      %v6729 = vrot.slane %v6160, %v6728
      %v6730 = vlaneseq
      %v6731 = vshrl.u32 %v6730, 7
      %v6732 = vsub.s32 0, %v6731
      %v6733 = vrot.slane %v6161, %v6732
      %v6734 = vlaneseq
      %v6735 = vshrl.u32 %v6734, 7
      %v6736 = vsub.s32 0, %v6735
      %v6737 = vrot.slane %v6162, %v6736
      %v6738 = vlaneseq
      %v6739 = vshrl.u32 %v6738, 7
      %v6740 = vsub.s32 0, %v6739
      %v6741 = vrot.slane %v6163, %v6740
      %v6742 = vlaneseq
      %v6743 = vshrl.u32 %v6742, 7
      %v6744 = vsub.s32 0, %v6743
      %v6745 = vrot.slane %v6164, %v6744
      %v6746 = vlaneseq
      %v6747 = vshrl.u32 %v6746, 7
      %v6748 = vsub.s32 0, %v6747
      %v6749 = vrot.slane %v6165, %v6748
      %v6750 = vlaneseq
      %v6751 = vshrl.u32 %v6750, 7
      %v6752 = vsub.s32 0, %v6751
      %v6753 = vrot.slane %v6166, %v6752
      %v6754 = vlaneseq
      %v6755 = vshrl.u32 %v6754, 7
      %v6756 = vsub.s32 0, %v6755
      %v6757 = vrot.slane %v6167, %v6756
      %v6758 = vlaneseq
      %v6759 = vshrl.u32 %v6758, 7
      %v6760 = vsub.s32 0, %v6759
      %v6761 = vrot.slane %v6168, %v6760
      %v6762 = vlaneseq
      %v6763 = vshrl.u32 %v6762, 7
      %v6764 = vsub.s32 0, %v6763
      %v6765 = vrot.slane %v6169, %v6764
      %v6766 = vlaneseq
      %v6767 = vshrl.u32 %v6766, 7
      %v6768 = vsub.s32 0, %v6767
      %v6769 = vrot.slane %v6170, %v6768
      %v6770 = vlaneseq
      %v6771 = vshrl.u32 %v6770, 7
      %v6772 = vsub.s32 0, %v6771
      %v6773 = vrot.slane %v6171, %v6772
      %v6774 = vlaneseq
      %v6775 = vshrl.u32 %v6774, 7
      %v6776 = vsub.s32 0, %v6775
      %v6777 = vrot.slane %v6172, %v6776
      %v6778 = vlaneseq
      %v6779 = vshrl.u32 %v6778, 7
      %v6780 = vsub.s32 0, %v6779
      %v6781 = vrot.slane %v6173, %v6780
      %v6782 = vlaneseq
      %v6783 = vshrl.u32 %v6782, 7
      %v6784 = vsub.s32 0, %v6783
      %v6785 = vrot.slane %v6174, %v6784
      %v6786 = vlaneseq
      %v6787 = vshrl.u32 %v6786, 7
      %v6788 = vsub.s32 0, %v6787
      %v6789 = vrot.slane %v6175, %v6788
      %v6790 = vlaneseq
      %v6791 = vshrl.u32 %v6790, 7
      %v6792 = vsub.s32 0, %v6791
      %v6793 = vrot.slane %v6176, %v6792
      %v6794 = vlaneseq
      %v6795 = vshrl.u32 %v6794, 7
      %v6796 = vsub.s32 0, %v6795
      %v6797 = vrot.slane %v6177, %v6796
      %v6798 = vlaneseq
      %v6799 = vshrl.u32 %v6798, 7
      %v6800 = vsub.s32 0, %v6799
      %v6801 = vrot.slane %v6178, %v6800
      %v6802 = vlaneseq
      %v6803 = vshrl.u32 %v6802, 7
      %v6804 = vsub.s32 0, %v6803
      %v6805 = vrot.slane %v6179, %v6804
      %v6806 = vlaneseq
      %v6807 = vshrl.u32 %v6806, 7
      %v6808 = vsub.s32 0, %v6807
      %v6809 = vrot.slane %v6180, %v6808
      %v6810 = vlaneseq
      %v6811 = vshrl.u32 %v6810, 7
      %v6812 = vsub.s32 0, %v6811
      %v6813 = vrot.slane %v6181, %v6812
      %v6814 = vlaneseq
      %v6815 = vshrl.u32 %v6814, 7
      %v6816 = vsub.s32 0, %v6815
      %v6817 = vrot.slane %v6182, %v6816
      %v6818 = vlaneseq
      %v6819 = vshrl.u32 %v6818, 7
      %v6820 = vsub.s32 0, %v6819
      %v6821 = vrot.slane %v6183, %v6820
      %v6822 = vlaneseq
      %v6823 = vshrl.u32 %v6822, 7
      %v6824 = vsub.s32 0, %v6823
      %v6825 = vrot.slane %v6184, %v6824
      %v6826 = vlaneseq
      %v6827 = vshrl.u32 %v6826, 7
      %v6828 = vsub.s32 0, %v6827
      %v6829 = vrot.slane %v6185, %v6828
      %v6830 = vlaneseq
      %v6831 = vshrl.u32 %v6830, 7
      %v6832 = vsub.s32 0, %v6831
      %v6833 = vrot.slane %v6186, %v6832
      %v6834 = vlaneseq
      %v6835 = vshrl.u32 %v6834, 7
      %v6836 = vsub.s32 0, %v6835
      %v6837 = vrot.slane %v6187, %v6836
      %v6838 = vlaneseq
      %v6839 = vshrl.u32 %v6838, 7
      %v6840 = vsub.s32 0, %v6839
      %v6841 = vrot.slane %v6188, %v6840
      %v6842 = vlaneseq
      %v6843 = vshrl.u32 %v6842, 7
      %v6844 = vsub.s32 0, %v6843
      %v6845 = vrot.slane %v6189, %v6844
      %v6846 = vlaneseq
      %v6847 = vshrl.u32 %v6846, 7
      %v6848 = vsub.s32 0, %v6847
      %v6849 = vrot.slane %v6190, %v6848
      %v6850 = vlaneseq
      %v6851 = vshrl.u32 %v6850, 7
      %v6852 = vsub.s32 0, %v6851
      %v6853 = vrot.slane %v6191, %v6852
      %v6854 = vlaneseq
      %v6855 = vshrl.u32 %v6854, 7
      %v6856 = vsub.s32 0, %v6855
      %v6857 = vrot.slane %v6192, %v6856
      %v6858 = vlaneseq
      %v6859 = vshrl.u32 %v6858, 7
      %v6860 = vsub.s32 0, %v6859
      %v6861 = vrot.slane %v6193, %v6860
      %v6862 = vlaneseq
      %v6863 = vshrl.u32 %v6862, 7
      %v6864 = vsub.s32 0, %v6863
      %v6865 = vrot.slane %v6194, %v6864
      %v6866 = vlaneseq
      %v6867 = vshrl.u32 %v6866, 7
      %v6868 = vsub.s32 0, %v6867
      %v6869 = vrot.slane %v6195, %v6868
      %v6870 = vlaneseq
      %v6871 = vshrl.u32 %v6870, 7
      %v6872 = vsub.s32 0, %v6871
      %v6873 = vrot.slane %v6196, %v6872
      %v6874 = vlaneseq
      %v6875 = vshrl.u32 %v6874, 7
      %v6876 = vsub.s32 0, %v6875
      %v6877 = vrot.slane %v6197, %v6876
      %v6878 = vlaneseq
      %v6879 = vshrl.u32 %v6878, 7
      %v6880 = vsub.s32 0, %v6879
      %v6881 = vrot.slane %v6198, %v6880
      %v6882 = vlaneseq
      %v6883 = vshrl.u32 %v6882, 7
      %v6884 = vsub.s32 0, %v6883
      %v6885 = vrot.slane %v6199, %v6884
      %v6886 = vlaneseq
      %v6887 = vshrl.u32 %v6886, 7
      %v6888 = vsub.s32 0, %v6887
      %v6889 = vrot.slane %v6200, %v6888
      %v6890 = vlaneseq
      %v6891 = vshrl.u32 %v6890, 7
      %v6892 = vsub.s32 0, %v6891
      %v6893 = vrot.slane %v6201, %v6892
      %v6894 = vlaneseq
      %v6895 = vshrl.u32 %v6894, 7
      %v6896 = vsub.s32 0, %v6895
      %v6897 = vrot.slane %v6202, %v6896
      %v6898 = vlaneseq
      %v6899 = vshrl.u32 %v6898, 7
      %v6900 = vsub.s32 0, %v6899
      %v6901 = vrot.slane %v6203, %v6900
      %v6902 = vlaneseq
      %v6903 = vshrl.u32 %v6902, 7
      %v6904 = vsub.s32 0, %v6903
      %v6905 = vrot.slane %v6204, %v6904
      %v6906 = vlaneseq
      %v6907 = vshrl.u32 %v6906, 7
      %v6908 = vsub.s32 0, %v6907
      %v6909 = vrot.slane %v6205, %v6908
      %v6910 = vlaneseq
      %v6911 = vshrl.u32 %v6910, 7
      %v6912 = vsub.s32 0, %v6911
      %v6913 = vrot.slane %v6206, %v6912
      %v6914 = vlaneseq
      %v6915 = vshrl.u32 %v6914, 7
      %v6916 = vsub.s32 0, %v6915
      %v6917 = vrot.slane %v6207, %v6916
      %v6918 = vlaneseq
      %v6919 = vshrl.u32 %v6918, 7
      %v6920 = vsub.s32 0, %v6919
      %v6921 = vrot.slane %v6208, %v6920
      %v6922 = vlaneseq
      %v6923 = vshrl.u32 %v6922, 7
      %v6924 = vsub.s32 0, %v6923
      %v6925 = vrot.slane %v6209, %v6924
      %v6926 = vlaneseq
      %v6927 = vshrl.u32 %v6926, 7
      %v6928 = vsub.s32 0, %v6927
      %v6929 = vrot.slane %v6210, %v6928
      %v6930 = vlaneseq
      %v6931 = vshrl.u32 %v6930, 7
      %v6932 = vsub.s32 0, %v6931
      %v6933 = vrot.slane %v6211, %v6932
      %v6934 = vlaneseq
      %v6935 = vshrl.u32 %v6934, 7
      %v6936 = vsub.s32 0, %v6935
      %v6937 = vrot.slane %v6212, %v6936
      %v6938 = vlaneseq
      %v6939 = vshrl.u32 %v6938, 7
      %v6940 = vsub.s32 0, %v6939
      %v6941 = vrot.slane %v6213, %v6940
      %v6942 = vlaneseq
      %v6943 = vshrl.u32 %v6942, 7
      %v6944 = vsub.s32 0, %v6943
      %v6945 = vrot.slane %v6214, %v6944
      %v6946 = vlaneseq
      %v6947 = vshrl.u32 %v6946, 7
      %v6948 = vsub.s32 0, %v6947
      %v6949 = vrot.slane %v6215, %v6948
      %v6950 = vlaneseq
      %v6951 = vshrl.u32 %v6950, 7
      %v6952 = vsub.s32 0, %v6951
      %v6953 = vrot.slane %v6216, %v6952
      %v6954 = vlaneseq
      %v6955 = vshrl.u32 %v6954, 7
      %v6956 = vsub.s32 0, %v6955
      %v6957 = vrot.slane %v6217, %v6956
      %v6958 = vlaneseq
      %v6959 = vshrl.u32 %v6958, 7
      %v6960 = vsub.s32 0, %v6959
      %v6961 = vrot.slane %v6218, %v6960
      %v6962 = vlaneseq
      %v6963 = vshrl.u32 %v6962, 7
      %v6964 = vsub.s32 0, %v6963
      %v6965 = vrot.slane %v6219, %v6964
      %v6966 = vlaneseq
      %v6967 = vshrl.u32 %v6966, 7
      %v6968 = vsub.s32 0, %v6967
      %v6969 = vrot.slane %v6220, %v6968
      %v6970 = vlaneseq
      %v6971 = vshrl.u32 %v6970, 7
      %v6972 = vsub.s32 0, %v6971
      %v6973 = vrot.slane %v6221, %v6972
      %v6974 = vlaneseq
      %v6975 = vshrl.u32 %v6974, 7
      %v6976 = vsub.s32 0, %v6975
      %v6977 = vrot.slane %v6222, %v6976
      %v6978 = vlaneseq
      %v6979 = vshrl.u32 %v6978, 7
      %v6980 = vsub.s32 0, %v6979
      %v6981 = vrot.slane %v6223, %v6980
      %v6982 = vlaneseq
      %v6983 = vshrl.u32 %v6982, 7
      %v6984 = vsub.s32 0, %v6983
      %v6985 = vrot.slane %v6224, %v6984
      %v6986 = vlaneseq
      %v6987 = vshrl.u32 %v6986, 7
      %v6988 = vsub.s32 0, %v6987
      %v6989 = vrot.slane %v6225, %v6988
      %v6990 = vlaneseq
      %v6991 = vshrl.u32 %v6990, 7
      %v6992 = vsub.s32 0, %v6991
      %v6993 = vrot.slane %v6226, %v6992
      %v6994 = vlaneseq
      %v6995 = vshrl.u32 %v6994, 7
      %v6996 = vsub.s32 0, %v6995
      %v6997 = vrot.slane %v6227, %v6996
      %v6998 = vlaneseq
      %v6999 = vshrl.u32 %v6998, 7
      %v7000 = vsub.s32 0, %v6999
      %v7001 = vrot.slane %v6228, %v7000
      %v7002 = vlaneseq
      %v7003 = vshrl.u32 %v7002, 7
      %v7004 = vsub.s32 0, %v7003
      %v7005 = vrot.slane %v6229, %v7004
      %v7006 = vlaneseq
      %v7007 = vshrl.u32 %v7006, 7
      %v7008 = vsub.s32 0, %v7007
      %v7009 = vrot.slane %v6230, %v7008
      %v7010 = vlaneseq
      %v7011 = vshrl.u32 %v7010, 7
      %v7012 = vsub.s32 0, %v7011
      %v7013 = vrot.slane %v6231, %v7012
      %v7014 = vlaneseq
      %v7015 = vshrl.u32 %v7014, 7
      %v7016 = vsub.s32 0, %v7015
      %v7017 = vrot.slane %v6232, %v7016
      %v7018 = vlaneseq
      %v7019 = vshrl.u32 %v7018, 7
      %v7020 = vsub.s32 0, %v7019
      %v7021 = vrot.slane %v6233, %v7020
      %v7022 = vlaneseq
      %v7023 = vshrl.u32 %v7022, 7
      %v7024 = vsub.s32 0, %v7023
      %v7025 = vrot.slane %v6234, %v7024
      %v7026 = vlaneseq
      %v7027 = vshrl.u32 %v7026, 7
      %v7028 = vsub.s32 0, %v7027
      %v7029 = vrot.slane %v6235, %v7028
      %v7030 = vlaneseq
      %v7031 = vshrl.u32 %v7030, 7
      %v7032 = vsub.s32 0, %v7031
      %v7033 = vrot.slane %v6236, %v7032
      %v7034 = vlaneseq
      %v7035 = vshrl.u32 %v7034, 7
      %v7036 = vsub.s32 0, %v7035
      %v7037 = vrot.slane %v6237, %v7036
      %v7038 = vlaneseq
      %v7039 = vshrl.u32 %v7038, 7
      %v7040 = vsub.s32 0, %v7039
      %v7041 = vrot.slane %v6238, %v7040
      %v7042 = vlaneseq
      %v7043 = vshrl.u32 %v7042, 7
      %v7044 = vsub.s32 0, %v7043
      %v7045 = vrot.slane %v6239, %v7044
      %v7046 = vlaneseq
      %v7047 = vshrl.u32 %v7046, 7
      %v7048 = vsub.s32 0, %v7047
      %v7049 = vrot.slane %v6240, %v7048
      %v7050 = vlaneseq
      %v7051 = vshrl.u32 %v7050, 7
      %v7052 = vsub.s32 0, %v7051
      %v7053 = vrot.slane %v6241, %v7052
      %v7054 = vlaneseq
      %v7055 = vshrl.u32 %v7054, 7
      %v7056 = vsub.s32 0, %v7055
      %v7057 = vrot.slane %v6242, %v7056
      %v7058 = vlaneseq
      %v7059 = vshrl.u32 %v7058, 7
      %v7060 = vsub.s32 0, %v7059
      %v7061 = vrot.slane %v6243, %v7060
      %v7062 = vlaneseq
      %v7063 = vshrl.u32 %v7062, 7
      %v7064 = vsub.s32 0, %v7063
      %v7065 = vrot.slane %v6244, %v7064
      %v7066 = vlaneseq
      %v7067 = vshrl.u32 %v7066, 7
      %v7068 = vsub.s32 0, %v7067
      %v7069 = vrot.slane %v6245, %v7068
      %v7070 = vlaneseq
      %v7071 = vshrl.u32 %v7070, 7
      %v7072 = vsub.s32 0, %v7071
      %v7073 = vrot.slane %v6246, %v7072
      %v7074 = vlaneseq
      %v7075 = vshrl.u32 %v7074, 7
      %v7076 = vsub.s32 0, %v7075
      %v7077 = vrot.slane %v6247, %v7076
      %v7078 = vlaneseq
      %v7079 = vshrl.u32 %v7078, 7
      %v7080 = vsub.s32 0, %v7079
      %v7081 = vrot.slane %v6248, %v7080
      %v7082 = vlaneseq
      %v7083 = vshrl.u32 %v7082, 7
      %v7084 = vsub.s32 0, %v7083
      %v7085 = vrot.slane %v6249, %v7084
      %v7086 = vlaneseq
      %v7087 = vshrl.u32 %v7086, 7
      %v7088 = vsub.s32 0, %v7087
      %v7089 = vrot.slane %v6250, %v7088
      %v7090 = vlaneseq
      %v7091 = vshrl.u32 %v7090, 7
      %v7092 = vsub.s32 0, %v7091
      %v7093 = vrot.slane %v6251, %v7092
      %v7094 = vlaneseq
      %v7095 = vshrl.u32 %v7094, 7
      %v7096 = vsub.s32 0, %v7095
      %v7097 = vrot.slane %v6252, %v7096
      %vm7098 = vcmask 1041409
      %v7099 = vsel %vm7098, %v6429, %v6425
      %vm7100 = vcmask 1042434
      %v7101 = vsel %vm7100, %v6433, %v7099
      %vm7102 = vcmask 1043459
      %v7103 = vsel %vm7102, %v6437, %v7101
      %vm7104 = vcmask 1044484
      %v7105 = vsel %vm7104, %v6441, %v7103
      %vm7106 = vcmask 1045509
      %v7107 = vsel %vm7106, %v6445, %v7105
      %vm7108 = vcmask 1046534
      %v7109 = vsel %vm7108, %v6449, %v7107
      %vm7110 = vcmask 1047559
      %v7111 = vsel %vm7110, %v6453, %v7109
      %v7112 = vsel %vm7098, %v6461, %v6457
      %v7113 = vsel %vm7100, %v6465, %v7112
      %v7114 = vsel %vm7102, %v6469, %v7113
      %v7115 = vsel %vm7104, %v6473, %v7114
      %v7116 = vsel %vm7098, %v6481, %v6477
      %v7117 = vsel %vm7100, %v6485, %v7116
      %v7118 = vsel %vm7102, %v6489, %v7117
      %v7119 = vsel %vm7104, %v6493, %v7118
      %v7120 = vsel %vm7106, %v6497, %v7119
      %v7121 = vsel %vm7108, %v6501, %v7120
      %v7122 = vsel %vm7110, %v6505, %v7121
      %v7123 = vsel %vm7098, %v6513, %v6509
      %v7124 = vsel %vm7100, %v6517, %v7123
      %v7125 = vsel %vm7102, %v6521, %v7124
      %v7126 = vsel %vm7104, %v6525, %v7125
      %v7127 = vsel %vm7098, %v6533, %v6529
      %v7128 = vsel %vm7100, %v6537, %v7127
      %v7129 = vsel %vm7102, %v6541, %v7128
      %v7130 = vsel %vm7104, %v6545, %v7129
      %v7131 = vsel %vm7106, %v6549, %v7130
      %v7132 = vsel %vm7108, %v6553, %v7131
      %v7133 = vsel %vm7110, %v6557, %v7132
      %v7134 = vsel %vm7098, %v6565, %v6561
      %v7135 = vsel %vm7100, %v6569, %v7134
      %v7136 = vsel %vm7102, %v6573, %v7135
      %v7137 = vsel %vm7104, %v6577, %v7136
      %v7138 = vsel %vm7098, %v6585, %v6581
      %v7139 = vsel %vm7100, %v6589, %v7138
      %v7140 = vsel %vm7102, %v6593, %v7139
      %v7141 = vsel %vm7104, %v6597, %v7140
      %v7142 = vsel %vm7106, %v6601, %v7141
      %v7143 = vsel %vm7108, %v6605, %v7142
      %v7144 = vsel %vm7110, %v6609, %v7143
      %v7145 = vsel %vm7098, %v6617, %v6613
      %v7146 = vsel %vm7100, %v6621, %v7145
      %v7147 = vsel %vm7102, %v6625, %v7146
      %v7148 = vsel %vm7104, %v6629, %v7147
      %v7149 = vsel %vm7098, %v6637, %v6633
      %v7150 = vsel %vm7100, %v6641, %v7149
      %v7151 = vsel %vm7102, %v6645, %v7150
      %v7152 = vsel %vm7104, %v6649, %v7151
      %v7153 = vsel %vm7106, %v6653, %v7152
      %v7154 = vsel %vm7108, %v6657, %v7153
      %v7155 = vsel %vm7110, %v6661, %v7154
      %v7156 = vsel %vm7098, %v6669, %v6665
      %v7157 = vsel %vm7100, %v6673, %v7156
      %v7158 = vsel %vm7102, %v6677, %v7157
      %v7159 = vsel %vm7104, %v6681, %v7158
      %v7160 = vsel %vm7098, %v6689, %v6685
      %v7161 = vsel %vm7100, %v6693, %v7160
      %v7162 = vsel %vm7102, %v6697, %v7161
      %v7163 = vsel %vm7104, %v6701, %v7162
      %v7164 = vsel %vm7106, %v6705, %v7163
      %v7165 = vsel %vm7108, %v6709, %v7164
      %v7166 = vsel %vm7110, %v6713, %v7165
      %v7167 = vsel %vm7098, %v6721, %v6717
      %v7168 = vsel %vm7100, %v6725, %v7167
      %v7169 = vsel %vm7102, %v6729, %v7168
      %v7170 = vsel %vm7104, %v6733, %v7169
      %v7171 = vsel %vm7098, %v6741, %v6737
      %v7172 = vsel %vm7100, %v6745, %v7171
      %v7173 = vsel %vm7102, %v6749, %v7172
      %v7174 = vsel %vm7104, %v6753, %v7173
      %v7175 = vsel %vm7106, %v6757, %v7174
      %v7176 = vsel %vm7108, %v6761, %v7175
      %v7177 = vsel %vm7110, %v6765, %v7176
      %v7178 = vsel %vm7098, %v6773, %v6769
      %v7179 = vsel %vm7100, %v6777, %v7178
      %v7180 = vsel %vm7102, %v6781, %v7179
      %v7181 = vsel %vm7104, %v6785, %v7180
      %v7182 = vsel %vm7098, %v6793, %v6789
      %v7183 = vsel %vm7100, %v6797, %v7182
      %v7184 = vsel %vm7102, %v6801, %v7183
      %v7185 = vsel %vm7104, %v6805, %v7184
      %v7186 = vsel %vm7106, %v6809, %v7185
      %v7187 = vsel %vm7108, %v6813, %v7186
      %v7188 = vsel %vm7110, %v6817, %v7187
      %v7189 = vsel %vm7098, %v6825, %v6821
      %v7190 = vsel %vm7100, %v6829, %v7189
      %v7191 = vsel %vm7102, %v6833, %v7190
      %v7192 = vsel %vm7104, %v6837, %v7191
      %v7193 = vsel %vm7098, %v6845, %v6841
      %v7194 = vsel %vm7100, %v6849, %v7193
      %v7195 = vsel %vm7102, %v6853, %v7194
      %v7196 = vsel %vm7104, %v6857, %v7195
      %v7197 = vsel %vm7106, %v6861, %v7196
      %v7198 = vsel %vm7108, %v6865, %v7197
      %v7199 = vsel %vm7110, %v6869, %v7198
      %v7200 = vsel %vm7098, %v6877, %v6873
      %v7201 = vsel %vm7100, %v6881, %v7200
      %v7202 = vsel %vm7102, %v6885, %v7201
      %v7203 = vsel %vm7104, %v6889, %v7202
      %v7204 = vsel %vm7098, %v6897, %v6893
      %v7205 = vsel %vm7100, %v6901, %v7204
      %v7206 = vsel %vm7102, %v6905, %v7205
      %v7207 = vsel %vm7104, %v6909, %v7206
      %v7208 = vsel %vm7106, %v6913, %v7207
      %v7209 = vsel %vm7108, %v6917, %v7208
      %v7210 = vsel %vm7110, %v6921, %v7209
      %v7211 = vsel %vm7098, %v6929, %v6925
      %v7212 = vsel %vm7100, %v6933, %v7211
      %v7213 = vsel %vm7102, %v6937, %v7212
      %v7214 = vsel %vm7104, %v6941, %v7213
      %v7215 = vsel %vm7098, %v6949, %v6945
      %v7216 = vsel %vm7100, %v6953, %v7215
      %v7217 = vsel %vm7102, %v6957, %v7216
      %v7218 = vsel %vm7104, %v6961, %v7217
      %v7219 = vsel %vm7106, %v6965, %v7218
      %v7220 = vsel %vm7108, %v6969, %v7219
      %v7221 = vsel %vm7110, %v6973, %v7220
      %v7222 = vsel %vm7098, %v6981, %v6977
      %v7223 = vsel %vm7100, %v6985, %v7222
      %v7224 = vsel %vm7102, %v6989, %v7223
      %v7225 = vsel %vm7104, %v6993, %v7224
      %v7226 = vsel %vm7098, %v7001, %v6997
      %v7227 = vsel %vm7100, %v7005, %v7226
      %v7228 = vsel %vm7102, %v7009, %v7227
      %v7229 = vsel %vm7104, %v7013, %v7228
      %v7230 = vsel %vm7106, %v7017, %v7229
      %v7231 = vsel %vm7108, %v7021, %v7230
      %v7232 = vsel %vm7110, %v7025, %v7231
      %v7233 = vsel %vm7098, %v7033, %v7029
      %v7234 = vsel %vm7100, %v7037, %v7233
      %v7235 = vsel %vm7102, %v7041, %v7234
      %v7236 = vsel %vm7104, %v7045, %v7235
      %v7237 = vsel %vm7098, %v7053, %v7049
      %v7238 = vsel %vm7100, %v7057, %v7237
      %v7239 = vsel %vm7102, %v7061, %v7238
      %v7240 = vsel %vm7104, %v7065, %v7239
      %v7241 = vsel %vm7106, %v7069, %v7240
      %v7242 = vsel %vm7108, %v7073, %v7241
      %v7243 = vsel %vm7110, %v7077, %v7242
      %v7244 = vsel %vm7098, %v7085, %v7081
      %v7245 = vsel %vm7100, %v7089, %v7244
      %v7246 = vsel %vm7102, %v7093, %v7245
      %v7247 = vsel %vm7104, %v7097, %v7246
      %s7274 = smul.u32 %s199, 208
      %s7275 = scalar_lea.vmem [#allocation2], %s7274
      %7276 = vst [vmem:[%s7275] sm:$0xff] %v7111
      %7277 = vst [vmem:[%s7275 + $0x8] sm:$0x1f] %v7115
      %7278 = vst [vmem:[%s7275 + $0x10] sm:$0xff] %v7122
      %7279 = vst [vmem:[%s7275 + $0x18] sm:$0x1f] %v7126
      %7280 = vst [vmem:[%s7275 + $0x20] sm:$0xff] %v7133
      %7281 = vst [vmem:[%s7275 + $0x28] sm:$0x1f] %v7137
      %7282 = vst [vmem:[%s7275 + $0x30] sm:$0xff] %v7144
      %7283 = vst [vmem:[%s7275 + $0x38] sm:$0x1f] %v7148
      %7284 = vst [vmem:[%s7275 + $0x40] sm:$0xff] %v7155
      %7285 = vst [vmem:[%s7275 + $0x48] sm:$0x1f] %v7159
      %7286 = vst [vmem:[%s7275 + $0x50] sm:$0xff] %v7166
      %7287 = vst [vmem:[%s7275 + $0x58] sm:$0x1f] %v7170
      %7288 = vst [vmem:[%s7275 + $0x60] sm:$0xff] %v7177
      %7289 = vst [vmem:[%s7275 + $0x68] sm:$0x1f] %v7181
      %7290 = vst [vmem:[%s7275 + $0x70] sm:$0xff] %v7188
      %7291 = vst [vmem:[%s7275 + $0x78] sm:$0x1f] %v7192
      %7292 = vst [vmem:[%s7275 + $0x80] sm:$0xff] %v7199
      %7293 = vst [vmem:[%s7275 + $0x88] sm:$0x1f] %v7203
      %7294 = vst [vmem:[%s7275 + $0x90] sm:$0xff] %v7210
      %7295 = vst [vmem:[%s7275 + $0x98] sm:$0x1f] %v7214
      %7296 = vst [vmem:[%s7275 + $0xa0] sm:$0xff] %v7221
      %7297 = vst [vmem:[%s7275 + $0xa8] sm:$0x1f] %v7225
      %7298 = vst [vmem:[%s7275 + $0xb0] sm:$0xff] %v7232
      %7299 = vst [vmem:[%s7275 + $0xb8] sm:$0x1f] %v7236
      %7300 = vst [vmem:[%s7275 + $0xc0] sm:$0xff] %v7243
      %7301 = vst [vmem:[%s7275 + $0xc8] sm:$0x1f] %v7247
    $region66: #{convolutional_network_forward.1} parent=1 // loop_footer
      %s203 = sadd.s32 1, %s199
    $region67: #{convolutional_network_forward.1} parent=1 // loop_footer_branch
      %198 = sbr.rel target = $region63
    $region68: #{convolutional_network_forward.1} parent=1 // loop_exit
      _
    %v7302 = vld [vmem:[#allocation2] sm:$0xff]
    %v7303 = vld [vmem:[#allocation2 + $0x8] sm:$0x1f]
    %v7304 = vld [vmem:[#allocation2 + $0x10] sm:$0xff]
    %v7305 = vld [vmem:[#allocation2 + $0x18] sm:$0x1f]
    %v7306 = vld [vmem:[#allocation2 + $0x20] sm:$0xff]
    %v7307 = vld [vmem:[#allocation2 + $0x28] sm:$0x1f]
    %v7308 = vld [vmem:[#allocation2 + $0x30] sm:$0xff]
    %v7309 = vld [vmem:[#allocation2 + $0x38] sm:$0x1f]
    %v7310 = vld [vmem:[#allocation2 + $0x40] sm:$0xff]
    %v7311 = vld [vmem:[#allocation2 + $0x48] sm:$0x1f]
    %v7312 = vld [vmem:[#allocation2 + $0x50] sm:$0xff]
    %v7313 = vld [vmem:[#allocation2 + $0x58] sm:$0x1f]
    %v7314 = vld [vmem:[#allocation2 + $0x60] sm:$0xff]
    %v7315 = vld [vmem:[#allocation2 + $0x68] sm:$0x1f]
    %v7316 = vld [vmem:[#allocation2 + $0x70] sm:$0xff]
    %v7317 = vld [vmem:[#allocation2 + $0x78] sm:$0x1f]
    %v7318 = vld [vmem:[#allocation2 + $0x80] sm:$0xff]
    %v7319 = vld [vmem:[#allocation2 + $0x88] sm:$0x1f]
    %v7320 = vld [vmem:[#allocation2 + $0x90] sm:$0xff]
    %v7321 = vld [vmem:[#allocation2 + $0x98] sm:$0x1f]
    %v7322 = vld [vmem:[#allocation2 + $0xa0] sm:$0xff]
    %v7323 = vld [vmem:[#allocation2 + $0xa8] sm:$0x1f]
    %v7324 = vld [vmem:[#allocation2 + $0xb0] sm:$0xff]
    %v7325 = vld [vmem:[#allocation2 + $0xb8] sm:$0x1f]
    %s7326 = scalar_lea.vmem [#allocation2], 208
    %v7327 = vld [vmem:[%s7326] sm:$0xff]
    %v7328 = vld [vmem:[%s7326 + $0x8] sm:$0x1f]
    %v7329 = vld [vmem:[%s7326 + $0x10] sm:$0xff]
    %v7330 = vld [vmem:[%s7326 + $0x18] sm:$0x1f]
    %v7331 = vld [vmem:[%s7326 + $0x20] sm:$0xff]
    %v7332 = vld [vmem:[%s7326 + $0x28] sm:$0x1f]
    %v7333 = vld [vmem:[%s7326 + $0x30] sm:$0xff]
    %v7334 = vld [vmem:[%s7326 + $0x38] sm:$0x1f]
    %v7335 = vld [vmem:[%s7326 + $0x40] sm:$0xff]
    %v7336 = vld [vmem:[%s7326 + $0x48] sm:$0x1f]
    %v7337 = vld [vmem:[%s7326 + $0x50] sm:$0xff]
    %v7338 = vld [vmem:[%s7326 + $0x58] sm:$0x1f]
    %v7339 = vld [vmem:[%s7326 + $0x60] sm:$0xff]
    %v7340 = vld [vmem:[%s7326 + $0x68] sm:$0x1f]
    %v7341 = vld [vmem:[%s7326 + $0x70] sm:$0xff]
    %v7342 = vld [vmem:[%s7326 + $0x78] sm:$0x1f]
    %v7343 = vld [vmem:[%s7326 + $0x80] sm:$0xff]
    %v7344 = vld [vmem:[%s7326 + $0x88] sm:$0x1f]
    %v7345 = vld [vmem:[%s7326 + $0x90] sm:$0xff]
    %v7346 = vld [vmem:[%s7326 + $0x98] sm:$0x1f]
    %v7347 = vld [vmem:[%s7326 + $0xa0] sm:$0xff]
    %v7348 = vld [vmem:[%s7326 + $0xa8] sm:$0x1f]
    %v7349 = vld [vmem:[%s7326 + $0xb0] sm:$0xff]
    %v7350 = vld [vmem:[%s7326 + $0xb8] sm:$0x1f]
    %s7351 = scalar_lea.vmem [#allocation2], 416
    %v7352 = vld [vmem:[%s7351] sm:$0xff]
    %v7353 = vld [vmem:[%s7351 + $0x8] sm:$0x1f]
    %v7354 = vld [vmem:[%s7351 + $0x10] sm:$0xff]
    %v7355 = vld [vmem:[%s7351 + $0x18] sm:$0x1f]
    %v7356 = vld [vmem:[%s7351 + $0x20] sm:$0xff]
    %v7357 = vld [vmem:[%s7351 + $0x28] sm:$0x1f]
    %v7358 = vld [vmem:[%s7351 + $0x30] sm:$0xff]
    %v7359 = vld [vmem:[%s7351 + $0x38] sm:$0x1f]
    %v7360 = vld [vmem:[%s7351 + $0x40] sm:$0xff]
    %v7361 = vld [vmem:[%s7351 + $0x48] sm:$0x1f]
    %v7362 = vld [vmem:[%s7351 + $0x50] sm:$0xff]
    %v7363 = vld [vmem:[%s7351 + $0x58] sm:$0x1f]
    %v7364 = vld [vmem:[%s7351 + $0x60] sm:$0xff]
    %v7365 = vld [vmem:[%s7351 + $0x68] sm:$0x1f]
    %v7366 = vld [vmem:[%s7351 + $0x70] sm:$0xff]
    %v7367 = vld [vmem:[%s7351 + $0x78] sm:$0x1f]
    %v7368 = vld [vmem:[%s7351 + $0x80] sm:$0xff]
    %v7369 = vld [vmem:[%s7351 + $0x88] sm:$0x1f]
    %v7370 = vld [vmem:[%s7351 + $0x90] sm:$0xff]
    %v7371 = vld [vmem:[%s7351 + $0x98] sm:$0x1f]
    %v7372 = vld [vmem:[%s7351 + $0xa0] sm:$0xff]
    %v7373 = vld [vmem:[%s7351 + $0xa8] sm:$0x1f]
    %v7374 = vld [vmem:[%s7351 + $0xb0] sm:$0xff]
    %v7375 = vld [vmem:[%s7351 + $0xb8] sm:$0x1f]
    %s7376 = scalar_lea.vmem [#allocation2], 624
    %v7377 = vld [vmem:[%s7376] sm:$0xff]
    %v7378 = vld [vmem:[%s7376 + $0x8] sm:$0x1f]
    %v7379 = vld [vmem:[%s7376 + $0x10] sm:$0xff]
    %v7380 = vld [vmem:[%s7376 + $0x18] sm:$0x1f]
    %v7381 = vld [vmem:[%s7376 + $0x20] sm:$0xff]
    %v7382 = vld [vmem:[%s7376 + $0x28] sm:$0x1f]
    %v7383 = vld [vmem:[%s7376 + $0x30] sm:$0xff]
    %v7384 = vld [vmem:[%s7376 + $0x38] sm:$0x1f]
    %v7385 = vld [vmem:[%s7376 + $0x40] sm:$0xff]
    %v7386 = vld [vmem:[%s7376 + $0x48] sm:$0x1f]
    %v7387 = vld [vmem:[%s7376 + $0x50] sm:$0xff]
    %v7388 = vld [vmem:[%s7376 + $0x58] sm:$0x1f]
    %v7389 = vld [vmem:[%s7376 + $0x60] sm:$0xff]
    %v7390 = vld [vmem:[%s7376 + $0x68] sm:$0x1f]
    %v7391 = vld [vmem:[%s7376 + $0x70] sm:$0xff]
    %v7392 = vld [vmem:[%s7376 + $0x78] sm:$0x1f]
    %v7393 = vld [vmem:[%s7376 + $0x80] sm:$0xff]
    %v7394 = vld [vmem:[%s7376 + $0x88] sm:$0x1f]
    %v7395 = vld [vmem:[%s7376 + $0x90] sm:$0xff]
    %v7396 = vld [vmem:[%s7376 + $0x98] sm:$0x1f]
    %v7397 = vld [vmem:[%s7376 + $0xa0] sm:$0xff]
    %v7398 = vld [vmem:[%s7376 + $0xa8] sm:$0x1f]
    %v7399 = vld [vmem:[%s7376 + $0xb0] sm:$0xff]
    %v7400 = vld [vmem:[%s7376 + $0xb8] sm:$0x1f]
    %s7401 = scalar_lea.vmem [#allocation2], 832
    %v7402 = vld [vmem:[%s7401] sm:$0xff]
    %v7403 = vld [vmem:[%s7401 + $0x8] sm:$0x1f]
    %v7404 = vld [vmem:[%s7401 + $0x10] sm:$0xff]
    %v7405 = vld [vmem:[%s7401 + $0x18] sm:$0x1f]
    %v7406 = vld [vmem:[%s7401 + $0x20] sm:$0xff]
    %v7407 = vld [vmem:[%s7401 + $0x28] sm:$0x1f]
    %v7408 = vld [vmem:[%s7401 + $0x30] sm:$0xff]
    %v7409 = vld [vmem:[%s7401 + $0x38] sm:$0x1f]
    %v7410 = vld [vmem:[%s7401 + $0x40] sm:$0xff]
    %v7411 = vld [vmem:[%s7401 + $0x48] sm:$0x1f]
    %v7412 = vld [vmem:[%s7401 + $0x50] sm:$0xff]
    %v7413 = vld [vmem:[%s7401 + $0x58] sm:$0x1f]
    %v7414 = vld [vmem:[%s7401 + $0x60] sm:$0xff]
    %v7415 = vld [vmem:[%s7401 + $0x68] sm:$0x1f]
    %v7416 = vld [vmem:[%s7401 + $0x70] sm:$0xff]
    %v7417 = vld [vmem:[%s7401 + $0x78] sm:$0x1f]
    %v7418 = vld [vmem:[%s7401 + $0x80] sm:$0xff]
    %v7419 = vld [vmem:[%s7401 + $0x88] sm:$0x1f]
    %v7420 = vld [vmem:[%s7401 + $0x90] sm:$0xff]
    %v7421 = vld [vmem:[%s7401 + $0x98] sm:$0x1f]
    %v7422 = vld [vmem:[%s7401 + $0xa0] sm:$0xff]
    %v7423 = vld [vmem:[%s7401 + $0xa8] sm:$0x1f]
    %v7424 = vld [vmem:[%s7401 + $0xb0] sm:$0xff]
    %v7425 = vld [vmem:[%s7401 + $0xb8] sm:$0x1f]
    %s7426 = scalar_lea.vmem [#allocation2], 1040
    %v7427 = vld [vmem:[%s7426] sm:$0xff]
    %v7428 = vld [vmem:[%s7426 + $0x8] sm:$0x1f]
    %v7429 = vld [vmem:[%s7426 + $0x10] sm:$0xff]
    %v7430 = vld [vmem:[%s7426 + $0x18] sm:$0x1f]
    %v7431 = vld [vmem:[%s7426 + $0x20] sm:$0xff]
    %v7432 = vld [vmem:[%s7426 + $0x28] sm:$0x1f]
    %v7433 = vld [vmem:[%s7426 + $0x30] sm:$0xff]
    %v7434 = vld [vmem:[%s7426 + $0x38] sm:$0x1f]
    %v7435 = vld [vmem:[%s7426 + $0x40] sm:$0xff]
    %v7436 = vld [vmem:[%s7426 + $0x48] sm:$0x1f]
    %v7437 = vld [vmem:[%s7426 + $0x50] sm:$0xff]
    %v7438 = vld [vmem:[%s7426 + $0x58] sm:$0x1f]
    %v7439 = vld [vmem:[%s7426 + $0x60] sm:$0xff]
    %v7440 = vld [vmem:[%s7426 + $0x68] sm:$0x1f]
    %v7441 = vld [vmem:[%s7426 + $0x70] sm:$0xff]
    %v7442 = vld [vmem:[%s7426 + $0x78] sm:$0x1f]
    %v7443 = vld [vmem:[%s7426 + $0x80] sm:$0xff]
    %v7444 = vld [vmem:[%s7426 + $0x88] sm:$0x1f]
    %v7445 = vld [vmem:[%s7426 + $0x90] sm:$0xff]
    %v7446 = vld [vmem:[%s7426 + $0x98] sm:$0x1f]
    %v7447 = vld [vmem:[%s7426 + $0xa0] sm:$0xff]
    %v7448 = vld [vmem:[%s7426 + $0xa8] sm:$0x1f]
    %v7449 = vld [vmem:[%s7426 + $0xb0] sm:$0xff]
    %v7450 = vld [vmem:[%s7426 + $0xb8] sm:$0x1f]
    loop: start=0, step=1, limit=16
    $region69: #{convolutional_network_forward.1} parent=1 // loop_pre_header
      _
    $region70: #{convolutional_network_forward.1} parent=1 // loop_header
      %s7452 = sphi 0, %s7456
      %p7453 = scmp.ge.s32.totalorder %s7452, 16
    $region71: #{convolutional_network_forward.1} parent=1 // loop_header_branch
      %7455 = sbr.rel (%p7453) target = $region75
    $region72: #{convolutional_network_forward.1} parent=1 // loop_body
      %s7457 = sld [smem:[#allocation8 + %s7452]]
      %v7458 = vstv %s7457
      %v7459 = vmul.f32 %v7302, %v7458
      %v7460 = vmul.f32 %v7303, %v7458
      %v7461 = vmul.f32 %v7304, %v7458
      %v7462 = vmul.f32 %v7305, %v7458
      %v7463 = vmul.f32 %v7306, %v7458
      %v7464 = vmul.f32 %v7307, %v7458
      %v7465 = vmul.f32 %v7308, %v7458
      %v7466 = vmul.f32 %v7309, %v7458
      %v7467 = vmul.f32 %v7310, %v7458
      %v7468 = vmul.f32 %v7311, %v7458
      %v7469 = vmul.f32 %v7312, %v7458
      %v7470 = vmul.f32 %v7313, %v7458
      %v7471 = vmul.f32 %v7314, %v7458
      %v7472 = vmul.f32 %v7315, %v7458
      %v7473 = vmul.f32 %v7316, %v7458
      %v7474 = vmul.f32 %v7317, %v7458
      %v7475 = vmul.f32 %v7318, %v7458
      %v7476 = vmul.f32 %v7319, %v7458
      %v7477 = vmul.f32 %v7320, %v7458
      %v7478 = vmul.f32 %v7321, %v7458
      %s7479 = sadd.s32 %s7452, 16
      %s7480 = sld [smem:[#allocation8 + %s7479]]
      %v7481 = vstv %s7480
      %v7482 = vmul.f32 %v7327, %v7481
      %v7483 = vmul.f32 %v7328, %v7481
      %v7484 = vmul.f32 %v7329, %v7481
      %v7485 = vmul.f32 %v7330, %v7481
      %v7486 = vmul.f32 %v7331, %v7481
      %v7487 = vmul.f32 %v7332, %v7481
      %v7488 = vmul.f32 %v7333, %v7481
      %v7489 = vmul.f32 %v7334, %v7481
      %v7490 = vmul.f32 %v7335, %v7481
      %v7491 = vmul.f32 %v7336, %v7481
      %v7492 = vmul.f32 %v7337, %v7481
      %v7493 = vmul.f32 %v7338, %v7481
      %v7494 = vmul.f32 %v7339, %v7481
      %v7495 = vmul.f32 %v7340, %v7481
      %v7496 = vmul.f32 %v7341, %v7481
      %v7497 = vmul.f32 %v7342, %v7481
      %v7498 = vmul.f32 %v7343, %v7481
      %v7499 = vmul.f32 %v7344, %v7481
      %v7500 = vmul.f32 %v7345, %v7481
      %v7501 = vmul.f32 %v7346, %v7481
      %v7502 = vadd.f32 %v7459, %v7482
      %v7503 = vadd.f32 %v7460, %v7483
      %v7504 = vadd.f32 %v7461, %v7484
      %v7505 = vadd.f32 %v7462, %v7485
      %v7506 = vadd.f32 %v7463, %v7486
      %v7507 = vadd.f32 %v7464, %v7487
      %v7508 = vadd.f32 %v7465, %v7488
      %v7509 = vadd.f32 %v7466, %v7489
      %v7510 = vadd.f32 %v7467, %v7490
      %v7511 = vadd.f32 %v7468, %v7491
      %v7512 = vadd.f32 %v7469, %v7492
      %v7513 = vadd.f32 %v7470, %v7493
      %v7514 = vadd.f32 %v7471, %v7494
      %v7515 = vadd.f32 %v7472, %v7495
      %v7516 = vadd.f32 %v7473, %v7496
      %v7517 = vadd.f32 %v7474, %v7497
      %v7518 = vadd.f32 %v7475, %v7498
      %v7519 = vadd.f32 %v7476, %v7499
      %v7520 = vadd.f32 %v7477, %v7500
      %v7521 = vadd.f32 %v7478, %v7501
      %s7522 = sadd.s32 %s7452, 32
      %s7523 = sld [smem:[#allocation8 + %s7522]]
      %v7524 = vstv %s7523
      %v7525 = vmul.f32 %v7352, %v7524
      %v7526 = vmul.f32 %v7353, %v7524
      %v7527 = vmul.f32 %v7354, %v7524
      %v7528 = vmul.f32 %v7355, %v7524
      %v7529 = vmul.f32 %v7356, %v7524
      %v7530 = vmul.f32 %v7357, %v7524
      %v7531 = vmul.f32 %v7358, %v7524
      %v7532 = vmul.f32 %v7359, %v7524
      %v7533 = vmul.f32 %v7360, %v7524
      %v7534 = vmul.f32 %v7361, %v7524
      %v7535 = vmul.f32 %v7362, %v7524
      %v7536 = vmul.f32 %v7363, %v7524
      %v7537 = vmul.f32 %v7364, %v7524
      %v7538 = vmul.f32 %v7365, %v7524
      %v7539 = vmul.f32 %v7366, %v7524
      %v7540 = vmul.f32 %v7367, %v7524
      %v7541 = vmul.f32 %v7368, %v7524
      %v7542 = vmul.f32 %v7369, %v7524
      %v7543 = vmul.f32 %v7370, %v7524
      %v7544 = vmul.f32 %v7371, %v7524
      %v7545 = vadd.f32 %v7502, %v7525
      %v7546 = vadd.f32 %v7503, %v7526
      %v7547 = vadd.f32 %v7504, %v7527
      %v7548 = vadd.f32 %v7505, %v7528
      %v7549 = vadd.f32 %v7506, %v7529
      %v7550 = vadd.f32 %v7507, %v7530
      %v7551 = vadd.f32 %v7508, %v7531
      %v7552 = vadd.f32 %v7509, %v7532
      %v7553 = vadd.f32 %v7510, %v7533
      %v7554 = vadd.f32 %v7511, %v7534
      %v7555 = vadd.f32 %v7512, %v7535
      %v7556 = vadd.f32 %v7513, %v7536
      %v7557 = vadd.f32 %v7514, %v7537
      %v7558 = vadd.f32 %v7515, %v7538
      %v7559 = vadd.f32 %v7516, %v7539
      %v7560 = vadd.f32 %v7517, %v7540
      %v7561 = vadd.f32 %v7518, %v7541
      %v7562 = vadd.f32 %v7519, %v7542
      %v7563 = vadd.f32 %v7520, %v7543
      %v7564 = vadd.f32 %v7521, %v7544
      %s7565 = sadd.s32 %s7452, 48
      %s7566 = sld [smem:[#allocation8 + %s7565]]
      %v7567 = vstv %s7566
      %v7568 = vmul.f32 %v7377, %v7567
      %v7569 = vmul.f32 %v7378, %v7567
      %v7570 = vmul.f32 %v7379, %v7567
      %v7571 = vmul.f32 %v7380, %v7567
      %v7572 = vmul.f32 %v7381, %v7567
      %v7573 = vmul.f32 %v7382, %v7567
      %v7574 = vmul.f32 %v7383, %v7567
      %v7575 = vmul.f32 %v7384, %v7567
      %v7576 = vmul.f32 %v7385, %v7567
      %v7577 = vmul.f32 %v7386, %v7567
      %v7578 = vmul.f32 %v7387, %v7567
      %v7579 = vmul.f32 %v7388, %v7567
      %v7580 = vmul.f32 %v7389, %v7567
      %v7581 = vmul.f32 %v7390, %v7567
      %v7582 = vmul.f32 %v7391, %v7567
      %v7583 = vmul.f32 %v7392, %v7567
      %v7584 = vmul.f32 %v7393, %v7567
      %v7585 = vmul.f32 %v7394, %v7567
      %v7586 = vmul.f32 %v7395, %v7567
      %v7587 = vmul.f32 %v7396, %v7567
      %v7588 = vadd.f32 %v7545, %v7568
      %v7589 = vadd.f32 %v7546, %v7569
      %v7590 = vadd.f32 %v7547, %v7570
      %v7591 = vadd.f32 %v7548, %v7571
      %v7592 = vadd.f32 %v7549, %v7572
      %v7593 = vadd.f32 %v7550, %v7573
      %v7594 = vadd.f32 %v7551, %v7574
      %v7595 = vadd.f32 %v7552, %v7575
      %v7596 = vadd.f32 %v7553, %v7576
      %v7597 = vadd.f32 %v7554, %v7577
      %v7598 = vadd.f32 %v7555, %v7578
      %v7599 = vadd.f32 %v7556, %v7579
      %v7600 = vadd.f32 %v7557, %v7580
      %v7601 = vadd.f32 %v7558, %v7581
      %v7602 = vadd.f32 %v7559, %v7582
      %v7603 = vadd.f32 %v7560, %v7583
      %v7604 = vadd.f32 %v7561, %v7584
      %v7605 = vadd.f32 %v7562, %v7585
      %v7606 = vadd.f32 %v7563, %v7586
      %v7607 = vadd.f32 %v7564, %v7587
      %s7608 = sadd.s32 %s7452, 64
      %s7609 = sld [smem:[#allocation8 + %s7608]]
      %v7610 = vstv %s7609
      %v7611 = vmul.f32 %v7402, %v7610
      %v7612 = vmul.f32 %v7403, %v7610
      %v7613 = vmul.f32 %v7404, %v7610
      %v7614 = vmul.f32 %v7405, %v7610
      %v7615 = vmul.f32 %v7406, %v7610
      %v7616 = vmul.f32 %v7407, %v7610
      %v7617 = vmul.f32 %v7408, %v7610
      %v7618 = vmul.f32 %v7409, %v7610
      %v7619 = vmul.f32 %v7410, %v7610
      %v7620 = vmul.f32 %v7411, %v7610
      %v7621 = vmul.f32 %v7412, %v7610
      %v7622 = vmul.f32 %v7413, %v7610
      %v7623 = vmul.f32 %v7414, %v7610
      %v7624 = vmul.f32 %v7415, %v7610
      %v7625 = vmul.f32 %v7416, %v7610
      %v7626 = vmul.f32 %v7417, %v7610
      %v7627 = vmul.f32 %v7418, %v7610
      %v7628 = vmul.f32 %v7419, %v7610
      %v7629 = vmul.f32 %v7420, %v7610
      %v7630 = vmul.f32 %v7421, %v7610
      %v7631 = vadd.f32 %v7588, %v7611
      %v7632 = vadd.f32 %v7589, %v7612
      %v7633 = vadd.f32 %v7590, %v7613
      %v7634 = vadd.f32 %v7591, %v7614
      %v7635 = vadd.f32 %v7592, %v7615
      %v7636 = vadd.f32 %v7593, %v7616
      %v7637 = vadd.f32 %v7594, %v7617
      %v7638 = vadd.f32 %v7595, %v7618
      %v7639 = vadd.f32 %v7596, %v7619
      %v7640 = vadd.f32 %v7597, %v7620
      %v7641 = vadd.f32 %v7598, %v7621
      %v7642 = vadd.f32 %v7599, %v7622
      %v7643 = vadd.f32 %v7600, %v7623
      %v7644 = vadd.f32 %v7601, %v7624
      %v7645 = vadd.f32 %v7602, %v7625
      %v7646 = vadd.f32 %v7603, %v7626
      %v7647 = vadd.f32 %v7604, %v7627
      %v7648 = vadd.f32 %v7605, %v7628
      %v7649 = vadd.f32 %v7606, %v7629
      %v7650 = vadd.f32 %v7607, %v7630
      %s7651 = sadd.s32 %s7452, 80
      %s7652 = sld [smem:[#allocation8 + %s7651]]
      %v7653 = vstv %s7652
      %v7654 = vmul.f32 %v7427, %v7653
      %v7655 = vmul.f32 %v7428, %v7653
      %v7656 = vmul.f32 %v7429, %v7653
      %v7657 = vmul.f32 %v7430, %v7653
      %v7658 = vmul.f32 %v7431, %v7653
      %v7659 = vmul.f32 %v7432, %v7653
      %v7660 = vmul.f32 %v7433, %v7653
      %v7661 = vmul.f32 %v7434, %v7653
      %v7662 = vmul.f32 %v7435, %v7653
      %v7663 = vmul.f32 %v7436, %v7653
      %v7664 = vmul.f32 %v7437, %v7653
      %v7665 = vmul.f32 %v7438, %v7653
      %v7666 = vmul.f32 %v7439, %v7653
      %v7667 = vmul.f32 %v7440, %v7653
      %v7668 = vmul.f32 %v7441, %v7653
      %v7669 = vmul.f32 %v7442, %v7653
      %v7670 = vmul.f32 %v7443, %v7653
      %v7671 = vmul.f32 %v7444, %v7653
      %v7672 = vmul.f32 %v7445, %v7653
      %v7673 = vmul.f32 %v7446, %v7653
      %v7674 = vadd.f32 %v7631, %v7654
      %v7675 = vadd.f32 %v7632, %v7655
      %v7676 = vadd.f32 %v7633, %v7656
      %v7677 = vadd.f32 %v7634, %v7657
      %v7678 = vadd.f32 %v7635, %v7658
      %v7679 = vadd.f32 %v7636, %v7659
      %v7680 = vadd.f32 %v7637, %v7660
      %v7681 = vadd.f32 %v7638, %v7661
      %v7682 = vadd.f32 %v7639, %v7662
      %v7683 = vadd.f32 %v7640, %v7663
      %v7684 = vadd.f32 %v7641, %v7664
      %v7685 = vadd.f32 %v7642, %v7665
      %v7686 = vadd.f32 %v7643, %v7666
      %v7687 = vadd.f32 %v7644, %v7667
      %v7688 = vadd.f32 %v7645, %v7668
      %v7689 = vadd.f32 %v7646, %v7669
      %v7690 = vadd.f32 %v7647, %v7670
      %v7691 = vadd.f32 %v7648, %v7671
      %v7692 = vadd.f32 %v7649, %v7672
      %v7693 = vadd.f32 %v7650, %v7673
      %s7694 = sadd.s32 %s7452, 96
      %s7695 = sld [smem:[#allocation8 + %s7694]]
      %v7696 = vstv %s7695
      %v7697 = vmul.f32 %v7302, %v7696
      %v7698 = vmul.f32 %v7303, %v7696
      %v7699 = vmul.f32 %v7304, %v7696
      %v7700 = vmul.f32 %v7305, %v7696
      %v7701 = vmul.f32 %v7306, %v7696
      %v7702 = vmul.f32 %v7307, %v7696
      %v7703 = vmul.f32 %v7308, %v7696
      %v7704 = vmul.f32 %v7309, %v7696
      %v7705 = vmul.f32 %v7310, %v7696
      %v7706 = vmul.f32 %v7311, %v7696
      %v7707 = vmul.f32 %v7312, %v7696
      %v7708 = vmul.f32 %v7313, %v7696
      %v7709 = vmul.f32 %v7314, %v7696
      %v7710 = vmul.f32 %v7315, %v7696
      %v7711 = vmul.f32 %v7316, %v7696
      %v7712 = vmul.f32 %v7317, %v7696
      %v7713 = vmul.f32 %v7318, %v7696
      %v7714 = vmul.f32 %v7319, %v7696
      %v7715 = vmul.f32 %v7320, %v7696
      %v7716 = vmul.f32 %v7321, %v7696
      %vm7737 = vcmask 1046528
      %v7738 = vrot.slane %v7697, 1
      %v7739 = vrot.slane %v7698, 1
      %v7740 = vsel %vm7737, %v7738, %v7739
      %v7741 = vrot.slane %v7699, 1
      %v7742 = vrot.slane %v7700, 1
      %v7743 = vsel %vm7737, %v7741, %v7742
      %v7744 = vrot.slane %v7701, 1
      %v7745 = vrot.slane %v7702, 1
      %v7746 = vsel %vm7737, %v7744, %v7745
      %v7747 = vrot.slane %v7703, 1
      %v7748 = vrot.slane %v7704, 1
      %v7749 = vsel %vm7737, %v7747, %v7748
      %v7750 = vrot.slane %v7705, 1
      %v7751 = vrot.slane %v7706, 1
      %v7752 = vsel %vm7737, %v7750, %v7751
      %v7753 = vrot.slane %v7707, 1
      %v7754 = vrot.slane %v7708, 1
      %v7755 = vsel %vm7737, %v7753, %v7754
      %v7756 = vrot.slane %v7709, 1
      %v7757 = vrot.slane %v7710, 1
      %v7758 = vsel %vm7737, %v7756, %v7757
      %v7759 = vrot.slane %v7711, 1
      %v7760 = vrot.slane %v7712, 1
      %v7761 = vsel %vm7737, %v7759, %v7760
      %v7762 = vrot.slane %v7713, 1
      %v7763 = vrot.slane %v7714, 1
      %v7764 = vsel %vm7737, %v7762, %v7763
      %v7765 = vrot.slane %v7715, 1
      %v7766 = vrot.slane %v7716, 1
      %v7767 = vsel %vm7737, %v7765, %v7766
      %v7788 = vadd.f32 %v7674, %v7740
      %v7789 = vadd.f32 %v7675, %v7739
      %v7790 = vadd.f32 %v7676, %v7743
      %v7791 = vadd.f32 %v7677, %v7742
      %v7792 = vadd.f32 %v7678, %v7746
      %v7793 = vadd.f32 %v7679, %v7745
      %v7794 = vadd.f32 %v7680, %v7749
      %v7795 = vadd.f32 %v7681, %v7748
      %v7796 = vadd.f32 %v7682, %v7752
      %v7797 = vadd.f32 %v7683, %v7751
      %v7798 = vadd.f32 %v7684, %v7755
      %v7799 = vadd.f32 %v7685, %v7754
      %v7800 = vadd.f32 %v7686, %v7758
      %v7801 = vadd.f32 %v7687, %v7757
      %v7802 = vadd.f32 %v7688, %v7761
      %v7803 = vadd.f32 %v7689, %v7760
      %v7804 = vadd.f32 %v7690, %v7764
      %v7805 = vadd.f32 %v7691, %v7763
      %v7806 = vadd.f32 %v7692, %v7767
      %v7807 = vadd.f32 %v7693, %v7766
      %s7808 = sadd.s32 %s7452, 112
      %s7809 = sld [smem:[#allocation8 + %s7808]]
      %v7810 = vstv %s7809
      %v7811 = vmul.f32 %v7327, %v7810
      %v7812 = vmul.f32 %v7328, %v7810
      %v7813 = vmul.f32 %v7329, %v7810
      %v7814 = vmul.f32 %v7330, %v7810
      %v7815 = vmul.f32 %v7331, %v7810
      %v7816 = vmul.f32 %v7332, %v7810
      %v7817 = vmul.f32 %v7333, %v7810
      %v7818 = vmul.f32 %v7334, %v7810
      %v7819 = vmul.f32 %v7335, %v7810
      %v7820 = vmul.f32 %v7336, %v7810
      %v7821 = vmul.f32 %v7337, %v7810
      %v7822 = vmul.f32 %v7338, %v7810
      %v7823 = vmul.f32 %v7339, %v7810
      %v7824 = vmul.f32 %v7340, %v7810
      %v7825 = vmul.f32 %v7341, %v7810
      %v7826 = vmul.f32 %v7342, %v7810
      %v7827 = vmul.f32 %v7343, %v7810
      %v7828 = vmul.f32 %v7344, %v7810
      %v7829 = vmul.f32 %v7345, %v7810
      %v7830 = vmul.f32 %v7346, %v7810
      %v7851 = vrot.slane %v7811, 1
      %v7852 = vrot.slane %v7812, 1
      %v7853 = vsel %vm7737, %v7851, %v7852
      %v7854 = vrot.slane %v7813, 1
      %v7855 = vrot.slane %v7814, 1
      %v7856 = vsel %vm7737, %v7854, %v7855
      %v7857 = vrot.slane %v7815, 1
      %v7858 = vrot.slane %v7816, 1
      %v7859 = vsel %vm7737, %v7857, %v7858
      %v7860 = vrot.slane %v7817, 1
      %v7861 = vrot.slane %v7818, 1
      %v7862 = vsel %vm7737, %v7860, %v7861
      %v7863 = vrot.slane %v7819, 1
      %v7864 = vrot.slane %v7820, 1
      %v7865 = vsel %vm7737, %v7863, %v7864
      %v7866 = vrot.slane %v7821, 1
      %v7867 = vrot.slane %v7822, 1
      %v7868 = vsel %vm7737, %v7866, %v7867
      %v7869 = vrot.slane %v7823, 1
      %v7870 = vrot.slane %v7824, 1
      %v7871 = vsel %vm7737, %v7869, %v7870
      %v7872 = vrot.slane %v7825, 1
      %v7873 = vrot.slane %v7826, 1
      %v7874 = vsel %vm7737, %v7872, %v7873
      %v7875 = vrot.slane %v7827, 1
      %v7876 = vrot.slane %v7828, 1
      %v7877 = vsel %vm7737, %v7875, %v7876
      %v7878 = vrot.slane %v7829, 1
      %v7879 = vrot.slane %v7830, 1
      %v7880 = vsel %vm7737, %v7878, %v7879
      %v7901 = vadd.f32 %v7788, %v7853
      %v7902 = vadd.f32 %v7789, %v7852
      %v7903 = vadd.f32 %v7790, %v7856
      %v7904 = vadd.f32 %v7791, %v7855
      %v7905 = vadd.f32 %v7792, %v7859
      %v7906 = vadd.f32 %v7793, %v7858
      %v7907 = vadd.f32 %v7794, %v7862
      %v7908 = vadd.f32 %v7795, %v7861
      %v7909 = vadd.f32 %v7796, %v7865
      %v7910 = vadd.f32 %v7797, %v7864
      %v7911 = vadd.f32 %v7798, %v7868
      %v7912 = vadd.f32 %v7799, %v7867
      %v7913 = vadd.f32 %v7800, %v7871
      %v7914 = vadd.f32 %v7801, %v7870
      %v7915 = vadd.f32 %v7802, %v7874
      %v7916 = vadd.f32 %v7803, %v7873
      %v7917 = vadd.f32 %v7804, %v7877
      %v7918 = vadd.f32 %v7805, %v7876
      %v7919 = vadd.f32 %v7806, %v7880
      %v7920 = vadd.f32 %v7807, %v7879
      %s7921 = sadd.s32 %s7452, 128
      %s7922 = sld [smem:[#allocation8 + %s7921]]
      %v7923 = vstv %s7922
      %v7924 = vmul.f32 %v7352, %v7923
      %v7925 = vmul.f32 %v7353, %v7923
      %v7926 = vmul.f32 %v7354, %v7923
      %v7927 = vmul.f32 %v7355, %v7923
      %v7928 = vmul.f32 %v7356, %v7923
      %v7929 = vmul.f32 %v7357, %v7923
      %v7930 = vmul.f32 %v7358, %v7923
      %v7931 = vmul.f32 %v7359, %v7923
      %v7932 = vmul.f32 %v7360, %v7923
      %v7933 = vmul.f32 %v7361, %v7923
      %v7934 = vmul.f32 %v7362, %v7923
      %v7935 = vmul.f32 %v7363, %v7923
      %v7936 = vmul.f32 %v7364, %v7923
      %v7937 = vmul.f32 %v7365, %v7923
      %v7938 = vmul.f32 %v7366, %v7923
      %v7939 = vmul.f32 %v7367, %v7923
      %v7940 = vmul.f32 %v7368, %v7923
      %v7941 = vmul.f32 %v7369, %v7923
      %v7942 = vmul.f32 %v7370, %v7923
      %v7943 = vmul.f32 %v7371, %v7923
      %v7964 = vrot.slane %v7924, 1
      %v7965 = vrot.slane %v7925, 1
      %v7966 = vsel %vm7737, %v7964, %v7965
      %v7967 = vrot.slane %v7926, 1
      %v7968 = vrot.slane %v7927, 1
      %v7969 = vsel %vm7737, %v7967, %v7968
      %v7970 = vrot.slane %v7928, 1
      %v7971 = vrot.slane %v7929, 1
      %v7972 = vsel %vm7737, %v7970, %v7971
      %v7973 = vrot.slane %v7930, 1
      %v7974 = vrot.slane %v7931, 1
      %v7975 = vsel %vm7737, %v7973, %v7974
      %v7976 = vrot.slane %v7932, 1
      %v7977 = vrot.slane %v7933, 1
      %v7978 = vsel %vm7737, %v7976, %v7977
      %v7979 = vrot.slane %v7934, 1
      %v7980 = vrot.slane %v7935, 1
      %v7981 = vsel %vm7737, %v7979, %v7980
      %v7982 = vrot.slane %v7936, 1
      %v7983 = vrot.slane %v7937, 1
      %v7984 = vsel %vm7737, %v7982, %v7983
      %v7985 = vrot.slane %v7938, 1
      %v7986 = vrot.slane %v7939, 1
      %v7987 = vsel %vm7737, %v7985, %v7986
      %v7988 = vrot.slane %v7940, 1
      %v7989 = vrot.slane %v7941, 1
      %v7990 = vsel %vm7737, %v7988, %v7989
      %v7991 = vrot.slane %v7942, 1
      %v7992 = vrot.slane %v7943, 1
      %v7993 = vsel %vm7737, %v7991, %v7992
      %v8014 = vadd.f32 %v7901, %v7966
      %v8015 = vadd.f32 %v7902, %v7965
      %v8016 = vadd.f32 %v7903, %v7969
      %v8017 = vadd.f32 %v7904, %v7968
      %v8018 = vadd.f32 %v7905, %v7972
      %v8019 = vadd.f32 %v7906, %v7971
      %v8020 = vadd.f32 %v7907, %v7975
      %v8021 = vadd.f32 %v7908, %v7974
      %v8022 = vadd.f32 %v7909, %v7978
      %v8023 = vadd.f32 %v7910, %v7977
      %v8024 = vadd.f32 %v7911, %v7981
      %v8025 = vadd.f32 %v7912, %v7980
      %v8026 = vadd.f32 %v7913, %v7984
      %v8027 = vadd.f32 %v7914, %v7983
      %v8028 = vadd.f32 %v7915, %v7987
      %v8029 = vadd.f32 %v7916, %v7986
      %v8030 = vadd.f32 %v7917, %v7990
      %v8031 = vadd.f32 %v7918, %v7989
      %v8032 = vadd.f32 %v7919, %v7993
      %v8033 = vadd.f32 %v7920, %v7992
      %s8034 = sadd.s32 %s7452, 144
      %s8035 = sld [smem:[#allocation8 + %s8034]]
      %v8036 = vstv %s8035
      %v8037 = vmul.f32 %v7377, %v8036
      %v8038 = vmul.f32 %v7378, %v8036
      %v8039 = vmul.f32 %v7379, %v8036
      %v8040 = vmul.f32 %v7380, %v8036
      %v8041 = vmul.f32 %v7381, %v8036
      %v8042 = vmul.f32 %v7382, %v8036
      %v8043 = vmul.f32 %v7383, %v8036
      %v8044 = vmul.f32 %v7384, %v8036
      %v8045 = vmul.f32 %v7385, %v8036
      %v8046 = vmul.f32 %v7386, %v8036
      %v8047 = vmul.f32 %v7387, %v8036
      %v8048 = vmul.f32 %v7388, %v8036
      %v8049 = vmul.f32 %v7389, %v8036
      %v8050 = vmul.f32 %v7390, %v8036
      %v8051 = vmul.f32 %v7391, %v8036
      %v8052 = vmul.f32 %v7392, %v8036
      %v8053 = vmul.f32 %v7393, %v8036
      %v8054 = vmul.f32 %v7394, %v8036
      %v8055 = vmul.f32 %v7395, %v8036
      %v8056 = vmul.f32 %v7396, %v8036
      %v8077 = vrot.slane %v8037, 1
      %v8078 = vrot.slane %v8038, 1
      %v8079 = vsel %vm7737, %v8077, %v8078
      %v8080 = vrot.slane %v8039, 1
      %v8081 = vrot.slane %v8040, 1
      %v8082 = vsel %vm7737, %v8080, %v8081
      %v8083 = vrot.slane %v8041, 1
      %v8084 = vrot.slane %v8042, 1
      %v8085 = vsel %vm7737, %v8083, %v8084
      %v8086 = vrot.slane %v8043, 1
      %v8087 = vrot.slane %v8044, 1
      %v8088 = vsel %vm7737, %v8086, %v8087
      %v8089 = vrot.slane %v8045, 1
      %v8090 = vrot.slane %v8046, 1
      %v8091 = vsel %vm7737, %v8089, %v8090
      %v8092 = vrot.slane %v8047, 1
      %v8093 = vrot.slane %v8048, 1
      %v8094 = vsel %vm7737, %v8092, %v8093
      %v8095 = vrot.slane %v8049, 1
      %v8096 = vrot.slane %v8050, 1
      %v8097 = vsel %vm7737, %v8095, %v8096
      %v8098 = vrot.slane %v8051, 1
      %v8099 = vrot.slane %v8052, 1
      %v8100 = vsel %vm7737, %v8098, %v8099
      %v8101 = vrot.slane %v8053, 1
      %v8102 = vrot.slane %v8054, 1
      %v8103 = vsel %vm7737, %v8101, %v8102
      %v8104 = vrot.slane %v8055, 1
      %v8105 = vrot.slane %v8056, 1
      %v8106 = vsel %vm7737, %v8104, %v8105
      %v8127 = vadd.f32 %v8014, %v8079
      %v8128 = vadd.f32 %v8015, %v8078
      %v8129 = vadd.f32 %v8016, %v8082
      %v8130 = vadd.f32 %v8017, %v8081
      %v8131 = vadd.f32 %v8018, %v8085
      %v8132 = vadd.f32 %v8019, %v8084
      %v8133 = vadd.f32 %v8020, %v8088
      %v8134 = vadd.f32 %v8021, %v8087
      %v8135 = vadd.f32 %v8022, %v8091
      %v8136 = vadd.f32 %v8023, %v8090
      %v8137 = vadd.f32 %v8024, %v8094
      %v8138 = vadd.f32 %v8025, %v8093
      %v8139 = vadd.f32 %v8026, %v8097
      %v8140 = vadd.f32 %v8027, %v8096
      %v8141 = vadd.f32 %v8028, %v8100
      %v8142 = vadd.f32 %v8029, %v8099
      %v8143 = vadd.f32 %v8030, %v8103
      %v8144 = vadd.f32 %v8031, %v8102
      %v8145 = vadd.f32 %v8032, %v8106
      %v8146 = vadd.f32 %v8033, %v8105
      %s8147 = sadd.s32 %s7452, 160
      %s8148 = sld [smem:[#allocation8 + %s8147]]
      %v8149 = vstv %s8148
      %v8150 = vmul.f32 %v7402, %v8149
      %v8151 = vmul.f32 %v7403, %v8149
      %v8152 = vmul.f32 %v7404, %v8149
      %v8153 = vmul.f32 %v7405, %v8149
      %v8154 = vmul.f32 %v7406, %v8149
      %v8155 = vmul.f32 %v7407, %v8149
      %v8156 = vmul.f32 %v7408, %v8149
      %v8157 = vmul.f32 %v7409, %v8149
      %v8158 = vmul.f32 %v7410, %v8149
      %v8159 = vmul.f32 %v7411, %v8149
      %v8160 = vmul.f32 %v7412, %v8149
      %v8161 = vmul.f32 %v7413, %v8149
      %v8162 = vmul.f32 %v7414, %v8149
      %v8163 = vmul.f32 %v7415, %v8149
      %v8164 = vmul.f32 %v7416, %v8149
      %v8165 = vmul.f32 %v7417, %v8149
      %v8166 = vmul.f32 %v7418, %v8149
      %v8167 = vmul.f32 %v7419, %v8149
      %v8168 = vmul.f32 %v7420, %v8149
      %v8169 = vmul.f32 %v7421, %v8149
      %v8190 = vrot.slane %v8150, 1
      %v8191 = vrot.slane %v8151, 1
      %v8192 = vsel %vm7737, %v8190, %v8191
      %v8193 = vrot.slane %v8152, 1
      %v8194 = vrot.slane %v8153, 1
      %v8195 = vsel %vm7737, %v8193, %v8194
      %v8196 = vrot.slane %v8154, 1
      %v8197 = vrot.slane %v8155, 1
      %v8198 = vsel %vm7737, %v8196, %v8197
      %v8199 = vrot.slane %v8156, 1
      %v8200 = vrot.slane %v8157, 1
      %v8201 = vsel %vm7737, %v8199, %v8200
      %v8202 = vrot.slane %v8158, 1
      %v8203 = vrot.slane %v8159, 1
      %v8204 = vsel %vm7737, %v8202, %v8203
      %v8205 = vrot.slane %v8160, 1
      %v8206 = vrot.slane %v8161, 1
      %v8207 = vsel %vm7737, %v8205, %v8206
      %v8208 = vrot.slane %v8162, 1
      %v8209 = vrot.slane %v8163, 1
      %v8210 = vsel %vm7737, %v8208, %v8209
      %v8211 = vrot.slane %v8164, 1
      %v8212 = vrot.slane %v8165, 1
      %v8213 = vsel %vm7737, %v8211, %v8212
      %v8214 = vrot.slane %v8166, 1
      %v8215 = vrot.slane %v8167, 1
      %v8216 = vsel %vm7737, %v8214, %v8215
      %v8217 = vrot.slane %v8168, 1
      %v8218 = vrot.slane %v8169, 1
      %v8219 = vsel %vm7737, %v8217, %v8218
      %v8240 = vadd.f32 %v8127, %v8192
      %v8241 = vadd.f32 %v8128, %v8191
      %v8242 = vadd.f32 %v8129, %v8195
      %v8243 = vadd.f32 %v8130, %v8194
      %v8244 = vadd.f32 %v8131, %v8198
      %v8245 = vadd.f32 %v8132, %v8197
      %v8246 = vadd.f32 %v8133, %v8201
      %v8247 = vadd.f32 %v8134, %v8200
      %v8248 = vadd.f32 %v8135, %v8204
      %v8249 = vadd.f32 %v8136, %v8203
      %v8250 = vadd.f32 %v8137, %v8207
      %v8251 = vadd.f32 %v8138, %v8206
      %v8252 = vadd.f32 %v8139, %v8210
      %v8253 = vadd.f32 %v8140, %v8209
      %v8254 = vadd.f32 %v8141, %v8213
      %v8255 = vadd.f32 %v8142, %v8212
      %v8256 = vadd.f32 %v8143, %v8216
      %v8257 = vadd.f32 %v8144, %v8215
      %v8258 = vadd.f32 %v8145, %v8219
      %v8259 = vadd.f32 %v8146, %v8218
      %s8260 = sadd.s32 %s7452, 176
      %s8261 = sld [smem:[#allocation8 + %s8260]]
      %v8262 = vstv %s8261
      %v8263 = vmul.f32 %v7427, %v8262
      %v8264 = vmul.f32 %v7428, %v8262
      %v8265 = vmul.f32 %v7429, %v8262
      %v8266 = vmul.f32 %v7430, %v8262
      %v8267 = vmul.f32 %v7431, %v8262
      %v8268 = vmul.f32 %v7432, %v8262
      %v8269 = vmul.f32 %v7433, %v8262
      %v8270 = vmul.f32 %v7434, %v8262
      %v8271 = vmul.f32 %v7435, %v8262
      %v8272 = vmul.f32 %v7436, %v8262
      %v8273 = vmul.f32 %v7437, %v8262
      %v8274 = vmul.f32 %v7438, %v8262
      %v8275 = vmul.f32 %v7439, %v8262
      %v8276 = vmul.f32 %v7440, %v8262
      %v8277 = vmul.f32 %v7441, %v8262
      %v8278 = vmul.f32 %v7442, %v8262
      %v8279 = vmul.f32 %v7443, %v8262
      %v8280 = vmul.f32 %v7444, %v8262
      %v8281 = vmul.f32 %v7445, %v8262
      %v8282 = vmul.f32 %v7446, %v8262
      %v8303 = vrot.slane %v8263, 1
      %v8304 = vrot.slane %v8264, 1
      %v8305 = vsel %vm7737, %v8303, %v8304
      %v8306 = vrot.slane %v8265, 1
      %v8307 = vrot.slane %v8266, 1
      %v8308 = vsel %vm7737, %v8306, %v8307
      %v8309 = vrot.slane %v8267, 1
      %v8310 = vrot.slane %v8268, 1
      %v8311 = vsel %vm7737, %v8309, %v8310
      %v8312 = vrot.slane %v8269, 1
      %v8313 = vrot.slane %v8270, 1
      %v8314 = vsel %vm7737, %v8312, %v8313
      %v8315 = vrot.slane %v8271, 1
      %v8316 = vrot.slane %v8272, 1
      %v8317 = vsel %vm7737, %v8315, %v8316
      %v8318 = vrot.slane %v8273, 1
      %v8319 = vrot.slane %v8274, 1
      %v8320 = vsel %vm7737, %v8318, %v8319
      %v8321 = vrot.slane %v8275, 1
      %v8322 = vrot.slane %v8276, 1
      %v8323 = vsel %vm7737, %v8321, %v8322
      %v8324 = vrot.slane %v8277, 1
      %v8325 = vrot.slane %v8278, 1
      %v8326 = vsel %vm7737, %v8324, %v8325
      %v8327 = vrot.slane %v8279, 1
      %v8328 = vrot.slane %v8280, 1
      %v8329 = vsel %vm7737, %v8327, %v8328
      %v8330 = vrot.slane %v8281, 1
      %v8331 = vrot.slane %v8282, 1
      %v8332 = vsel %vm7737, %v8330, %v8331
      %v8353 = vadd.f32 %v8240, %v8305
      %v8354 = vadd.f32 %v8241, %v8304
      %v8355 = vadd.f32 %v8242, %v8308
      %v8356 = vadd.f32 %v8243, %v8307
      %v8357 = vadd.f32 %v8244, %v8311
      %v8358 = vadd.f32 %v8245, %v8310
      %v8359 = vadd.f32 %v8246, %v8314
      %v8360 = vadd.f32 %v8247, %v8313
      %v8361 = vadd.f32 %v8248, %v8317
      %v8362 = vadd.f32 %v8249, %v8316
      %v8363 = vadd.f32 %v8250, %v8320
      %v8364 = vadd.f32 %v8251, %v8319
      %v8365 = vadd.f32 %v8252, %v8323
      %v8366 = vadd.f32 %v8253, %v8322
      %v8367 = vadd.f32 %v8254, %v8326
      %v8368 = vadd.f32 %v8255, %v8325
      %v8369 = vadd.f32 %v8256, %v8329
      %v8370 = vadd.f32 %v8257, %v8328
      %v8371 = vadd.f32 %v8258, %v8332
      %v8372 = vadd.f32 %v8259, %v8331
      %s8373 = sadd.s32 %s7452, 192
      %s8374 = sld [smem:[#allocation8 + %s8373]]
      %v8375 = vstv %s8374
      %v8376 = vmul.f32 %v7302, %v8375
      %v8377 = vmul.f32 %v7303, %v8375
      %v8378 = vmul.f32 %v7304, %v8375
      %v8379 = vmul.f32 %v7305, %v8375
      %v8380 = vmul.f32 %v7306, %v8375
      %v8381 = vmul.f32 %v7307, %v8375
      %v8382 = vmul.f32 %v7308, %v8375
      %v8383 = vmul.f32 %v7309, %v8375
      %v8384 = vmul.f32 %v7310, %v8375
      %v8385 = vmul.f32 %v7311, %v8375
      %v8386 = vmul.f32 %v7312, %v8375
      %v8387 = vmul.f32 %v7313, %v8375
      %v8388 = vmul.f32 %v7314, %v8375
      %v8389 = vmul.f32 %v7315, %v8375
      %v8390 = vmul.f32 %v7316, %v8375
      %v8391 = vmul.f32 %v7317, %v8375
      %v8392 = vmul.f32 %v7318, %v8375
      %v8393 = vmul.f32 %v7319, %v8375
      %v8394 = vmul.f32 %v7320, %v8375
      %v8395 = vmul.f32 %v7321, %v8375
      %vm8416 = vcmask 1045504
      %v8417 = vrot.slane %v8376, 2
      %v8418 = vrot.slane %v8377, 2
      %v8419 = vsel %vm8416, %v8417, %v8418
      %v8420 = vrot.slane %v8378, 2
      %v8421 = vrot.slane %v8379, 2
      %v8422 = vsel %vm8416, %v8420, %v8421
      %v8423 = vrot.slane %v8380, 2
      %v8424 = vrot.slane %v8381, 2
      %v8425 = vsel %vm8416, %v8423, %v8424
      %v8426 = vrot.slane %v8382, 2
      %v8427 = vrot.slane %v8383, 2
      %v8428 = vsel %vm8416, %v8426, %v8427
      %v8429 = vrot.slane %v8384, 2
      %v8430 = vrot.slane %v8385, 2
      %v8431 = vsel %vm8416, %v8429, %v8430
      %v8432 = vrot.slane %v8386, 2
      %v8433 = vrot.slane %v8387, 2
      %v8434 = vsel %vm8416, %v8432, %v8433
      %v8435 = vrot.slane %v8388, 2
      %v8436 = vrot.slane %v8389, 2
      %v8437 = vsel %vm8416, %v8435, %v8436
      %v8438 = vrot.slane %v8390, 2
      %v8439 = vrot.slane %v8391, 2
      %v8440 = vsel %vm8416, %v8438, %v8439
      %v8441 = vrot.slane %v8392, 2
      %v8442 = vrot.slane %v8393, 2
      %v8443 = vsel %vm8416, %v8441, %v8442
      %v8444 = vrot.slane %v8394, 2
      %v8445 = vrot.slane %v8395, 2
      %v8446 = vsel %vm8416, %v8444, %v8445
      %v8467 = vadd.f32 %v8353, %v8419
      %v8468 = vadd.f32 %v8354, %v8418
      %v8469 = vadd.f32 %v8355, %v8422
      %v8470 = vadd.f32 %v8356, %v8421
      %v8471 = vadd.f32 %v8357, %v8425
      %v8472 = vadd.f32 %v8358, %v8424
      %v8473 = vadd.f32 %v8359, %v8428
      %v8474 = vadd.f32 %v8360, %v8427
      %v8475 = vadd.f32 %v8361, %v8431
      %v8476 = vadd.f32 %v8362, %v8430
      %v8477 = vadd.f32 %v8363, %v8434
      %v8478 = vadd.f32 %v8364, %v8433
      %v8479 = vadd.f32 %v8365, %v8437
      %v8480 = vadd.f32 %v8366, %v8436
      %v8481 = vadd.f32 %v8367, %v8440
      %v8482 = vadd.f32 %v8368, %v8439
      %v8483 = vadd.f32 %v8369, %v8443
      %v8484 = vadd.f32 %v8370, %v8442
      %v8485 = vadd.f32 %v8371, %v8446
      %v8486 = vadd.f32 %v8372, %v8445
      %s8487 = sadd.s32 %s7452, 208
      %s8488 = sld [smem:[#allocation8 + %s8487]]
      %v8489 = vstv %s8488
      %v8490 = vmul.f32 %v7327, %v8489
      %v8491 = vmul.f32 %v7328, %v8489
      %v8492 = vmul.f32 %v7329, %v8489
      %v8493 = vmul.f32 %v7330, %v8489
      %v8494 = vmul.f32 %v7331, %v8489
      %v8495 = vmul.f32 %v7332, %v8489
      %v8496 = vmul.f32 %v7333, %v8489
      %v8497 = vmul.f32 %v7334, %v8489
      %v8498 = vmul.f32 %v7335, %v8489
      %v8499 = vmul.f32 %v7336, %v8489
      %v8500 = vmul.f32 %v7337, %v8489
      %v8501 = vmul.f32 %v7338, %v8489
      %v8502 = vmul.f32 %v7339, %v8489
      %v8503 = vmul.f32 %v7340, %v8489
      %v8504 = vmul.f32 %v7341, %v8489
      %v8505 = vmul.f32 %v7342, %v8489
      %v8506 = vmul.f32 %v7343, %v8489
      %v8507 = vmul.f32 %v7344, %v8489
      %v8508 = vmul.f32 %v7345, %v8489
      %v8509 = vmul.f32 %v7346, %v8489
      %v8530 = vrot.slane %v8490, 2
      %v8531 = vrot.slane %v8491, 2
      %v8532 = vsel %vm8416, %v8530, %v8531
      %v8533 = vrot.slane %v8492, 2
      %v8534 = vrot.slane %v8493, 2
      %v8535 = vsel %vm8416, %v8533, %v8534
      %v8536 = vrot.slane %v8494, 2
      %v8537 = vrot.slane %v8495, 2
      %v8538 = vsel %vm8416, %v8536, %v8537
      %v8539 = vrot.slane %v8496, 2
      %v8540 = vrot.slane %v8497, 2
      %v8541 = vsel %vm8416, %v8539, %v8540
      %v8542 = vrot.slane %v8498, 2
      %v8543 = vrot.slane %v8499, 2
      %v8544 = vsel %vm8416, %v8542, %v8543
      %v8545 = vrot.slane %v8500, 2
      %v8546 = vrot.slane %v8501, 2
      %v8547 = vsel %vm8416, %v8545, %v8546
      %v8548 = vrot.slane %v8502, 2
      %v8549 = vrot.slane %v8503, 2
      %v8550 = vsel %vm8416, %v8548, %v8549
      %v8551 = vrot.slane %v8504, 2
      %v8552 = vrot.slane %v8505, 2
      %v8553 = vsel %vm8416, %v8551, %v8552
      %v8554 = vrot.slane %v8506, 2
      %v8555 = vrot.slane %v8507, 2
      %v8556 = vsel %vm8416, %v8554, %v8555
      %v8557 = vrot.slane %v8508, 2
      %v8558 = vrot.slane %v8509, 2
      %v8559 = vsel %vm8416, %v8557, %v8558
      %v8580 = vadd.f32 %v8467, %v8532
      %v8581 = vadd.f32 %v8468, %v8531
      %v8582 = vadd.f32 %v8469, %v8535
      %v8583 = vadd.f32 %v8470, %v8534
      %v8584 = vadd.f32 %v8471, %v8538
      %v8585 = vadd.f32 %v8472, %v8537
      %v8586 = vadd.f32 %v8473, %v8541
      %v8587 = vadd.f32 %v8474, %v8540
      %v8588 = vadd.f32 %v8475, %v8544
      %v8589 = vadd.f32 %v8476, %v8543
      %v8590 = vadd.f32 %v8477, %v8547
      %v8591 = vadd.f32 %v8478, %v8546
      %v8592 = vadd.f32 %v8479, %v8550
      %v8593 = vadd.f32 %v8480, %v8549
      %v8594 = vadd.f32 %v8481, %v8553
      %v8595 = vadd.f32 %v8482, %v8552
      %v8596 = vadd.f32 %v8483, %v8556
      %v8597 = vadd.f32 %v8484, %v8555
      %v8598 = vadd.f32 %v8485, %v8559
      %v8599 = vadd.f32 %v8486, %v8558
      %s8600 = sadd.s32 %s7452, 224
      %s8601 = sld [smem:[#allocation8 + %s8600]]
      %v8602 = vstv %s8601
      %v8603 = vmul.f32 %v7352, %v8602
      %v8604 = vmul.f32 %v7353, %v8602
      %v8605 = vmul.f32 %v7354, %v8602
      %v8606 = vmul.f32 %v7355, %v8602
      %v8607 = vmul.f32 %v7356, %v8602
      %v8608 = vmul.f32 %v7357, %v8602
      %v8609 = vmul.f32 %v7358, %v8602
      %v8610 = vmul.f32 %v7359, %v8602
      %v8611 = vmul.f32 %v7360, %v8602
      %v8612 = vmul.f32 %v7361, %v8602
      %v8613 = vmul.f32 %v7362, %v8602
      %v8614 = vmul.f32 %v7363, %v8602
      %v8615 = vmul.f32 %v7364, %v8602
      %v8616 = vmul.f32 %v7365, %v8602
      %v8617 = vmul.f32 %v7366, %v8602
      %v8618 = vmul.f32 %v7367, %v8602
      %v8619 = vmul.f32 %v7368, %v8602
      %v8620 = vmul.f32 %v7369, %v8602
      %v8621 = vmul.f32 %v7370, %v8602
      %v8622 = vmul.f32 %v7371, %v8602
      %v8643 = vrot.slane %v8603, 2
      %v8644 = vrot.slane %v8604, 2
      %v8645 = vsel %vm8416, %v8643, %v8644
      %v8646 = vrot.slane %v8605, 2
      %v8647 = vrot.slane %v8606, 2
      %v8648 = vsel %vm8416, %v8646, %v8647
      %v8649 = vrot.slane %v8607, 2
      %v8650 = vrot.slane %v8608, 2
      %v8651 = vsel %vm8416, %v8649, %v8650
      %v8652 = vrot.slane %v8609, 2
      %v8653 = vrot.slane %v8610, 2
      %v8654 = vsel %vm8416, %v8652, %v8653
      %v8655 = vrot.slane %v8611, 2
      %v8656 = vrot.slane %v8612, 2
      %v8657 = vsel %vm8416, %v8655, %v8656
      %v8658 = vrot.slane %v8613, 2
      %v8659 = vrot.slane %v8614, 2
      %v8660 = vsel %vm8416, %v8658, %v8659
      %v8661 = vrot.slane %v8615, 2
      %v8662 = vrot.slane %v8616, 2
      %v8663 = vsel %vm8416, %v8661, %v8662
      %v8664 = vrot.slane %v8617, 2
      %v8665 = vrot.slane %v8618, 2
      %v8666 = vsel %vm8416, %v8664, %v8665
      %v8667 = vrot.slane %v8619, 2
      %v8668 = vrot.slane %v8620, 2
      %v8669 = vsel %vm8416, %v8667, %v8668
      %v8670 = vrot.slane %v8621, 2
      %v8671 = vrot.slane %v8622, 2
      %v8672 = vsel %vm8416, %v8670, %v8671
      %v8693 = vadd.f32 %v8580, %v8645
      %v8694 = vadd.f32 %v8581, %v8644
      %v8695 = vadd.f32 %v8582, %v8648
      %v8696 = vadd.f32 %v8583, %v8647
      %v8697 = vadd.f32 %v8584, %v8651
      %v8698 = vadd.f32 %v8585, %v8650
      %v8699 = vadd.f32 %v8586, %v8654
      %v8700 = vadd.f32 %v8587, %v8653
      %v8701 = vadd.f32 %v8588, %v8657
      %v8702 = vadd.f32 %v8589, %v8656
      %v8703 = vadd.f32 %v8590, %v8660
      %v8704 = vadd.f32 %v8591, %v8659
      %v8705 = vadd.f32 %v8592, %v8663
      %v8706 = vadd.f32 %v8593, %v8662
      %v8707 = vadd.f32 %v8594, %v8666
      %v8708 = vadd.f32 %v8595, %v8665
      %v8709 = vadd.f32 %v8596, %v8669
      %v8710 = vadd.f32 %v8597, %v8668
      %v8711 = vadd.f32 %v8598, %v8672
      %v8712 = vadd.f32 %v8599, %v8671
      %s8713 = sadd.s32 %s7452, 240
      %s8714 = sld [smem:[#allocation8 + %s8713]]
      %v8715 = vstv %s8714
      %v8716 = vmul.f32 %v7377, %v8715
      %v8717 = vmul.f32 %v7378, %v8715
      %v8718 = vmul.f32 %v7379, %v8715
      %v8719 = vmul.f32 %v7380, %v8715
      %v8720 = vmul.f32 %v7381, %v8715
      %v8721 = vmul.f32 %v7382, %v8715
      %v8722 = vmul.f32 %v7383, %v8715
      %v8723 = vmul.f32 %v7384, %v8715
      %v8724 = vmul.f32 %v7385, %v8715
      %v8725 = vmul.f32 %v7386, %v8715
      %v8726 = vmul.f32 %v7387, %v8715
      %v8727 = vmul.f32 %v7388, %v8715
      %v8728 = vmul.f32 %v7389, %v8715
      %v8729 = vmul.f32 %v7390, %v8715
      %v8730 = vmul.f32 %v7391, %v8715
      %v8731 = vmul.f32 %v7392, %v8715
      %v8732 = vmul.f32 %v7393, %v8715
      %v8733 = vmul.f32 %v7394, %v8715
      %v8734 = vmul.f32 %v7395, %v8715
      %v8735 = vmul.f32 %v7396, %v8715
      %v8756 = vrot.slane %v8716, 2
      %v8757 = vrot.slane %v8717, 2
      %v8758 = vsel %vm8416, %v8756, %v8757
      %v8759 = vrot.slane %v8718, 2
      %v8760 = vrot.slane %v8719, 2
      %v8761 = vsel %vm8416, %v8759, %v8760
      %v8762 = vrot.slane %v8720, 2
      %v8763 = vrot.slane %v8721, 2
      %v8764 = vsel %vm8416, %v8762, %v8763
      %v8765 = vrot.slane %v8722, 2
      %v8766 = vrot.slane %v8723, 2
      %v8767 = vsel %vm8416, %v8765, %v8766
      %v8768 = vrot.slane %v8724, 2
      %v8769 = vrot.slane %v8725, 2
      %v8770 = vsel %vm8416, %v8768, %v8769
      %v8771 = vrot.slane %v8726, 2
      %v8772 = vrot.slane %v8727, 2
      %v8773 = vsel %vm8416, %v8771, %v8772
      %v8774 = vrot.slane %v8728, 2
      %v8775 = vrot.slane %v8729, 2
      %v8776 = vsel %vm8416, %v8774, %v8775
      %v8777 = vrot.slane %v8730, 2
      %v8778 = vrot.slane %v8731, 2
      %v8779 = vsel %vm8416, %v8777, %v8778
      %v8780 = vrot.slane %v8732, 2
      %v8781 = vrot.slane %v8733, 2
      %v8782 = vsel %vm8416, %v8780, %v8781
      %v8783 = vrot.slane %v8734, 2
      %v8784 = vrot.slane %v8735, 2
      %v8785 = vsel %vm8416, %v8783, %v8784
      %v8806 = vadd.f32 %v8693, %v8758
      %v8807 = vadd.f32 %v8694, %v8757
      %v8808 = vadd.f32 %v8695, %v8761
      %v8809 = vadd.f32 %v8696, %v8760
      %v8810 = vadd.f32 %v8697, %v8764
      %v8811 = vadd.f32 %v8698, %v8763
      %v8812 = vadd.f32 %v8699, %v8767
      %v8813 = vadd.f32 %v8700, %v8766
      %v8814 = vadd.f32 %v8701, %v8770
      %v8815 = vadd.f32 %v8702, %v8769
      %v8816 = vadd.f32 %v8703, %v8773
      %v8817 = vadd.f32 %v8704, %v8772
      %v8818 = vadd.f32 %v8705, %v8776
      %v8819 = vadd.f32 %v8706, %v8775
      %v8820 = vadd.f32 %v8707, %v8779
      %v8821 = vadd.f32 %v8708, %v8778
      %v8822 = vadd.f32 %v8709, %v8782
      %v8823 = vadd.f32 %v8710, %v8781
      %v8824 = vadd.f32 %v8711, %v8785
      %v8825 = vadd.f32 %v8712, %v8784
      %s8826 = sadd.s32 %s7452, 256
      %s8827 = sld [smem:[#allocation8 + %s8826]]
      %v8828 = vstv %s8827
      %v8829 = vmul.f32 %v7402, %v8828
      %v8830 = vmul.f32 %v7403, %v8828
      %v8831 = vmul.f32 %v7404, %v8828
      %v8832 = vmul.f32 %v7405, %v8828
      %v8833 = vmul.f32 %v7406, %v8828
      %v8834 = vmul.f32 %v7407, %v8828
      %v8835 = vmul.f32 %v7408, %v8828
      %v8836 = vmul.f32 %v7409, %v8828
      %v8837 = vmul.f32 %v7410, %v8828
      %v8838 = vmul.f32 %v7411, %v8828
      %v8839 = vmul.f32 %v7412, %v8828
      %v8840 = vmul.f32 %v7413, %v8828
      %v8841 = vmul.f32 %v7414, %v8828
      %v8842 = vmul.f32 %v7415, %v8828
      %v8843 = vmul.f32 %v7416, %v8828
      %v8844 = vmul.f32 %v7417, %v8828
      %v8845 = vmul.f32 %v7418, %v8828
      %v8846 = vmul.f32 %v7419, %v8828
      %v8847 = vmul.f32 %v7420, %v8828
      %v8848 = vmul.f32 %v7421, %v8828
      %v8869 = vrot.slane %v8829, 2
      %v8870 = vrot.slane %v8830, 2
      %v8871 = vsel %vm8416, %v8869, %v8870
      %v8872 = vrot.slane %v8831, 2
      %v8873 = vrot.slane %v8832, 2
      %v8874 = vsel %vm8416, %v8872, %v8873
      %v8875 = vrot.slane %v8833, 2
      %v8876 = vrot.slane %v8834, 2
      %v8877 = vsel %vm8416, %v8875, %v8876
      %v8878 = vrot.slane %v8835, 2
      %v8879 = vrot.slane %v8836, 2
      %v8880 = vsel %vm8416, %v8878, %v8879
      %v8881 = vrot.slane %v8837, 2
      %v8882 = vrot.slane %v8838, 2
      %v8883 = vsel %vm8416, %v8881, %v8882
      %v8884 = vrot.slane %v8839, 2
      %v8885 = vrot.slane %v8840, 2
      %v8886 = vsel %vm8416, %v8884, %v8885
      %v8887 = vrot.slane %v8841, 2
      %v8888 = vrot.slane %v8842, 2
      %v8889 = vsel %vm8416, %v8887, %v8888
      %v8890 = vrot.slane %v8843, 2
      %v8891 = vrot.slane %v8844, 2
      %v8892 = vsel %vm8416, %v8890, %v8891
      %v8893 = vrot.slane %v8845, 2
      %v8894 = vrot.slane %v8846, 2
      %v8895 = vsel %vm8416, %v8893, %v8894
      %v8896 = vrot.slane %v8847, 2
      %v8897 = vrot.slane %v8848, 2
      %v8898 = vsel %vm8416, %v8896, %v8897
      %v8919 = vadd.f32 %v8806, %v8871
      %v8920 = vadd.f32 %v8807, %v8870
      %v8921 = vadd.f32 %v8808, %v8874
      %v8922 = vadd.f32 %v8809, %v8873
      %v8923 = vadd.f32 %v8810, %v8877
      %v8924 = vadd.f32 %v8811, %v8876
      %v8925 = vadd.f32 %v8812, %v8880
      %v8926 = vadd.f32 %v8813, %v8879
      %v8927 = vadd.f32 %v8814, %v8883
      %v8928 = vadd.f32 %v8815, %v8882
      %v8929 = vadd.f32 %v8816, %v8886
      %v8930 = vadd.f32 %v8817, %v8885
      %v8931 = vadd.f32 %v8818, %v8889
      %v8932 = vadd.f32 %v8819, %v8888
      %v8933 = vadd.f32 %v8820, %v8892
      %v8934 = vadd.f32 %v8821, %v8891
      %v8935 = vadd.f32 %v8822, %v8895
      %v8936 = vadd.f32 %v8823, %v8894
      %v8937 = vadd.f32 %v8824, %v8898
      %v8938 = vadd.f32 %v8825, %v8897
      %s8939 = sadd.s32 %s7452, 272
      %s8940 = sld [smem:[#allocation8 + %s8939]]
      %v8941 = vstv %s8940
      %v8942 = vmul.f32 %v7427, %v8941
      %v8943 = vmul.f32 %v7428, %v8941
      %v8944 = vmul.f32 %v7429, %v8941
      %v8945 = vmul.f32 %v7430, %v8941
      %v8946 = vmul.f32 %v7431, %v8941
      %v8947 = vmul.f32 %v7432, %v8941
      %v8948 = vmul.f32 %v7433, %v8941
      %v8949 = vmul.f32 %v7434, %v8941
      %v8950 = vmul.f32 %v7435, %v8941
      %v8951 = vmul.f32 %v7436, %v8941
      %v8952 = vmul.f32 %v7437, %v8941
      %v8953 = vmul.f32 %v7438, %v8941
      %v8954 = vmul.f32 %v7439, %v8941
      %v8955 = vmul.f32 %v7440, %v8941
      %v8956 = vmul.f32 %v7441, %v8941
      %v8957 = vmul.f32 %v7442, %v8941
      %v8958 = vmul.f32 %v7443, %v8941
      %v8959 = vmul.f32 %v7444, %v8941
      %v8960 = vmul.f32 %v7445, %v8941
      %v8961 = vmul.f32 %v7446, %v8941
      %v8982 = vrot.slane %v8942, 2
      %v8983 = vrot.slane %v8943, 2
      %v8984 = vsel %vm8416, %v8982, %v8983
      %v8985 = vrot.slane %v8944, 2
      %v8986 = vrot.slane %v8945, 2
      %v8987 = vsel %vm8416, %v8985, %v8986
      %v8988 = vrot.slane %v8946, 2
      %v8989 = vrot.slane %v8947, 2
      %v8990 = vsel %vm8416, %v8988, %v8989
      %v8991 = vrot.slane %v8948, 2
      %v8992 = vrot.slane %v8949, 2
      %v8993 = vsel %vm8416, %v8991, %v8992
      %v8994 = vrot.slane %v8950, 2
      %v8995 = vrot.slane %v8951, 2
      %v8996 = vsel %vm8416, %v8994, %v8995
      %v8997 = vrot.slane %v8952, 2
      %v8998 = vrot.slane %v8953, 2
      %v8999 = vsel %vm8416, %v8997, %v8998
      %v9000 = vrot.slane %v8954, 2
      %v9001 = vrot.slane %v8955, 2
      %v9002 = vsel %vm8416, %v9000, %v9001
      %v9003 = vrot.slane %v8956, 2
      %v9004 = vrot.slane %v8957, 2
      %v9005 = vsel %vm8416, %v9003, %v9004
      %v9006 = vrot.slane %v8958, 2
      %v9007 = vrot.slane %v8959, 2
      %v9008 = vsel %vm8416, %v9006, %v9007
      %v9009 = vrot.slane %v8960, 2
      %v9010 = vrot.slane %v8961, 2
      %v9011 = vsel %vm8416, %v9009, %v9010
      %v9032 = vadd.f32 %v8919, %v8984
      %v9033 = vadd.f32 %v8920, %v8983
      %v9034 = vadd.f32 %v8921, %v8987
      %v9035 = vadd.f32 %v8922, %v8986
      %v9036 = vadd.f32 %v8923, %v8990
      %v9037 = vadd.f32 %v8924, %v8989
      %v9038 = vadd.f32 %v8925, %v8993
      %v9039 = vadd.f32 %v8926, %v8992
      %v9040 = vadd.f32 %v8927, %v8996
      %v9041 = vadd.f32 %v8928, %v8995
      %v9042 = vadd.f32 %v8929, %v8999
      %v9043 = vadd.f32 %v8930, %v8998
      %v9044 = vadd.f32 %v8931, %v9002
      %v9045 = vadd.f32 %v8932, %v9001
      %v9046 = vadd.f32 %v8933, %v9005
      %v9047 = vadd.f32 %v8934, %v9004
      %v9048 = vadd.f32 %v8935, %v9008
      %v9049 = vadd.f32 %v8936, %v9007
      %v9050 = vadd.f32 %v8937, %v9011
      %v9051 = vadd.f32 %v8938, %v9010
      %s9052 = sadd.s32 %s7452, 288
      %s9053 = sld [smem:[#allocation8 + %s9052]]
      %v9054 = vstv %s9053
      %v9055 = vmul.f32 %v7304, %v9054
      %v9056 = vmul.f32 %v7305, %v9054
      %v9057 = vmul.f32 %v7306, %v9054
      %v9058 = vmul.f32 %v7307, %v9054
      %v9059 = vmul.f32 %v7308, %v9054
      %v9060 = vmul.f32 %v7309, %v9054
      %v9061 = vmul.f32 %v7310, %v9054
      %v9062 = vmul.f32 %v7311, %v9054
      %v9063 = vmul.f32 %v7312, %v9054
      %v9064 = vmul.f32 %v7313, %v9054
      %v9065 = vmul.f32 %v7314, %v9054
      %v9066 = vmul.f32 %v7315, %v9054
      %v9067 = vmul.f32 %v7316, %v9054
      %v9068 = vmul.f32 %v7317, %v9054
      %v9069 = vmul.f32 %v7318, %v9054
      %v9070 = vmul.f32 %v7319, %v9054
      %v9071 = vmul.f32 %v7320, %v9054
      %v9072 = vmul.f32 %v7321, %v9054
      %v9073 = vmul.f32 %v7322, %v9054
      %v9074 = vmul.f32 %v7323, %v9054
      %v9075 = vadd.f32 %v9032, %v9055
      %v9076 = vadd.f32 %v9033, %v9056
      %v9077 = vadd.f32 %v9034, %v9057
      %v9078 = vadd.f32 %v9035, %v9058
      %v9079 = vadd.f32 %v9036, %v9059
      %v9080 = vadd.f32 %v9037, %v9060
      %v9081 = vadd.f32 %v9038, %v9061
      %v9082 = vadd.f32 %v9039, %v9062
      %v9083 = vadd.f32 %v9040, %v9063
      %v9084 = vadd.f32 %v9041, %v9064
      %v9085 = vadd.f32 %v9042, %v9065
      %v9086 = vadd.f32 %v9043, %v9066
      %v9087 = vadd.f32 %v9044, %v9067
      %v9088 = vadd.f32 %v9045, %v9068
      %v9089 = vadd.f32 %v9046, %v9069
      %v9090 = vadd.f32 %v9047, %v9070
      %v9091 = vadd.f32 %v9048, %v9071
      %v9092 = vadd.f32 %v9049, %v9072
      %v9093 = vadd.f32 %v9050, %v9073
      %v9094 = vadd.f32 %v9051, %v9074
      %s9095 = sadd.s32 %s7452, 304
      %s9096 = sld [smem:[#allocation8 + %s9095]]
      %v9097 = vstv %s9096
      %v9098 = vmul.f32 %v7329, %v9097
      %v9099 = vmul.f32 %v7330, %v9097
      %v9100 = vmul.f32 %v7331, %v9097
      %v9101 = vmul.f32 %v7332, %v9097
      %v9102 = vmul.f32 %v7333, %v9097
      %v9103 = vmul.f32 %v7334, %v9097
      %v9104 = vmul.f32 %v7335, %v9097
      %v9105 = vmul.f32 %v7336, %v9097
      %v9106 = vmul.f32 %v7337, %v9097
      %v9107 = vmul.f32 %v7338, %v9097
      %v9108 = vmul.f32 %v7339, %v9097
      %v9109 = vmul.f32 %v7340, %v9097
      %v9110 = vmul.f32 %v7341, %v9097
      %v9111 = vmul.f32 %v7342, %v9097
      %v9112 = vmul.f32 %v7343, %v9097
      %v9113 = vmul.f32 %v7344, %v9097
      %v9114 = vmul.f32 %v7345, %v9097
      %v9115 = vmul.f32 %v7346, %v9097
      %v9116 = vmul.f32 %v7347, %v9097
      %v9117 = vmul.f32 %v7348, %v9097
      %v9118 = vadd.f32 %v9075, %v9098
      %v9119 = vadd.f32 %v9076, %v9099
      %v9120 = vadd.f32 %v9077, %v9100
      %v9121 = vadd.f32 %v9078, %v9101
      %v9122 = vadd.f32 %v9079, %v9102
      %v9123 = vadd.f32 %v9080, %v9103
      %v9124 = vadd.f32 %v9081, %v9104
      %v9125 = vadd.f32 %v9082, %v9105
      %v9126 = vadd.f32 %v9083, %v9106
      %v9127 = vadd.f32 %v9084, %v9107
      %v9128 = vadd.f32 %v9085, %v9108
      %v9129 = vadd.f32 %v9086, %v9109
      %v9130 = vadd.f32 %v9087, %v9110
      %v9131 = vadd.f32 %v9088, %v9111
      %v9132 = vadd.f32 %v9089, %v9112
      %v9133 = vadd.f32 %v9090, %v9113
      %v9134 = vadd.f32 %v9091, %v9114
      %v9135 = vadd.f32 %v9092, %v9115
      %v9136 = vadd.f32 %v9093, %v9116
      %v9137 = vadd.f32 %v9094, %v9117
      %s9138 = sadd.s32 %s7452, 320
      %s9139 = sld [smem:[#allocation8 + %s9138]]
      %v9140 = vstv %s9139
      %v9141 = vmul.f32 %v7354, %v9140
      %v9142 = vmul.f32 %v7355, %v9140
      %v9143 = vmul.f32 %v7356, %v9140
      %v9144 = vmul.f32 %v7357, %v9140
      %v9145 = vmul.f32 %v7358, %v9140
      %v9146 = vmul.f32 %v7359, %v9140
      %v9147 = vmul.f32 %v7360, %v9140
      %v9148 = vmul.f32 %v7361, %v9140
      %v9149 = vmul.f32 %v7362, %v9140
      %v9150 = vmul.f32 %v7363, %v9140
      %v9151 = vmul.f32 %v7364, %v9140
      %v9152 = vmul.f32 %v7365, %v9140
      %v9153 = vmul.f32 %v7366, %v9140
      %v9154 = vmul.f32 %v7367, %v9140
      %v9155 = vmul.f32 %v7368, %v9140
      %v9156 = vmul.f32 %v7369, %v9140
      %v9157 = vmul.f32 %v7370, %v9140
      %v9158 = vmul.f32 %v7371, %v9140
      %v9159 = vmul.f32 %v7372, %v9140
      %v9160 = vmul.f32 %v7373, %v9140
      %v9161 = vadd.f32 %v9118, %v9141
      %v9162 = vadd.f32 %v9119, %v9142
      %v9163 = vadd.f32 %v9120, %v9143
      %v9164 = vadd.f32 %v9121, %v9144
      %v9165 = vadd.f32 %v9122, %v9145
      %v9166 = vadd.f32 %v9123, %v9146
      %v9167 = vadd.f32 %v9124, %v9147
      %v9168 = vadd.f32 %v9125, %v9148
      %v9169 = vadd.f32 %v9126, %v9149
      %v9170 = vadd.f32 %v9127, %v9150
      %v9171 = vadd.f32 %v9128, %v9151
      %v9172 = vadd.f32 %v9129, %v9152
      %v9173 = vadd.f32 %v9130, %v9153
      %v9174 = vadd.f32 %v9131, %v9154
      %v9175 = vadd.f32 %v9132, %v9155
      %v9176 = vadd.f32 %v9133, %v9156
      %v9177 = vadd.f32 %v9134, %v9157
      %v9178 = vadd.f32 %v9135, %v9158
      %v9179 = vadd.f32 %v9136, %v9159
      %v9180 = vadd.f32 %v9137, %v9160
      %s9181 = sadd.s32 %s7452, 336
      %s9182 = sld [smem:[#allocation8 + %s9181]]
      %v9183 = vstv %s9182
      %v9184 = vmul.f32 %v7379, %v9183
      %v9185 = vmul.f32 %v7380, %v9183
      %v9186 = vmul.f32 %v7381, %v9183
      %v9187 = vmul.f32 %v7382, %v9183
      %v9188 = vmul.f32 %v7383, %v9183
      %v9189 = vmul.f32 %v7384, %v9183
      %v9190 = vmul.f32 %v7385, %v9183
      %v9191 = vmul.f32 %v7386, %v9183
      %v9192 = vmul.f32 %v7387, %v9183
      %v9193 = vmul.f32 %v7388, %v9183
      %v9194 = vmul.f32 %v7389, %v9183
      %v9195 = vmul.f32 %v7390, %v9183
      %v9196 = vmul.f32 %v7391, %v9183
      %v9197 = vmul.f32 %v7392, %v9183
      %v9198 = vmul.f32 %v7393, %v9183
      %v9199 = vmul.f32 %v7394, %v9183
      %v9200 = vmul.f32 %v7395, %v9183
      %v9201 = vmul.f32 %v7396, %v9183
      %v9202 = vmul.f32 %v7397, %v9183
      %v9203 = vmul.f32 %v7398, %v9183
      %v9204 = vadd.f32 %v9161, %v9184
      %v9205 = vadd.f32 %v9162, %v9185
      %v9206 = vadd.f32 %v9163, %v9186
      %v9207 = vadd.f32 %v9164, %v9187
      %v9208 = vadd.f32 %v9165, %v9188
      %v9209 = vadd.f32 %v9166, %v9189
      %v9210 = vadd.f32 %v9167, %v9190
      %v9211 = vadd.f32 %v9168, %v9191
      %v9212 = vadd.f32 %v9169, %v9192
      %v9213 = vadd.f32 %v9170, %v9193
      %v9214 = vadd.f32 %v9171, %v9194
      %v9215 = vadd.f32 %v9172, %v9195
      %v9216 = vadd.f32 %v9173, %v9196
      %v9217 = vadd.f32 %v9174, %v9197
      %v9218 = vadd.f32 %v9175, %v9198
      %v9219 = vadd.f32 %v9176, %v9199
      %v9220 = vadd.f32 %v9177, %v9200
      %v9221 = vadd.f32 %v9178, %v9201
      %v9222 = vadd.f32 %v9179, %v9202
      %v9223 = vadd.f32 %v9180, %v9203
      %s9224 = sadd.s32 %s7452, 352
      %s9225 = sld [smem:[#allocation8 + %s9224]]
      %v9226 = vstv %s9225
      %v9227 = vmul.f32 %v7404, %v9226
      %v9228 = vmul.f32 %v7405, %v9226
      %v9229 = vmul.f32 %v7406, %v9226
      %v9230 = vmul.f32 %v7407, %v9226
      %v9231 = vmul.f32 %v7408, %v9226
      %v9232 = vmul.f32 %v7409, %v9226
      %v9233 = vmul.f32 %v7410, %v9226
      %v9234 = vmul.f32 %v7411, %v9226
      %v9235 = vmul.f32 %v7412, %v9226
      %v9236 = vmul.f32 %v7413, %v9226
      %v9237 = vmul.f32 %v7414, %v9226
      %v9238 = vmul.f32 %v7415, %v9226
      %v9239 = vmul.f32 %v7416, %v9226
      %v9240 = vmul.f32 %v7417, %v9226
      %v9241 = vmul.f32 %v7418, %v9226
      %v9242 = vmul.f32 %v7419, %v9226
      %v9243 = vmul.f32 %v7420, %v9226
      %v9244 = vmul.f32 %v7421, %v9226
      %v9245 = vmul.f32 %v7422, %v9226
      %v9246 = vmul.f32 %v7423, %v9226
      %v9247 = vadd.f32 %v9204, %v9227
      %v9248 = vadd.f32 %v9205, %v9228
      %v9249 = vadd.f32 %v9206, %v9229
      %v9250 = vadd.f32 %v9207, %v9230
      %v9251 = vadd.f32 %v9208, %v9231
      %v9252 = vadd.f32 %v9209, %v9232
      %v9253 = vadd.f32 %v9210, %v9233
      %v9254 = vadd.f32 %v9211, %v9234
      %v9255 = vadd.f32 %v9212, %v9235
      %v9256 = vadd.f32 %v9213, %v9236
      %v9257 = vadd.f32 %v9214, %v9237
      %v9258 = vadd.f32 %v9215, %v9238
      %v9259 = vadd.f32 %v9216, %v9239
      %v9260 = vadd.f32 %v9217, %v9240
      %v9261 = vadd.f32 %v9218, %v9241
      %v9262 = vadd.f32 %v9219, %v9242
      %v9263 = vadd.f32 %v9220, %v9243
      %v9264 = vadd.f32 %v9221, %v9244
      %v9265 = vadd.f32 %v9222, %v9245
      %v9266 = vadd.f32 %v9223, %v9246
      %s9267 = sadd.s32 %s7452, 368
      %s9268 = sld [smem:[#allocation8 + %s9267]]
      %v9269 = vstv %s9268
      %v9270 = vmul.f32 %v7429, %v9269
      %v9271 = vmul.f32 %v7430, %v9269
      %v9272 = vmul.f32 %v7431, %v9269
      %v9273 = vmul.f32 %v7432, %v9269
      %v9274 = vmul.f32 %v7433, %v9269
      %v9275 = vmul.f32 %v7434, %v9269
      %v9276 = vmul.f32 %v7435, %v9269
      %v9277 = vmul.f32 %v7436, %v9269
      %v9278 = vmul.f32 %v7437, %v9269
      %v9279 = vmul.f32 %v7438, %v9269
      %v9280 = vmul.f32 %v7439, %v9269
      %v9281 = vmul.f32 %v7440, %v9269
      %v9282 = vmul.f32 %v7441, %v9269
      %v9283 = vmul.f32 %v7442, %v9269
      %v9284 = vmul.f32 %v7443, %v9269
      %v9285 = vmul.f32 %v7444, %v9269
      %v9286 = vmul.f32 %v7445, %v9269
      %v9287 = vmul.f32 %v7446, %v9269
      %v9288 = vmul.f32 %v7447, %v9269
      %v9289 = vmul.f32 %v7448, %v9269
      %v9290 = vadd.f32 %v9247, %v9270
      %v9291 = vadd.f32 %v9248, %v9271
      %v9292 = vadd.f32 %v9249, %v9272
      %v9293 = vadd.f32 %v9250, %v9273
      %v9294 = vadd.f32 %v9251, %v9274
      %v9295 = vadd.f32 %v9252, %v9275
      %v9296 = vadd.f32 %v9253, %v9276
      %v9297 = vadd.f32 %v9254, %v9277
      %v9298 = vadd.f32 %v9255, %v9278
      %v9299 = vadd.f32 %v9256, %v9279
      %v9300 = vadd.f32 %v9257, %v9280
      %v9301 = vadd.f32 %v9258, %v9281
      %v9302 = vadd.f32 %v9259, %v9282
      %v9303 = vadd.f32 %v9260, %v9283
      %v9304 = vadd.f32 %v9261, %v9284
      %v9305 = vadd.f32 %v9262, %v9285
      %v9306 = vadd.f32 %v9263, %v9286
      %v9307 = vadd.f32 %v9264, %v9287
      %v9308 = vadd.f32 %v9265, %v9288
      %v9309 = vadd.f32 %v9266, %v9289
      %s9310 = sadd.s32 %s7452, 384
      %s9311 = sld [smem:[#allocation8 + %s9310]]
      %v9312 = vstv %s9311
      %v9313 = vmul.f32 %v7304, %v9312
      %v9314 = vmul.f32 %v7305, %v9312
      %v9315 = vmul.f32 %v7306, %v9312
      %v9316 = vmul.f32 %v7307, %v9312
      %v9317 = vmul.f32 %v7308, %v9312
      %v9318 = vmul.f32 %v7309, %v9312
      %v9319 = vmul.f32 %v7310, %v9312
      %v9320 = vmul.f32 %v7311, %v9312
      %v9321 = vmul.f32 %v7312, %v9312
      %v9322 = vmul.f32 %v7313, %v9312
      %v9323 = vmul.f32 %v7314, %v9312
      %v9324 = vmul.f32 %v7315, %v9312
      %v9325 = vmul.f32 %v7316, %v9312
      %v9326 = vmul.f32 %v7317, %v9312
      %v9327 = vmul.f32 %v7318, %v9312
      %v9328 = vmul.f32 %v7319, %v9312
      %v9329 = vmul.f32 %v7320, %v9312
      %v9330 = vmul.f32 %v7321, %v9312
      %v9331 = vmul.f32 %v7322, %v9312
      %v9332 = vmul.f32 %v7323, %v9312
      %v9353 = vrot.slane %v9313, 1
      %v9354 = vrot.slane %v9314, 1
      %v9355 = vsel %vm7737, %v9353, %v9354
      %v9356 = vrot.slane %v9315, 1
      %v9357 = vrot.slane %v9316, 1
      %v9358 = vsel %vm7737, %v9356, %v9357
      %v9359 = vrot.slane %v9317, 1
      %v9360 = vrot.slane %v9318, 1
      %v9361 = vsel %vm7737, %v9359, %v9360
      %v9362 = vrot.slane %v9319, 1
      %v9363 = vrot.slane %v9320, 1
      %v9364 = vsel %vm7737, %v9362, %v9363
      %v9365 = vrot.slane %v9321, 1
      %v9366 = vrot.slane %v9322, 1
      %v9367 = vsel %vm7737, %v9365, %v9366
      %v9368 = vrot.slane %v9323, 1
      %v9369 = vrot.slane %v9324, 1
      %v9370 = vsel %vm7737, %v9368, %v9369
      %v9371 = vrot.slane %v9325, 1
      %v9372 = vrot.slane %v9326, 1
      %v9373 = vsel %vm7737, %v9371, %v9372
      %v9374 = vrot.slane %v9327, 1
      %v9375 = vrot.slane %v9328, 1
      %v9376 = vsel %vm7737, %v9374, %v9375
      %v9377 = vrot.slane %v9329, 1
      %v9378 = vrot.slane %v9330, 1
      %v9379 = vsel %vm7737, %v9377, %v9378
      %v9380 = vrot.slane %v9331, 1
      %v9381 = vrot.slane %v9332, 1
      %v9382 = vsel %vm7737, %v9380, %v9381
      %v9403 = vadd.f32 %v9290, %v9355
      %v9404 = vadd.f32 %v9291, %v9354
      %v9405 = vadd.f32 %v9292, %v9358
      %v9406 = vadd.f32 %v9293, %v9357
      %v9407 = vadd.f32 %v9294, %v9361
      %v9408 = vadd.f32 %v9295, %v9360
      %v9409 = vadd.f32 %v9296, %v9364
      %v9410 = vadd.f32 %v9297, %v9363
      %v9411 = vadd.f32 %v9298, %v9367
      %v9412 = vadd.f32 %v9299, %v9366
      %v9413 = vadd.f32 %v9300, %v9370
      %v9414 = vadd.f32 %v9301, %v9369
      %v9415 = vadd.f32 %v9302, %v9373
      %v9416 = vadd.f32 %v9303, %v9372
      %v9417 = vadd.f32 %v9304, %v9376
      %v9418 = vadd.f32 %v9305, %v9375
      %v9419 = vadd.f32 %v9306, %v9379
      %v9420 = vadd.f32 %v9307, %v9378
      %v9421 = vadd.f32 %v9308, %v9382
      %v9422 = vadd.f32 %v9309, %v9381
      %s9423 = sadd.s32 %s7452, 400
      %s9424 = sld [smem:[#allocation8 + %s9423]]
      %v9425 = vstv %s9424
      %v9426 = vmul.f32 %v7329, %v9425
      %v9427 = vmul.f32 %v7330, %v9425
      %v9428 = vmul.f32 %v7331, %v9425
      %v9429 = vmul.f32 %v7332, %v9425
      %v9430 = vmul.f32 %v7333, %v9425
      %v9431 = vmul.f32 %v7334, %v9425
      %v9432 = vmul.f32 %v7335, %v9425
      %v9433 = vmul.f32 %v7336, %v9425
      %v9434 = vmul.f32 %v7337, %v9425
      %v9435 = vmul.f32 %v7338, %v9425
      %v9436 = vmul.f32 %v7339, %v9425
      %v9437 = vmul.f32 %v7340, %v9425
      %v9438 = vmul.f32 %v7341, %v9425
      %v9439 = vmul.f32 %v7342, %v9425
      %v9440 = vmul.f32 %v7343, %v9425
      %v9441 = vmul.f32 %v7344, %v9425
      %v9442 = vmul.f32 %v7345, %v9425
      %v9443 = vmul.f32 %v7346, %v9425
      %v9444 = vmul.f32 %v7347, %v9425
      %v9445 = vmul.f32 %v7348, %v9425
      %v9466 = vrot.slane %v9426, 1
      %v9467 = vrot.slane %v9427, 1
      %v9468 = vsel %vm7737, %v9466, %v9467
      %v9469 = vrot.slane %v9428, 1
      %v9470 = vrot.slane %v9429, 1
      %v9471 = vsel %vm7737, %v9469, %v9470
      %v9472 = vrot.slane %v9430, 1
      %v9473 = vrot.slane %v9431, 1
      %v9474 = vsel %vm7737, %v9472, %v9473
      %v9475 = vrot.slane %v9432, 1
      %v9476 = vrot.slane %v9433, 1
      %v9477 = vsel %vm7737, %v9475, %v9476
      %v9478 = vrot.slane %v9434, 1
      %v9479 = vrot.slane %v9435, 1
      %v9480 = vsel %vm7737, %v9478, %v9479
      %v9481 = vrot.slane %v9436, 1
      %v9482 = vrot.slane %v9437, 1
      %v9483 = vsel %vm7737, %v9481, %v9482
      %v9484 = vrot.slane %v9438, 1
      %v9485 = vrot.slane %v9439, 1
      %v9486 = vsel %vm7737, %v9484, %v9485
      %v9487 = vrot.slane %v9440, 1
      %v9488 = vrot.slane %v9441, 1
      %v9489 = vsel %vm7737, %v9487, %v9488
      %v9490 = vrot.slane %v9442, 1
      %v9491 = vrot.slane %v9443, 1
      %v9492 = vsel %vm7737, %v9490, %v9491
      %v9493 = vrot.slane %v9444, 1
      %v9494 = vrot.slane %v9445, 1
      %v9495 = vsel %vm7737, %v9493, %v9494
      %v9516 = vadd.f32 %v9403, %v9468
      %v9517 = vadd.f32 %v9404, %v9467
      %v9518 = vadd.f32 %v9405, %v9471
      %v9519 = vadd.f32 %v9406, %v9470
      %v9520 = vadd.f32 %v9407, %v9474
      %v9521 = vadd.f32 %v9408, %v9473
      %v9522 = vadd.f32 %v9409, %v9477
      %v9523 = vadd.f32 %v9410, %v9476
      %v9524 = vadd.f32 %v9411, %v9480
      %v9525 = vadd.f32 %v9412, %v9479
      %v9526 = vadd.f32 %v9413, %v9483
      %v9527 = vadd.f32 %v9414, %v9482
      %v9528 = vadd.f32 %v9415, %v9486
      %v9529 = vadd.f32 %v9416, %v9485
      %v9530 = vadd.f32 %v9417, %v9489
      %v9531 = vadd.f32 %v9418, %v9488
      %v9532 = vadd.f32 %v9419, %v9492
      %v9533 = vadd.f32 %v9420, %v9491
      %v9534 = vadd.f32 %v9421, %v9495
      %v9535 = vadd.f32 %v9422, %v9494
      %s9536 = sadd.s32 %s7452, 416
      %s9537 = sld [smem:[#allocation8 + %s9536]]
      %v9538 = vstv %s9537
      %v9539 = vmul.f32 %v7354, %v9538
      %v9540 = vmul.f32 %v7355, %v9538
      %v9541 = vmul.f32 %v7356, %v9538
      %v9542 = vmul.f32 %v7357, %v9538
      %v9543 = vmul.f32 %v7358, %v9538
      %v9544 = vmul.f32 %v7359, %v9538
      %v9545 = vmul.f32 %v7360, %v9538
      %v9546 = vmul.f32 %v7361, %v9538
      %v9547 = vmul.f32 %v7362, %v9538
      %v9548 = vmul.f32 %v7363, %v9538
      %v9549 = vmul.f32 %v7364, %v9538
      %v9550 = vmul.f32 %v7365, %v9538
      %v9551 = vmul.f32 %v7366, %v9538
      %v9552 = vmul.f32 %v7367, %v9538
      %v9553 = vmul.f32 %v7368, %v9538
      %v9554 = vmul.f32 %v7369, %v9538
      %v9555 = vmul.f32 %v7370, %v9538
      %v9556 = vmul.f32 %v7371, %v9538
      %v9557 = vmul.f32 %v7372, %v9538
      %v9558 = vmul.f32 %v7373, %v9538
      %v9579 = vrot.slane %v9539, 1
      %v9580 = vrot.slane %v9540, 1
      %v9581 = vsel %vm7737, %v9579, %v9580
      %v9582 = vrot.slane %v9541, 1
      %v9583 = vrot.slane %v9542, 1
      %v9584 = vsel %vm7737, %v9582, %v9583
      %v9585 = vrot.slane %v9543, 1
      %v9586 = vrot.slane %v9544, 1
      %v9587 = vsel %vm7737, %v9585, %v9586
      %v9588 = vrot.slane %v9545, 1
      %v9589 = vrot.slane %v9546, 1
      %v9590 = vsel %vm7737, %v9588, %v9589
      %v9591 = vrot.slane %v9547, 1
      %v9592 = vrot.slane %v9548, 1
      %v9593 = vsel %vm7737, %v9591, %v9592
      %v9594 = vrot.slane %v9549, 1
      %v9595 = vrot.slane %v9550, 1
      %v9596 = vsel %vm7737, %v9594, %v9595
      %v9597 = vrot.slane %v9551, 1
      %v9598 = vrot.slane %v9552, 1
      %v9599 = vsel %vm7737, %v9597, %v9598
      %v9600 = vrot.slane %v9553, 1
      %v9601 = vrot.slane %v9554, 1
      %v9602 = vsel %vm7737, %v9600, %v9601
      %v9603 = vrot.slane %v9555, 1
      %v9604 = vrot.slane %v9556, 1
      %v9605 = vsel %vm7737, %v9603, %v9604
      %v9606 = vrot.slane %v9557, 1
      %v9607 = vrot.slane %v9558, 1
      %v9608 = vsel %vm7737, %v9606, %v9607
      %v9629 = vadd.f32 %v9516, %v9581
      %v9630 = vadd.f32 %v9517, %v9580
      %v9631 = vadd.f32 %v9518, %v9584
      %v9632 = vadd.f32 %v9519, %v9583
      %v9633 = vadd.f32 %v9520, %v9587
      %v9634 = vadd.f32 %v9521, %v9586
      %v9635 = vadd.f32 %v9522, %v9590
      %v9636 = vadd.f32 %v9523, %v9589
      %v9637 = vadd.f32 %v9524, %v9593
      %v9638 = vadd.f32 %v9525, %v9592
      %v9639 = vadd.f32 %v9526, %v9596
      %v9640 = vadd.f32 %v9527, %v9595
      %v9641 = vadd.f32 %v9528, %v9599
      %v9642 = vadd.f32 %v9529, %v9598
      %v9643 = vadd.f32 %v9530, %v9602
      %v9644 = vadd.f32 %v9531, %v9601
      %v9645 = vadd.f32 %v9532, %v9605
      %v9646 = vadd.f32 %v9533, %v9604
      %v9647 = vadd.f32 %v9534, %v9608
      %v9648 = vadd.f32 %v9535, %v9607
      %s9649 = sadd.s32 %s7452, 432
      %s9650 = sld [smem:[#allocation8 + %s9649]]
      %v9651 = vstv %s9650
      %v9652 = vmul.f32 %v7379, %v9651
      %v9653 = vmul.f32 %v7380, %v9651
      %v9654 = vmul.f32 %v7381, %v9651
      %v9655 = vmul.f32 %v7382, %v9651
      %v9656 = vmul.f32 %v7383, %v9651
      %v9657 = vmul.f32 %v7384, %v9651
      %v9658 = vmul.f32 %v7385, %v9651
      %v9659 = vmul.f32 %v7386, %v9651
      %v9660 = vmul.f32 %v7387, %v9651
      %v9661 = vmul.f32 %v7388, %v9651
      %v9662 = vmul.f32 %v7389, %v9651
      %v9663 = vmul.f32 %v7390, %v9651
      %v9664 = vmul.f32 %v7391, %v9651
      %v9665 = vmul.f32 %v7392, %v9651
      %v9666 = vmul.f32 %v7393, %v9651
      %v9667 = vmul.f32 %v7394, %v9651
      %v9668 = vmul.f32 %v7395, %v9651
      %v9669 = vmul.f32 %v7396, %v9651
      %v9670 = vmul.f32 %v7397, %v9651
      %v9671 = vmul.f32 %v7398, %v9651
      %v9692 = vrot.slane %v9652, 1
      %v9693 = vrot.slane %v9653, 1
      %v9694 = vsel %vm7737, %v9692, %v9693
      %v9695 = vrot.slane %v9654, 1
      %v9696 = vrot.slane %v9655, 1
      %v9697 = vsel %vm7737, %v9695, %v9696
      %v9698 = vrot.slane %v9656, 1
      %v9699 = vrot.slane %v9657, 1
      %v9700 = vsel %vm7737, %v9698, %v9699
      %v9701 = vrot.slane %v9658, 1
      %v9702 = vrot.slane %v9659, 1
      %v9703 = vsel %vm7737, %v9701, %v9702
      %v9704 = vrot.slane %v9660, 1
      %v9705 = vrot.slane %v9661, 1
      %v9706 = vsel %vm7737, %v9704, %v9705
      %v9707 = vrot.slane %v9662, 1
      %v9708 = vrot.slane %v9663, 1
      %v9709 = vsel %vm7737, %v9707, %v9708
      %v9710 = vrot.slane %v9664, 1
      %v9711 = vrot.slane %v9665, 1
      %v9712 = vsel %vm7737, %v9710, %v9711
      %v9713 = vrot.slane %v9666, 1
      %v9714 = vrot.slane %v9667, 1
      %v9715 = vsel %vm7737, %v9713, %v9714
      %v9716 = vrot.slane %v9668, 1
      %v9717 = vrot.slane %v9669, 1
      %v9718 = vsel %vm7737, %v9716, %v9717
      %v9719 = vrot.slane %v9670, 1
      %v9720 = vrot.slane %v9671, 1
      %v9721 = vsel %vm7737, %v9719, %v9720
      %v9742 = vadd.f32 %v9629, %v9694
      %v9743 = vadd.f32 %v9630, %v9693
      %v9744 = vadd.f32 %v9631, %v9697
      %v9745 = vadd.f32 %v9632, %v9696
      %v9746 = vadd.f32 %v9633, %v9700
      %v9747 = vadd.f32 %v9634, %v9699
      %v9748 = vadd.f32 %v9635, %v9703
      %v9749 = vadd.f32 %v9636, %v9702
      %v9750 = vadd.f32 %v9637, %v9706
      %v9751 = vadd.f32 %v9638, %v9705
      %v9752 = vadd.f32 %v9639, %v9709
      %v9753 = vadd.f32 %v9640, %v9708
      %v9754 = vadd.f32 %v9641, %v9712
      %v9755 = vadd.f32 %v9642, %v9711
      %v9756 = vadd.f32 %v9643, %v9715
      %v9757 = vadd.f32 %v9644, %v9714
      %v9758 = vadd.f32 %v9645, %v9718
      %v9759 = vadd.f32 %v9646, %v9717
      %v9760 = vadd.f32 %v9647, %v9721
      %v9761 = vadd.f32 %v9648, %v9720
      %s9762 = sadd.s32 %s7452, 448
      %s9763 = sld [smem:[#allocation8 + %s9762]]
      %v9764 = vstv %s9763
      %v9765 = vmul.f32 %v7404, %v9764
      %v9766 = vmul.f32 %v7405, %v9764
      %v9767 = vmul.f32 %v7406, %v9764
      %v9768 = vmul.f32 %v7407, %v9764
      %v9769 = vmul.f32 %v7408, %v9764
      %v9770 = vmul.f32 %v7409, %v9764
      %v9771 = vmul.f32 %v7410, %v9764
      %v9772 = vmul.f32 %v7411, %v9764
      %v9773 = vmul.f32 %v7412, %v9764
      %v9774 = vmul.f32 %v7413, %v9764
      %v9775 = vmul.f32 %v7414, %v9764
      %v9776 = vmul.f32 %v7415, %v9764
      %v9777 = vmul.f32 %v7416, %v9764
      %v9778 = vmul.f32 %v7417, %v9764
      %v9779 = vmul.f32 %v7418, %v9764
      %v9780 = vmul.f32 %v7419, %v9764
      %v9781 = vmul.f32 %v7420, %v9764
      %v9782 = vmul.f32 %v7421, %v9764
      %v9783 = vmul.f32 %v7422, %v9764
      %v9784 = vmul.f32 %v7423, %v9764
      %v9805 = vrot.slane %v9765, 1
      %v9806 = vrot.slane %v9766, 1
      %v9807 = vsel %vm7737, %v9805, %v9806
      %v9808 = vrot.slane %v9767, 1
      %v9809 = vrot.slane %v9768, 1
      %v9810 = vsel %vm7737, %v9808, %v9809
      %v9811 = vrot.slane %v9769, 1
      %v9812 = vrot.slane %v9770, 1
      %v9813 = vsel %vm7737, %v9811, %v9812
      %v9814 = vrot.slane %v9771, 1
      %v9815 = vrot.slane %v9772, 1
      %v9816 = vsel %vm7737, %v9814, %v9815
      %v9817 = vrot.slane %v9773, 1
      %v9818 = vrot.slane %v9774, 1
      %v9819 = vsel %vm7737, %v9817, %v9818
      %v9820 = vrot.slane %v9775, 1
      %v9821 = vrot.slane %v9776, 1
      %v9822 = vsel %vm7737, %v9820, %v9821
      %v9823 = vrot.slane %v9777, 1
      %v9824 = vrot.slane %v9778, 1
      %v9825 = vsel %vm7737, %v9823, %v9824
      %v9826 = vrot.slane %v9779, 1
      %v9827 = vrot.slane %v9780, 1
      %v9828 = vsel %vm7737, %v9826, %v9827
      %v9829 = vrot.slane %v9781, 1
      %v9830 = vrot.slane %v9782, 1
      %v9831 = vsel %vm7737, %v9829, %v9830
      %v9832 = vrot.slane %v9783, 1
      %v9833 = vrot.slane %v9784, 1
      %v9834 = vsel %vm7737, %v9832, %v9833
      %v9855 = vadd.f32 %v9742, %v9807
      %v9856 = vadd.f32 %v9743, %v9806
      %v9857 = vadd.f32 %v9744, %v9810
      %v9858 = vadd.f32 %v9745, %v9809
      %v9859 = vadd.f32 %v9746, %v9813
      %v9860 = vadd.f32 %v9747, %v9812
      %v9861 = vadd.f32 %v9748, %v9816
      %v9862 = vadd.f32 %v9749, %v9815
      %v9863 = vadd.f32 %v9750, %v9819
      %v9864 = vadd.f32 %v9751, %v9818
      %v9865 = vadd.f32 %v9752, %v9822
      %v9866 = vadd.f32 %v9753, %v9821
      %v9867 = vadd.f32 %v9754, %v9825
      %v9868 = vadd.f32 %v9755, %v9824
      %v9869 = vadd.f32 %v9756, %v9828
      %v9870 = vadd.f32 %v9757, %v9827
      %v9871 = vadd.f32 %v9758, %v9831
      %v9872 = vadd.f32 %v9759, %v9830
      %v9873 = vadd.f32 %v9760, %v9834
      %v9874 = vadd.f32 %v9761, %v9833
      %s9875 = sadd.s32 %s7452, 464
      %s9876 = sld [smem:[#allocation8 + %s9875]]
      %v9877 = vstv %s9876
      %v9878 = vmul.f32 %v7429, %v9877
      %v9879 = vmul.f32 %v7430, %v9877
      %v9880 = vmul.f32 %v7431, %v9877
      %v9881 = vmul.f32 %v7432, %v9877
      %v9882 = vmul.f32 %v7433, %v9877
      %v9883 = vmul.f32 %v7434, %v9877
      %v9884 = vmul.f32 %v7435, %v9877
      %v9885 = vmul.f32 %v7436, %v9877
      %v9886 = vmul.f32 %v7437, %v9877
      %v9887 = vmul.f32 %v7438, %v9877
      %v9888 = vmul.f32 %v7439, %v9877
      %v9889 = vmul.f32 %v7440, %v9877
      %v9890 = vmul.f32 %v7441, %v9877
      %v9891 = vmul.f32 %v7442, %v9877
      %v9892 = vmul.f32 %v7443, %v9877
      %v9893 = vmul.f32 %v7444, %v9877
      %v9894 = vmul.f32 %v7445, %v9877
      %v9895 = vmul.f32 %v7446, %v9877
      %v9896 = vmul.f32 %v7447, %v9877
      %v9897 = vmul.f32 %v7448, %v9877
      %v9918 = vrot.slane %v9878, 1
      %v9919 = vrot.slane %v9879, 1
      %v9920 = vsel %vm7737, %v9918, %v9919
      %v9921 = vrot.slane %v9880, 1
      %v9922 = vrot.slane %v9881, 1
      %v9923 = vsel %vm7737, %v9921, %v9922
      %v9924 = vrot.slane %v9882, 1
      %v9925 = vrot.slane %v9883, 1
      %v9926 = vsel %vm7737, %v9924, %v9925
      %v9927 = vrot.slane %v9884, 1
      %v9928 = vrot.slane %v9885, 1
      %v9929 = vsel %vm7737, %v9927, %v9928
      %v9930 = vrot.slane %v9886, 1
      %v9931 = vrot.slane %v9887, 1
      %v9932 = vsel %vm7737, %v9930, %v9931
      %v9933 = vrot.slane %v9888, 1
      %v9934 = vrot.slane %v9889, 1
      %v9935 = vsel %vm7737, %v9933, %v9934
      %v9936 = vrot.slane %v9890, 1
      %v9937 = vrot.slane %v9891, 1
      %v9938 = vsel %vm7737, %v9936, %v9937
      %v9939 = vrot.slane %v9892, 1
      %v9940 = vrot.slane %v9893, 1
      %v9941 = vsel %vm7737, %v9939, %v9940
      %v9942 = vrot.slane %v9894, 1
      %v9943 = vrot.slane %v9895, 1
      %v9944 = vsel %vm7737, %v9942, %v9943
      %v9945 = vrot.slane %v9896, 1
      %v9946 = vrot.slane %v9897, 1
      %v9947 = vsel %vm7737, %v9945, %v9946
      %v9968 = vadd.f32 %v9855, %v9920
      %v9969 = vadd.f32 %v9856, %v9919
      %v9970 = vadd.f32 %v9857, %v9923
      %v9971 = vadd.f32 %v9858, %v9922
      %v9972 = vadd.f32 %v9859, %v9926
      %v9973 = vadd.f32 %v9860, %v9925
      %v9974 = vadd.f32 %v9861, %v9929
      %v9975 = vadd.f32 %v9862, %v9928
      %v9976 = vadd.f32 %v9863, %v9932
      %v9977 = vadd.f32 %v9864, %v9931
      %v9978 = vadd.f32 %v9865, %v9935
      %v9979 = vadd.f32 %v9866, %v9934
      %v9980 = vadd.f32 %v9867, %v9938
      %v9981 = vadd.f32 %v9868, %v9937
      %v9982 = vadd.f32 %v9869, %v9941
      %v9983 = vadd.f32 %v9870, %v9940
      %v9984 = vadd.f32 %v9871, %v9944
      %v9985 = vadd.f32 %v9872, %v9943
      %v9986 = vadd.f32 %v9873, %v9947
      %v9987 = vadd.f32 %v9874, %v9946
      %s9988 = sadd.s32 %s7452, 480
      %s9989 = sld [smem:[#allocation8 + %s9988]]
      %v9990 = vstv %s9989
      %v9991 = vmul.f32 %v7304, %v9990
      %v9992 = vmul.f32 %v7305, %v9990
      %v9993 = vmul.f32 %v7306, %v9990
      %v9994 = vmul.f32 %v7307, %v9990
      %v9995 = vmul.f32 %v7308, %v9990
      %v9996 = vmul.f32 %v7309, %v9990
      %v9997 = vmul.f32 %v7310, %v9990
      %v9998 = vmul.f32 %v7311, %v9990
      %v9999 = vmul.f32 %v7312, %v9990
      %v10000 = vmul.f32 %v7313, %v9990
      %v10001 = vmul.f32 %v7314, %v9990
      %v10002 = vmul.f32 %v7315, %v9990
      %v10003 = vmul.f32 %v7316, %v9990
      %v10004 = vmul.f32 %v7317, %v9990
      %v10005 = vmul.f32 %v7318, %v9990
      %v10006 = vmul.f32 %v7319, %v9990
      %v10007 = vmul.f32 %v7320, %v9990
      %v10008 = vmul.f32 %v7321, %v9990
      %v10009 = vmul.f32 %v7322, %v9990
      %v10010 = vmul.f32 %v7323, %v9990
      %v10031 = vrot.slane %v9991, 2
      %v10032 = vrot.slane %v9992, 2
      %v10033 = vsel %vm8416, %v10031, %v10032
      %v10034 = vrot.slane %v9993, 2
      %v10035 = vrot.slane %v9994, 2
      %v10036 = vsel %vm8416, %v10034, %v10035
      %v10037 = vrot.slane %v9995, 2
      %v10038 = vrot.slane %v9996, 2
      %v10039 = vsel %vm8416, %v10037, %v10038
      %v10040 = vrot.slane %v9997, 2
      %v10041 = vrot.slane %v9998, 2
      %v10042 = vsel %vm8416, %v10040, %v10041
      %v10043 = vrot.slane %v9999, 2
      %v10044 = vrot.slane %v10000, 2
      %v10045 = vsel %vm8416, %v10043, %v10044
      %v10046 = vrot.slane %v10001, 2
      %v10047 = vrot.slane %v10002, 2
      %v10048 = vsel %vm8416, %v10046, %v10047
      %v10049 = vrot.slane %v10003, 2
      %v10050 = vrot.slane %v10004, 2
      %v10051 = vsel %vm8416, %v10049, %v10050
      %v10052 = vrot.slane %v10005, 2
      %v10053 = vrot.slane %v10006, 2
      %v10054 = vsel %vm8416, %v10052, %v10053
      %v10055 = vrot.slane %v10007, 2
      %v10056 = vrot.slane %v10008, 2
      %v10057 = vsel %vm8416, %v10055, %v10056
      %v10058 = vrot.slane %v10009, 2
      %v10059 = vrot.slane %v10010, 2
      %v10060 = vsel %vm8416, %v10058, %v10059
      %v10081 = vadd.f32 %v9968, %v10033
      %v10082 = vadd.f32 %v9969, %v10032
      %v10083 = vadd.f32 %v9970, %v10036
      %v10084 = vadd.f32 %v9971, %v10035
      %v10085 = vadd.f32 %v9972, %v10039
      %v10086 = vadd.f32 %v9973, %v10038
      %v10087 = vadd.f32 %v9974, %v10042
      %v10088 = vadd.f32 %v9975, %v10041
      %v10089 = vadd.f32 %v9976, %v10045
      %v10090 = vadd.f32 %v9977, %v10044
      %v10091 = vadd.f32 %v9978, %v10048
      %v10092 = vadd.f32 %v9979, %v10047
      %v10093 = vadd.f32 %v9980, %v10051
      %v10094 = vadd.f32 %v9981, %v10050
      %v10095 = vadd.f32 %v9982, %v10054
      %v10096 = vadd.f32 %v9983, %v10053
      %v10097 = vadd.f32 %v9984, %v10057
      %v10098 = vadd.f32 %v9985, %v10056
      %v10099 = vadd.f32 %v9986, %v10060
      %v10100 = vadd.f32 %v9987, %v10059
      %s10101 = sadd.s32 %s7452, 496
      %s10102 = sld [smem:[#allocation8 + %s10101]]
      %v10103 = vstv %s10102
      %v10104 = vmul.f32 %v7329, %v10103
      %v10105 = vmul.f32 %v7330, %v10103
      %v10106 = vmul.f32 %v7331, %v10103
      %v10107 = vmul.f32 %v7332, %v10103
      %v10108 = vmul.f32 %v7333, %v10103
      %v10109 = vmul.f32 %v7334, %v10103
      %v10110 = vmul.f32 %v7335, %v10103
      %v10111 = vmul.f32 %v7336, %v10103
      %v10112 = vmul.f32 %v7337, %v10103
      %v10113 = vmul.f32 %v7338, %v10103
      %v10114 = vmul.f32 %v7339, %v10103
      %v10115 = vmul.f32 %v7340, %v10103
      %v10116 = vmul.f32 %v7341, %v10103
      %v10117 = vmul.f32 %v7342, %v10103
      %v10118 = vmul.f32 %v7343, %v10103
      %v10119 = vmul.f32 %v7344, %v10103
      %v10120 = vmul.f32 %v7345, %v10103
      %v10121 = vmul.f32 %v7346, %v10103
      %v10122 = vmul.f32 %v7347, %v10103
      %v10123 = vmul.f32 %v7348, %v10103
      %v10144 = vrot.slane %v10104, 2
      %v10145 = vrot.slane %v10105, 2
      %v10146 = vsel %vm8416, %v10144, %v10145
      %v10147 = vrot.slane %v10106, 2
      %v10148 = vrot.slane %v10107, 2
      %v10149 = vsel %vm8416, %v10147, %v10148
      %v10150 = vrot.slane %v10108, 2
      %v10151 = vrot.slane %v10109, 2
      %v10152 = vsel %vm8416, %v10150, %v10151
      %v10153 = vrot.slane %v10110, 2
      %v10154 = vrot.slane %v10111, 2
      %v10155 = vsel %vm8416, %v10153, %v10154
      %v10156 = vrot.slane %v10112, 2
      %v10157 = vrot.slane %v10113, 2
      %v10158 = vsel %vm8416, %v10156, %v10157
      %v10159 = vrot.slane %v10114, 2
      %v10160 = vrot.slane %v10115, 2
      %v10161 = vsel %vm8416, %v10159, %v10160
      %v10162 = vrot.slane %v10116, 2
      %v10163 = vrot.slane %v10117, 2
      %v10164 = vsel %vm8416, %v10162, %v10163
      %v10165 = vrot.slane %v10118, 2
      %v10166 = vrot.slane %v10119, 2
      %v10167 = vsel %vm8416, %v10165, %v10166
      %v10168 = vrot.slane %v10120, 2
      %v10169 = vrot.slane %v10121, 2
      %v10170 = vsel %vm8416, %v10168, %v10169
      %v10171 = vrot.slane %v10122, 2
      %v10172 = vrot.slane %v10123, 2
      %v10173 = vsel %vm8416, %v10171, %v10172
      %v10194 = vadd.f32 %v10081, %v10146
      %v10195 = vadd.f32 %v10082, %v10145
      %v10196 = vadd.f32 %v10083, %v10149
      %v10197 = vadd.f32 %v10084, %v10148
      %v10198 = vadd.f32 %v10085, %v10152
      %v10199 = vadd.f32 %v10086, %v10151
      %v10200 = vadd.f32 %v10087, %v10155
      %v10201 = vadd.f32 %v10088, %v10154
      %v10202 = vadd.f32 %v10089, %v10158
      %v10203 = vadd.f32 %v10090, %v10157
      %v10204 = vadd.f32 %v10091, %v10161
      %v10205 = vadd.f32 %v10092, %v10160
      %v10206 = vadd.f32 %v10093, %v10164
      %v10207 = vadd.f32 %v10094, %v10163
      %v10208 = vadd.f32 %v10095, %v10167
      %v10209 = vadd.f32 %v10096, %v10166
      %v10210 = vadd.f32 %v10097, %v10170
      %v10211 = vadd.f32 %v10098, %v10169
      %v10212 = vadd.f32 %v10099, %v10173
      %v10213 = vadd.f32 %v10100, %v10172
      %s10214 = sadd.s32 %s7452, 512
      %s10215 = sld [smem:[#allocation8 + %s10214]]
      %v10216 = vstv %s10215
      %v10217 = vmul.f32 %v7354, %v10216
      %v10218 = vmul.f32 %v7355, %v10216
      %v10219 = vmul.f32 %v7356, %v10216
      %v10220 = vmul.f32 %v7357, %v10216
      %v10221 = vmul.f32 %v7358, %v10216
      %v10222 = vmul.f32 %v7359, %v10216
      %v10223 = vmul.f32 %v7360, %v10216
      %v10224 = vmul.f32 %v7361, %v10216
      %v10225 = vmul.f32 %v7362, %v10216
      %v10226 = vmul.f32 %v7363, %v10216
      %v10227 = vmul.f32 %v7364, %v10216
      %v10228 = vmul.f32 %v7365, %v10216
      %v10229 = vmul.f32 %v7366, %v10216
      %v10230 = vmul.f32 %v7367, %v10216
      %v10231 = vmul.f32 %v7368, %v10216
      %v10232 = vmul.f32 %v7369, %v10216
      %v10233 = vmul.f32 %v7370, %v10216
      %v10234 = vmul.f32 %v7371, %v10216
      %v10235 = vmul.f32 %v7372, %v10216
      %v10236 = vmul.f32 %v7373, %v10216
      %v10257 = vrot.slane %v10217, 2
      %v10258 = vrot.slane %v10218, 2
      %v10259 = vsel %vm8416, %v10257, %v10258
      %v10260 = vrot.slane %v10219, 2
      %v10261 = vrot.slane %v10220, 2
      %v10262 = vsel %vm8416, %v10260, %v10261
      %v10263 = vrot.slane %v10221, 2
      %v10264 = vrot.slane %v10222, 2
      %v10265 = vsel %vm8416, %v10263, %v10264
      %v10266 = vrot.slane %v10223, 2
      %v10267 = vrot.slane %v10224, 2
      %v10268 = vsel %vm8416, %v10266, %v10267
      %v10269 = vrot.slane %v10225, 2
      %v10270 = vrot.slane %v10226, 2
      %v10271 = vsel %vm8416, %v10269, %v10270
      %v10272 = vrot.slane %v10227, 2
      %v10273 = vrot.slane %v10228, 2
      %v10274 = vsel %vm8416, %v10272, %v10273
      %v10275 = vrot.slane %v10229, 2
      %v10276 = vrot.slane %v10230, 2
      %v10277 = vsel %vm8416, %v10275, %v10276
      %v10278 = vrot.slane %v10231, 2
      %v10279 = vrot.slane %v10232, 2
      %v10280 = vsel %vm8416, %v10278, %v10279
      %v10281 = vrot.slane %v10233, 2
      %v10282 = vrot.slane %v10234, 2
      %v10283 = vsel %vm8416, %v10281, %v10282
      %v10284 = vrot.slane %v10235, 2
      %v10285 = vrot.slane %v10236, 2
      %v10286 = vsel %vm8416, %v10284, %v10285
      %v10307 = vadd.f32 %v10194, %v10259
      %v10308 = vadd.f32 %v10195, %v10258
      %v10309 = vadd.f32 %v10196, %v10262
      %v10310 = vadd.f32 %v10197, %v10261
      %v10311 = vadd.f32 %v10198, %v10265
      %v10312 = vadd.f32 %v10199, %v10264
      %v10313 = vadd.f32 %v10200, %v10268
      %v10314 = vadd.f32 %v10201, %v10267
      %v10315 = vadd.f32 %v10202, %v10271
      %v10316 = vadd.f32 %v10203, %v10270
      %v10317 = vadd.f32 %v10204, %v10274
      %v10318 = vadd.f32 %v10205, %v10273
      %v10319 = vadd.f32 %v10206, %v10277
      %v10320 = vadd.f32 %v10207, %v10276
      %v10321 = vadd.f32 %v10208, %v10280
      %v10322 = vadd.f32 %v10209, %v10279
      %v10323 = vadd.f32 %v10210, %v10283
      %v10324 = vadd.f32 %v10211, %v10282
      %v10325 = vadd.f32 %v10212, %v10286
      %v10326 = vadd.f32 %v10213, %v10285
      %s10327 = sadd.s32 %s7452, 528
      %s10328 = sld [smem:[#allocation8 + %s10327]]
      %v10329 = vstv %s10328
      %v10330 = vmul.f32 %v7379, %v10329
      %v10331 = vmul.f32 %v7380, %v10329
      %v10332 = vmul.f32 %v7381, %v10329
      %v10333 = vmul.f32 %v7382, %v10329
      %v10334 = vmul.f32 %v7383, %v10329
      %v10335 = vmul.f32 %v7384, %v10329
      %v10336 = vmul.f32 %v7385, %v10329
      %v10337 = vmul.f32 %v7386, %v10329
      %v10338 = vmul.f32 %v7387, %v10329
      %v10339 = vmul.f32 %v7388, %v10329
      %v10340 = vmul.f32 %v7389, %v10329
      %v10341 = vmul.f32 %v7390, %v10329
      %v10342 = vmul.f32 %v7391, %v10329
      %v10343 = vmul.f32 %v7392, %v10329
      %v10344 = vmul.f32 %v7393, %v10329
      %v10345 = vmul.f32 %v7394, %v10329
      %v10346 = vmul.f32 %v7395, %v10329
      %v10347 = vmul.f32 %v7396, %v10329
      %v10348 = vmul.f32 %v7397, %v10329
      %v10349 = vmul.f32 %v7398, %v10329
      %v10370 = vrot.slane %v10330, 2
      %v10371 = vrot.slane %v10331, 2
      %v10372 = vsel %vm8416, %v10370, %v10371
      %v10373 = vrot.slane %v10332, 2
      %v10374 = vrot.slane %v10333, 2
      %v10375 = vsel %vm8416, %v10373, %v10374
      %v10376 = vrot.slane %v10334, 2
      %v10377 = vrot.slane %v10335, 2
      %v10378 = vsel %vm8416, %v10376, %v10377
      %v10379 = vrot.slane %v10336, 2
      %v10380 = vrot.slane %v10337, 2
      %v10381 = vsel %vm8416, %v10379, %v10380
      %v10382 = vrot.slane %v10338, 2
      %v10383 = vrot.slane %v10339, 2
      %v10384 = vsel %vm8416, %v10382, %v10383
      %v10385 = vrot.slane %v10340, 2
      %v10386 = vrot.slane %v10341, 2
      %v10387 = vsel %vm8416, %v10385, %v10386
      %v10388 = vrot.slane %v10342, 2
      %v10389 = vrot.slane %v10343, 2
      %v10390 = vsel %vm8416, %v10388, %v10389
      %v10391 = vrot.slane %v10344, 2
      %v10392 = vrot.slane %v10345, 2
      %v10393 = vsel %vm8416, %v10391, %v10392
      %v10394 = vrot.slane %v10346, 2
      %v10395 = vrot.slane %v10347, 2
      %v10396 = vsel %vm8416, %v10394, %v10395
      %v10397 = vrot.slane %v10348, 2
      %v10398 = vrot.slane %v10349, 2
      %v10399 = vsel %vm8416, %v10397, %v10398
      %v10420 = vadd.f32 %v10307, %v10372
      %v10421 = vadd.f32 %v10308, %v10371
      %v10422 = vadd.f32 %v10309, %v10375
      %v10423 = vadd.f32 %v10310, %v10374
      %v10424 = vadd.f32 %v10311, %v10378
      %v10425 = vadd.f32 %v10312, %v10377
      %v10426 = vadd.f32 %v10313, %v10381
      %v10427 = vadd.f32 %v10314, %v10380
      %v10428 = vadd.f32 %v10315, %v10384
      %v10429 = vadd.f32 %v10316, %v10383
      %v10430 = vadd.f32 %v10317, %v10387
      %v10431 = vadd.f32 %v10318, %v10386
      %v10432 = vadd.f32 %v10319, %v10390
      %v10433 = vadd.f32 %v10320, %v10389
      %v10434 = vadd.f32 %v10321, %v10393
      %v10435 = vadd.f32 %v10322, %v10392
      %v10436 = vadd.f32 %v10323, %v10396
      %v10437 = vadd.f32 %v10324, %v10395
      %v10438 = vadd.f32 %v10325, %v10399
      %v10439 = vadd.f32 %v10326, %v10398
      %s10440 = sadd.s32 %s7452, 544
      %s10441 = sld [smem:[#allocation8 + %s10440]]
      %v10442 = vstv %s10441
      %v10443 = vmul.f32 %v7404, %v10442
      %v10444 = vmul.f32 %v7405, %v10442
      %v10445 = vmul.f32 %v7406, %v10442
      %v10446 = vmul.f32 %v7407, %v10442
      %v10447 = vmul.f32 %v7408, %v10442
      %v10448 = vmul.f32 %v7409, %v10442
      %v10449 = vmul.f32 %v7410, %v10442
      %v10450 = vmul.f32 %v7411, %v10442
      %v10451 = vmul.f32 %v7412, %v10442
      %v10452 = vmul.f32 %v7413, %v10442
      %v10453 = vmul.f32 %v7414, %v10442
      %v10454 = vmul.f32 %v7415, %v10442
      %v10455 = vmul.f32 %v7416, %v10442
      %v10456 = vmul.f32 %v7417, %v10442
      %v10457 = vmul.f32 %v7418, %v10442
      %v10458 = vmul.f32 %v7419, %v10442
      %v10459 = vmul.f32 %v7420, %v10442
      %v10460 = vmul.f32 %v7421, %v10442
      %v10461 = vmul.f32 %v7422, %v10442
      %v10462 = vmul.f32 %v7423, %v10442
      %v10483 = vrot.slane %v10443, 2
      %v10484 = vrot.slane %v10444, 2
      %v10485 = vsel %vm8416, %v10483, %v10484
      %v10486 = vrot.slane %v10445, 2
      %v10487 = vrot.slane %v10446, 2
      %v10488 = vsel %vm8416, %v10486, %v10487
      %v10489 = vrot.slane %v10447, 2
      %v10490 = vrot.slane %v10448, 2
      %v10491 = vsel %vm8416, %v10489, %v10490
      %v10492 = vrot.slane %v10449, 2
      %v10493 = vrot.slane %v10450, 2
      %v10494 = vsel %vm8416, %v10492, %v10493
      %v10495 = vrot.slane %v10451, 2
      %v10496 = vrot.slane %v10452, 2
      %v10497 = vsel %vm8416, %v10495, %v10496
      %v10498 = vrot.slane %v10453, 2
      %v10499 = vrot.slane %v10454, 2
      %v10500 = vsel %vm8416, %v10498, %v10499
      %v10501 = vrot.slane %v10455, 2
      %v10502 = vrot.slane %v10456, 2
      %v10503 = vsel %vm8416, %v10501, %v10502
      %v10504 = vrot.slane %v10457, 2
      %v10505 = vrot.slane %v10458, 2
      %v10506 = vsel %vm8416, %v10504, %v10505
      %v10507 = vrot.slane %v10459, 2
      %v10508 = vrot.slane %v10460, 2
      %v10509 = vsel %vm8416, %v10507, %v10508
      %v10510 = vrot.slane %v10461, 2
      %v10511 = vrot.slane %v10462, 2
      %v10512 = vsel %vm8416, %v10510, %v10511
      %v10533 = vadd.f32 %v10420, %v10485
      %v10534 = vadd.f32 %v10421, %v10484
      %v10535 = vadd.f32 %v10422, %v10488
      %v10536 = vadd.f32 %v10423, %v10487
      %v10537 = vadd.f32 %v10424, %v10491
      %v10538 = vadd.f32 %v10425, %v10490
      %v10539 = vadd.f32 %v10426, %v10494
      %v10540 = vadd.f32 %v10427, %v10493
      %v10541 = vadd.f32 %v10428, %v10497
      %v10542 = vadd.f32 %v10429, %v10496
      %v10543 = vadd.f32 %v10430, %v10500
      %v10544 = vadd.f32 %v10431, %v10499
      %v10545 = vadd.f32 %v10432, %v10503
      %v10546 = vadd.f32 %v10433, %v10502
      %v10547 = vadd.f32 %v10434, %v10506
      %v10548 = vadd.f32 %v10435, %v10505
      %v10549 = vadd.f32 %v10436, %v10509
      %v10550 = vadd.f32 %v10437, %v10508
      %v10551 = vadd.f32 %v10438, %v10512
      %v10552 = vadd.f32 %v10439, %v10511
      %s10553 = sadd.s32 %s7452, 560
      %s10554 = sld [smem:[#allocation8 + %s10553]]
      %v10555 = vstv %s10554
      %v10556 = vmul.f32 %v7429, %v10555
      %v10557 = vmul.f32 %v7430, %v10555
      %v10558 = vmul.f32 %v7431, %v10555
      %v10559 = vmul.f32 %v7432, %v10555
      %v10560 = vmul.f32 %v7433, %v10555
      %v10561 = vmul.f32 %v7434, %v10555
      %v10562 = vmul.f32 %v7435, %v10555
      %v10563 = vmul.f32 %v7436, %v10555
      %v10564 = vmul.f32 %v7437, %v10555
      %v10565 = vmul.f32 %v7438, %v10555
      %v10566 = vmul.f32 %v7439, %v10555
      %v10567 = vmul.f32 %v7440, %v10555
      %v10568 = vmul.f32 %v7441, %v10555
      %v10569 = vmul.f32 %v7442, %v10555
      %v10570 = vmul.f32 %v7443, %v10555
      %v10571 = vmul.f32 %v7444, %v10555
      %v10572 = vmul.f32 %v7445, %v10555
      %v10573 = vmul.f32 %v7446, %v10555
      %v10574 = vmul.f32 %v7447, %v10555
      %v10575 = vmul.f32 %v7448, %v10555
      %v10596 = vrot.slane %v10556, 2
      %v10597 = vrot.slane %v10557, 2
      %v10598 = vsel %vm8416, %v10596, %v10597
      %v10599 = vrot.slane %v10558, 2
      %v10600 = vrot.slane %v10559, 2
      %v10601 = vsel %vm8416, %v10599, %v10600
      %v10602 = vrot.slane %v10560, 2
      %v10603 = vrot.slane %v10561, 2
      %v10604 = vsel %vm8416, %v10602, %v10603
      %v10605 = vrot.slane %v10562, 2
      %v10606 = vrot.slane %v10563, 2
      %v10607 = vsel %vm8416, %v10605, %v10606
      %v10608 = vrot.slane %v10564, 2
      %v10609 = vrot.slane %v10565, 2
      %v10610 = vsel %vm8416, %v10608, %v10609
      %v10611 = vrot.slane %v10566, 2
      %v10612 = vrot.slane %v10567, 2
      %v10613 = vsel %vm8416, %v10611, %v10612
      %v10614 = vrot.slane %v10568, 2
      %v10615 = vrot.slane %v10569, 2
      %v10616 = vsel %vm8416, %v10614, %v10615
      %v10617 = vrot.slane %v10570, 2
      %v10618 = vrot.slane %v10571, 2
      %v10619 = vsel %vm8416, %v10617, %v10618
      %v10620 = vrot.slane %v10572, 2
      %v10621 = vrot.slane %v10573, 2
      %v10622 = vsel %vm8416, %v10620, %v10621
      %v10623 = vrot.slane %v10574, 2
      %v10624 = vrot.slane %v10575, 2
      %v10625 = vsel %vm8416, %v10623, %v10624
      %v10646 = vadd.f32 %v10533, %v10598
      %v10647 = vadd.f32 %v10534, %v10597
      %v10648 = vadd.f32 %v10535, %v10601
      %v10649 = vadd.f32 %v10536, %v10600
      %v10650 = vadd.f32 %v10537, %v10604
      %v10651 = vadd.f32 %v10538, %v10603
      %v10652 = vadd.f32 %v10539, %v10607
      %v10653 = vadd.f32 %v10540, %v10606
      %v10654 = vadd.f32 %v10541, %v10610
      %v10655 = vadd.f32 %v10542, %v10609
      %v10656 = vadd.f32 %v10543, %v10613
      %v10657 = vadd.f32 %v10544, %v10612
      %v10658 = vadd.f32 %v10545, %v10616
      %v10659 = vadd.f32 %v10546, %v10615
      %v10660 = vadd.f32 %v10547, %v10619
      %v10661 = vadd.f32 %v10548, %v10618
      %v10662 = vadd.f32 %v10549, %v10622
      %v10663 = vadd.f32 %v10550, %v10621
      %v10664 = vadd.f32 %v10551, %v10625
      %v10665 = vadd.f32 %v10552, %v10624
      %s10666 = sadd.s32 %s7452, 576
      %s10667 = sld [smem:[#allocation8 + %s10666]]
      %v10668 = vstv %s10667
      %v10669 = vmul.f32 %v7306, %v10668
      %v10670 = vmul.f32 %v7307, %v10668
      %v10671 = vmul.f32 %v7308, %v10668
      %v10672 = vmul.f32 %v7309, %v10668
      %v10673 = vmul.f32 %v7310, %v10668
      %v10674 = vmul.f32 %v7311, %v10668
      %v10675 = vmul.f32 %v7312, %v10668
      %v10676 = vmul.f32 %v7313, %v10668
      %v10677 = vmul.f32 %v7314, %v10668
      %v10678 = vmul.f32 %v7315, %v10668
      %v10679 = vmul.f32 %v7316, %v10668
      %v10680 = vmul.f32 %v7317, %v10668
      %v10681 = vmul.f32 %v7318, %v10668
      %v10682 = vmul.f32 %v7319, %v10668
      %v10683 = vmul.f32 %v7320, %v10668
      %v10684 = vmul.f32 %v7321, %v10668
      %v10685 = vmul.f32 %v7322, %v10668
      %v10686 = vmul.f32 %v7323, %v10668
      %v10687 = vmul.f32 %v7324, %v10668
      %v10688 = vmul.f32 %v7325, %v10668
      %v10689 = vadd.f32 %v10646, %v10669
      %v10690 = vadd.f32 %v10647, %v10670
      %v10691 = vadd.f32 %v10648, %v10671
      %v10692 = vadd.f32 %v10649, %v10672
      %v10693 = vadd.f32 %v10650, %v10673
      %v10694 = vadd.f32 %v10651, %v10674
      %v10695 = vadd.f32 %v10652, %v10675
      %v10696 = vadd.f32 %v10653, %v10676
      %v10697 = vadd.f32 %v10654, %v10677
      %v10698 = vadd.f32 %v10655, %v10678
      %v10699 = vadd.f32 %v10656, %v10679
      %v10700 = vadd.f32 %v10657, %v10680
      %v10701 = vadd.f32 %v10658, %v10681
      %v10702 = vadd.f32 %v10659, %v10682
      %v10703 = vadd.f32 %v10660, %v10683
      %v10704 = vadd.f32 %v10661, %v10684
      %v10705 = vadd.f32 %v10662, %v10685
      %v10706 = vadd.f32 %v10663, %v10686
      %v10707 = vadd.f32 %v10664, %v10687
      %v10708 = vadd.f32 %v10665, %v10688
      %s10709 = sadd.s32 %s7452, 592
      %s10710 = sld [smem:[#allocation8 + %s10709]]
      %v10711 = vstv %s10710
      %v10712 = vmul.f32 %v7331, %v10711
      %v10713 = vmul.f32 %v7332, %v10711
      %v10714 = vmul.f32 %v7333, %v10711
      %v10715 = vmul.f32 %v7334, %v10711
      %v10716 = vmul.f32 %v7335, %v10711
      %v10717 = vmul.f32 %v7336, %v10711
      %v10718 = vmul.f32 %v7337, %v10711
      %v10719 = vmul.f32 %v7338, %v10711
      %v10720 = vmul.f32 %v7339, %v10711
      %v10721 = vmul.f32 %v7340, %v10711
      %v10722 = vmul.f32 %v7341, %v10711
      %v10723 = vmul.f32 %v7342, %v10711
      %v10724 = vmul.f32 %v7343, %v10711
      %v10725 = vmul.f32 %v7344, %v10711
      %v10726 = vmul.f32 %v7345, %v10711
      %v10727 = vmul.f32 %v7346, %v10711
      %v10728 = vmul.f32 %v7347, %v10711
      %v10729 = vmul.f32 %v7348, %v10711
      %v10730 = vmul.f32 %v7349, %v10711
      %v10731 = vmul.f32 %v7350, %v10711
      %v10732 = vadd.f32 %v10689, %v10712
      %v10733 = vadd.f32 %v10690, %v10713
      %v10734 = vadd.f32 %v10691, %v10714
      %v10735 = vadd.f32 %v10692, %v10715
      %v10736 = vadd.f32 %v10693, %v10716
      %v10737 = vadd.f32 %v10694, %v10717
      %v10738 = vadd.f32 %v10695, %v10718
      %v10739 = vadd.f32 %v10696, %v10719
      %v10740 = vadd.f32 %v10697, %v10720
      %v10741 = vadd.f32 %v10698, %v10721
      %v10742 = vadd.f32 %v10699, %v10722
      %v10743 = vadd.f32 %v10700, %v10723
      %v10744 = vadd.f32 %v10701, %v10724
      %v10745 = vadd.f32 %v10702, %v10725
      %v10746 = vadd.f32 %v10703, %v10726
      %v10747 = vadd.f32 %v10704, %v10727
      %v10748 = vadd.f32 %v10705, %v10728
      %v10749 = vadd.f32 %v10706, %v10729
      %v10750 = vadd.f32 %v10707, %v10730
      %v10751 = vadd.f32 %v10708, %v10731
      %s10752 = sadd.s32 %s7452, 608
      %s10753 = sld [smem:[#allocation8 + %s10752]]
      %v10754 = vstv %s10753
      %v10755 = vmul.f32 %v7356, %v10754
      %v10756 = vmul.f32 %v7357, %v10754
      %v10757 = vmul.f32 %v7358, %v10754
      %v10758 = vmul.f32 %v7359, %v10754
      %v10759 = vmul.f32 %v7360, %v10754
      %v10760 = vmul.f32 %v7361, %v10754
      %v10761 = vmul.f32 %v7362, %v10754
      %v10762 = vmul.f32 %v7363, %v10754
      %v10763 = vmul.f32 %v7364, %v10754
      %v10764 = vmul.f32 %v7365, %v10754
      %v10765 = vmul.f32 %v7366, %v10754
      %v10766 = vmul.f32 %v7367, %v10754
      %v10767 = vmul.f32 %v7368, %v10754
      %v10768 = vmul.f32 %v7369, %v10754
      %v10769 = vmul.f32 %v7370, %v10754
      %v10770 = vmul.f32 %v7371, %v10754
      %v10771 = vmul.f32 %v7372, %v10754
      %v10772 = vmul.f32 %v7373, %v10754
      %v10773 = vmul.f32 %v7374, %v10754
      %v10774 = vmul.f32 %v7375, %v10754
      %v10775 = vadd.f32 %v10732, %v10755
      %v10776 = vadd.f32 %v10733, %v10756
      %v10777 = vadd.f32 %v10734, %v10757
      %v10778 = vadd.f32 %v10735, %v10758
      %v10779 = vadd.f32 %v10736, %v10759
      %v10780 = vadd.f32 %v10737, %v10760
      %v10781 = vadd.f32 %v10738, %v10761
      %v10782 = vadd.f32 %v10739, %v10762
      %v10783 = vadd.f32 %v10740, %v10763
      %v10784 = vadd.f32 %v10741, %v10764
      %v10785 = vadd.f32 %v10742, %v10765
      %v10786 = vadd.f32 %v10743, %v10766
      %v10787 = vadd.f32 %v10744, %v10767
      %v10788 = vadd.f32 %v10745, %v10768
      %v10789 = vadd.f32 %v10746, %v10769
      %v10790 = vadd.f32 %v10747, %v10770
      %v10791 = vadd.f32 %v10748, %v10771
      %v10792 = vadd.f32 %v10749, %v10772
      %v10793 = vadd.f32 %v10750, %v10773
      %v10794 = vadd.f32 %v10751, %v10774
      %s10795 = sadd.s32 %s7452, 624
      %s10796 = sld [smem:[#allocation8 + %s10795]]
      %v10797 = vstv %s10796
      %v10798 = vmul.f32 %v7381, %v10797
      %v10799 = vmul.f32 %v7382, %v10797
      %v10800 = vmul.f32 %v7383, %v10797
      %v10801 = vmul.f32 %v7384, %v10797
      %v10802 = vmul.f32 %v7385, %v10797
      %v10803 = vmul.f32 %v7386, %v10797
      %v10804 = vmul.f32 %v7387, %v10797
      %v10805 = vmul.f32 %v7388, %v10797
      %v10806 = vmul.f32 %v7389, %v10797
      %v10807 = vmul.f32 %v7390, %v10797
      %v10808 = vmul.f32 %v7391, %v10797
      %v10809 = vmul.f32 %v7392, %v10797
      %v10810 = vmul.f32 %v7393, %v10797
      %v10811 = vmul.f32 %v7394, %v10797
      %v10812 = vmul.f32 %v7395, %v10797
      %v10813 = vmul.f32 %v7396, %v10797
      %v10814 = vmul.f32 %v7397, %v10797
      %v10815 = vmul.f32 %v7398, %v10797
      %v10816 = vmul.f32 %v7399, %v10797
      %v10817 = vmul.f32 %v7400, %v10797
      %v10818 = vadd.f32 %v10775, %v10798
      %v10819 = vadd.f32 %v10776, %v10799
      %v10820 = vadd.f32 %v10777, %v10800
      %v10821 = vadd.f32 %v10778, %v10801
      %v10822 = vadd.f32 %v10779, %v10802
      %v10823 = vadd.f32 %v10780, %v10803
      %v10824 = vadd.f32 %v10781, %v10804
      %v10825 = vadd.f32 %v10782, %v10805
      %v10826 = vadd.f32 %v10783, %v10806
      %v10827 = vadd.f32 %v10784, %v10807
      %v10828 = vadd.f32 %v10785, %v10808
      %v10829 = vadd.f32 %v10786, %v10809
      %v10830 = vadd.f32 %v10787, %v10810
      %v10831 = vadd.f32 %v10788, %v10811
      %v10832 = vadd.f32 %v10789, %v10812
      %v10833 = vadd.f32 %v10790, %v10813
      %v10834 = vadd.f32 %v10791, %v10814
      %v10835 = vadd.f32 %v10792, %v10815
      %v10836 = vadd.f32 %v10793, %v10816
      %v10837 = vadd.f32 %v10794, %v10817
      %s10838 = sadd.s32 %s7452, 640
      %s10839 = sld [smem:[#allocation8 + %s10838]]
      %v10840 = vstv %s10839
      %v10841 = vmul.f32 %v7406, %v10840
      %v10842 = vmul.f32 %v7407, %v10840
      %v10843 = vmul.f32 %v7408, %v10840
      %v10844 = vmul.f32 %v7409, %v10840
      %v10845 = vmul.f32 %v7410, %v10840
      %v10846 = vmul.f32 %v7411, %v10840
      %v10847 = vmul.f32 %v7412, %v10840
      %v10848 = vmul.f32 %v7413, %v10840
      %v10849 = vmul.f32 %v7414, %v10840
      %v10850 = vmul.f32 %v7415, %v10840
      %v10851 = vmul.f32 %v7416, %v10840
      %v10852 = vmul.f32 %v7417, %v10840
      %v10853 = vmul.f32 %v7418, %v10840
      %v10854 = vmul.f32 %v7419, %v10840
      %v10855 = vmul.f32 %v7420, %v10840
      %v10856 = vmul.f32 %v7421, %v10840
      %v10857 = vmul.f32 %v7422, %v10840
      %v10858 = vmul.f32 %v7423, %v10840
      %v10859 = vmul.f32 %v7424, %v10840
      %v10860 = vmul.f32 %v7425, %v10840
      %v10861 = vadd.f32 %v10818, %v10841
      %v10862 = vadd.f32 %v10819, %v10842
      %v10863 = vadd.f32 %v10820, %v10843
      %v10864 = vadd.f32 %v10821, %v10844
      %v10865 = vadd.f32 %v10822, %v10845
      %v10866 = vadd.f32 %v10823, %v10846
      %v10867 = vadd.f32 %v10824, %v10847
      %v10868 = vadd.f32 %v10825, %v10848
      %v10869 = vadd.f32 %v10826, %v10849
      %v10870 = vadd.f32 %v10827, %v10850
      %v10871 = vadd.f32 %v10828, %v10851
      %v10872 = vadd.f32 %v10829, %v10852
      %v10873 = vadd.f32 %v10830, %v10853
      %v10874 = vadd.f32 %v10831, %v10854
      %v10875 = vadd.f32 %v10832, %v10855
      %v10876 = vadd.f32 %v10833, %v10856
      %v10877 = vadd.f32 %v10834, %v10857
      %v10878 = vadd.f32 %v10835, %v10858
      %v10879 = vadd.f32 %v10836, %v10859
      %v10880 = vadd.f32 %v10837, %v10860
      %s10881 = sadd.s32 %s7452, 656
      %s10882 = sld [smem:[#allocation8 + %s10881]]
      %v10883 = vstv %s10882
      %v10884 = vmul.f32 %v7431, %v10883
      %v10885 = vmul.f32 %v7432, %v10883
      %v10886 = vmul.f32 %v7433, %v10883
      %v10887 = vmul.f32 %v7434, %v10883
      %v10888 = vmul.f32 %v7435, %v10883
      %v10889 = vmul.f32 %v7436, %v10883
      %v10890 = vmul.f32 %v7437, %v10883
      %v10891 = vmul.f32 %v7438, %v10883
      %v10892 = vmul.f32 %v7439, %v10883
      %v10893 = vmul.f32 %v7440, %v10883
      %v10894 = vmul.f32 %v7441, %v10883
      %v10895 = vmul.f32 %v7442, %v10883
      %v10896 = vmul.f32 %v7443, %v10883
      %v10897 = vmul.f32 %v7444, %v10883
      %v10898 = vmul.f32 %v7445, %v10883
      %v10899 = vmul.f32 %v7446, %v10883
      %v10900 = vmul.f32 %v7447, %v10883
      %v10901 = vmul.f32 %v7448, %v10883
      %v10902 = vmul.f32 %v7449, %v10883
      %v10903 = vmul.f32 %v7450, %v10883
      %v10904 = vadd.f32 %v10861, %v10884
      %v10905 = vadd.f32 %v10862, %v10885
      %v10906 = vadd.f32 %v10863, %v10886
      %v10907 = vadd.f32 %v10864, %v10887
      %v10908 = vadd.f32 %v10865, %v10888
      %v10909 = vadd.f32 %v10866, %v10889
      %v10910 = vadd.f32 %v10867, %v10890
      %v10911 = vadd.f32 %v10868, %v10891
      %v10912 = vadd.f32 %v10869, %v10892
      %v10913 = vadd.f32 %v10870, %v10893
      %v10914 = vadd.f32 %v10871, %v10894
      %v10915 = vadd.f32 %v10872, %v10895
      %v10916 = vadd.f32 %v10873, %v10896
      %v10917 = vadd.f32 %v10874, %v10897
      %v10918 = vadd.f32 %v10875, %v10898
      %v10919 = vadd.f32 %v10876, %v10899
      %v10920 = vadd.f32 %v10877, %v10900
      %v10921 = vadd.f32 %v10878, %v10901
      %v10922 = vadd.f32 %v10879, %v10902
      %v10923 = vadd.f32 %v10880, %v10903
      %s10924 = sadd.s32 %s7452, 672
      %s10925 = sld [smem:[#allocation8 + %s10924]]
      %v10926 = vstv %s10925
      %v10927 = vmul.f32 %v7306, %v10926
      %v10928 = vmul.f32 %v7307, %v10926
      %v10929 = vmul.f32 %v7308, %v10926
      %v10930 = vmul.f32 %v7309, %v10926
      %v10931 = vmul.f32 %v7310, %v10926
      %v10932 = vmul.f32 %v7311, %v10926
      %v10933 = vmul.f32 %v7312, %v10926
      %v10934 = vmul.f32 %v7313, %v10926
      %v10935 = vmul.f32 %v7314, %v10926
      %v10936 = vmul.f32 %v7315, %v10926
      %v10937 = vmul.f32 %v7316, %v10926
      %v10938 = vmul.f32 %v7317, %v10926
      %v10939 = vmul.f32 %v7318, %v10926
      %v10940 = vmul.f32 %v7319, %v10926
      %v10941 = vmul.f32 %v7320, %v10926
      %v10942 = vmul.f32 %v7321, %v10926
      %v10943 = vmul.f32 %v7322, %v10926
      %v10944 = vmul.f32 %v7323, %v10926
      %v10945 = vmul.f32 %v7324, %v10926
      %v10946 = vmul.f32 %v7325, %v10926
      %v10967 = vrot.slane %v10927, 1
      %v10968 = vrot.slane %v10928, 1
      %v10969 = vsel %vm7737, %v10967, %v10968
      %v10970 = vrot.slane %v10929, 1
      %v10971 = vrot.slane %v10930, 1
      %v10972 = vsel %vm7737, %v10970, %v10971
      %v10973 = vrot.slane %v10931, 1
      %v10974 = vrot.slane %v10932, 1
      %v10975 = vsel %vm7737, %v10973, %v10974
      %v10976 = vrot.slane %v10933, 1
      %v10977 = vrot.slane %v10934, 1
      %v10978 = vsel %vm7737, %v10976, %v10977
      %v10979 = vrot.slane %v10935, 1
      %v10980 = vrot.slane %v10936, 1
      %v10981 = vsel %vm7737, %v10979, %v10980
      %v10982 = vrot.slane %v10937, 1
      %v10983 = vrot.slane %v10938, 1
      %v10984 = vsel %vm7737, %v10982, %v10983
      %v10985 = vrot.slane %v10939, 1
      %v10986 = vrot.slane %v10940, 1
      %v10987 = vsel %vm7737, %v10985, %v10986
      %v10988 = vrot.slane %v10941, 1
      %v10989 = vrot.slane %v10942, 1
      %v10990 = vsel %vm7737, %v10988, %v10989
      %v10991 = vrot.slane %v10943, 1
      %v10992 = vrot.slane %v10944, 1
      %v10993 = vsel %vm7737, %v10991, %v10992
      %v10994 = vrot.slane %v10945, 1
      %v10995 = vrot.slane %v10946, 1
      %v10996 = vsel %vm7737, %v10994, %v10995
      %v11017 = vadd.f32 %v10904, %v10969
      %v11018 = vadd.f32 %v10905, %v10968
      %v11019 = vadd.f32 %v10906, %v10972
      %v11020 = vadd.f32 %v10907, %v10971
      %v11021 = vadd.f32 %v10908, %v10975
      %v11022 = vadd.f32 %v10909, %v10974
      %v11023 = vadd.f32 %v10910, %v10978
      %v11024 = vadd.f32 %v10911, %v10977
      %v11025 = vadd.f32 %v10912, %v10981
      %v11026 = vadd.f32 %v10913, %v10980
      %v11027 = vadd.f32 %v10914, %v10984
      %v11028 = vadd.f32 %v10915, %v10983
      %v11029 = vadd.f32 %v10916, %v10987
      %v11030 = vadd.f32 %v10917, %v10986
      %v11031 = vadd.f32 %v10918, %v10990
      %v11032 = vadd.f32 %v10919, %v10989
      %v11033 = vadd.f32 %v10920, %v10993
      %v11034 = vadd.f32 %v10921, %v10992
      %v11035 = vadd.f32 %v10922, %v10996
      %v11036 = vadd.f32 %v10923, %v10995
      %s11037 = sadd.s32 %s7452, 688
      %s11038 = sld [smem:[#allocation8 + %s11037]]
      %v11039 = vstv %s11038
      %v11040 = vmul.f32 %v7331, %v11039
      %v11041 = vmul.f32 %v7332, %v11039
      %v11042 = vmul.f32 %v7333, %v11039
      %v11043 = vmul.f32 %v7334, %v11039
      %v11044 = vmul.f32 %v7335, %v11039
      %v11045 = vmul.f32 %v7336, %v11039
      %v11046 = vmul.f32 %v7337, %v11039
      %v11047 = vmul.f32 %v7338, %v11039
      %v11048 = vmul.f32 %v7339, %v11039
      %v11049 = vmul.f32 %v7340, %v11039
      %v11050 = vmul.f32 %v7341, %v11039
      %v11051 = vmul.f32 %v7342, %v11039
      %v11052 = vmul.f32 %v7343, %v11039
      %v11053 = vmul.f32 %v7344, %v11039
      %v11054 = vmul.f32 %v7345, %v11039
      %v11055 = vmul.f32 %v7346, %v11039
      %v11056 = vmul.f32 %v7347, %v11039
      %v11057 = vmul.f32 %v7348, %v11039
      %v11058 = vmul.f32 %v7349, %v11039
      %v11059 = vmul.f32 %v7350, %v11039
      %v11080 = vrot.slane %v11040, 1
      %v11081 = vrot.slane %v11041, 1
      %v11082 = vsel %vm7737, %v11080, %v11081
      %v11083 = vrot.slane %v11042, 1
      %v11084 = vrot.slane %v11043, 1
      %v11085 = vsel %vm7737, %v11083, %v11084
      %v11086 = vrot.slane %v11044, 1
      %v11087 = vrot.slane %v11045, 1
      %v11088 = vsel %vm7737, %v11086, %v11087
      %v11089 = vrot.slane %v11046, 1
      %v11090 = vrot.slane %v11047, 1
      %v11091 = vsel %vm7737, %v11089, %v11090
      %v11092 = vrot.slane %v11048, 1
      %v11093 = vrot.slane %v11049, 1
      %v11094 = vsel %vm7737, %v11092, %v11093
      %v11095 = vrot.slane %v11050, 1
      %v11096 = vrot.slane %v11051, 1
      %v11097 = vsel %vm7737, %v11095, %v11096
      %v11098 = vrot.slane %v11052, 1
      %v11099 = vrot.slane %v11053, 1
      %v11100 = vsel %vm7737, %v11098, %v11099
      %v11101 = vrot.slane %v11054, 1
      %v11102 = vrot.slane %v11055, 1
      %v11103 = vsel %vm7737, %v11101, %v11102
      %v11104 = vrot.slane %v11056, 1
      %v11105 = vrot.slane %v11057, 1
      %v11106 = vsel %vm7737, %v11104, %v11105
      %v11107 = vrot.slane %v11058, 1
      %v11108 = vrot.slane %v11059, 1
      %v11109 = vsel %vm7737, %v11107, %v11108
      %v11130 = vadd.f32 %v11017, %v11082
      %v11131 = vadd.f32 %v11018, %v11081
      %v11132 = vadd.f32 %v11019, %v11085
      %v11133 = vadd.f32 %v11020, %v11084
      %v11134 = vadd.f32 %v11021, %v11088
      %v11135 = vadd.f32 %v11022, %v11087
      %v11136 = vadd.f32 %v11023, %v11091
      %v11137 = vadd.f32 %v11024, %v11090
      %v11138 = vadd.f32 %v11025, %v11094
      %v11139 = vadd.f32 %v11026, %v11093
      %v11140 = vadd.f32 %v11027, %v11097
      %v11141 = vadd.f32 %v11028, %v11096
      %v11142 = vadd.f32 %v11029, %v11100
      %v11143 = vadd.f32 %v11030, %v11099
      %v11144 = vadd.f32 %v11031, %v11103
      %v11145 = vadd.f32 %v11032, %v11102
      %v11146 = vadd.f32 %v11033, %v11106
      %v11147 = vadd.f32 %v11034, %v11105
      %v11148 = vadd.f32 %v11035, %v11109
      %v11149 = vadd.f32 %v11036, %v11108
      %s11150 = sadd.s32 %s7452, 704
      %s11151 = sld [smem:[#allocation8 + %s11150]]
      %v11152 = vstv %s11151
      %v11153 = vmul.f32 %v7356, %v11152
      %v11154 = vmul.f32 %v7357, %v11152
      %v11155 = vmul.f32 %v7358, %v11152
      %v11156 = vmul.f32 %v7359, %v11152
      %v11157 = vmul.f32 %v7360, %v11152
      %v11158 = vmul.f32 %v7361, %v11152
      %v11159 = vmul.f32 %v7362, %v11152
      %v11160 = vmul.f32 %v7363, %v11152
      %v11161 = vmul.f32 %v7364, %v11152
      %v11162 = vmul.f32 %v7365, %v11152
      %v11163 = vmul.f32 %v7366, %v11152
      %v11164 = vmul.f32 %v7367, %v11152
      %v11165 = vmul.f32 %v7368, %v11152
      %v11166 = vmul.f32 %v7369, %v11152
      %v11167 = vmul.f32 %v7370, %v11152
      %v11168 = vmul.f32 %v7371, %v11152
      %v11169 = vmul.f32 %v7372, %v11152
      %v11170 = vmul.f32 %v7373, %v11152
      %v11171 = vmul.f32 %v7374, %v11152
      %v11172 = vmul.f32 %v7375, %v11152
      %v11193 = vrot.slane %v11153, 1
      %v11194 = vrot.slane %v11154, 1
      %v11195 = vsel %vm7737, %v11193, %v11194
      %v11196 = vrot.slane %v11155, 1
      %v11197 = vrot.slane %v11156, 1
      %v11198 = vsel %vm7737, %v11196, %v11197
      %v11199 = vrot.slane %v11157, 1
      %v11200 = vrot.slane %v11158, 1
      %v11201 = vsel %vm7737, %v11199, %v11200
      %v11202 = vrot.slane %v11159, 1
      %v11203 = vrot.slane %v11160, 1
      %v11204 = vsel %vm7737, %v11202, %v11203
      %v11205 = vrot.slane %v11161, 1
      %v11206 = vrot.slane %v11162, 1
      %v11207 = vsel %vm7737, %v11205, %v11206
      %v11208 = vrot.slane %v11163, 1
      %v11209 = vrot.slane %v11164, 1
      %v11210 = vsel %vm7737, %v11208, %v11209
      %v11211 = vrot.slane %v11165, 1
      %v11212 = vrot.slane %v11166, 1
      %v11213 = vsel %vm7737, %v11211, %v11212
      %v11214 = vrot.slane %v11167, 1
      %v11215 = vrot.slane %v11168, 1
      %v11216 = vsel %vm7737, %v11214, %v11215
      %v11217 = vrot.slane %v11169, 1
      %v11218 = vrot.slane %v11170, 1
      %v11219 = vsel %vm7737, %v11217, %v11218
      %v11220 = vrot.slane %v11171, 1
      %v11221 = vrot.slane %v11172, 1
      %v11222 = vsel %vm7737, %v11220, %v11221
      %v11243 = vadd.f32 %v11130, %v11195
      %v11244 = vadd.f32 %v11131, %v11194
      %v11245 = vadd.f32 %v11132, %v11198
      %v11246 = vadd.f32 %v11133, %v11197
      %v11247 = vadd.f32 %v11134, %v11201
      %v11248 = vadd.f32 %v11135, %v11200
      %v11249 = vadd.f32 %v11136, %v11204
      %v11250 = vadd.f32 %v11137, %v11203
      %v11251 = vadd.f32 %v11138, %v11207
      %v11252 = vadd.f32 %v11139, %v11206
      %v11253 = vadd.f32 %v11140, %v11210
      %v11254 = vadd.f32 %v11141, %v11209
      %v11255 = vadd.f32 %v11142, %v11213
      %v11256 = vadd.f32 %v11143, %v11212
      %v11257 = vadd.f32 %v11144, %v11216
      %v11258 = vadd.f32 %v11145, %v11215
      %v11259 = vadd.f32 %v11146, %v11219
      %v11260 = vadd.f32 %v11147, %v11218
      %v11261 = vadd.f32 %v11148, %v11222
      %v11262 = vadd.f32 %v11149, %v11221
      %s11263 = sadd.s32 %s7452, 720
      %s11264 = sld [smem:[#allocation8 + %s11263]]
      %v11265 = vstv %s11264
      %v11266 = vmul.f32 %v7381, %v11265
      %v11267 = vmul.f32 %v7382, %v11265
      %v11268 = vmul.f32 %v7383, %v11265
      %v11269 = vmul.f32 %v7384, %v11265
      %v11270 = vmul.f32 %v7385, %v11265
      %v11271 = vmul.f32 %v7386, %v11265
      %v11272 = vmul.f32 %v7387, %v11265
      %v11273 = vmul.f32 %v7388, %v11265
      %v11274 = vmul.f32 %v7389, %v11265
      %v11275 = vmul.f32 %v7390, %v11265
      %v11276 = vmul.f32 %v7391, %v11265
      %v11277 = vmul.f32 %v7392, %v11265
      %v11278 = vmul.f32 %v7393, %v11265
      %v11279 = vmul.f32 %v7394, %v11265
      %v11280 = vmul.f32 %v7395, %v11265
      %v11281 = vmul.f32 %v7396, %v11265
      %v11282 = vmul.f32 %v7397, %v11265
      %v11283 = vmul.f32 %v7398, %v11265
      %v11284 = vmul.f32 %v7399, %v11265
      %v11285 = vmul.f32 %v7400, %v11265
      %v11306 = vrot.slane %v11266, 1
      %v11307 = vrot.slane %v11267, 1
      %v11308 = vsel %vm7737, %v11306, %v11307
      %v11309 = vrot.slane %v11268, 1
      %v11310 = vrot.slane %v11269, 1
      %v11311 = vsel %vm7737, %v11309, %v11310
      %v11312 = vrot.slane %v11270, 1
      %v11313 = vrot.slane %v11271, 1
      %v11314 = vsel %vm7737, %v11312, %v11313
      %v11315 = vrot.slane %v11272, 1
      %v11316 = vrot.slane %v11273, 1
      %v11317 = vsel %vm7737, %v11315, %v11316
      %v11318 = vrot.slane %v11274, 1
      %v11319 = vrot.slane %v11275, 1
      %v11320 = vsel %vm7737, %v11318, %v11319
      %v11321 = vrot.slane %v11276, 1
      %v11322 = vrot.slane %v11277, 1
      %v11323 = vsel %vm7737, %v11321, %v11322
      %v11324 = vrot.slane %v11278, 1
      %v11325 = vrot.slane %v11279, 1
      %v11326 = vsel %vm7737, %v11324, %v11325
      %v11327 = vrot.slane %v11280, 1
      %v11328 = vrot.slane %v11281, 1
      %v11329 = vsel %vm7737, %v11327, %v11328
      %v11330 = vrot.slane %v11282, 1
      %v11331 = vrot.slane %v11283, 1
      %v11332 = vsel %vm7737, %v11330, %v11331
      %v11333 = vrot.slane %v11284, 1
      %v11334 = vrot.slane %v11285, 1
      %v11335 = vsel %vm7737, %v11333, %v11334
      %v11356 = vadd.f32 %v11243, %v11308
      %v11357 = vadd.f32 %v11244, %v11307
      %v11358 = vadd.f32 %v11245, %v11311
      %v11359 = vadd.f32 %v11246, %v11310
      %v11360 = vadd.f32 %v11247, %v11314
      %v11361 = vadd.f32 %v11248, %v11313
      %v11362 = vadd.f32 %v11249, %v11317
      %v11363 = vadd.f32 %v11250, %v11316
      %v11364 = vadd.f32 %v11251, %v11320
      %v11365 = vadd.f32 %v11252, %v11319
      %v11366 = vadd.f32 %v11253, %v11323
      %v11367 = vadd.f32 %v11254, %v11322
      %v11368 = vadd.f32 %v11255, %v11326
      %v11369 = vadd.f32 %v11256, %v11325
      %v11370 = vadd.f32 %v11257, %v11329
      %v11371 = vadd.f32 %v11258, %v11328
      %v11372 = vadd.f32 %v11259, %v11332
      %v11373 = vadd.f32 %v11260, %v11331
      %v11374 = vadd.f32 %v11261, %v11335
      %v11375 = vadd.f32 %v11262, %v11334
      %s11376 = sadd.s32 %s7452, 736
      %s11377 = sld [smem:[#allocation8 + %s11376]]
      %v11378 = vstv %s11377
      %v11379 = vmul.f32 %v7406, %v11378
      %v11380 = vmul.f32 %v7407, %v11378
      %v11381 = vmul.f32 %v7408, %v11378
      %v11382 = vmul.f32 %v7409, %v11378
      %v11383 = vmul.f32 %v7410, %v11378
      %v11384 = vmul.f32 %v7411, %v11378
      %v11385 = vmul.f32 %v7412, %v11378
      %v11386 = vmul.f32 %v7413, %v11378
      %v11387 = vmul.f32 %v7414, %v11378
      %v11388 = vmul.f32 %v7415, %v11378
      %v11389 = vmul.f32 %v7416, %v11378
      %v11390 = vmul.f32 %v7417, %v11378
      %v11391 = vmul.f32 %v7418, %v11378
      %v11392 = vmul.f32 %v7419, %v11378
      %v11393 = vmul.f32 %v7420, %v11378
      %v11394 = vmul.f32 %v7421, %v11378
      %v11395 = vmul.f32 %v7422, %v11378
      %v11396 = vmul.f32 %v7423, %v11378
      %v11397 = vmul.f32 %v7424, %v11378
      %v11398 = vmul.f32 %v7425, %v11378
      %v11419 = vrot.slane %v11379, 1
      %v11420 = vrot.slane %v11380, 1
      %v11421 = vsel %vm7737, %v11419, %v11420
      %v11422 = vrot.slane %v11381, 1
      %v11423 = vrot.slane %v11382, 1
      %v11424 = vsel %vm7737, %v11422, %v11423
      %v11425 = vrot.slane %v11383, 1
      %v11426 = vrot.slane %v11384, 1
      %v11427 = vsel %vm7737, %v11425, %v11426
      %v11428 = vrot.slane %v11385, 1
      %v11429 = vrot.slane %v11386, 1
      %v11430 = vsel %vm7737, %v11428, %v11429
      %v11431 = vrot.slane %v11387, 1
      %v11432 = vrot.slane %v11388, 1
      %v11433 = vsel %vm7737, %v11431, %v11432
      %v11434 = vrot.slane %v11389, 1
      %v11435 = vrot.slane %v11390, 1
      %v11436 = vsel %vm7737, %v11434, %v11435
      %v11437 = vrot.slane %v11391, 1
      %v11438 = vrot.slane %v11392, 1
      %v11439 = vsel %vm7737, %v11437, %v11438
      %v11440 = vrot.slane %v11393, 1
      %v11441 = vrot.slane %v11394, 1
      %v11442 = vsel %vm7737, %v11440, %v11441
      %v11443 = vrot.slane %v11395, 1
      %v11444 = vrot.slane %v11396, 1
      %v11445 = vsel %vm7737, %v11443, %v11444
      %v11446 = vrot.slane %v11397, 1
      %v11447 = vrot.slane %v11398, 1
      %v11448 = vsel %vm7737, %v11446, %v11447
      %v11469 = vadd.f32 %v11356, %v11421
      %v11470 = vadd.f32 %v11357, %v11420
      %v11471 = vadd.f32 %v11358, %v11424
      %v11472 = vadd.f32 %v11359, %v11423
      %v11473 = vadd.f32 %v11360, %v11427
      %v11474 = vadd.f32 %v11361, %v11426
      %v11475 = vadd.f32 %v11362, %v11430
      %v11476 = vadd.f32 %v11363, %v11429
      %v11477 = vadd.f32 %v11364, %v11433
      %v11478 = vadd.f32 %v11365, %v11432
      %v11479 = vadd.f32 %v11366, %v11436
      %v11480 = vadd.f32 %v11367, %v11435
      %v11481 = vadd.f32 %v11368, %v11439
      %v11482 = vadd.f32 %v11369, %v11438
      %v11483 = vadd.f32 %v11370, %v11442
      %v11484 = vadd.f32 %v11371, %v11441
      %v11485 = vadd.f32 %v11372, %v11445
      %v11486 = vadd.f32 %v11373, %v11444
      %v11487 = vadd.f32 %v11374, %v11448
      %v11488 = vadd.f32 %v11375, %v11447
      %s11489 = sadd.s32 %s7452, 752
      %s11490 = sld [smem:[#allocation8 + %s11489]]
      %v11491 = vstv %s11490
      %v11492 = vmul.f32 %v7431, %v11491
      %v11493 = vmul.f32 %v7432, %v11491
      %v11494 = vmul.f32 %v7433, %v11491
      %v11495 = vmul.f32 %v7434, %v11491
      %v11496 = vmul.f32 %v7435, %v11491
      %v11497 = vmul.f32 %v7436, %v11491
      %v11498 = vmul.f32 %v7437, %v11491
      %v11499 = vmul.f32 %v7438, %v11491
      %v11500 = vmul.f32 %v7439, %v11491
      %v11501 = vmul.f32 %v7440, %v11491
      %v11502 = vmul.f32 %v7441, %v11491
      %v11503 = vmul.f32 %v7442, %v11491
      %v11504 = vmul.f32 %v7443, %v11491
      %v11505 = vmul.f32 %v7444, %v11491
      %v11506 = vmul.f32 %v7445, %v11491
      %v11507 = vmul.f32 %v7446, %v11491
      %v11508 = vmul.f32 %v7447, %v11491
      %v11509 = vmul.f32 %v7448, %v11491
      %v11510 = vmul.f32 %v7449, %v11491
      %v11511 = vmul.f32 %v7450, %v11491
      %v11532 = vrot.slane %v11492, 1
      %v11533 = vrot.slane %v11493, 1
      %v11534 = vsel %vm7737, %v11532, %v11533
      %v11535 = vrot.slane %v11494, 1
      %v11536 = vrot.slane %v11495, 1
      %v11537 = vsel %vm7737, %v11535, %v11536
      %v11538 = vrot.slane %v11496, 1
      %v11539 = vrot.slane %v11497, 1
      %v11540 = vsel %vm7737, %v11538, %v11539
      %v11541 = vrot.slane %v11498, 1
      %v11542 = vrot.slane %v11499, 1
      %v11543 = vsel %vm7737, %v11541, %v11542
      %v11544 = vrot.slane %v11500, 1
      %v11545 = vrot.slane %v11501, 1
      %v11546 = vsel %vm7737, %v11544, %v11545
      %v11547 = vrot.slane %v11502, 1
      %v11548 = vrot.slane %v11503, 1
      %v11549 = vsel %vm7737, %v11547, %v11548
      %v11550 = vrot.slane %v11504, 1
      %v11551 = vrot.slane %v11505, 1
      %v11552 = vsel %vm7737, %v11550, %v11551
      %v11553 = vrot.slane %v11506, 1
      %v11554 = vrot.slane %v11507, 1
      %v11555 = vsel %vm7737, %v11553, %v11554
      %v11556 = vrot.slane %v11508, 1
      %v11557 = vrot.slane %v11509, 1
      %v11558 = vsel %vm7737, %v11556, %v11557
      %v11559 = vrot.slane %v11510, 1
      %v11560 = vrot.slane %v11511, 1
      %v11561 = vsel %vm7737, %v11559, %v11560
      %v11582 = vadd.f32 %v11469, %v11534
      %v11583 = vadd.f32 %v11470, %v11533
      %v11584 = vadd.f32 %v11471, %v11537
      %v11585 = vadd.f32 %v11472, %v11536
      %v11586 = vadd.f32 %v11473, %v11540
      %v11587 = vadd.f32 %v11474, %v11539
      %v11588 = vadd.f32 %v11475, %v11543
      %v11589 = vadd.f32 %v11476, %v11542
      %v11590 = vadd.f32 %v11477, %v11546
      %v11591 = vadd.f32 %v11478, %v11545
      %v11592 = vadd.f32 %v11479, %v11549
      %v11593 = vadd.f32 %v11480, %v11548
      %v11594 = vadd.f32 %v11481, %v11552
      %v11595 = vadd.f32 %v11482, %v11551
      %v11596 = vadd.f32 %v11483, %v11555
      %v11597 = vadd.f32 %v11484, %v11554
      %v11598 = vadd.f32 %v11485, %v11558
      %v11599 = vadd.f32 %v11486, %v11557
      %v11600 = vadd.f32 %v11487, %v11561
      %v11601 = vadd.f32 %v11488, %v11560
      %s11602 = sadd.s32 %s7452, 768
      %s11603 = sld [smem:[#allocation8 + %s11602]]
      %v11604 = vstv %s11603
      %v11605 = vmul.f32 %v7306, %v11604
      %v11606 = vmul.f32 %v7307, %v11604
      %v11607 = vmul.f32 %v7308, %v11604
      %v11608 = vmul.f32 %v7309, %v11604
      %v11609 = vmul.f32 %v7310, %v11604
      %v11610 = vmul.f32 %v7311, %v11604
      %v11611 = vmul.f32 %v7312, %v11604
      %v11612 = vmul.f32 %v7313, %v11604
      %v11613 = vmul.f32 %v7314, %v11604
      %v11614 = vmul.f32 %v7315, %v11604
      %v11615 = vmul.f32 %v7316, %v11604
      %v11616 = vmul.f32 %v7317, %v11604
      %v11617 = vmul.f32 %v7318, %v11604
      %v11618 = vmul.f32 %v7319, %v11604
      %v11619 = vmul.f32 %v7320, %v11604
      %v11620 = vmul.f32 %v7321, %v11604
      %v11621 = vmul.f32 %v7322, %v11604
      %v11622 = vmul.f32 %v7323, %v11604
      %v11623 = vmul.f32 %v7324, %v11604
      %v11624 = vmul.f32 %v7325, %v11604
      %v11645 = vrot.slane %v11605, 2
      %v11646 = vrot.slane %v11606, 2
      %v11647 = vsel %vm8416, %v11645, %v11646
      %v11648 = vrot.slane %v11607, 2
      %v11649 = vrot.slane %v11608, 2
      %v11650 = vsel %vm8416, %v11648, %v11649
      %v11651 = vrot.slane %v11609, 2
      %v11652 = vrot.slane %v11610, 2
      %v11653 = vsel %vm8416, %v11651, %v11652
      %v11654 = vrot.slane %v11611, 2
      %v11655 = vrot.slane %v11612, 2
      %v11656 = vsel %vm8416, %v11654, %v11655
      %v11657 = vrot.slane %v11613, 2
      %v11658 = vrot.slane %v11614, 2
      %v11659 = vsel %vm8416, %v11657, %v11658
      %v11660 = vrot.slane %v11615, 2
      %v11661 = vrot.slane %v11616, 2
      %v11662 = vsel %vm8416, %v11660, %v11661
      %v11663 = vrot.slane %v11617, 2
      %v11664 = vrot.slane %v11618, 2
      %v11665 = vsel %vm8416, %v11663, %v11664
      %v11666 = vrot.slane %v11619, 2
      %v11667 = vrot.slane %v11620, 2
      %v11668 = vsel %vm8416, %v11666, %v11667
      %v11669 = vrot.slane %v11621, 2
      %v11670 = vrot.slane %v11622, 2
      %v11671 = vsel %vm8416, %v11669, %v11670
      %v11672 = vrot.slane %v11623, 2
      %v11673 = vrot.slane %v11624, 2
      %v11674 = vsel %vm8416, %v11672, %v11673
      %v11695 = vadd.f32 %v11582, %v11647
      %v11696 = vadd.f32 %v11583, %v11646
      %v11697 = vadd.f32 %v11584, %v11650
      %v11698 = vadd.f32 %v11585, %v11649
      %v11699 = vadd.f32 %v11586, %v11653
      %v11700 = vadd.f32 %v11587, %v11652
      %v11701 = vadd.f32 %v11588, %v11656
      %v11702 = vadd.f32 %v11589, %v11655
      %v11703 = vadd.f32 %v11590, %v11659
      %v11704 = vadd.f32 %v11591, %v11658
      %v11705 = vadd.f32 %v11592, %v11662
      %v11706 = vadd.f32 %v11593, %v11661
      %v11707 = vadd.f32 %v11594, %v11665
      %v11708 = vadd.f32 %v11595, %v11664
      %v11709 = vadd.f32 %v11596, %v11668
      %v11710 = vadd.f32 %v11597, %v11667
      %v11711 = vadd.f32 %v11598, %v11671
      %v11712 = vadd.f32 %v11599, %v11670
      %v11713 = vadd.f32 %v11600, %v11674
      %v11714 = vadd.f32 %v11601, %v11673
      %s11715 = sadd.s32 %s7452, 784
      %s11716 = sld [smem:[#allocation8 + %s11715]]
      %v11717 = vstv %s11716
      %v11718 = vmul.f32 %v7331, %v11717
      %v11719 = vmul.f32 %v7332, %v11717
      %v11720 = vmul.f32 %v7333, %v11717
      %v11721 = vmul.f32 %v7334, %v11717
      %v11722 = vmul.f32 %v7335, %v11717
      %v11723 = vmul.f32 %v7336, %v11717
      %v11724 = vmul.f32 %v7337, %v11717
      %v11725 = vmul.f32 %v7338, %v11717
      %v11726 = vmul.f32 %v7339, %v11717
      %v11727 = vmul.f32 %v7340, %v11717
      %v11728 = vmul.f32 %v7341, %v11717
      %v11729 = vmul.f32 %v7342, %v11717
      %v11730 = vmul.f32 %v7343, %v11717
      %v11731 = vmul.f32 %v7344, %v11717
      %v11732 = vmul.f32 %v7345, %v11717
      %v11733 = vmul.f32 %v7346, %v11717
      %v11734 = vmul.f32 %v7347, %v11717
      %v11735 = vmul.f32 %v7348, %v11717
      %v11736 = vmul.f32 %v7349, %v11717
      %v11737 = vmul.f32 %v7350, %v11717
      %v11758 = vrot.slane %v11718, 2
      %v11759 = vrot.slane %v11719, 2
      %v11760 = vsel %vm8416, %v11758, %v11759
      %v11761 = vrot.slane %v11720, 2
      %v11762 = vrot.slane %v11721, 2
      %v11763 = vsel %vm8416, %v11761, %v11762
      %v11764 = vrot.slane %v11722, 2
      %v11765 = vrot.slane %v11723, 2
      %v11766 = vsel %vm8416, %v11764, %v11765
      %v11767 = vrot.slane %v11724, 2
      %v11768 = vrot.slane %v11725, 2
      %v11769 = vsel %vm8416, %v11767, %v11768
      %v11770 = vrot.slane %v11726, 2
      %v11771 = vrot.slane %v11727, 2
      %v11772 = vsel %vm8416, %v11770, %v11771
      %v11773 = vrot.slane %v11728, 2
      %v11774 = vrot.slane %v11729, 2
      %v11775 = vsel %vm8416, %v11773, %v11774
      %v11776 = vrot.slane %v11730, 2
      %v11777 = vrot.slane %v11731, 2
      %v11778 = vsel %vm8416, %v11776, %v11777
      %v11779 = vrot.slane %v11732, 2
      %v11780 = vrot.slane %v11733, 2
      %v11781 = vsel %vm8416, %v11779, %v11780
      %v11782 = vrot.slane %v11734, 2
      %v11783 = vrot.slane %v11735, 2
      %v11784 = vsel %vm8416, %v11782, %v11783
      %v11785 = vrot.slane %v11736, 2
      %v11786 = vrot.slane %v11737, 2
      %v11787 = vsel %vm8416, %v11785, %v11786
      %v11808 = vadd.f32 %v11695, %v11760
      %v11809 = vadd.f32 %v11696, %v11759
      %v11810 = vadd.f32 %v11697, %v11763
      %v11811 = vadd.f32 %v11698, %v11762
      %v11812 = vadd.f32 %v11699, %v11766
      %v11813 = vadd.f32 %v11700, %v11765
      %v11814 = vadd.f32 %v11701, %v11769
      %v11815 = vadd.f32 %v11702, %v11768
      %v11816 = vadd.f32 %v11703, %v11772
      %v11817 = vadd.f32 %v11704, %v11771
      %v11818 = vadd.f32 %v11705, %v11775
      %v11819 = vadd.f32 %v11706, %v11774
      %v11820 = vadd.f32 %v11707, %v11778
      %v11821 = vadd.f32 %v11708, %v11777
      %v11822 = vadd.f32 %v11709, %v11781
      %v11823 = vadd.f32 %v11710, %v11780
      %v11824 = vadd.f32 %v11711, %v11784
      %v11825 = vadd.f32 %v11712, %v11783
      %v11826 = vadd.f32 %v11713, %v11787
      %v11827 = vadd.f32 %v11714, %v11786
      %s11828 = sadd.s32 %s7452, 800
      %s11829 = sld [smem:[#allocation8 + %s11828]]
      %v11830 = vstv %s11829
      %v11831 = vmul.f32 %v7356, %v11830
      %v11832 = vmul.f32 %v7357, %v11830
      %v11833 = vmul.f32 %v7358, %v11830
      %v11834 = vmul.f32 %v7359, %v11830
      %v11835 = vmul.f32 %v7360, %v11830
      %v11836 = vmul.f32 %v7361, %v11830
      %v11837 = vmul.f32 %v7362, %v11830
      %v11838 = vmul.f32 %v7363, %v11830
      %v11839 = vmul.f32 %v7364, %v11830
      %v11840 = vmul.f32 %v7365, %v11830
      %v11841 = vmul.f32 %v7366, %v11830
      %v11842 = vmul.f32 %v7367, %v11830
      %v11843 = vmul.f32 %v7368, %v11830
      %v11844 = vmul.f32 %v7369, %v11830
      %v11845 = vmul.f32 %v7370, %v11830
      %v11846 = vmul.f32 %v7371, %v11830
      %v11847 = vmul.f32 %v7372, %v11830
      %v11848 = vmul.f32 %v7373, %v11830
      %v11849 = vmul.f32 %v7374, %v11830
      %v11850 = vmul.f32 %v7375, %v11830
      %v11871 = vrot.slane %v11831, 2
      %v11872 = vrot.slane %v11832, 2
      %v11873 = vsel %vm8416, %v11871, %v11872
      %v11874 = vrot.slane %v11833, 2
      %v11875 = vrot.slane %v11834, 2
      %v11876 = vsel %vm8416, %v11874, %v11875
      %v11877 = vrot.slane %v11835, 2
      %v11878 = vrot.slane %v11836, 2
      %v11879 = vsel %vm8416, %v11877, %v11878
      %v11880 = vrot.slane %v11837, 2
      %v11881 = vrot.slane %v11838, 2
      %v11882 = vsel %vm8416, %v11880, %v11881
      %v11883 = vrot.slane %v11839, 2
      %v11884 = vrot.slane %v11840, 2
      %v11885 = vsel %vm8416, %v11883, %v11884
      %v11886 = vrot.slane %v11841, 2
      %v11887 = vrot.slane %v11842, 2
      %v11888 = vsel %vm8416, %v11886, %v11887
      %v11889 = vrot.slane %v11843, 2
      %v11890 = vrot.slane %v11844, 2
      %v11891 = vsel %vm8416, %v11889, %v11890
      %v11892 = vrot.slane %v11845, 2
      %v11893 = vrot.slane %v11846, 2
      %v11894 = vsel %vm8416, %v11892, %v11893
      %v11895 = vrot.slane %v11847, 2
      %v11896 = vrot.slane %v11848, 2
      %v11897 = vsel %vm8416, %v11895, %v11896
      %v11898 = vrot.slane %v11849, 2
      %v11899 = vrot.slane %v11850, 2
      %v11900 = vsel %vm8416, %v11898, %v11899
      %v11921 = vadd.f32 %v11808, %v11873
      %v11922 = vadd.f32 %v11809, %v11872
      %v11923 = vadd.f32 %v11810, %v11876
      %v11924 = vadd.f32 %v11811, %v11875
      %v11925 = vadd.f32 %v11812, %v11879
      %v11926 = vadd.f32 %v11813, %v11878
      %v11927 = vadd.f32 %v11814, %v11882
      %v11928 = vadd.f32 %v11815, %v11881
      %v11929 = vadd.f32 %v11816, %v11885
      %v11930 = vadd.f32 %v11817, %v11884
      %v11931 = vadd.f32 %v11818, %v11888
      %v11932 = vadd.f32 %v11819, %v11887
      %v11933 = vadd.f32 %v11820, %v11891
      %v11934 = vadd.f32 %v11821, %v11890
      %v11935 = vadd.f32 %v11822, %v11894
      %v11936 = vadd.f32 %v11823, %v11893
      %v11937 = vadd.f32 %v11824, %v11897
      %v11938 = vadd.f32 %v11825, %v11896
      %v11939 = vadd.f32 %v11826, %v11900
      %v11940 = vadd.f32 %v11827, %v11899
      %s11941 = sadd.s32 %s7452, 816
      %s11942 = sld [smem:[#allocation8 + %s11941]]
      %v11943 = vstv %s11942
      %v11944 = vmul.f32 %v7381, %v11943
      %v11945 = vmul.f32 %v7382, %v11943
      %v11946 = vmul.f32 %v7383, %v11943
      %v11947 = vmul.f32 %v7384, %v11943
      %v11948 = vmul.f32 %v7385, %v11943
      %v11949 = vmul.f32 %v7386, %v11943
      %v11950 = vmul.f32 %v7387, %v11943
      %v11951 = vmul.f32 %v7388, %v11943
      %v11952 = vmul.f32 %v7389, %v11943
      %v11953 = vmul.f32 %v7390, %v11943
      %v11954 = vmul.f32 %v7391, %v11943
      %v11955 = vmul.f32 %v7392, %v11943
      %v11956 = vmul.f32 %v7393, %v11943
      %v11957 = vmul.f32 %v7394, %v11943
      %v11958 = vmul.f32 %v7395, %v11943
      %v11959 = vmul.f32 %v7396, %v11943
      %v11960 = vmul.f32 %v7397, %v11943
      %v11961 = vmul.f32 %v7398, %v11943
      %v11962 = vmul.f32 %v7399, %v11943
      %v11963 = vmul.f32 %v7400, %v11943
      %v11984 = vrot.slane %v11944, 2
      %v11985 = vrot.slane %v11945, 2
      %v11986 = vsel %vm8416, %v11984, %v11985
      %v11987 = vrot.slane %v11946, 2
      %v11988 = vrot.slane %v11947, 2
      %v11989 = vsel %vm8416, %v11987, %v11988
      %v11990 = vrot.slane %v11948, 2
      %v11991 = vrot.slane %v11949, 2
      %v11992 = vsel %vm8416, %v11990, %v11991
      %v11993 = vrot.slane %v11950, 2
      %v11994 = vrot.slane %v11951, 2
      %v11995 = vsel %vm8416, %v11993, %v11994
      %v11996 = vrot.slane %v11952, 2
      %v11997 = vrot.slane %v11953, 2
      %v11998 = vsel %vm8416, %v11996, %v11997
      %v11999 = vrot.slane %v11954, 2
      %v12000 = vrot.slane %v11955, 2
      %v12001 = vsel %vm8416, %v11999, %v12000
      %v12002 = vrot.slane %v11956, 2
      %v12003 = vrot.slane %v11957, 2
      %v12004 = vsel %vm8416, %v12002, %v12003
      %v12005 = vrot.slane %v11958, 2
      %v12006 = vrot.slane %v11959, 2
      %v12007 = vsel %vm8416, %v12005, %v12006
      %v12008 = vrot.slane %v11960, 2
      %v12009 = vrot.slane %v11961, 2
      %v12010 = vsel %vm8416, %v12008, %v12009
      %v12011 = vrot.slane %v11962, 2
      %v12012 = vrot.slane %v11963, 2
      %v12013 = vsel %vm8416, %v12011, %v12012
      %v12034 = vadd.f32 %v11921, %v11986
      %v12035 = vadd.f32 %v11922, %v11985
      %v12036 = vadd.f32 %v11923, %v11989
      %v12037 = vadd.f32 %v11924, %v11988
      %v12038 = vadd.f32 %v11925, %v11992
      %v12039 = vadd.f32 %v11926, %v11991
      %v12040 = vadd.f32 %v11927, %v11995
      %v12041 = vadd.f32 %v11928, %v11994
      %v12042 = vadd.f32 %v11929, %v11998
      %v12043 = vadd.f32 %v11930, %v11997
      %v12044 = vadd.f32 %v11931, %v12001
      %v12045 = vadd.f32 %v11932, %v12000
      %v12046 = vadd.f32 %v11933, %v12004
      %v12047 = vadd.f32 %v11934, %v12003
      %v12048 = vadd.f32 %v11935, %v12007
      %v12049 = vadd.f32 %v11936, %v12006
      %v12050 = vadd.f32 %v11937, %v12010
      %v12051 = vadd.f32 %v11938, %v12009
      %v12052 = vadd.f32 %v11939, %v12013
      %v12053 = vadd.f32 %v11940, %v12012
      %s12054 = sadd.s32 %s7452, 832
      %s12055 = sld [smem:[#allocation8 + %s12054]]
      %v12056 = vstv %s12055
      %v12057 = vmul.f32 %v7406, %v12056
      %v12058 = vmul.f32 %v7407, %v12056
      %v12059 = vmul.f32 %v7408, %v12056
      %v12060 = vmul.f32 %v7409, %v12056
      %v12061 = vmul.f32 %v7410, %v12056
      %v12062 = vmul.f32 %v7411, %v12056
      %v12063 = vmul.f32 %v7412, %v12056
      %v12064 = vmul.f32 %v7413, %v12056
      %v12065 = vmul.f32 %v7414, %v12056
      %v12066 = vmul.f32 %v7415, %v12056
      %v12067 = vmul.f32 %v7416, %v12056
      %v12068 = vmul.f32 %v7417, %v12056
      %v12069 = vmul.f32 %v7418, %v12056
      %v12070 = vmul.f32 %v7419, %v12056
      %v12071 = vmul.f32 %v7420, %v12056
      %v12072 = vmul.f32 %v7421, %v12056
      %v12073 = vmul.f32 %v7422, %v12056
      %v12074 = vmul.f32 %v7423, %v12056
      %v12075 = vmul.f32 %v7424, %v12056
      %v12076 = vmul.f32 %v7425, %v12056
      %v12097 = vrot.slane %v12057, 2
      %v12098 = vrot.slane %v12058, 2
      %v12099 = vsel %vm8416, %v12097, %v12098
      %v12100 = vrot.slane %v12059, 2
      %v12101 = vrot.slane %v12060, 2
      %v12102 = vsel %vm8416, %v12100, %v12101
      %v12103 = vrot.slane %v12061, 2
      %v12104 = vrot.slane %v12062, 2
      %v12105 = vsel %vm8416, %v12103, %v12104
      %v12106 = vrot.slane %v12063, 2
      %v12107 = vrot.slane %v12064, 2
      %v12108 = vsel %vm8416, %v12106, %v12107
      %v12109 = vrot.slane %v12065, 2
      %v12110 = vrot.slane %v12066, 2
      %v12111 = vsel %vm8416, %v12109, %v12110
      %v12112 = vrot.slane %v12067, 2
      %v12113 = vrot.slane %v12068, 2
      %v12114 = vsel %vm8416, %v12112, %v12113
      %v12115 = vrot.slane %v12069, 2
      %v12116 = vrot.slane %v12070, 2
      %v12117 = vsel %vm8416, %v12115, %v12116
      %v12118 = vrot.slane %v12071, 2
      %v12119 = vrot.slane %v12072, 2
      %v12120 = vsel %vm8416, %v12118, %v12119
      %v12121 = vrot.slane %v12073, 2
      %v12122 = vrot.slane %v12074, 2
      %v12123 = vsel %vm8416, %v12121, %v12122
      %v12124 = vrot.slane %v12075, 2
      %v12125 = vrot.slane %v12076, 2
      %v12126 = vsel %vm8416, %v12124, %v12125
      %v12147 = vadd.f32 %v12034, %v12099
      %v12148 = vadd.f32 %v12035, %v12098
      %v12149 = vadd.f32 %v12036, %v12102
      %v12150 = vadd.f32 %v12037, %v12101
      %v12151 = vadd.f32 %v12038, %v12105
      %v12152 = vadd.f32 %v12039, %v12104
      %v12153 = vadd.f32 %v12040, %v12108
      %v12154 = vadd.f32 %v12041, %v12107
      %v12155 = vadd.f32 %v12042, %v12111
      %v12156 = vadd.f32 %v12043, %v12110
      %v12157 = vadd.f32 %v12044, %v12114
      %v12158 = vadd.f32 %v12045, %v12113
      %v12159 = vadd.f32 %v12046, %v12117
      %v12160 = vadd.f32 %v12047, %v12116
      %v12161 = vadd.f32 %v12048, %v12120
      %v12162 = vadd.f32 %v12049, %v12119
      %v12163 = vadd.f32 %v12050, %v12123
      %v12164 = vadd.f32 %v12051, %v12122
      %v12165 = vadd.f32 %v12052, %v12126
      %v12166 = vadd.f32 %v12053, %v12125
      %s12167 = sadd.s32 %s7452, 848
      %s12168 = sld [smem:[#allocation8 + %s12167]]
      %v12169 = vstv %s12168
      %v12170 = vmul.f32 %v7431, %v12169
      %v12171 = vmul.f32 %v7432, %v12169
      %v12172 = vmul.f32 %v7433, %v12169
      %v12173 = vmul.f32 %v7434, %v12169
      %v12174 = vmul.f32 %v7435, %v12169
      %v12175 = vmul.f32 %v7436, %v12169
      %v12176 = vmul.f32 %v7437, %v12169
      %v12177 = vmul.f32 %v7438, %v12169
      %v12178 = vmul.f32 %v7439, %v12169
      %v12179 = vmul.f32 %v7440, %v12169
      %v12180 = vmul.f32 %v7441, %v12169
      %v12181 = vmul.f32 %v7442, %v12169
      %v12182 = vmul.f32 %v7443, %v12169
      %v12183 = vmul.f32 %v7444, %v12169
      %v12184 = vmul.f32 %v7445, %v12169
      %v12185 = vmul.f32 %v7446, %v12169
      %v12186 = vmul.f32 %v7447, %v12169
      %v12187 = vmul.f32 %v7448, %v12169
      %v12188 = vmul.f32 %v7449, %v12169
      %v12189 = vmul.f32 %v7450, %v12169
      %v12210 = vrot.slane %v12170, 2
      %v12211 = vrot.slane %v12171, 2
      %v12212 = vsel %vm8416, %v12210, %v12211
      %v12213 = vrot.slane %v12172, 2
      %v12214 = vrot.slane %v12173, 2
      %v12215 = vsel %vm8416, %v12213, %v12214
      %v12216 = vrot.slane %v12174, 2
      %v12217 = vrot.slane %v12175, 2
      %v12218 = vsel %vm8416, %v12216, %v12217
      %v12219 = vrot.slane %v12176, 2
      %v12220 = vrot.slane %v12177, 2
      %v12221 = vsel %vm8416, %v12219, %v12220
      %v12222 = vrot.slane %v12178, 2
      %v12223 = vrot.slane %v12179, 2
      %v12224 = vsel %vm8416, %v12222, %v12223
      %v12225 = vrot.slane %v12180, 2
      %v12226 = vrot.slane %v12181, 2
      %v12227 = vsel %vm8416, %v12225, %v12226
      %v12228 = vrot.slane %v12182, 2
      %v12229 = vrot.slane %v12183, 2
      %v12230 = vsel %vm8416, %v12228, %v12229
      %v12231 = vrot.slane %v12184, 2
      %v12232 = vrot.slane %v12185, 2
      %v12233 = vsel %vm8416, %v12231, %v12232
      %v12234 = vrot.slane %v12186, 2
      %v12235 = vrot.slane %v12187, 2
      %v12236 = vsel %vm8416, %v12234, %v12235
      %v12237 = vrot.slane %v12188, 2
      %v12238 = vrot.slane %v12189, 2
      %v12239 = vsel %vm8416, %v12237, %v12238
      %v12260 = vadd.f32 %v12147, %v12212
      %v12261 = vadd.f32 %v12148, %v12211
      %v12262 = vadd.f32 %v12149, %v12215
      %v12263 = vadd.f32 %v12150, %v12214
      %v12264 = vadd.f32 %v12151, %v12218
      %v12265 = vadd.f32 %v12152, %v12217
      %v12266 = vadd.f32 %v12153, %v12221
      %v12267 = vadd.f32 %v12154, %v12220
      %v12268 = vadd.f32 %v12155, %v12224
      %v12269 = vadd.f32 %v12156, %v12223
      %v12270 = vadd.f32 %v12157, %v12227
      %v12271 = vadd.f32 %v12158, %v12226
      %v12272 = vadd.f32 %v12159, %v12230
      %v12273 = vadd.f32 %v12160, %v12229
      %v12274 = vadd.f32 %v12161, %v12233
      %v12275 = vadd.f32 %v12162, %v12232
      %v12276 = vadd.f32 %v12163, %v12236
      %v12277 = vadd.f32 %v12164, %v12235
      %v12278 = vadd.f32 %v12165, %v12239
      %v12279 = vadd.f32 %v12166, %v12238
      %s12280 = sld [smem:[#allocation9 + %s7452]]
      %v12281 = vstv %s12280
      %v12282 = vadd.f32 %v12260, %v12281
      %v12283 = vadd.f32 %v12261, %v12281
      %v12284 = vadd.f32 %v12262, %v12281
      %v12285 = vadd.f32 %v12263, %v12281
      %v12286 = vadd.f32 %v12264, %v12281
      %v12287 = vadd.f32 %v12265, %v12281
      %v12288 = vadd.f32 %v12266, %v12281
      %v12289 = vadd.f32 %v12267, %v12281
      %v12290 = vadd.f32 %v12268, %v12281
      %v12291 = vadd.f32 %v12269, %v12281
      %v12292 = vadd.f32 %v12270, %v12281
      %v12293 = vadd.f32 %v12271, %v12281
      %v12294 = vadd.f32 %v12272, %v12281
      %v12295 = vadd.f32 %v12273, %v12281
      %v12296 = vadd.f32 %v12274, %v12281
      %v12297 = vadd.f32 %v12275, %v12281
      %v12298 = vadd.f32 %v12276, %v12281
      %v12299 = vadd.f32 %v12277, %v12281
      %v12300 = vadd.f32 %v12278, %v12281
      %v12301 = vadd.f32 %v12279, %v12281
      %v12302 = vmax.f32 %v12282, 0.0
      %v12303 = vmax.f32 %v12283, 0.0
      %v12304 = vmax.f32 %v12284, 0.0
      %v12305 = vmax.f32 %v12285, 0.0
      %v12306 = vmax.f32 %v12286, 0.0
      %v12307 = vmax.f32 %v12287, 0.0
      %v12308 = vmax.f32 %v12288, 0.0
      %v12309 = vmax.f32 %v12289, 0.0
      %v12310 = vmax.f32 %v12290, 0.0
      %v12311 = vmax.f32 %v12291, 0.0
      %v12312 = vmax.f32 %v12292, 0.0
      %v12313 = vmax.f32 %v12293, 0.0
      %v12314 = vmax.f32 %v12294, 0.0
      %v12315 = vmax.f32 %v12295, 0.0
      %v12316 = vmax.f32 %v12296, 0.0
      %v12317 = vmax.f32 %v12297, 0.0
      %v12318 = vmax.f32 %v12298, 0.0
      %v12319 = vmax.f32 %v12299, 0.0
      %v12320 = vmax.f32 %v12300, 0.0
      %v12321 = vmax.f32 %v12301, 0.0
      %v12322 = vmax.f32 %v12302, %v12304
      %v12323 = vmax.f32 %v12303, %v12305
      %v12324 = vmax.f32 %v12306, %v12308
      %v12325 = vmax.f32 %v12307, %v12309
      %v12326 = vmax.f32 %v12310, %v12312
      %v12327 = vmax.f32 %v12311, %v12313
      %v12328 = vmax.f32 %v12314, %v12316
      %v12329 = vmax.f32 %v12315, %v12317
      %v12330 = vmax.f32 %v12318, %v12320
      %v12331 = vmax.f32 %v12319, %v12321
      %v12342 = vcombine.high %v12322, %v12322
      %v12344 = vunpack.c.l.s4 1983009808
      %v12345 = vunpack.c.0.s8 %v12344
      %v12346 = vlaneseq
      %v12347 = vshrl.u32 %v12346, 7
      %v12348 = vsub.s32 %v12345, %v12347
      %v12349 = vrot.slane %v12322, %v12348
      %v12351 = vunpack.c.l.s4 1983009808
      %v12352 = vunpack.c.0.s8 %v12351
      %v12353 = vlaneseq
      %v12354 = vshrl.u32 %v12353, 7
      %v12355 = vsub.s32 %v12352, %v12354
      %v12356 = vrot.slane %v12342, %v12355
      %v12357 = vcombine.high %v12349, %v12349
      %v12358 = vcombine.high %v12356, %v12356
      %v12360 = vunpack.c.l.s4 1983009808
      %v12361 = vunpack.c.0.s8 %v12360
      %v12362 = vlaneseq
      %v12363 = vshrl.u32 %v12362, 7
      %v12364 = vsub.s32 %v12361, %v12363
      %v12365 = vrot.slane %v12323, %v12364
      %v12366 = vcombine.high %v12324, %v12324
      %v12368 = vunpack.c.l.s4 1983009808
      %v12369 = vunpack.c.0.s8 %v12368
      %v12370 = vlaneseq
      %v12371 = vshrl.u32 %v12370, 7
      %v12372 = vsub.s32 %v12369, %v12371
      %v12373 = vrot.slane %v12324, %v12372
      %v12375 = vunpack.c.l.s4 1983009808
      %v12376 = vunpack.c.0.s8 %v12375
      %v12377 = vlaneseq
      %v12378 = vshrl.u32 %v12377, 7
      %v12379 = vsub.s32 %v12376, %v12378
      %v12380 = vrot.slane %v12366, %v12379
      %v12381 = vcombine.high %v12373, %v12373
      %v12382 = vcombine.high %v12380, %v12380
      %v12384 = vunpack.c.l.s4 1983009808
      %v12385 = vunpack.c.0.s8 %v12384
      %v12386 = vlaneseq
      %v12387 = vshrl.u32 %v12386, 7
      %v12388 = vsub.s32 %v12385, %v12387
      %v12389 = vrot.slane %v12325, %v12388
      %v12390 = vcombine.high %v12326, %v12326
      %v12392 = vunpack.c.l.s4 1983009808
      %v12393 = vunpack.c.0.s8 %v12392
      %v12394 = vlaneseq
      %v12395 = vshrl.u32 %v12394, 7
      %v12396 = vsub.s32 %v12393, %v12395
      %v12397 = vrot.slane %v12326, %v12396
      %v12399 = vunpack.c.l.s4 1983009808
      %v12400 = vunpack.c.0.s8 %v12399
      %v12401 = vlaneseq
      %v12402 = vshrl.u32 %v12401, 7
      %v12403 = vsub.s32 %v12400, %v12402
      %v12404 = vrot.slane %v12390, %v12403
      %v12405 = vcombine.high %v12397, %v12397
      %v12406 = vcombine.high %v12404, %v12404
      %v12408 = vunpack.c.l.s4 1983009808
      %v12409 = vunpack.c.0.s8 %v12408
      %v12410 = vlaneseq
      %v12411 = vshrl.u32 %v12410, 7
      %v12412 = vsub.s32 %v12409, %v12411
      %v12413 = vrot.slane %v12327, %v12412
      %v12414 = vcombine.high %v12328, %v12328
      %v12416 = vunpack.c.l.s4 1983009808
      %v12417 = vunpack.c.0.s8 %v12416
      %v12418 = vlaneseq
      %v12419 = vshrl.u32 %v12418, 7
      %v12420 = vsub.s32 %v12417, %v12419
      %v12421 = vrot.slane %v12328, %v12420
      %v12423 = vunpack.c.l.s4 1983009808
      %v12424 = vunpack.c.0.s8 %v12423
      %v12425 = vlaneseq
      %v12426 = vshrl.u32 %v12425, 7
      %v12427 = vsub.s32 %v12424, %v12426
      %v12428 = vrot.slane %v12414, %v12427
      %v12429 = vcombine.high %v12421, %v12421
      %v12430 = vcombine.high %v12428, %v12428
      %v12432 = vunpack.c.l.s4 1983009808
      %v12433 = vunpack.c.0.s8 %v12432
      %v12434 = vlaneseq
      %v12435 = vshrl.u32 %v12434, 7
      %v12436 = vsub.s32 %v12433, %v12435
      %v12437 = vrot.slane %v12329, %v12436
      %v12438 = vcombine.high %v12330, %v12330
      %v12440 = vunpack.c.l.s4 1983009808
      %v12441 = vunpack.c.0.s8 %v12440
      %v12442 = vlaneseq
      %v12443 = vshrl.u32 %v12442, 7
      %v12444 = vsub.s32 %v12441, %v12443
      %v12445 = vrot.slane %v12330, %v12444
      %v12447 = vunpack.c.l.s4 1983009808
      %v12448 = vunpack.c.0.s8 %v12447
      %v12449 = vlaneseq
      %v12450 = vshrl.u32 %v12449, 7
      %v12451 = vsub.s32 %v12448, %v12450
      %v12452 = vrot.slane %v12438, %v12451
      %v12453 = vcombine.high %v12445, %v12445
      %v12454 = vcombine.high %v12452, %v12452
      %v12456 = vunpack.c.l.s4 1983009808
      %v12457 = vunpack.c.0.s8 %v12456
      %v12458 = vlaneseq
      %v12459 = vshrl.u32 %v12458, 7
      %v12460 = vsub.s32 %v12457, %v12459
      %v12461 = vrot.slane %v12331, %v12460
      %v12487 = vrot.slane %v12349, 7
      %v12488 = vrot.slane %v12487, 2
      %v12489 = vrot.slane %v12357, 7
      %v12490 = vrot.slane %v12489, 2
      %v12491 = vrot.slane %v12356, 7
      %v12492 = vrot.slane %v12491, 2
      %v12493 = vrot.slane %v12358, 7
      %v12494 = vrot.slane %v12493, 2
      %v12495 = vrot.slane %v12365, 7
      %v12496 = vrot.slane %v12495, 2
      %v12497 = vrot.slane %v12373, 7
      %v12498 = vrot.slane %v12497, 2
      %v12499 = vrot.slane %v12381, 7
      %v12500 = vrot.slane %v12499, 2
      %v12501 = vrot.slane %v12380, 7
      %v12502 = vrot.slane %v12501, 2
      %v12503 = vrot.slane %v12382, 7
      %v12504 = vrot.slane %v12503, 2
      %v12505 = vrot.slane %v12389, 7
      %v12506 = vrot.slane %v12505, 2
      %v12507 = vrot.slane %v12397, 7
      %v12508 = vrot.slane %v12507, 2
      %v12509 = vrot.slane %v12405, 7
      %v12510 = vrot.slane %v12509, 2
      %v12511 = vrot.slane %v12404, 7
      %v12512 = vrot.slane %v12511, 2
      %v12513 = vrot.slane %v12406, 7
      %v12514 = vrot.slane %v12513, 2
      %v12515 = vrot.slane %v12413, 7
      %v12516 = vrot.slane %v12515, 2
      %v12517 = vrot.slane %v12421, 7
      %v12518 = vrot.slane %v12517, 2
      %v12519 = vrot.slane %v12429, 7
      %v12520 = vrot.slane %v12519, 2
      %v12521 = vrot.slane %v12428, 7
      %v12522 = vrot.slane %v12521, 2
      %v12523 = vrot.slane %v12430, 7
      %v12524 = vrot.slane %v12523, 2
      %v12525 = vrot.slane %v12437, 7
      %v12526 = vrot.slane %v12525, 2
      %v12527 = vrot.slane %v12445, 7
      %v12528 = vrot.slane %v12527, 2
      %v12529 = vrot.slane %v12453, 7
      %v12530 = vrot.slane %v12529, 2
      %v12531 = vrot.slane %v12452, 7
      %v12532 = vrot.slane %v12531, 2
      %v12533 = vrot.slane %v12454, 7
      %v12534 = vrot.slane %v12533, 2
      %v12535 = vrot.slane %v12461, 7
      %v12536 = vrot.slane %v12535, 2
      %v12562 = vmax.f32 %v12349, %v12488
      %v12563 = vmax.f32 %v12357, %v12490
      %v12564 = vmax.f32 %v12356, %v12492
      %v12565 = vmax.f32 %v12358, %v12494
      %v12566 = vmax.f32 %v12365, %v12496
      %v12567 = vmax.f32 %v12373, %v12498
      %v12568 = vmax.f32 %v12381, %v12500
      %v12569 = vmax.f32 %v12380, %v12502
      %v12570 = vmax.f32 %v12382, %v12504
      %v12571 = vmax.f32 %v12389, %v12506
      %v12572 = vmax.f32 %v12397, %v12508
      %v12573 = vmax.f32 %v12405, %v12510
      %v12574 = vmax.f32 %v12404, %v12512
      %v12575 = vmax.f32 %v12406, %v12514
      %v12576 = vmax.f32 %v12413, %v12516
      %v12577 = vmax.f32 %v12421, %v12518
      %v12578 = vmax.f32 %v12429, %v12520
      %v12579 = vmax.f32 %v12428, %v12522
      %v12580 = vmax.f32 %v12430, %v12524
      %v12581 = vmax.f32 %v12437, %v12526
      %v12582 = vmax.f32 %v12445, %v12528
      %v12583 = vmax.f32 %v12453, %v12530
      %v12584 = vmax.f32 %v12452, %v12532
      %v12585 = vmax.f32 %v12454, %v12534
      %v12586 = vmax.f32 %v12461, %v12536
      %v12612 = vlaneseq
      %v12613 = vshrl.u32 %v12612, 7
      %v12614 = vsub.s32 0, %v12613
      %v12615 = vrot.slane %v12562, %v12614
      %v12616 = vlaneseq
      %v12617 = vshrl.u32 %v12616, 7
      %v12618 = vsub.s32 0, %v12617
      %v12619 = vrot.slane %v12563, %v12618
      %v12620 = vlaneseq
      %v12621 = vshrl.u32 %v12620, 7
      %v12622 = vsub.s32 0, %v12621
      %v12623 = vrot.slane %v12564, %v12622
      %v12624 = vlaneseq
      %v12625 = vshrl.u32 %v12624, 7
      %v12626 = vsub.s32 0, %v12625
      %v12627 = vrot.slane %v12565, %v12626
      %v12628 = vlaneseq
      %v12629 = vshrl.u32 %v12628, 7
      %v12630 = vsub.s32 0, %v12629
      %v12631 = vrot.slane %v12566, %v12630
      %v12632 = vlaneseq
      %v12633 = vshrl.u32 %v12632, 7
      %v12634 = vsub.s32 0, %v12633
      %v12635 = vrot.slane %v12567, %v12634
      %v12636 = vlaneseq
      %v12637 = vshrl.u32 %v12636, 7
      %v12638 = vsub.s32 0, %v12637
      %v12639 = vrot.slane %v12568, %v12638
      %v12640 = vlaneseq
      %v12641 = vshrl.u32 %v12640, 7
      %v12642 = vsub.s32 0, %v12641
      %v12643 = vrot.slane %v12569, %v12642
      %v12644 = vlaneseq
      %v12645 = vshrl.u32 %v12644, 7
      %v12646 = vsub.s32 0, %v12645
      %v12647 = vrot.slane %v12570, %v12646
      %v12648 = vlaneseq
      %v12649 = vshrl.u32 %v12648, 7
      %v12650 = vsub.s32 0, %v12649
      %v12651 = vrot.slane %v12571, %v12650
      %v12652 = vlaneseq
      %v12653 = vshrl.u32 %v12652, 7
      %v12654 = vsub.s32 0, %v12653
      %v12655 = vrot.slane %v12572, %v12654
      %v12656 = vlaneseq
      %v12657 = vshrl.u32 %v12656, 7
      %v12658 = vsub.s32 0, %v12657
      %v12659 = vrot.slane %v12573, %v12658
      %v12660 = vlaneseq
      %v12661 = vshrl.u32 %v12660, 7
      %v12662 = vsub.s32 0, %v12661
      %v12663 = vrot.slane %v12574, %v12662
      %v12664 = vlaneseq
      %v12665 = vshrl.u32 %v12664, 7
      %v12666 = vsub.s32 0, %v12665
      %v12667 = vrot.slane %v12575, %v12666
      %v12668 = vlaneseq
      %v12669 = vshrl.u32 %v12668, 7
      %v12670 = vsub.s32 0, %v12669
      %v12671 = vrot.slane %v12576, %v12670
      %v12672 = vlaneseq
      %v12673 = vshrl.u32 %v12672, 7
      %v12674 = vsub.s32 0, %v12673
      %v12675 = vrot.slane %v12577, %v12674
      %v12676 = vlaneseq
      %v12677 = vshrl.u32 %v12676, 7
      %v12678 = vsub.s32 0, %v12677
      %v12679 = vrot.slane %v12578, %v12678
      %v12680 = vlaneseq
      %v12681 = vshrl.u32 %v12680, 7
      %v12682 = vsub.s32 0, %v12681
      %v12683 = vrot.slane %v12579, %v12682
      %v12684 = vlaneseq
      %v12685 = vshrl.u32 %v12684, 7
      %v12686 = vsub.s32 0, %v12685
      %v12687 = vrot.slane %v12580, %v12686
      %v12688 = vlaneseq
      %v12689 = vshrl.u32 %v12688, 7
      %v12690 = vsub.s32 0, %v12689
      %v12691 = vrot.slane %v12581, %v12690
      %v12692 = vlaneseq
      %v12693 = vshrl.u32 %v12692, 7
      %v12694 = vsub.s32 0, %v12693
      %v12695 = vrot.slane %v12582, %v12694
      %v12696 = vlaneseq
      %v12697 = vshrl.u32 %v12696, 7
      %v12698 = vsub.s32 0, %v12697
      %v12699 = vrot.slane %v12583, %v12698
      %v12700 = vlaneseq
      %v12701 = vshrl.u32 %v12700, 7
      %v12702 = vsub.s32 0, %v12701
      %v12703 = vrot.slane %v12584, %v12702
      %v12704 = vlaneseq
      %v12705 = vshrl.u32 %v12704, 7
      %v12706 = vsub.s32 0, %v12705
      %v12707 = vrot.slane %v12585, %v12706
      %v12708 = vlaneseq
      %v12709 = vshrl.u32 %v12708, 7
      %v12710 = vsub.s32 0, %v12709
      %v12711 = vrot.slane %v12586, %v12710
      %vm12712 = vcmask 1041409
      %v12713 = vsel %vm12712, %v12619, %v12615
      %vm12714 = vcmask 1042434
      %v12715 = vsel %vm12714, %v12623, %v12713
      %vm12716 = vcmask 1043459
      %v12717 = vsel %vm12716, %v12627, %v12715
      %vm12718 = vcmask 1044484
      %v12719 = vsel %vm12718, %v12631, %v12717
      %vm12720 = vcmask 1045509
      %v12721 = vsel %vm12720, %v12635, %v12719
      %vm12722 = vcmask 1046534
      %v12723 = vsel %vm12722, %v12639, %v12721
      %vm12724 = vcmask 1047559
      %v12725 = vsel %vm12724, %v12643, %v12723
      %v12726 = vsel %vm12712, %v12651, %v12647
      %v12727 = vsel %vm12714, %v12655, %v12726
      %v12728 = vsel %vm12716, %v12659, %v12727
      %v12729 = vsel %vm12718, %v12663, %v12728
      %v12730 = vsel %vm12720, %v12667, %v12729
      %v12731 = vsel %vm12722, %v12671, %v12730
      %v12732 = vsel %vm12724, %v12675, %v12731
      %v12733 = vsel %vm12712, %v12683, %v12679
      %v12734 = vsel %vm12714, %v12687, %v12733
      %v12735 = vsel %vm12716, %v12691, %v12734
      %v12736 = vsel %vm12718, %v12695, %v12735
      %v12737 = vsel %vm12720, %v12699, %v12736
      %v12738 = vsel %vm12722, %v12703, %v12737
      %v12739 = vsel %vm12724, %v12707, %v12738
      %vm12744 = vcmask 1040384
      %v12745 = vsel %vm12744, %v12711, 0.0
      %s12746 = smul.u32 %s7452, 32
      %s12747 = scalar_lea.vmem [#allocation3], %s12746
      %12748 = vst [vmem:[%s12747] sm:$0xff] %v12725
      %12749 = vst [vmem:[%s12747 + $0x8] sm:$0xff] %v12732
      %12750 = vst [vmem:[%s12747 + $0x10] sm:$0xff] %v12739
      %12751 = vst [vmem:[%s12747 + $0x18] sm:$0xff] %v12745
    $region73: #{convolutional_network_forward.1} parent=1 // loop_footer
      %s7456 = sadd.s32 1, %s7452
    $region74: #{convolutional_network_forward.1} parent=1 // loop_footer_branch
      %7451 = sbr.rel target = $region70
    $region75: #{convolutional_network_forward.1} parent=1 // loop_exit
      _
    %v12752 = vld [vmem:[#allocation3] sm:$0xff]
    %v12753 = vld [vmem:[#allocation3 + $0x8] sm:$0xff]
    %v12754 = vld [vmem:[#allocation3 + $0x10] sm:$0xff]
    %v12755 = vld [vmem:[#allocation3 + $0x18] sm:$0xff]
    %v12756 = vld [vmem:[#allocation3 + $0x20] sm:$0xff]
    %v12757 = vld [vmem:[#allocation3 + $0x28] sm:$0xff]
    %v12758 = vld [vmem:[#allocation3 + $0x30] sm:$0xff]
    %v12759 = vld [vmem:[#allocation3 + $0x38] sm:$0xff]
    %v12760 = vld [vmem:[#allocation3 + $0x40] sm:$0xff]
    %v12761 = vld [vmem:[#allocation3 + $0x48] sm:$0xff]
    %v12762 = vld [vmem:[#allocation3 + $0x50] sm:$0xff]
    %v12763 = vld [vmem:[#allocation3 + $0x58] sm:$0xff]
    %v12764 = vld [vmem:[#allocation3 + $0x60] sm:$0xff]
    %v12765 = vld [vmem:[#allocation3 + $0x68] sm:$0xff]
    %v12766 = vld [vmem:[#allocation3 + $0x70] sm:$0xff]
    %v12767 = vld [vmem:[#allocation3 + $0x78] sm:$0xff]
    %v12768 = vld [vmem:[#allocation3 + $0x80] sm:$0xff]
    %v12769 = vld [vmem:[#allocation3 + $0x88] sm:$0xff]
    %v12770 = vld [vmem:[#allocation3 + $0x90] sm:$0xff]
    %v12771 = vld [vmem:[#allocation3 + $0x98] sm:$0xff]
    %v12772 = vld [vmem:[#allocation3 + $0xa0] sm:$0xff]
    %v12773 = vld [vmem:[#allocation3 + $0xa8] sm:$0xff]
    %v12774 = vld [vmem:[#allocation3 + $0xb0] sm:$0xff]
    %v12775 = vld [vmem:[#allocation3 + $0xb8] sm:$0xff]
    %v12776 = vld [vmem:[#allocation3 + $0xc0] sm:$0xff]
    %v12777 = vld [vmem:[#allocation3 + $0xc8] sm:$0xff]
    %v12778 = vld [vmem:[#allocation3 + $0xd0] sm:$0xff]
    %v12779 = vld [vmem:[#allocation3 + $0xd8] sm:$0xff]
    %v12780 = vld [vmem:[#allocation3 + $0xe0] sm:$0xff]
    %v12781 = vld [vmem:[#allocation3 + $0xe8] sm:$0xff]
    %v12782 = vld [vmem:[#allocation3 + $0xf0] sm:$0xff]
    %v12783 = vld [vmem:[#allocation3 + $0xf8] sm:$0xff]
    %v12784 = vld [vmem:[#allocation3 + $0x100] sm:$0xff]
    %v12785 = vld [vmem:[#allocation3 + $0x108] sm:$0xff]
    %v12786 = vld [vmem:[#allocation3 + $0x110] sm:$0xff]
    %v12787 = vld [vmem:[#allocation3 + $0x118] sm:$0xff]
    %v12788 = vld [vmem:[#allocation3 + $0x120] sm:$0xff]
    %v12789 = vld [vmem:[#allocation3 + $0x128] sm:$0xff]
    %v12790 = vld [vmem:[#allocation3 + $0x130] sm:$0xff]
    %v12791 = vld [vmem:[#allocation3 + $0x138] sm:$0xff]
    %v12792 = vld [vmem:[#allocation3 + $0x140] sm:$0xff]
    %v12793 = vld [vmem:[#allocation3 + $0x148] sm:$0xff]
    %v12794 = vld [vmem:[#allocation3 + $0x150] sm:$0xff]
    %v12795 = vld [vmem:[#allocation3 + $0x158] sm:$0xff]
    %v12796 = vld [vmem:[#allocation3 + $0x160] sm:$0xff]
    %v12797 = vld [vmem:[#allocation3 + $0x168] sm:$0xff]
    %v12798 = vld [vmem:[#allocation3 + $0x170] sm:$0xff]
    %v12799 = vld [vmem:[#allocation3 + $0x178] sm:$0xff]
    %v12800 = vld [vmem:[#allocation3 + $0x180] sm:$0xff]
    %v12801 = vld [vmem:[#allocation3 + $0x188] sm:$0xff]
    %v12802 = vld [vmem:[#allocation3 + $0x190] sm:$0xff]
    %v12803 = vld [vmem:[#allocation3 + $0x198] sm:$0xff]
    %v12804 = vld [vmem:[#allocation3 + $0x1a0] sm:$0xff]
    %v12805 = vld [vmem:[#allocation3 + $0x1a8] sm:$0xff]
    %v12806 = vld [vmem:[#allocation3 + $0x1b0] sm:$0xff]
    %v12807 = vld [vmem:[#allocation3 + $0x1b8] sm:$0xff]
    %v12808 = vld [vmem:[#allocation3 + $0x1c0] sm:$0xff]
    %v12809 = vld [vmem:[#allocation3 + $0x1c8] sm:$0xff]
    %v12810 = vld [vmem:[#allocation3 + $0x1d0] sm:$0xff]
    %v12811 = vld [vmem:[#allocation3 + $0x1d8] sm:$0xff]
    %v12812 = vld [vmem:[#allocation3 + $0x1e0] sm:$0xff]
    %v12813 = vld [vmem:[#allocation3 + $0x1e8] sm:$0xff]
    %v12814 = vld [vmem:[#allocation3 + $0x1f0] sm:$0xff]
    %v12815 = vld [vmem:[#allocation3 + $0x1f8] sm:$0xff]
    %v12816 = vld [vmem:[%s5] sm:$0xff]
    %v12817 = vld [vmem:[%s5 + $0x8] sm:$0xff]
    %v12818 = vld [vmem:[%s5 + $0x10] sm:$0xff]
    %v12819 = vld [vmem:[%s5 + $0x18] sm:$0xff]
    %v12820 = vld [vmem:[%s5 + $0x20] sm:$0xff]
    %v12821 = vld [vmem:[%s5 + $0x28] sm:$0xff]
    %v12822 = vld [vmem:[%s5 + $0x30] sm:$0xff]
    %v12823 = vld [vmem:[%s5 + $0x38] sm:$0xff]
    %v12824 = vld [vmem:[%s5 + $0x40] sm:$0xff]
    %v12825 = vld [vmem:[%s5 + $0x48] sm:$0xff]
    %v12826 = vld [vmem:[%s5 + $0x50] sm:$0xff]
    %v12827 = vld [vmem:[%s5 + $0x58] sm:$0xff]
    %v12828 = vld [vmem:[%s5 + $0x60] sm:$0xff]
    %v12829 = vld [vmem:[%s5 + $0x68] sm:$0xff]
    %v12830 = vld [vmem:[%s5 + $0x70] sm:$0xff]
    %v12831 = vld [vmem:[%s5 + $0x78] sm:$0xff]
    %v12832 = vld [vmem:[%s5 + $0x80] sm:$0xff]
    %v12833 = vld [vmem:[%s5 + $0x88] sm:$0xff]
    %v12834 = vld [vmem:[%s5 + $0x90] sm:$0xff]
    %v12835 = vld [vmem:[%s5 + $0x98] sm:$0xff]
    %v12836 = vld [vmem:[%s5 + $0xa0] sm:$0xff]
    %v12837 = vld [vmem:[%s5 + $0xa8] sm:$0xff]
    %v12838 = vld [vmem:[%s5 + $0xb0] sm:$0xff]
    %v12839 = vld [vmem:[%s5 + $0xb8] sm:$0xff]
    %v12840 = vld [vmem:[%s5 + $0xc0] sm:$0xff]
    %v12841 = vld [vmem:[%s5 + $0xc8] sm:$0xff]
    %v12842 = vld [vmem:[%s5 + $0xd0] sm:$0xff]
    %v12843 = vld [vmem:[%s5 + $0xd8] sm:$0xff]
    %v12844 = vld [vmem:[%s5 + $0xe0] sm:$0xff]
    %v12845 = vld [vmem:[%s5 + $0xe8] sm:$0xff]
    %v12846 = vld [vmem:[%s5 + $0xf0] sm:$0xff]
    %v12847 = vld [vmem:[%s5 + $0xf8] sm:$0xff]
    %v12848 = vld [vmem:[%s5 + $0x100] sm:$0xff]
    %v12849 = vld [vmem:[%s5 + $0x108] sm:$0xff]
    %v12850 = vld [vmem:[%s5 + $0x110] sm:$0xff]
    %v12851 = vld [vmem:[%s5 + $0x118] sm:$0xff]
    %v12852 = vld [vmem:[%s5 + $0x120] sm:$0xff]
    %v12853 = vld [vmem:[%s5 + $0x128] sm:$0xff]
    %v12854 = vld [vmem:[%s5 + $0x130] sm:$0xff]
    %v12855 = vld [vmem:[%s5 + $0x138] sm:$0xff]
    %v12856 = vld [vmem:[%s5 + $0x140] sm:$0xff]
    %v12857 = vld [vmem:[%s5 + $0x148] sm:$0xff]
    %v12858 = vld [vmem:[%s5 + $0x150] sm:$0xff]
    %v12859 = vld [vmem:[%s5 + $0x158] sm:$0xff]
    %v12860 = vld [vmem:[%s5 + $0x160] sm:$0xff]
    %v12861 = vld [vmem:[%s5 + $0x168] sm:$0xff]
    %v12862 = vld [vmem:[%s5 + $0x170] sm:$0xff]
    %v12863 = vld [vmem:[%s5 + $0x178] sm:$0xff]
    %v12864 = vld [vmem:[%s5 + $0x180] sm:$0xff]
    %v12865 = vld [vmem:[%s5 + $0x188] sm:$0xff]
    %v12866 = vld [vmem:[%s5 + $0x190] sm:$0xff]
    %v12867 = vld [vmem:[%s5 + $0x198] sm:$0xff]
    %v12868 = vld [vmem:[%s5 + $0x1a0] sm:$0xff]
    %v12869 = vld [vmem:[%s5 + $0x1a8] sm:$0xff]
    %v12870 = vld [vmem:[%s5 + $0x1b0] sm:$0xff]
    %v12871 = vld [vmem:[%s5 + $0x1b8] sm:$0xff]
    %v12872 = vld [vmem:[%s5 + $0x1c0] sm:$0xff]
    %v12873 = vld [vmem:[%s5 + $0x1c8] sm:$0xff]
    %v12874 = vld [vmem:[%s5 + $0x1d0] sm:$0xff]
    %v12875 = vld [vmem:[%s5 + $0x1d8] sm:$0xff]
    %v12876 = vld [vmem:[%s5 + $0x1e0] sm:$0xff]
    %v12877 = vld [vmem:[%s5 + $0x1e8] sm:$0xff]
    %v12878 = vld [vmem:[%s5 + $0x1f0] sm:$0xff]
    %v12879 = vld [vmem:[%s5 + $0x1f8] sm:$0xff]
    %v12880 = vld [vmem:[%s6] sm:$0xff]
    %v12881 = vld [vmem:[%s6 + $0x8] sm:$0xff]
    %v12882 = vld [vmem:[%s6 + $0x10] sm:$0xff]
    %v12883 = vld [vmem:[%s6 + $0x18] sm:$0xff]
    %v12884 = vld [vmem:[%s6 + $0x20] sm:$0xff]
    %v12885 = vld [vmem:[%s6 + $0x28] sm:$0xff]
    %v12886 = vld [vmem:[%s6 + $0x30] sm:$0xff]
    %v12887 = vld [vmem:[%s6 + $0x38] sm:$0xff]
    %v12888 = vld [vmem:[%s6 + $0x40] sm:$0xff]
    %v12889 = vld [vmem:[%s6 + $0x48] sm:$0xff]
    %v12890 = vld [vmem:[%s6 + $0x50] sm:$0xff]
    %v12891 = vld [vmem:[%s6 + $0x58] sm:$0xff]
    %v12892 = vld [vmem:[%s6 + $0x60] sm:$0xff]
    %v12893 = vld [vmem:[%s6 + $0x68] sm:$0xff]
    %v12894 = vld [vmem:[%s6 + $0x70] sm:$0xff]
    %v12895 = vld [vmem:[%s6 + $0x78] sm:$0xff]
    %12897 = vset.pattern.permute.xlu0 0
    %12898 = vperm.xlu0 %12897, %v12880
    %v12899 = vpop.permute.xlu0 %12898
    %12902 = vset.pattern.permute.xlu0 0
    %12903 = vperm.xlu0 %12902, %v12881
    %v12904 = vpop.permute.xlu0 %12903
    %12907 = vset.pattern.permute.xlu0 0
    %12908 = vperm.xlu0 %12907, %v12882
    %v12909 = vpop.permute.xlu0 %12908
    %12912 = vset.pattern.permute.xlu0 0
    %12913 = vperm.xlu0 %12912, %v12883
    %v12914 = vpop.permute.xlu0 %12913
    %12917 = vset.pattern.permute.xlu0 0
    %12918 = vperm.xlu0 %12917, %v12884
    %v12919 = vpop.permute.xlu0 %12918
    %12922 = vset.pattern.permute.xlu0 0
    %12923 = vperm.xlu0 %12922, %v12885
    %v12924 = vpop.permute.xlu0 %12923
    %12927 = vset.pattern.permute.xlu0 0
    %12928 = vperm.xlu0 %12927, %v12886
    %v12929 = vpop.permute.xlu0 %12928
    %12932 = vset.pattern.permute.xlu0 0
    %12933 = vperm.xlu0 %12932, %v12887
    %v12934 = vpop.permute.xlu0 %12933
    %12937 = vset.pattern.permute.xlu0 0
    %12938 = vperm.xlu0 %12937, %v12888
    %v12939 = vpop.permute.xlu0 %12938
    %12942 = vset.pattern.permute.xlu0 0
    %12943 = vperm.xlu0 %12942, %v12889
    %v12944 = vpop.permute.xlu0 %12943
    %12947 = vset.pattern.permute.xlu0 0
    %12948 = vperm.xlu0 %12947, %v12890
    %v12949 = vpop.permute.xlu0 %12948
    %12952 = vset.pattern.permute.xlu0 0
    %12953 = vperm.xlu0 %12952, %v12891
    %v12954 = vpop.permute.xlu0 %12953
    %12957 = vset.pattern.permute.xlu0 0
    %12958 = vperm.xlu0 %12957, %v12892
    %v12959 = vpop.permute.xlu0 %12958
    %12962 = vset.pattern.permute.xlu0 0
    %12963 = vperm.xlu0 %12962, %v12893
    %v12964 = vpop.permute.xlu0 %12963
    %12967 = vset.pattern.permute.xlu0 0
    %12968 = vperm.xlu0 %12967, %v12894
    %v12969 = vpop.permute.xlu0 %12968
    %12972 = vset.pattern.permute.xlu0 0
    %12973 = vperm.xlu0 %12972, %v12895
    %v12974 = vpop.permute.xlu0 %12973
    %12976 = vmatprep.subr.mxu0 0.0
    %12977 = vmatpush1.msra.mxu0 %v12752
    %12978 = vmatprep.subr.mxu0 0.0
    %12979 = vmatpush1.msra.mxu0 %v12753
    %12980 = vmatprep.subr.mxu0 0.0
    %12981 = vmatpush1.msra.mxu0 %v12754
    %12982 = vmatprep.subr.mxu0 0.0
    %12983 = vmatpush1.msra.mxu0 %v12755
    %12984 = vmatprep.subr.mxu0 0.0
    %12985 = vmatpush1.msra.mxu0 %v12756
    %12986 = vmatprep.subr.mxu0 0.0
    %12987 = vmatpush1.msra.mxu0 %v12757
    %12988 = vmatprep.subr.mxu0 0.0
    %12989 = vmatpush1.msra.mxu0 %v12758
    %12990 = vmatprep.subr.mxu0 0.0
    %12991 = vmatpush1.msra.mxu0 %v12759
    %12992 = vmatprep.subr.mxu0 0.0
    %12993 = vmatpush1.msra.mxu0 %v12760
    %12994 = vmatprep.subr.mxu0 0.0
    %12995 = vmatpush1.msra.mxu0 %v12761
    %12996 = vmatprep.subr.mxu0 0.0
    %12997 = vmatpush1.msra.mxu0 %v12762
    %12998 = vmatprep.subr.mxu0 0.0
    %12999 = vmatpush1.msra.mxu0 %v12763
    %13000 = vmatprep.subr.mxu0 0.0
    %13001 = vmatpush1.msra.mxu0 %v12764
    %13002 = vmatprep.subr.mxu0 0.0
    %13003 = vmatpush1.msra.mxu0 %v12765
    %13004 = vmatprep.subr.mxu0 0.0
    %13005 = vmatpush1.msra.mxu0 %v12766
    %13006 = vmatprep.subr.mxu0 0.0
    %13007 = vmatpush1.msra.mxu0 %v12767
    %13008 = vmatprep.subr.mxu0 0.0
    %13009 = vmatpush1.msra.mxu0 %v12768
    %13010 = vmatprep.subr.mxu0 0.0
    %13011 = vmatpush1.msra.mxu0 %v12769
    %13012 = vmatprep.subr.mxu0 0.0
    %13013 = vmatpush1.msra.mxu0 %v12770
    %13014 = vmatprep.subr.mxu0 0.0
    %13015 = vmatpush1.msra.mxu0 %v12771
    %13016 = vmatprep.subr.mxu0 0.0
    %13017 = vmatpush1.msra.mxu0 %v12772
    %13018 = vmatprep.subr.mxu0 0.0
    %13019 = vmatpush1.msra.mxu0 %v12773
    %13020 = vmatprep.subr.mxu0 0.0
    %13021 = vmatpush1.msra.mxu0 %v12774
    %13022 = vmatprep.subr.mxu0 0.0
    %13023 = vmatpush1.msra.mxu0 %v12775
    %13024 = vmatprep.subr.mxu0 0.0
    %13025 = vmatpush1.msra.mxu0 %v12776
    %13026 = vmatprep.subr.mxu0 0.0
    %13027 = vmatpush1.msra.mxu0 %v12777
    %13028 = vmatprep.subr.mxu0 0.0
    %13029 = vmatpush1.msra.mxu0 %v12778
    %13030 = vmatprep.subr.mxu0 0.0
    %13031 = vmatpush1.msra.mxu0 %v12779
    %13032 = vmatprep.subr.mxu0 0.0
    %13033 = vmatpush1.msra.mxu0 %v12780
    %13034 = vmatprep.subr.mxu0 0.0
    %13035 = vmatpush1.msra.mxu0 %v12781
    %13036 = vmatprep.subr.mxu0 0.0
    %13037 = vmatpush1.msra.mxu0 %v12782
    %13038 = vmatprep.subr.mxu0 0.0
    %13039 = vmatpush1.msra.mxu0 %v12783
    %13040 = vmatprep.mubr.f32.mxu0 %v12817
    %13041 = vmatmul.mubr.f32.gmra.mrb[0].mxu0 %v12816
    %v13042 = vpop.f32.mrb[0].mxu0
    %v13043 = vadd.f32 %v12899, %v13042
    %v13044 = vpop.f32.mrb[0].mxu0
    %13045 = vmatprep.mubr.f32.mxu0 %v12821
    %13046 = vmatmul.mubr.f32.gmra.mrb[0].mxu0 %v12820
    %v13047 = vpop.f32.mrb[0].mxu0
    %v13048 = vadd.f32 %v12904, %v13047
    %v13049 = vpop.f32.mrb[0].mxu0
    %13050 = vmatprep.mubr.f32.mxu0 %v12825
    %13051 = vmatmul.mubr.f32.gmra.mrb[0].mxu0 %v12824
    %v13052 = vpop.f32.mrb[0].mxu0
    %v13053 = vadd.f32 %v12909, %v13052
    %v13054 = vpop.f32.mrb[0].mxu0
    %13055 = vmatprep.mubr.f32.mxu0 %v12829
    %13056 = vmatmul.mubr.f32.gmra.mrb[0].mxu0 %v12828
    %v13057 = vpop.f32.mrb[0].mxu0
    %v13058 = vadd.f32 %v12914, %v13057
    %v13059 = vpop.f32.mrb[0].mxu0
    %13060 = vmatprep.mubr.f32.mxu0 %v12833
    %13061 = vmatmul.mubr.f32.gmra.mrb[0].mxu0 %v12832
    %v13062 = vpop.f32.mrb[0].mxu0
    %v13063 = vadd.f32 %v12919, %v13062
    %v13064 = vpop.f32.mrb[0].mxu0
    %13065 = vmatprep.mubr.f32.mxu0 %v12837
    %13066 = vmatmul.mubr.f32.gmra.mrb[0].mxu0 %v12836
    %v13067 = vpop.f32.mrb[0].mxu0
    %v13068 = vadd.f32 %v12924, %v13067
    %v13069 = vpop.f32.mrb[0].mxu0
    %13070 = vmatprep.mubr.f32.mxu0 %v12841
    %13071 = vmatmul.mubr.f32.gmra.mrb[0].mxu0 %v12840
    %v13072 = vpop.f32.mrb[0].mxu0
    %v13073 = vadd.f32 %v12929, %v13072
    %v13074 = vpop.f32.mrb[0].mxu0
    %13075 = vmatprep.mubr.f32.mxu0 %v12845
    %13076 = vmatmul.mubr.f32.gmra.mrb[0].mxu0 %v12844
    %v13077 = vpop.f32.mrb[0].mxu0
    %v13078 = vadd.f32 %v12934, %v13077
    %v13079 = vpop.f32.mrb[0].mxu0
    %13080 = vmatprep.mubr.f32.mxu0 %v12849
    %13081 = vmatmul.mubr.f32.gmra.mrb[0].mxu0 %v12848
    %v13082 = vpop.f32.mrb[0].mxu0
    %v13083 = vadd.f32 %v12939, %v13082
    %v13084 = vpop.f32.mrb[0].mxu0
    %13085 = vmatprep.mubr.f32.mxu0 %v12853
    %13086 = vmatmul.mubr.f32.gmra.mrb[0].mxu0 %v12852
    %v13087 = vpop.f32.mrb[0].mxu0
    %v13088 = vadd.f32 %v12944, %v13087
    %v13089 = vpop.f32.mrb[0].mxu0
    %13090 = vmatprep.mubr.f32.mxu0 %v12857
    %13091 = vmatmul.mubr.f32.gmra.mrb[0].mxu0 %v12856
    %v13092 = vpop.f32.mrb[0].mxu0
    %v13093 = vadd.f32 %v12949, %v13092
    %v13094 = vpop.f32.mrb[0].mxu0
    %13095 = vmatprep.mubr.f32.mxu0 %v12861
    %13096 = vmatmul.mubr.f32.gmra.mrb[0].mxu0 %v12860
    %v13097 = vpop.f32.mrb[0].mxu0
    %v13098 = vadd.f32 %v12954, %v13097
    %v13099 = vpop.f32.mrb[0].mxu0
    %13100 = vmatprep.mubr.f32.mxu0 %v12865
    %13101 = vmatmul.mubr.f32.gmra.mrb[0].mxu0 %v12864
    %v13102 = vpop.f32.mrb[0].mxu0
    %v13103 = vadd.f32 %v12959, %v13102
    %v13104 = vpop.f32.mrb[0].mxu0
    %13105 = vmatprep.mubr.f32.mxu0 %v12869
    %13106 = vmatmul.mubr.f32.gmra.mrb[0].mxu0 %v12868
    %v13107 = vpop.f32.mrb[0].mxu0
    %v13108 = vadd.f32 %v12964, %v13107
    %v13109 = vpop.f32.mrb[0].mxu0
    %13110 = vmatprep.mubr.f32.mxu0 %v12873
    %13111 = vmatmul.mubr.f32.gmra.mrb[0].mxu0 %v12872
    %v13112 = vpop.f32.mrb[0].mxu0
    %v13113 = vadd.f32 %v12969, %v13112
    %v13114 = vpop.f32.mrb[0].mxu0
    %13115 = vmatprep.mubr.f32.mxu0 %v12877
    %13116 = vmatmul.mubr.f32.gmra.mrb[0].mxu0 %v12876
    %v13117 = vpop.f32.mrb[0].mxu0
    %v13118 = vadd.f32 %v12974, %v13117
    %v13119 = vpop.f32.mrb[0].mxu0
    %13120 = vdwg.mxu0
    %13121 = vmatprep.subr.mxu0 0.0
    %13122 = vmatpush1.msra.mxu0 %v12784
    %13123 = vmatprep.subr.mxu0 0.0
    %13124 = vmatpush1.msra.mxu0 %v12785
    %13125 = vmatprep.subr.mxu0 0.0
    %13126 = vmatpush1.msra.mxu0 %v12786
    %13127 = vmatprep.subr.mxu0 0.0
    %13128 = vmatpush1.msra.mxu0 %v12787
    %13129 = vmatprep.subr.mxu0 0.0
    %13130 = vmatpush1.msra.mxu0 %v12788
    %13131 = vmatprep.subr.mxu0 0.0
    %13132 = vmatpush1.msra.mxu0 %v12789
    %13133 = vmatprep.subr.mxu0 0.0
    %13134 = vmatpush1.msra.mxu0 %v12790
    %13135 = vmatprep.subr.mxu0 0.0
    %13136 = vmatpush1.msra.mxu0 %v12791
    %13137 = vmatprep.subr.mxu0 0.0
    %13138 = vmatpush1.msra.mxu0 %v12792
    %13139 = vmatprep.subr.mxu0 0.0
    %13140 = vmatpush1.msra.mxu0 %v12793
    %13141 = vmatprep.subr.mxu0 0.0
    %13142 = vmatpush1.msra.mxu0 %v12794
    %13143 = vmatprep.subr.mxu0 0.0
    %13144 = vmatpush1.msra.mxu0 %v12795
    %13145 = vmatprep.subr.mxu0 0.0
    %13146 = vmatpush1.msra.mxu0 %v12796
    %13147 = vmatprep.subr.mxu0 0.0
    %13148 = vmatpush1.msra.mxu0 %v12797
    %13149 = vmatprep.subr.mxu0 0.0
    %13150 = vmatpush1.msra.mxu0 %v12798
    %13151 = vmatprep.subr.mxu0 0.0
    %13152 = vmatpush1.msra.mxu0 %v12799
    %13153 = vmatprep.subr.mxu0 0.0
    %13154 = vmatpush1.msra.mxu0 %v12800
    %13155 = vmatprep.subr.mxu0 0.0
    %13156 = vmatpush1.msra.mxu0 %v12801
    %13157 = vmatprep.subr.mxu0 0.0
    %13158 = vmatpush1.msra.mxu0 %v12802
    %13159 = vmatprep.subr.mxu0 0.0
    %13160 = vmatpush1.msra.mxu0 %v12803
    %13161 = vmatprep.subr.mxu0 0.0
    %13162 = vmatpush1.msra.mxu0 %v12804
    %13163 = vmatprep.subr.mxu0 0.0
    %13164 = vmatpush1.msra.mxu0 %v12805
    %13165 = vmatprep.subr.mxu0 0.0
    %13166 = vmatpush1.msra.mxu0 %v12806
    %13167 = vmatprep.subr.mxu0 0.0
    %13168 = vmatpush1.msra.mxu0 %v12807
    %13169 = vmatprep.subr.mxu0 0.0
    %13170 = vmatpush1.msra.mxu0 %v12808
    %13171 = vmatprep.subr.mxu0 0.0
    %13172 = vmatpush1.msra.mxu0 %v12809
    %13173 = vmatprep.subr.mxu0 0.0
    %13174 = vmatpush1.msra.mxu0 %v12810
    %13175 = vmatprep.subr.mxu0 0.0
    %13176 = vmatpush1.msra.mxu0 %v12811
    %13177 = vmatprep.subr.mxu0 0.0
    %13178 = vmatpush1.msra.mxu0 %v12812
    %13179 = vmatprep.subr.mxu0 0.0
    %13180 = vmatpush1.msra.mxu0 %v12813
    %13181 = vmatprep.subr.mxu0 0.0
    %13182 = vmatpush1.msra.mxu0 %v12814
    %13183 = vmatprep.subr.mxu0 0.0
    %13184 = vmatpush1.msra.mxu0 %v12815
    %13185 = vmatprep.mubr.f32.mxu0 %v12819
    %13186 = vmatmul.mubr.f32.gmra.mrb[0].mxu0 %v12818
    %v13187 = vpop.f32.mrb[0].mxu0
    %v13188 = vadd.f32 %v13043, %v13187
    %v13189 = vpop.f32.mrb[0].mxu0
    %13190 = vmatprep.mubr.f32.mxu0 %v12823
    %13191 = vmatmul.mubr.f32.gmra.mrb[0].mxu0 %v12822
    %v13192 = vpop.f32.mrb[0].mxu0
    %v13193 = vadd.f32 %v13048, %v13192
    %v13194 = vpop.f32.mrb[0].mxu0
    %13195 = vmatprep.mubr.f32.mxu0 %v12827
    %13196 = vmatmul.mubr.f32.gmra.mrb[0].mxu0 %v12826
    %v13197 = vpop.f32.mrb[0].mxu0
    %v13198 = vadd.f32 %v13053, %v13197
    %v13199 = vpop.f32.mrb[0].mxu0
    %13200 = vmatprep.mubr.f32.mxu0 %v12831
    %13201 = vmatmul.mubr.f32.gmra.mrb[0].mxu0 %v12830
    %v13202 = vpop.f32.mrb[0].mxu0
    %v13203 = vadd.f32 %v13058, %v13202
    %v13204 = vpop.f32.mrb[0].mxu0
    %13205 = vmatprep.mubr.f32.mxu0 %v12835
    %13206 = vmatmul.mubr.f32.gmra.mrb[0].mxu0 %v12834
    %v13207 = vpop.f32.mrb[0].mxu0
    %v13208 = vadd.f32 %v13063, %v13207
    %v13209 = vpop.f32.mrb[0].mxu0
    %13210 = vmatprep.mubr.f32.mxu0 %v12839
    %13211 = vmatmul.mubr.f32.gmra.mrb[0].mxu0 %v12838
    %v13212 = vpop.f32.mrb[0].mxu0
    %v13213 = vadd.f32 %v13068, %v13212
    %v13214 = vpop.f32.mrb[0].mxu0
    %13215 = vmatprep.mubr.f32.mxu0 %v12843
    %13216 = vmatmul.mubr.f32.gmra.mrb[0].mxu0 %v12842
    %v13217 = vpop.f32.mrb[0].mxu0
    %v13218 = vadd.f32 %v13073, %v13217
    %v13219 = vpop.f32.mrb[0].mxu0
    %13220 = vmatprep.mubr.f32.mxu0 %v12847
    %13221 = vmatmul.mubr.f32.gmra.mrb[0].mxu0 %v12846
    %v13222 = vpop.f32.mrb[0].mxu0
    %v13223 = vadd.f32 %v13078, %v13222
    %v13224 = vpop.f32.mrb[0].mxu0
    %13225 = vmatprep.mubr.f32.mxu0 %v12851
    %13226 = vmatmul.mubr.f32.gmra.mrb[0].mxu0 %v12850
    %v13227 = vpop.f32.mrb[0].mxu0
    %v13228 = vadd.f32 %v13083, %v13227
    %v13229 = vpop.f32.mrb[0].mxu0
    %13230 = vmatprep.mubr.f32.mxu0 %v12855
    %13231 = vmatmul.mubr.f32.gmra.mrb[0].mxu0 %v12854
    %v13232 = vpop.f32.mrb[0].mxu0
    %v13233 = vadd.f32 %v13088, %v13232
    %v13234 = vpop.f32.mrb[0].mxu0
    %13235 = vmatprep.mubr.f32.mxu0 %v12859
    %13236 = vmatmul.mubr.f32.gmra.mrb[0].mxu0 %v12858
    %v13237 = vpop.f32.mrb[0].mxu0
    %v13238 = vadd.f32 %v13093, %v13237
    %v13239 = vpop.f32.mrb[0].mxu0
    %13240 = vmatprep.mubr.f32.mxu0 %v12863
    %13241 = vmatmul.mubr.f32.gmra.mrb[0].mxu0 %v12862
    %v13242 = vpop.f32.mrb[0].mxu0
    %v13243 = vadd.f32 %v13098, %v13242
    %v13244 = vpop.f32.mrb[0].mxu0
    %13245 = vmatprep.mubr.f32.mxu0 %v12867
    %13246 = vmatmul.mubr.f32.gmra.mrb[0].mxu0 %v12866
    %v13247 = vpop.f32.mrb[0].mxu0
    %v13248 = vadd.f32 %v13103, %v13247
    %v13249 = vpop.f32.mrb[0].mxu0
    %13250 = vmatprep.mubr.f32.mxu0 %v12871
    %13251 = vmatmul.mubr.f32.gmra.mrb[0].mxu0 %v12870
    %v13252 = vpop.f32.mrb[0].mxu0
    %v13253 = vadd.f32 %v13108, %v13252
    %v13254 = vpop.f32.mrb[0].mxu0
    %13255 = vmatprep.mubr.f32.mxu0 %v12875
    %13256 = vmatmul.mubr.f32.gmra.mrb[0].mxu0 %v12874
    %v13257 = vpop.f32.mrb[0].mxu0
    %v13258 = vadd.f32 %v13113, %v13257
    %v13259 = vpop.f32.mrb[0].mxu0
    %13260 = vmatprep.mubr.f32.mxu0 %v12879
    %13261 = vmatmul.mubr.f32.gmra.mrb[0].mxu0 %v12878
    %v13262 = vpop.f32.mrb[0].mxu0
    %v13263 = vadd.f32 %v13118, %v13262
    %v13264 = vpop.f32.mrb[0].mxu0
    %13265 = vdwg.mxu0
    %v13266 = vmax.f32 %v13188, 0.0
    %v13267 = vmax.f32 %v13193, 0.0
    %v13268 = vmax.f32 %v13198, 0.0
    %v13269 = vmax.f32 %v13203, 0.0
    %v13270 = vmax.f32 %v13208, 0.0
    %v13271 = vmax.f32 %v13213, 0.0
    %v13272 = vmax.f32 %v13218, 0.0
    %v13273 = vmax.f32 %v13223, 0.0
    %v13274 = vmax.f32 %v13228, 0.0
    %v13275 = vmax.f32 %v13233, 0.0
    %v13276 = vmax.f32 %v13238, 0.0
    %v13277 = vmax.f32 %v13243, 0.0
    %v13278 = vmax.f32 %v13248, 0.0
    %v13279 = vmax.f32 %v13253, 0.0
    %v13280 = vmax.f32 %v13258, 0.0
    %v13281 = vmax.f32 %v13263, 0.0
    %v13282 = vld [vmem:[%s7] sm:$0xff]
    %v13283 = vld [vmem:[%s7 + $0x8] sm:$0xff]
    %v13284 = vld [vmem:[%s7 + $0x10] sm:$0xff]
    %v13285 = vld [vmem:[%s7 + $0x18] sm:$0xff]
    %v13286 = vld [vmem:[%s7 + $0x20] sm:$0xff]
    %v13287 = vld [vmem:[%s7 + $0x28] sm:$0xff]
    %v13288 = vld [vmem:[%s7 + $0x30] sm:$0xff]
    %v13289 = vld [vmem:[%s7 + $0x38] sm:$0xff]
    %v13290 = vld [vmem:[%s7 + $0x40] sm:$0xff]
    %v13291 = vld [vmem:[%s7 + $0x48] sm:$0xff]
    %v13292 = vld [vmem:[%s7 + $0x50] sm:$0xff]
    %v13293 = vld [vmem:[%s7 + $0x58] sm:$0xff]
    %v13294 = vld [vmem:[%s7 + $0x60] sm:$0xff]
    %v13295 = vld [vmem:[%s7 + $0x68] sm:$0xff]
    %v13296 = vld [vmem:[%s7 + $0x70] sm:$0xff]
    %v13297 = vld [vmem:[%s7 + $0x78] sm:$0xff]
    %v13298 = vld [vmem:[%s8] sm:$0xff]
    %v13299 = vld [vmem:[%s8 + $0x8] sm:$0xff]
    %v13300 = vld [vmem:[%s8 + $0x10] sm:$0xff]
    %v13301 = vld [vmem:[%s8 + $0x18] sm:$0xff]
    %v13302 = vld [vmem:[%s8 + $0x20] sm:$0xff]
    %v13303 = vld [vmem:[%s8 + $0x28] sm:$0xff]
    %v13304 = vld [vmem:[%s8 + $0x30] sm:$0xff]
    %v13305 = vld [vmem:[%s8 + $0x38] sm:$0xff]
    %v13306 = vld [vmem:[%s8 + $0x40] sm:$0xff]
    %v13307 = vld [vmem:[%s8 + $0x48] sm:$0xff]
    %v13308 = vld [vmem:[%s8 + $0x50] sm:$0xff]
    %v13309 = vld [vmem:[%s8 + $0x58] sm:$0xff]
    %v13310 = vld [vmem:[%s8 + $0x60] sm:$0xff]
    %v13311 = vld [vmem:[%s8 + $0x68] sm:$0xff]
    %v13312 = vld [vmem:[%s8 + $0x70] sm:$0xff]
    %v13313 = vld [vmem:[%s8 + $0x78] sm:$0xff]
    %13315 = vset.pattern.permute.xlu0 0
    %13316 = vperm.xlu0 %13315, %v13298
    %v13317 = vpop.permute.xlu0 %13316
    %13320 = vset.pattern.permute.xlu0 0
    %13321 = vperm.xlu0 %13320, %v13299
    %v13322 = vpop.permute.xlu0 %13321
    %13325 = vset.pattern.permute.xlu0 0
    %13326 = vperm.xlu0 %13325, %v13300
    %v13327 = vpop.permute.xlu0 %13326
    %13330 = vset.pattern.permute.xlu0 0
    %13331 = vperm.xlu0 %13330, %v13301
    %v13332 = vpop.permute.xlu0 %13331
    %13335 = vset.pattern.permute.xlu0 0
    %13336 = vperm.xlu0 %13335, %v13302
    %v13337 = vpop.permute.xlu0 %13336
    %13340 = vset.pattern.permute.xlu0 0
    %13341 = vperm.xlu0 %13340, %v13303
    %v13342 = vpop.permute.xlu0 %13341
    %13345 = vset.pattern.permute.xlu0 0
    %13346 = vperm.xlu0 %13345, %v13304
    %v13347 = vpop.permute.xlu0 %13346
    %13350 = vset.pattern.permute.xlu0 0
    %13351 = vperm.xlu0 %13350, %v13305
    %v13352 = vpop.permute.xlu0 %13351
    %13355 = vset.pattern.permute.xlu0 0
    %13356 = vperm.xlu0 %13355, %v13306
    %v13357 = vpop.permute.xlu0 %13356
    %13360 = vset.pattern.permute.xlu0 0
    %13361 = vperm.xlu0 %13360, %v13307
    %v13362 = vpop.permute.xlu0 %13361
    %13365 = vset.pattern.permute.xlu0 0
    %13366 = vperm.xlu0 %13365, %v13308
    %v13367 = vpop.permute.xlu0 %13366
    %13370 = vset.pattern.permute.xlu0 0
    %13371 = vperm.xlu0 %13370, %v13309
    %v13372 = vpop.permute.xlu0 %13371
    %13375 = vset.pattern.permute.xlu0 0
    %13376 = vperm.xlu0 %13375, %v13310
    %v13377 = vpop.permute.xlu0 %13376
    %13380 = vset.pattern.permute.xlu0 0
    %13381 = vperm.xlu0 %13380, %v13311
    %v13382 = vpop.permute.xlu0 %13381
    %13385 = vset.pattern.permute.xlu0 0
    %13386 = vperm.xlu0 %13385, %v13312
    %v13387 = vpop.permute.xlu0 %13386
    %13390 = vset.pattern.permute.xlu0 0
    %13391 = vperm.xlu0 %13390, %v13313
    %v13392 = vpop.permute.xlu0 %13391
    %13394 = vmatprep.subr.mxu0 0.0
    %13395 = vmatpush1.msra.mxu0 %v13266
    %13396 = vmatprep.subr.mxu0 0.0
    %13397 = vmatpush1.msra.mxu0 %v13267
    %13398 = vmatprep.subr.mxu0 0.0
    %13399 = vmatpush1.msra.mxu0 %v13268
    %13400 = vmatprep.subr.mxu0 0.0
    %13401 = vmatpush1.msra.mxu0 %v13269
    %13402 = vmatprep.subr.mxu0 0.0
    %13403 = vmatpush1.msra.mxu0 %v13270
    %13404 = vmatprep.subr.mxu0 0.0
    %13405 = vmatpush1.msra.mxu0 %v13271
    %13406 = vmatprep.subr.mxu0 0.0
    %13407 = vmatpush1.msra.mxu0 %v13272
    %13408 = vmatprep.subr.mxu0 0.0
    %13409 = vmatpush1.msra.mxu0 %v13273
    %13410 = vmatprep.subr.mxu0 0.0
    %13411 = vmatpush1.msra.mxu0 %v13274
    %13412 = vmatprep.subr.mxu0 0.0
    %13413 = vmatpush1.msra.mxu0 %v13275
    %13414 = vmatprep.subr.mxu0 0.0
    %13415 = vmatpush1.msra.mxu0 %v13276
    %13416 = vmatprep.subr.mxu0 0.0
    %13417 = vmatpush1.msra.mxu0 %v13277
    %13418 = vmatprep.subr.mxu0 0.0
    %13419 = vmatpush1.msra.mxu0 %v13278
    %13420 = vmatprep.subr.mxu0 0.0
    %13421 = vmatpush1.msra.mxu0 %v13279
    %13422 = vmatprep.subr.mxu0 0.0
    %13423 = vmatpush1.msra.mxu0 %v13280
    %13424 = vmatprep.subr.mxu0 0.0
    %13425 = vmatpush1.msra.mxu0 %v13281
    %13426 = vmatprep.subr.mxu0 0.0
    %13427 = vmatpush1.msra.mxu0 0.0
    %13428 = vmatprep.subr.mxu0 0.0
    %13429 = vmatpush1.msra.mxu0 0.0
    %13430 = vmatprep.subr.mxu0 0.0
    %13431 = vmatpush1.msra.mxu0 0.0
    %13432 = vmatprep.subr.mxu0 0.0
    %13433 = vmatpush1.msra.mxu0 0.0
    %13434 = vmatprep.subr.mxu0 0.0
    %13435 = vmatpush1.msra.mxu0 0.0
    %13436 = vmatprep.subr.mxu0 0.0
    %13437 = vmatpush1.msra.mxu0 0.0
    %13438 = vmatprep.subr.mxu0 0.0
    %13439 = vmatpush1.msra.mxu0 0.0
    %13440 = vmatprep.subr.mxu0 0.0
    %13441 = vmatpush1.msra.mxu0 0.0
    %13442 = vmatprep.subr.mxu0 0.0
    %13443 = vmatpush1.msra.mxu0 0.0
    %13444 = vmatprep.subr.mxu0 0.0
    %13445 = vmatpush1.msra.mxu0 0.0
    %13446 = vmatprep.subr.mxu0 0.0
    %13447 = vmatpush1.msra.mxu0 0.0
    %13448 = vmatprep.subr.mxu0 0.0
    %13449 = vmatpush1.msra.mxu0 0.0
    %13450 = vmatprep.subr.mxu0 0.0
    %13451 = vmatpush1.msra.mxu0 0.0
    %13452 = vmatprep.subr.mxu0 0.0
    %13453 = vmatpush1.msra.mxu0 0.0
    %13454 = vmatprep.subr.mxu0 0.0
    %13455 = vmatpush1.msra.mxu0 0.0
    %13456 = vmatprep.subr.mxu0 0.0
    %13457 = vmatpush1.msra.mxu0 0.0
    %13458 = vmatprep.mubr.f32.mxu0 0.0
    %13459 = vmatmul.mubr.f32.gmra.mrb[0].mxu0 %v13282
    %v13460 = vpop.f32.mrb[0].mxu0
    %v13461 = vadd.f32 %v13317, %v13460
    %v13462 = vpop.f32.mrb[0].mxu0
    %13463 = vmatprep.mubr.f32.mxu0 0.0
    %13464 = vmatmul.mubr.f32.gmra.mrb[0].mxu0 %v13283
    %v13465 = vpop.f32.mrb[0].mxu0
    %v13466 = vadd.f32 %v13322, %v13465
    %v13467 = vpop.f32.mrb[0].mxu0
    %13468 = vmatprep.mubr.f32.mxu0 0.0
    %13469 = vmatmul.mubr.f32.gmra.mrb[0].mxu0 %v13284
    %v13470 = vpop.f32.mrb[0].mxu0
    %v13471 = vadd.f32 %v13327, %v13470
    %v13472 = vpop.f32.mrb[0].mxu0
    %13473 = vmatprep.mubr.f32.mxu0 0.0
    %13474 = vmatmul.mubr.f32.gmra.mrb[0].mxu0 %v13285
    %v13475 = vpop.f32.mrb[0].mxu0
    %v13476 = vadd.f32 %v13332, %v13475
    %v13477 = vpop.f32.mrb[0].mxu0
    %13478 = vmatprep.mubr.f32.mxu0 0.0
    %13479 = vmatmul.mubr.f32.gmra.mrb[0].mxu0 %v13286
    %v13480 = vpop.f32.mrb[0].mxu0
    %v13481 = vadd.f32 %v13337, %v13480
    %v13482 = vpop.f32.mrb[0].mxu0
    %13483 = vmatprep.mubr.f32.mxu0 0.0
    %13484 = vmatmul.mubr.f32.gmra.mrb[0].mxu0 %v13287
    %v13485 = vpop.f32.mrb[0].mxu0
    %v13486 = vadd.f32 %v13342, %v13485
    %v13487 = vpop.f32.mrb[0].mxu0
    %13488 = vmatprep.mubr.f32.mxu0 0.0
    %13489 = vmatmul.mubr.f32.gmra.mrb[0].mxu0 %v13288
    %v13490 = vpop.f32.mrb[0].mxu0
    %v13491 = vadd.f32 %v13347, %v13490
    %v13492 = vpop.f32.mrb[0].mxu0
    %13493 = vmatprep.mubr.f32.mxu0 0.0
    %13494 = vmatmul.mubr.f32.gmra.mrb[0].mxu0 %v13289
    %v13495 = vpop.f32.mrb[0].mxu0
    %v13496 = vadd.f32 %v13352, %v13495
    %v13497 = vpop.f32.mrb[0].mxu0
    %13498 = vmatprep.mubr.f32.mxu0 0.0
    %13499 = vmatmul.mubr.f32.gmra.mrb[0].mxu0 %v13290
    %v13500 = vpop.f32.mrb[0].mxu0
    %v13501 = vadd.f32 %v13357, %v13500
    %v13502 = vpop.f32.mrb[0].mxu0
    %13503 = vmatprep.mubr.f32.mxu0 0.0
    %13504 = vmatmul.mubr.f32.gmra.mrb[0].mxu0 %v13291
    %v13505 = vpop.f32.mrb[0].mxu0
    %v13506 = vadd.f32 %v13362, %v13505
    %v13507 = vpop.f32.mrb[0].mxu0
    %13508 = vmatprep.mubr.f32.mxu0 0.0
    %13509 = vmatmul.mubr.f32.gmra.mrb[0].mxu0 %v13292
    %v13510 = vpop.f32.mrb[0].mxu0
    %v13511 = vadd.f32 %v13367, %v13510
    %v13512 = vpop.f32.mrb[0].mxu0
    %13513 = vmatprep.mubr.f32.mxu0 0.0
    %13514 = vmatmul.mubr.f32.gmra.mrb[0].mxu0 %v13293
    %v13515 = vpop.f32.mrb[0].mxu0
    %v13516 = vadd.f32 %v13372, %v13515
    %v13517 = vpop.f32.mrb[0].mxu0
    %13518 = vmatprep.mubr.f32.mxu0 0.0
    %13519 = vmatmul.mubr.f32.gmra.mrb[0].mxu0 %v13294
    %v13520 = vpop.f32.mrb[0].mxu0
    %v13521 = vadd.f32 %v13377, %v13520
    %v13522 = vpop.f32.mrb[0].mxu0
    %13523 = vmatprep.mubr.f32.mxu0 0.0
    %13524 = vmatmul.mubr.f32.gmra.mrb[0].mxu0 %v13295
    %v13525 = vpop.f32.mrb[0].mxu0
    %v13526 = vadd.f32 %v13382, %v13525
    %v13527 = vpop.f32.mrb[0].mxu0
    %13528 = vmatprep.mubr.f32.mxu0 0.0
    %13529 = vmatmul.mubr.f32.gmra.mrb[0].mxu0 %v13296
    %v13530 = vpop.f32.mrb[0].mxu0
    %v13531 = vadd.f32 %v13387, %v13530
    %v13532 = vpop.f32.mrb[0].mxu0
    %13533 = vmatprep.mubr.f32.mxu0 0.0
    %13534 = vmatmul.mubr.f32.gmra.mrb[0].mxu0 %v13297
    %v13535 = vpop.f32.mrb[0].mxu0
    %v13536 = vadd.f32 %v13392, %v13535
    %v13537 = vpop.f32.mrb[0].mxu0
    %13538 = vdwg.mxu0
    %v13539 = vmax.f32 %v13461, 0.0
    %v13540 = vmax.f32 %v13466, 0.0
    %v13541 = vmax.f32 %v13471, 0.0
    %v13542 = vmax.f32 %v13476, 0.0
    %v13543 = vmax.f32 %v13481, 0.0
    %v13544 = vmax.f32 %v13486, 0.0
    %v13545 = vmax.f32 %v13491, 0.0
    %v13546 = vmax.f32 %v13496, 0.0
    %v13547 = vmax.f32 %v13501, 0.0
    %v13548 = vmax.f32 %v13506, 0.0
    %v13549 = vmax.f32 %v13511, 0.0
    %v13550 = vmax.f32 %v13516, 0.0
    %v13551 = vmax.f32 %v13521, 0.0
    %v13552 = vmax.f32 %v13526, 0.0
    %v13553 = vmax.f32 %v13531, 0.0
    %v13554 = vmax.f32 %v13536, 0.0
    %v13555 = vld [vmem:[%s9] sm:$0xff]
    %v13556 = vld [vmem:[%s9 + $0x8] sm:$0xff]
    %v13557 = vld [vmem:[%s9 + $0x10] sm:$0xff]
    %v13558 = vld [vmem:[%s9 + $0x18] sm:$0xff]
    %v13559 = vld [vmem:[%s9 + $0x20] sm:$0xff]
    %v13560 = vld [vmem:[%s9 + $0x28] sm:$0xff]
    %v13561 = vld [vmem:[%s9 + $0x30] sm:$0xff]
    %v13562 = vld [vmem:[%s9 + $0x38] sm:$0xff]
    %v13563 = vld [vmem:[%s9 + $0x40] sm:$0xff]
    %v13564 = vld [vmem:[%s9 + $0x48] sm:$0xff]
    %v13565 = vld [vmem:[%s9 + $0x50] sm:$0xff]
    %v13566 = vld [vmem:[%s9 + $0x58] sm:$0xff]
    %v13567 = vld [vmem:[%s9 + $0x60] sm:$0xff]
    %v13568 = vld [vmem:[%s9 + $0x68] sm:$0xff]
    %v13569 = vld [vmem:[%s9 + $0x70] sm:$0xff]
    %v13570 = vld [vmem:[%s9 + $0x78] sm:$0xff]
    %v13571 = vld [vmem:[%s10] sm:$0xff]
    %v13572 = vld [vmem:[%s10 + $0x8] sm:$0xff]
    %v13573 = vld [vmem:[%s10 + $0x10] sm:$0xff]
    %v13574 = vld [vmem:[%s10 + $0x18] sm:$0xff]
    %v13575 = vld [vmem:[%s10 + $0x20] sm:$0xff]
    %v13576 = vld [vmem:[%s10 + $0x28] sm:$0xff]
    %v13577 = vld [vmem:[%s10 + $0x30] sm:$0xff]
    %v13578 = vld [vmem:[%s10 + $0x38] sm:$0xff]
    %v13579 = vld [vmem:[%s10 + $0x40] sm:$0xff]
    %v13580 = vld [vmem:[%s10 + $0x48] sm:$0xff]
    %v13581 = vld [vmem:[%s10 + $0x50] sm:$0xff]
    %v13582 = vld [vmem:[%s10 + $0x58] sm:$0xff]
    %v13583 = vld [vmem:[%s10 + $0x60] sm:$0xff]
    %v13584 = vld [vmem:[%s10 + $0x68] sm:$0xff]
    %v13585 = vld [vmem:[%s10 + $0x70] sm:$0xff]
    %v13586 = vld [vmem:[%s10 + $0x78] sm:$0xff]
    %13588 = vset.pattern.permute.xlu0 0
    %13589 = vperm.xlu0 %13588, %v13571
    %v13590 = vpop.permute.xlu0 %13589
    %13593 = vset.pattern.permute.xlu0 0
    %13594 = vperm.xlu0 %13593, %v13572
    %v13595 = vpop.permute.xlu0 %13594
    %13598 = vset.pattern.permute.xlu0 0
    %13599 = vperm.xlu0 %13598, %v13573
    %v13600 = vpop.permute.xlu0 %13599
    %13603 = vset.pattern.permute.xlu0 0
    %13604 = vperm.xlu0 %13603, %v13574
    %v13605 = vpop.permute.xlu0 %13604
    %13608 = vset.pattern.permute.xlu0 0
    %13609 = vperm.xlu0 %13608, %v13575
    %v13610 = vpop.permute.xlu0 %13609
    %13613 = vset.pattern.permute.xlu0 0
    %13614 = vperm.xlu0 %13613, %v13576
    %v13615 = vpop.permute.xlu0 %13614
    %13618 = vset.pattern.permute.xlu0 0
    %13619 = vperm.xlu0 %13618, %v13577
    %v13620 = vpop.permute.xlu0 %13619
    %13623 = vset.pattern.permute.xlu0 0
    %13624 = vperm.xlu0 %13623, %v13578
    %v13625 = vpop.permute.xlu0 %13624
    %13628 = vset.pattern.permute.xlu0 0
    %13629 = vperm.xlu0 %13628, %v13579
    %v13630 = vpop.permute.xlu0 %13629
    %13633 = vset.pattern.permute.xlu0 0
    %13634 = vperm.xlu0 %13633, %v13580
    %v13635 = vpop.permute.xlu0 %13634
    %13638 = vset.pattern.permute.xlu0 0
    %13639 = vperm.xlu0 %13638, %v13581
    %v13640 = vpop.permute.xlu0 %13639
    %13643 = vset.pattern.permute.xlu0 0
    %13644 = vperm.xlu0 %13643, %v13582
    %v13645 = vpop.permute.xlu0 %13644
    %13648 = vset.pattern.permute.xlu0 0
    %13649 = vperm.xlu0 %13648, %v13583
    %v13650 = vpop.permute.xlu0 %13649
    %13653 = vset.pattern.permute.xlu0 0
    %13654 = vperm.xlu0 %13653, %v13584
    %v13655 = vpop.permute.xlu0 %13654
    %13658 = vset.pattern.permute.xlu0 0
    %13659 = vperm.xlu0 %13658, %v13585
    %v13660 = vpop.permute.xlu0 %13659
    %13663 = vset.pattern.permute.xlu0 0
    %13664 = vperm.xlu0 %13663, %v13586
    %v13665 = vpop.permute.xlu0 %13664
    %13667 = vmatprep.subr.mxu0 0.0
    %13668 = vmatpush1.msra.mxu0 %v13539
    %13669 = vmatprep.subr.mxu0 0.0
    %13670 = vmatpush1.msra.mxu0 %v13540
    %13671 = vmatprep.subr.mxu0 0.0
    %13672 = vmatpush1.msra.mxu0 %v13541
    %13673 = vmatprep.subr.mxu0 0.0
    %13674 = vmatpush1.msra.mxu0 %v13542
    %13675 = vmatprep.subr.mxu0 0.0
    %13676 = vmatpush1.msra.mxu0 %v13543
    %13677 = vmatprep.subr.mxu0 0.0
    %13678 = vmatpush1.msra.mxu0 %v13544
    %13679 = vmatprep.subr.mxu0 0.0
    %13680 = vmatpush1.msra.mxu0 %v13545
    %13681 = vmatprep.subr.mxu0 0.0
    %13682 = vmatpush1.msra.mxu0 %v13546
    %13683 = vmatprep.subr.mxu0 0.0
    %13684 = vmatpush1.msra.mxu0 %v13547
    %13685 = vmatprep.subr.mxu0 0.0
    %13686 = vmatpush1.msra.mxu0 %v13548
    %13687 = vmatprep.subr.mxu0 0.0
    %13688 = vmatpush1.msra.mxu0 %v13549
    %13689 = vmatprep.subr.mxu0 0.0
    %13690 = vmatpush1.msra.mxu0 %v13550
    %13691 = vmatprep.subr.mxu0 0.0
    %13692 = vmatpush1.msra.mxu0 %v13551
    %13693 = vmatprep.subr.mxu0 0.0
    %13694 = vmatpush1.msra.mxu0 %v13552
    %13695 = vmatprep.subr.mxu0 0.0
    %13696 = vmatpush1.msra.mxu0 %v13553
    %13697 = vmatprep.subr.mxu0 0.0
    %13698 = vmatpush1.msra.mxu0 %v13554
    %13699 = vmatprep.subr.mxu0 0.0
    %13700 = vmatpush1.msra.mxu0 0.0
    %13701 = vmatprep.subr.mxu0 0.0
    %13702 = vmatpush1.msra.mxu0 0.0
    %13703 = vmatprep.subr.mxu0 0.0
    %13704 = vmatpush1.msra.mxu0 0.0
    %13705 = vmatprep.subr.mxu0 0.0
    %13706 = vmatpush1.msra.mxu0 0.0
    %13707 = vmatprep.subr.mxu0 0.0
    %13708 = vmatpush1.msra.mxu0 0.0
    %13709 = vmatprep.subr.mxu0 0.0
    %13710 = vmatpush1.msra.mxu0 0.0
    %13711 = vmatprep.subr.mxu0 0.0
    %13712 = vmatpush1.msra.mxu0 0.0
    %13713 = vmatprep.subr.mxu0 0.0
    %13714 = vmatpush1.msra.mxu0 0.0
    %13715 = vmatprep.subr.mxu0 0.0
    %13716 = vmatpush1.msra.mxu0 0.0
    %13717 = vmatprep.subr.mxu0 0.0
    %13718 = vmatpush1.msra.mxu0 0.0
    %13719 = vmatprep.subr.mxu0 0.0
    %13720 = vmatpush1.msra.mxu0 0.0
    %13721 = vmatprep.subr.mxu0 0.0
    %13722 = vmatpush1.msra.mxu0 0.0
    %13723 = vmatprep.subr.mxu0 0.0
    %13724 = vmatpush1.msra.mxu0 0.0
    %13725 = vmatprep.subr.mxu0 0.0
    %13726 = vmatpush1.msra.mxu0 0.0
    %13727 = vmatprep.subr.mxu0 0.0
    %13728 = vmatpush1.msra.mxu0 0.0
    %13729 = vmatprep.subr.mxu0 0.0
    %13730 = vmatpush1.msra.mxu0 0.0
    %13731 = vmatprep.mubr.f32.mxu0 0.0
    %13732 = vmatmul.mubr.f32.gmra.mrb[0].mxu0 %v13555
    %v13733 = vpop.f32.mrb[0].mxu0
    %v13734 = vadd.f32 %v13590, %v13733
    %v13735 = vpop.f32.mrb[0].mxu0
    %13736 = vmatprep.mubr.f32.mxu0 0.0
    %13737 = vmatmul.mubr.f32.gmra.mrb[0].mxu0 %v13556
    %v13738 = vpop.f32.mrb[0].mxu0
    %v13739 = vadd.f32 %v13595, %v13738
    %v13740 = vpop.f32.mrb[0].mxu0
    %13741 = vmatprep.mubr.f32.mxu0 0.0
    %13742 = vmatmul.mubr.f32.gmra.mrb[0].mxu0 %v13557
    %v13743 = vpop.f32.mrb[0].mxu0
    %v13744 = vadd.f32 %v13600, %v13743
    %v13745 = vpop.f32.mrb[0].mxu0
    %13746 = vmatprep.mubr.f32.mxu0 0.0
    %13747 = vmatmul.mubr.f32.gmra.mrb[0].mxu0 %v13558
    %v13748 = vpop.f32.mrb[0].mxu0
    %v13749 = vadd.f32 %v13605, %v13748
    %v13750 = vpop.f32.mrb[0].mxu0
    %13751 = vmatprep.mubr.f32.mxu0 0.0
    %13752 = vmatmul.mubr.f32.gmra.mrb[0].mxu0 %v13559
    %v13753 = vpop.f32.mrb[0].mxu0
    %v13754 = vadd.f32 %v13610, %v13753
    %v13755 = vpop.f32.mrb[0].mxu0
    %13756 = vmatprep.mubr.f32.mxu0 0.0
    %13757 = vmatmul.mubr.f32.gmra.mrb[0].mxu0 %v13560
    %v13758 = vpop.f32.mrb[0].mxu0
    %v13759 = vadd.f32 %v13615, %v13758
    %v13760 = vpop.f32.mrb[0].mxu0
    %13761 = vmatprep.mubr.f32.mxu0 0.0
    %13762 = vmatmul.mubr.f32.gmra.mrb[0].mxu0 %v13561
    %v13763 = vpop.f32.mrb[0].mxu0
    %v13764 = vadd.f32 %v13620, %v13763
    %v13765 = vpop.f32.mrb[0].mxu0
    %13766 = vmatprep.mubr.f32.mxu0 0.0
    %13767 = vmatmul.mubr.f32.gmra.mrb[0].mxu0 %v13562
    %v13768 = vpop.f32.mrb[0].mxu0
    %v13769 = vadd.f32 %v13625, %v13768
    %v13770 = vpop.f32.mrb[0].mxu0
    %13771 = vmatprep.mubr.f32.mxu0 0.0
    %13772 = vmatmul.mubr.f32.gmra.mrb[0].mxu0 %v13563
    %v13773 = vpop.f32.mrb[0].mxu0
    %v13774 = vadd.f32 %v13630, %v13773
    %v13775 = vpop.f32.mrb[0].mxu0
    %13776 = vmatprep.mubr.f32.mxu0 0.0
    %13777 = vmatmul.mubr.f32.gmra.mrb[0].mxu0 %v13564
    %v13778 = vpop.f32.mrb[0].mxu0
    %v13779 = vadd.f32 %v13635, %v13778
    %v13780 = vpop.f32.mrb[0].mxu0
    %13781 = vmatprep.mubr.f32.mxu0 0.0
    %13782 = vmatmul.mubr.f32.gmra.mrb[0].mxu0 %v13565
    %v13783 = vpop.f32.mrb[0].mxu0
    %v13784 = vadd.f32 %v13640, %v13783
    %v13785 = vpop.f32.mrb[0].mxu0
    %13786 = vmatprep.mubr.f32.mxu0 0.0
    %13787 = vmatmul.mubr.f32.gmra.mrb[0].mxu0 %v13566
    %v13788 = vpop.f32.mrb[0].mxu0
    %v13789 = vadd.f32 %v13645, %v13788
    %v13790 = vpop.f32.mrb[0].mxu0
    %13791 = vmatprep.mubr.f32.mxu0 0.0
    %13792 = vmatmul.mubr.f32.gmra.mrb[0].mxu0 %v13567
    %v13793 = vpop.f32.mrb[0].mxu0
    %v13794 = vadd.f32 %v13650, %v13793
    %v13795 = vpop.f32.mrb[0].mxu0
    %13796 = vmatprep.mubr.f32.mxu0 0.0
    %13797 = vmatmul.mubr.f32.gmra.mrb[0].mxu0 %v13568
    %v13798 = vpop.f32.mrb[0].mxu0
    %v13799 = vadd.f32 %v13655, %v13798
    %v13800 = vpop.f32.mrb[0].mxu0
    %13801 = vmatprep.mubr.f32.mxu0 0.0
    %13802 = vmatmul.mubr.f32.gmra.mrb[0].mxu0 %v13569
    %v13803 = vpop.f32.mrb[0].mxu0
    %v13804 = vadd.f32 %v13660, %v13803
    %v13805 = vpop.f32.mrb[0].mxu0
    %13806 = vmatprep.mubr.f32.mxu0 0.0
    %13807 = vmatmul.mubr.f32.gmra.mrb[0].mxu0 %v13570
    %v13808 = vpop.f32.mrb[0].mxu0
    %v13809 = vadd.f32 %v13665, %v13808
    %v13810 = vpop.f32.mrb[0].mxu0
    %13811 = vdwg.mxu0
    %v13812 = vmax.f32 %v13734, %v13754
    %v13813 = vmax.f32 %v13739, %v13759
    %v13814 = vmax.f32 %v13744, %v13764
    %v13815 = vmax.f32 %v13749, %v13769
    %v13816 = vmax.f32 %v13812, %v13774
    %v13817 = vmax.f32 %v13813, %v13779
    %v13818 = vmax.f32 %v13814, %v13784
    %v13819 = vmax.f32 %v13815, %v13789
    %v13820 = vmax.f32 %v13816, %v13794
    %v13821 = vmax.f32 %v13817, %v13799
    %v13822 = vmax.f32 %v13818, %v13804
    %v13823 = vmax.f32 %v13819, %v13809
    %v13824 = vmax.f32 %v13820, %v13821
    %v13825 = vmax.f32 %v13822, %v13823
    %v13826 = vmax.f32 %v13824, %v13825
    %v13827 = vrot.slane %v13826, 4
    %v13828 = vmax.f32 %v13826, %v13827
    %v13829 = vrot.slane %v13828, 2
    %v13830 = vmax.f32 %v13828, %v13829
    %v13831 = vrot.slane %v13830, 1
    %v13832 = vmax.f32 %v13830, %v13831
    %v13833 = vsub.f32 %v13734, %v13832
    %v13834 = vsub.f32 %v13739, %v13832
    %v13835 = vsub.f32 %v13744, %v13832
    %v13836 = vsub.f32 %v13749, %v13832
    %v13837 = vsub.f32 %v13754, %v13832
    %v13838 = vsub.f32 %v13759, %v13832
    %v13839 = vsub.f32 %v13764, %v13832
    %v13840 = vsub.f32 %v13769, %v13832
    %v13841 = vsub.f32 %v13774, %v13832
    %v13842 = vsub.f32 %v13779, %v13832
    %v13843 = vsub.f32 %v13784, %v13832
    %v13844 = vsub.f32 %v13789, %v13832
    %v13845 = vsub.f32 %v13794, %v13832
    %v13846 = vsub.f32 %v13799, %v13832
    %v13847 = vsub.f32 %v13804, %v13832
    %v13848 = vsub.f32 %v13809, %v13832
    %v13849 = vmul.f32 %v13833, 1.442695
    %v13850 = vpow.pop %v13849
    %v13851 = vmul.f32 %v13834, 1.442695
    %v13852 = vpow.pop %v13851
    %v13853 = vmul.f32 %v13835, 1.442695
    %v13854 = vpow.pop %v13853
    %v13855 = vmul.f32 %v13836, 1.442695
    %v13856 = vpow.pop %v13855
    %v13857 = vmul.f32 %v13837, 1.442695
    %v13858 = vpow.pop %v13857
    %v13859 = vmul.f32 %v13838, 1.442695
    %v13860 = vpow.pop %v13859
    %v13861 = vmul.f32 %v13839, 1.442695
    %v13862 = vpow.pop %v13861
    %v13863 = vmul.f32 %v13840, 1.442695
    %v13864 = vpow.pop %v13863
    %v13865 = vmul.f32 %v13841, 1.442695
    %v13866 = vpow.pop %v13865
    %v13867 = vmul.f32 %v13842, 1.442695
    %v13868 = vpow.pop %v13867
    %v13869 = vmul.f32 %v13843, 1.442695
    %v13870 = vpow.pop %v13869
    %v13871 = vmul.f32 %v13844, 1.442695
    %v13872 = vpow.pop %v13871
    %v13873 = vmul.f32 %v13845, 1.442695
    %v13874 = vpow.pop %v13873
    %v13875 = vmul.f32 %v13846, 1.442695
    %v13876 = vpow.pop %v13875
    %v13877 = vmul.f32 %v13847, 1.442695
    %v13878 = vpow.pop %v13877
    %v13879 = vmul.f32 %v13848, 1.442695
    %v13880 = vpow.pop %v13879
    %v13881 = vadd.f32 %v13850, %v13852
    %v13882 = vadd.f32 %v13881, %v13854
    %v13883 = vadd.f32 %v13882, %v13856
    %v13884 = vadd.f32 %v13883, %v13858
    %v13885 = vadd.f32 %v13884, %v13860
    %v13886 = vadd.f32 %v13885, %v13862
    %v13887 = vadd.f32 %v13886, %v13864
    %v13888 = vadd.f32 %v13887, %v13866
    %v13889 = vadd.f32 %v13888, %v13868
    %v13890 = vadd.f32 %v13889, %v13870
    %v13891 = vadd.f32 %v13890, %v13872
    %v13892 = vadd.f32 %v13891, %v13874
    %v13893 = vadd.f32 %v13892, %v13876
    %v13894 = vadd.f32 %v13893, %v13878
    %v13895 = vadd.f32 %v13894, %v13880
    %v13896 = vrot.slane %v13895, 4
    %v13897 = vadd.f32 %v13895, %v13896
    %v13898 = vrot.slane %v13897, 2
    %v13899 = vadd.f32 %v13897, %v13898
    %v13900 = vrot.slane %v13899, 1
    %v13901 = vadd.f32 %v13899, %v13900
    %v13902 = vlog2.pop %v13901
    %v13903 = vmul.f32 %v13902, 0.6931472
    %v13904 = vsub.f32 %v13833, %v13903
    %v13905 = vsub.f32 %v13834, %v13903
    %v13906 = vsub.f32 %v13835, %v13903
    %v13907 = vsub.f32 %v13836, %v13903
    %v13908 = vsub.f32 %v13837, %v13903
    %v13909 = vsub.f32 %v13838, %v13903
    %v13910 = vsub.f32 %v13839, %v13903
    %v13911 = vsub.f32 %v13840, %v13903
    %v13912 = vsub.f32 %v13841, %v13903
    %v13913 = vsub.f32 %v13842, %v13903
    %v13914 = vsub.f32 %v13843, %v13903
    %v13915 = vsub.f32 %v13844, %v13903
    %v13916 = vsub.f32 %v13845, %v13903
    %v13917 = vsub.f32 %v13846, %v13903
    %v13918 = vsub.f32 %v13847, %v13903
    %v13919 = vsub.f32 %v13848, %v13903
    %13920 = vst [vmem:[%s11] sm:$0xff] %v13904
    %13921 = vst [vmem:[%s11 + $0x8] sm:$0xff] %v13905
    %13922 = vst [vmem:[%s11 + $0x10] sm:$0xff] %v13906
    %13923 = vst [vmem:[%s11 + $0x18] sm:$0xff] %v13907
    %13924 = vst [vmem:[%s11 + $0x20] sm:$0xff] %v13908
    %13925 = vst [vmem:[%s11 + $0x28] sm:$0xff] %v13909
    %13926 = vst [vmem:[%s11 + $0x30] sm:$0xff] %v13910
    %13927 = vst [vmem:[%s11 + $0x38] sm:$0xff] %v13911
    %13928 = vst [vmem:[%s11 + $0x40] sm:$0xff] %v13912
    %13929 = vst [vmem:[%s11 + $0x48] sm:$0xff] %v13913
    %13930 = vst [vmem:[%s11 + $0x50] sm:$0xff] %v13914
    %13931 = vst [vmem:[%s11 + $0x58] sm:$0xff] %v13915
    %13932 = vst [vmem:[%s11 + $0x60] sm:$0xff] %v13916
    %13933 = vst [vmem:[%s11 + $0x68] sm:$0xff] %v13917
    %13934 = vst [vmem:[%s11 + $0x70] sm:$0xff] %v13918
    %13935 = vst [vmem:[%s11 + $0x78] sm:$0xff] %v13919
    // Predicated region
    $region76: #{convolutional_network_forward.1} parent=1 // pred_check
      _
    $region77: #{convolutional_network_forward.1} parent=1 // pred_check_branch
      %13937 = sbr.rel (0) target = $region79
    $region78: #{convolutional_network_forward.1} parent=1 // pred_region
      _
    $region79: #{convolutional_network_forward.1} parent=1 // pred_fallthru
      _
    // Predicated region
    $region80: #{convolutional_network_forward.1} parent=1 // pred_check
      _
    $region81: #{convolutional_network_forward.1} parent=1 // pred_check_branch
      %13939 = sbr.rel (0) target = $region83
    $region82: #{convolutional_network_forward.1} parent=1 // pred_region
      _
    $region83: #{convolutional_network_forward.1} parent=1 // pred_fallthru
      _
    %13940 = vsyncpa [#allocation5], 1
    %13941 = vsyncpa [#allocation7], 1
    %13942 = vsyncpa [#allocation10], 1

</llo_original>
